<compile_context>
chip_gen: v5e
topology: v5e:2x2
jax: 0.10.0
libtpu: 0.0.40
codegen_flags: <defaults>
</compile_context>

<pallas_src>
import math
import functools

import jax
import jax.numpy as jnp
from jax.experimental import pallas as pl
from jax.experimental.pallas import tpu as pltpu

# Lane-axis (flattened spatial) tile.  Multiple of 128.
_TILE_L = 8192


def _lane_tile(L, n_batch):
    """Lane tile: full extent when small, else a multiple of 128.

    Guarantees >= 2 total grid steps when n_batch == 1 so v7x's two TensorCores
    both get work (no effect / no cost on single-TC v5e / v6e).
    """
    tile = L if L <= _TILE_L else _TILE_L
    if n_batch == 1 and tile == L and L >= 256:
        t = ((pl.cdiv(L, 2) + 127) // 128) * 128
        if t < L:
            tile = t
    return tile


# ----------------------------- Pallas kernels ---------------------------------
def _conv_kernel(x_ref, w_ref, b_ref, o_ref, *, relu):
    """Fused 1x1x1 conv (+folded-BN shift, +optional ReLU), channels-first.

    x_ref: (1, Cin, TL)   w_ref: (Cout, Cin) (BN scale pre-folded)
    b_ref: (Cout, 1)      o_ref: (1, Cout, TL)
    """
    y = jnp.dot(w_ref[...], x_ref[0], preferred_element_type=jnp.float32)
    y = y + b_ref[...]
    if relu:
        y = jnp.maximum(y, 0.0)
    o_ref[0] = y.astype(o_ref.dtype)


def _spec_pair_kernel(fur_ref, fui_ref, lfr_ref, lfi_ref,
                      wfr_ref, wfi_ref, wlr_ref, wli_ref,
                      bf_ref, blf_ref,
                      of_ref, ol_ref):
    """Both FourierUnit 1x1x1 spectral convs (+folded BN, +ReLU) in one launch.

    Inputs are rfftn real / imag parts in block (non-interleaved) channel
    layout; weights are pre-permuted to match:
        out_block = relu( W_re @ re + W_im @ im + b )
    out_block rows = [all real output channels | all imag output channels].
    """
    sf = jnp.dot(wfr_ref[...], fur_ref[0], preferred_element_type=jnp.float32)
    sf = sf + jnp.dot(wfi_ref[...], fui_ref[0], preferred_element_type=jnp.float32)
    sf = jnp.maximum(sf + bf_ref[...], 0.0)
    of_ref[0] = sf.astype(of_ref.dtype)

    sl = jnp.dot(wlr_ref[...], lfr_ref[0], preferred_element_type=jnp.float32)
    sl = sl + jnp.dot(wli_ref[...], lfi_ref[0], preferred_element_type=jnp.float32)
    sl = jnp.maximum(sl + blf_ref[...], 0.0)
    ol_ref[0] = sl.astype(ol_ref.dtype)


def _ffc_out_kernel(x_ref, y_ref, fu_ref, xs_ref,
                    wall_ref, wc2_ref, bl_ref, bg_ref,
                    ol_ref, og_ref, *, out_cl):
    """Fused FFC output stage + SpectralTransform pre-sum, channels-first.

      pre   = y + fu + xs_tiled                           (VPU, stays in VMEM)
      yx    = [s_l.Wl2l | s_l.Wg2l ; s_g.Wl2g | 0] @ x    (one packed MXU dot)
      out_l = relu(yx[:out_cl]           + b_l)
      out_g = relu(yx[out_cl:] + (s_g.Wconv2) @ pre + b_g)
    """
    yx = jnp.dot(wall_ref[...], x_ref[0], preferred_element_type=jnp.float32)
    pre = y_ref[0] + fu_ref[0] + xs_ref[0]
    yg = jnp.dot(wc2_ref[...], pre, preferred_element_type=jnp.float32)
    ol_ref[0] = jnp.maximum(yx[:out_cl] + bl_ref[...], 0.0).astype(ol_ref.dtype)
    og_ref[0] = jnp.maximum(yx[out_cl:] + yg + bg_ref[...], 0.0).astype(og_ref.dtype)


# ---------------------- conv wrapper (channels-first) --------------------------
def conv1x1_bn_relu(x3, w, scale, shift, *, relu=True, ch_offset=0, cin=None):
    """1x1x1 conv + folded eval-BN affine + optional ReLU on channels
    [ch_offset : ch_offset + cin] of x3 (the channel window is selected via the
    BlockSpec index_map, so no XLA channel-slice copy is made).

    x3: (N, Ctot, L) channels-first; w: (cin, cout).  Returns (N, cout, L).
    """
    N, Ctot, L = x3.shape
    if cin is None:
        cin = Ctot - ch_offset
    cout = w.shape[1]
    assert ch_offset % cin == 0, "channel offset must be a multiple of cin"
    cblk = ch_offset // cin

    wt = jnp.transpose(w)
    if scale is not None:
        wt = wt * scale[:, None]                       # fold eval-BN scale into weight
    if shift is None:
        shift = jnp.zeros((cout,), jnp.float32)
    b = shift.astype(jnp.float32).reshape(cout, 1)

    TL = _lane_tile(L, N)
    grid = (N, pl.cdiv(L, TL))
    cost = pl.CostEstimate(
        flops=2 * N * L * cin * cout, transcendentals=0,
        bytes_accessed=4 * (N * cin * L + cin * cout + cout + N * cout * L))

    return pl.pallas_call(
        functools.partial(_conv_kernel, relu=relu),
        out_shape=jax.ShapeDtypeStruct((N, cout, L), x3.dtype),
        grid=grid,
        in_specs=[
            pl.BlockSpec((1, cin, TL), lambda n, j: (n, cblk, j)),
            pl.BlockSpec((cout, cin), lambda n, j: (0, 0)),
            pl.BlockSpec((cout, 1), lambda n, j: (0, 0)),
        ],
        out_specs=pl.BlockSpec((1, cout, TL), lambda n, j: (n, 0, j)),
        compiler_params=pltpu.CompilerParams(
            dimension_semantics=("parallel", "parallel")),
        cost_estimate=cost,
    )(x3, wt, b)


# -------------------- FourierUnit weight re-layout (static) --------------------
def _fu_blocked_weight(w, scale, shift):
    """Convert an interleaved-channel FourierUnit conv weight / BN to block layout.

    w: (2*cin, 2*cout) stored (Cin, Cout), channel order [c0_re, c0_im, ...] on
    both axes (matching the PyTorch FourierUnit stack+permute+view ordering).
    Returns (W_re, W_im, b): W_* of shape (2*cout, cin) acting on the
    non-interleaved real / imag stacks; output rows = [real outs | imag outs].
    """
    two_cin, two_cout = w.shape
    cin, cout = two_cin // 2, two_cout // 2
    perm_in = jnp.concatenate([jnp.arange(cin) * 2, jnp.arange(cin) * 2 + 1])
    perm_out = jnp.concatenate([jnp.arange(cout) * 2, jnp.arange(cout) * 2 + 1])
    wt = jnp.transpose(w) * scale[:, None]              # (2cout, 2cin), interleaved
    wb = wt[perm_out][:, perm_in]                        # block layout
    b = shift[perm_out].astype(jnp.float32).reshape(two_cout, 1)
    return wb[:, :cin], wb[:, cin:], b


# --------------------- SpectralTransform FU + LFU branch -----------------------
def spectral_branch(y, p):
    """y = conv1 output, (N, half, D, H, W).  Returns (fu(y), tiled lfu(y)) at
    full resolution so the sum y + fu + lfu can be fused into the output kernel."""
    N, c, D, H, W = y.shape

    # FU spectrum (XLA FFT; no Pallas primitive for 3-D rfftn/irfftn).
    ff = jnp.fft.rfftn(y, axes=(-3, -2, -1), norm="ortho")
    Whf = ff.shape[-1]
    Lf = D * H * Whf
    fur = jnp.real(ff).reshape(N, c, Lf)
    fui = jnp.imag(ff).reshape(N, c, Lf)

    # LFU input (enable_lfu=True, dims==3): first c//4 channels, split 2x2 spatially.
    split_no = 2
    xs = y[:, : c // 4]
    xs = jnp.concatenate(jnp.split(xs, split_no, axis=-2), axis=1)
    xs = jnp.concatenate(jnp.split(xs, split_no, axis=-1), axis=1)   # (N, c, D, H/2, W/2)
    Hl, Wl = xs.shape[-2], xs.shape[-1]
    fl = jnp.fft.rfftn(xs, axes=(-3, -2, -1), norm="ortho")
    Whl = fl.shape[-1]
    Ll = D * Hl * Whl
    lfr = jnp.real(fl).reshape(N, c, Ll)
    lfi = jnp.imag(fl).reshape(N, c, Ll)

    wfr, wfi, bf = _fu_blocked_weight(p["fu_w"], *p["fu_bn"])
    wlr, wli, blf = _fu_blocked_weight(p["lfu_w"], *p["lfu_bn"])
    two_c = 2 * c

    cost = pl.CostEstimate(
        flops=4 * N * two_c * c * (Lf + Ll), transcendentals=0,
        bytes_accessed=4 * (N * (2 * c + two_c) * (Lf + Ll) + 4 * two_c * c + 2 * two_c))

    # One pallas_call for BOTH spectral convs (the spectra are tiny: a few lane
    # tiles at most), halving the launch / pipeline-prologue overhead.
    sfu, slf = pl.pallas_call(
        _spec_pair_kernel,
        out_shape=(jax.ShapeDtypeStruct((N, two_c, Lf), jnp.float32),
                   jax.ShapeDtypeStruct((N, two_c, Ll), jnp.float32)),
        grid=(N,),
        in_specs=[
            pl.BlockSpec((1, c, Lf), lambda n: (n, 0, 0)),
            pl.BlockSpec((1, c, Lf), lambda n: (n, 0, 0)),
            pl.BlockSpec((1, c, Ll), lambda n: (n, 0, 0)),
            pl.BlockSpec((1, c, Ll), lambda n: (n, 0, 0)),
            pl.BlockSpec((two_c, c), lambda n: (0, 0)),
            pl.BlockSpec((two_c, c), lambda n: (0, 0)),
            pl.BlockSpec((two_c, c), lambda n: (0, 0)),
            pl.BlockSpec((two_c, c), lambda n: (0, 0)),
            pl.BlockSpec((two_c, 1), lambda n: (0, 0)),
            pl.BlockSpec((two_c, 1), lambda n: (0, 0)),
        ],
        out_specs=(pl.BlockSpec((1, two_c, Lf), lambda n: (n, 0, 0)),
                   pl.BlockSpec((1, two_c, Ll), lambda n: (n, 0, 0))),
        compiler_params=pltpu.CompilerParams(dimension_semantics=("parallel",)),
        cost_estimate=cost,
    )(fur, fui, lfr, lfi, wfr, wfi, wlr, wli, bf, blf)

    # Rows [:c] are the real parts, [c:] the imag parts; XLA fuses the slices
    # into the complex-forming copy that feeds irfftn (no interleave round-trip).
    comp_fu = jax.lax.complex(sfu[:, :c], sfu[:, c:]).reshape(N, c, D, H, Whf)
    out_fu = jnp.fft.irfftn(comp_fu, s=(D, H, W), axes=(-3, -2, -1), norm="ortho")

    comp_lf = jax.lax.complex(slf[:, :c], slf[:, c:]).reshape(N, c, D, Hl, Whl)
    out_lf = jnp.fft.irfftn(comp_lf, s=(D, Hl, Wl), axes=(-3, -2, -1), norm="ortho")
    # TODO(synk): the 2x2 spatial broadcast of the LFU output is still an XLA
    # tile; removing it needs a (D, H-tile, W-tile) output grid with a modulo
    # index_map instead of a flattened lane axis.
    xs_tiled = jnp.tile(out_lf, (1, 1, 1, split_no, split_no))
    return out_fu, xs_tiled


# ------------------------------- FFC_BN_ACT ------------------------------------
def ffc_bn_act_forward(x, p):
    """x: (N, in_cl + in_cg, D, H, W) channels-first (i.e. the concatenated
    (x_l, x_g) tuple), or a tuple (x_l, x_g).  Returns (out_l, out_g)."""
    if isinstance(x, tuple):
        x = jnp.concatenate(x, axis=1)

    N, C = x.shape[:2]
    spatial = x.shape[2:]
    L = math.prod(spatial)

    in_cl = p["w_l2l"].shape[0]
    in_cg = p["w_g2l"].shape[0]
    assert in_cl + in_cg == C
    out_cl = p["w_l2l"].shape[1]
    out_cg = p["w_l2g"].shape[1]
    half = p["st_conv1_w"].shape[1]

    x3 = x.reshape(N, C, L)

    # --- SpectralTransform.conv1 + BN + ReLU on the global channels of the
    #     unsplit input (channel window picked by the BlockSpec index_map). ---
    y3 = conv1x1_bn_relu(x3, p["st_conv1_w"], *p["st_bn1"],
                         relu=True, ch_offset=in_cl, cin=in_cg)
    y = y3.reshape((N, half) + spatial)

    # --- FourierUnit + LFU (merged spectral conv; FFTs stay in XLA). ---
    out_fu, xs_tiled = spectral_branch(y, p)
    fu3 = out_fu.reshape(N, half, L)
    xs3 = xs_tiled.reshape(N, half, L)

    # --- Fused output stage. ---
    scale_l, shift_l = p["bn_l"]
    scale_g, shift_g = p["bn_g"]
    # Packed weight over the unsplit input: rows [out_l | out_g], cols [x_l | x_g].
    w_top = jnp.concatenate([p["w_l2l"].T, p["w_g2l"].T], axis=1) * scale_l[:, None]
    w_bot = jnp.concatenate(
        [p["w_l2g"].T, jnp.zeros((out_cg, in_cg), jnp.float32)], axis=1) * scale_g[:, None]
    w_all = jnp.concatenate([w_top, w_bot], axis=0)            # (out_cl+out_cg, C)
    wc2 = p["st_conv2_w"].T * scale_g[:, None]                 # (out_cg, half)
    bl = shift_l.astype(jnp.float32).reshape(out_cl, 1)
    bg = shift_g.astype(jnp.float32).reshape(out_cg, 1)

    TL = _lane_tile(L, N)
    grid = (N, pl.cdiv(L, TL))

    flops = 2 * N * L * ((out_cl + out_cg) * C + out_cg * half)
    bytes_acc = 4 * (N * L * (C + 3 * half + out_cl + out_cg)
                     + (out_cl + out_cg) * C + out_cg * half + out_cl + out_cg)
    cost = pl.CostEstimate(flops=flops, transcendentals=0, bytes_accessed=bytes_acc)

    out_l3, out_g3 = pl.pallas_call(
        functools.partial(_ffc_out_kernel, out_cl=out_cl),
        out_shape=(jax.ShapeDtypeStruct((N, out_cl, L), x.dtype),
                   jax.ShapeDtypeStruct((N, out_cg, L), x.dtype)),
        grid=grid,
        in_specs=[
            pl.BlockSpec((1, C, TL), lambda n, j: (n, 0, j)),
            pl.BlockSpec((1, half, TL), lambda n, j: (n, 0, j)),
            pl.BlockSpec((1, half, TL), lambda n, j: (n, 0, j)),
            pl.BlockSpec((1, half, TL), lambda n, j: (n, 0, j)),
            pl.BlockSpec((out_cl + out_cg, C), lambda n, j: (0, 0)),
            pl.BlockSpec((out_cg, half), lambda n, j: (0, 0)),
            pl.BlockSpec((out_cl, 1), lambda n, j: (0, 0)),
            pl.BlockSpec((out_cg, 1), lambda n, j: (0, 0)),
        ],
        out_specs=(pl.BlockSpec((1, out_cl, TL), lambda n, j: (n, 0, j)),
                   pl.BlockSpec((1, out_cg, TL), lambda n, j: (n, 0, j))),
        compiler_params=pltpu.CompilerParams(
            dimension_semantics=("parallel", "parallel")),
        cost_estimate=cost,
    )(x3, y3, fu3, xs3, w_all, wc2, bl, bg)

    out_l = out_l3.reshape((N, out_cl) + spatial)
    out_g = out_g3.reshape((N, out_cg) + spatial)
    return out_l, out_g


# --------------------------- deterministic params ------------------------------
def init_params(key, in_channels=16, out_channels=16, ratio_gin=0.5, ratio_gout=0.5):
    in_cg = int(in_channels * ratio_gin)
    in_cl = in_channels - in_cg
    out_cg = int(out_channels * ratio_gout)
    out_cl = out_channels - out_cg
    half = out_cg // 2                                   # SpectralTransform hidden width
    keys = iter(jax.random.split(key, 64))

    def conv_w(cin, cout):
        # Conv3d(cin, cout, 1, bias=False) weight stored as (Cin, Cout) matrix.
        return jax.random.normal(next(keys), (cin, cout), jnp.float32) / math.sqrt(cin)

    def bn_affine(c):
        # Eval-mode BatchNorm3d folded to per-channel (scale, shift); eps = 1e-5.
        eps = 1e-5
        gamma = 1.0 + 0.1 * jax.random.normal(next(keys), (c,), jnp.float32)
        beta = 0.1 * jax.random.normal(next(keys), (c,), jnp.float32)
        mean = 0.1 * jax.random.normal(next(keys), (c,), jnp.float32)
        var = 1.0 + 0.5 * jax.nn.sigmoid(jax.random.normal(next(keys), (c,), jnp.float32))
        scale = gamma / jnp.sqrt(var + eps)
        shift = beta - mean * scale
        return scale, shift

    return {
        "w_l2l": conv_w(in_cl, out_cl),
        "w_l2g": conv_w(in_cl, out_cg),
        "w_g2l": conv_w(in_cg, out_cl),
        # SpectralTransform(in_cg -> out_cg)
        "st_conv1_w": conv_w(in_cg, half),
        "st_bn1": bn_affine(half),
        # FourierUnit weights / BN in the interleaved [c_re, c_im, ...] layout
        # (matching the PyTorch module); re-laid-out statically at call time.
        "fu_w": conv_w(half * 2, half * 2),
        "fu_bn": bn_affine(half * 2),
        "lfu_w": conv_w(half * 2, half * 2),
        "lfu_bn": bn_affine(half * 2),
        "st_conv2_w": conv_w(half, out_cg),
        # FFC_BN_ACT norms
        "bn_l": bn_affine(out_cl),
        "bn_g": bn_affine(out_cg),
    }


if __name__ == "__main__":
    key = jax.random.PRNGKey(0)
    kx, kp = jax.random.split(key)

    N, C, D, H, W = 2, 16, 4, 8, 8          # H == W (required by the LFU split logic)
    in_cl = in_cg = C // 2                   # ratio_gin = 0.5

    # Full channels-first input; conceptually x_l = x[:, :in_cl], x_g = x[:, in_cl:].
    x = jax.random.normal(kx, (N, C, D, H, W), jnp.float32)
    params = init_params(kp, in_channels=C, out_channels=C)

    out_l, out_g = jax.jit(ffc_bn_act_forward)(x, params)
    jax.block_until_ready((out_l, out_g))

    assert out_l.shape == (N, C // 2, D, H, W)
    assert out_g.shape == (N, C // 2, D, H, W)
    assert bool(jnp.isfinite(out_l).all()) and bool(jnp.isfinite(out_g).all())
    print("KERNEL_OK")
</pallas_src>

<mosaic_0001>
module attributes {stable_mosaic.version = 11 : i64} {
  func.func @_conv_kernel(%arg0: i32, %arg1: i32, %arg2: memref<1x8x256xf32, #tpu.memory_space<vmem>>, %arg3: memref<4x8xf32, #tpu.memory_space<vmem>>, %arg4: memref<4x1xf32, #tpu.memory_space<vmem>>, %arg5: memref<1x4x256xf32, #tpu.memory_space<vmem>>) attributes {dimension_semantics = [#tpu.dimension_semantics<parallel>, #tpu.dimension_semantics<parallel>], iteration_bounds = array<i64: 2, 1>, scalar_prefetch = 0 : i64, scratch_operands = 0 : i64, tpu.core_type = #tpu.core_type<tc>, window_params = [{transform_indices = @transform_0, window_bounds = array<i64: 1, 8, 256>}, {pipeline_mode = #tpu.pipeline_mode<synchronous>, transform_indices = @transform_1, window_bounds = array<i64: 4, 8>}, {pipeline_mode = #tpu.pipeline_mode<synchronous>, transform_indices = @transform_2, window_bounds = array<i64: 4, 1>}, {transform_indices = @transform_3, window_bounds = array<i64: 1, 4, 256>}]} {
    %c0 = arith.constant 0 : index
    %c0_0 = arith.constant 0 : index
    %0 = vector.load %arg3[%c0, %c0_0] : memref<4x8xf32, #tpu.memory_space<vmem>>, vector<4x8xf32>
    %c0_1 = arith.constant 0 : index
    %c0_2 = arith.constant 0 : index
    %c0_3 = arith.constant 0 : index
    %1 = vector.load %arg2[%c0_1, %c0_2, %c0_3] : memref<1x8x256xf32, #tpu.memory_space<vmem>>, vector<1x8x256xf32>
    %2 = vector.shape_cast %1 : vector<1x8x256xf32> to vector<8x256xf32>
    %cst = arith.constant dense<0.000000e+00> : vector<4x256xf32>
    %3 = tpu.matmul %0, %2, %cst {dimension_numbers = #tpu.dot_dimension_numbers<[1], [0], [0], [1], [0, 0, 1, 1], [], []>} : vector<4x8xf32>, vector<8x256xf32>, vector<4x256xf32> -> vector<4x256xf32>
    %c0_4 = arith.constant 0 : index
    %c0_5 = arith.constant 0 : index
    %4 = vector.load %arg4[%c0_4, %c0_5] : memref<4x1xf32, #tpu.memory_space<vmem>>, vector<4x1xf32>
    %5 = vector.broadcast %4 : vector<4x1xf32> to vector<4x256xf32>
    %6 = arith.addf %3, %5 : vector<4x256xf32>
    %cst_6 = arith.constant 0.000000e+00 : f32
    %7 = vector.broadcast %cst_6 : f32 to vector<4x256xf32>
    %8 = arith.maximumf %6, %7 : vector<4x256xf32>
    %c0_7 = arith.constant 0 : index
    %c0_8 = arith.constant 0 : index
    %c0_9 = arith.constant 0 : index
    %9 = vector.load %arg5[%c0_7, %c0_8, %c0_9] : memref<1x4x256xf32, #tpu.memory_space<vmem>>, vector<1x4x256xf32>
    %10 = vector.shape_cast %9 : vector<1x4x256xf32> to vector<4x256xf32>
    %11 = vector.shape_cast %8 : vector<4x256xf32> to vector<1x4x256xf32>
    tpu.vector_store %arg5[%c0_7, %c0_8, %c0_9], %11 {strides = array<i32>} : memref<1x4x256xf32, #tpu.memory_space<vmem>>, vector<1x4x256xf32>,
    return
  }
  func.func @transform_0(%arg0: i32, %arg1: i32) -> (i32, i32, i32) {
    %c1_i32 = arith.constant 1 : i32
    %c0_i32 = arith.constant 0 : i32
    return %arg0, %c1_i32, %arg1 : i32, i32, i32
  }
  func.func @transform_1(%arg0: i32, %arg1: i32) -> (i32, i32) {
    %c0_i32 = arith.constant 0 : i32
    %c0_i32_0 = arith.constant 0 : i32
    %c0_i32_1 = arith.constant 0 : i32
    return %c0_i32, %c0_i32_0 : i32, i32
  }
  func.func @transform_2(%arg0: i32, %arg1: i32) -> (i32, i32) {
    %c0_i32 = arith.constant 0 : i32
    %c0_i32_0 = arith.constant 0 : i32
    %c0_i32_1 = arith.constant 0 : i32
    return %c0_i32, %c0_i32_0 : i32, i32
  }
  func.func @transform_3(%arg0: i32, %arg1: i32) -> (i32, i32, i32) {
    %c0_i32 = arith.constant 0 : i32
    %c0_i32_0 = arith.constant 0 : i32
    return %arg0, %c0_i32, %arg1 : i32, i32, i32
  }
}

module attributes {stable_mosaic.version = 11 : i64} {
  func.func @_spec_pair_kernel(%arg0: i32, %arg1: memref<1x4x160xf32, #tpu.memory_space<vmem>>, %arg2: memref<1x4x160xf32, #tpu.memory_space<vmem>>, %arg3: memref<1x4x48xf32, #tpu.memory_space<vmem>>, %arg4: memref<1x4x48xf32, #tpu.memory_space<vmem>>, %arg5: memref<8x4xf32, #tpu.memory_space<vmem>>, %arg6: memref<8x4xf32, #tpu.memory_space<vmem>>, %arg7: memref<8x4xf32, #tpu.memory_space<vmem>>, %arg8: memref<8x4xf32, #tpu.memory_space<vmem>>, %arg9: memref<8x1xf32, #tpu.memory_space<vmem>>, %arg10: memref<8x1xf32, #tpu.memory_space<vmem>>, %arg11: memref<1x8x160xf32, #tpu.memory_space<vmem>>, %arg12: memref<1x8x48xf32, #tpu.memory_space<vmem>>) attributes {dimension_semantics = [#tpu.dimension_semantics<parallel>], iteration_bounds = array<i64: 2>, scalar_prefetch = 0 : i64, scratch_operands = 0 : i64, tpu.core_type = #tpu.core_type<tc>, window_params = [{transform_indices = @transform_0, window_bounds = array<i64: 1, 4, 160>}, {transform_indices = @transform_1, window_bounds = array<i64: 1, 4, 160>}, {transform_indices = @transform_2, window_bounds = array<i64: 1, 4, 48>}, {transform_indices = @transform_3, window_bounds = array<i64: 1, 4, 48>}, {pipeline_mode = #tpu.pipeline_mode<synchronous>, transform_indices = @transform_4, window_bounds = array<i64: 8, 4>}, {pipeline_mode = #tpu.pipeline_mode<synchronous>, transform_indices = @transform_5, window_bounds = array<i64: 8, 4>}, {pipeline_mode = #tpu.pipeline_mode<synchronous>, transform_indices = @transform_6, window_bounds = array<i64: 8, 4>}, {pipeline_mode = #tpu.pipeline_mode<synchronous>, transform_indices = @transform_7, window_bounds = array<i64: 8, 4>}, {pipeline_mode = #tpu.pipeline_mode<synchronous>, transform_indices = @transform_8, window_bounds = array<i64: 8, 1>}, {pipeline_mode = #tpu.pipeline_mode<synchronous>, transform_indices = @transform_9, window_bounds = array<i64: 8, 1>}, {transform_indices = @transform_10, window_bounds = array<i64: 1, 8, 160>}, {transform_indices = @transform_11, window_bounds = array<i64: 1, 8, 48>}]} {
    %c0 = arith.constant 0 : index
    %c0_0 = arith.constant 0 : index
    %0 = vector.load %arg5[%c0, %c0_0] : memref<8x4xf32, #tpu.memory_space<vmem>>, vector<8x4xf32>
    %c0_1 = arith.constant 0 : index
    %c0_2 = arith.constant 0 : index
    %c0_3 = arith.constant 0 : index
    %1 = vector.load %arg1[%c0_1, %c0_2, %c0_3] : memref<1x4x160xf32, #tpu.memory_space<vmem>>, vector<1x4x160xf32>
    %2 = vector.shape_cast %1 : vector<1x4x160xf32> to vector<4x160xf32>
    %cst = arith.constant dense<0.000000e+00> : vector<8x160xf32>
    %3 = tpu.matmul %0, %2, %cst {dimension_numbers = #tpu.dot_dimension_numbers<[1], [0], [0], [1], [0, 0, 1, 1], [], []>} : vector<8x4xf32>, vector<4x160xf32>, vector<8x160xf32> -> vector<8x160xf32>
    %c0_4 = arith.constant 0 : index
    %c0_5 = arith.constant 0 : index
    %4 = vector.load %arg6[%c0_4, %c0_5] : memref<8x4xf32, #tpu.memory_space<vmem>>, vector<8x4xf32>
    %c0_6 = arith.constant 0 : index
    %c0_7 = arith.constant 0 : index
    %c0_8 = arith.constant 0 : index
    %5 = vector.load %arg2[%c0_6, %c0_7, %c0_8] : memref<1x4x160xf32, #tpu.memory_space<vmem>>, vector<1x4x160xf32>
    %6 = vector.shape_cast %5 : vector<1x4x160xf32> to vector<4x160xf32>
    %cst_9 = arith.constant dense<0.000000e+00> : vector<8x160xf32>
    %7 = tpu.matmul %4, %6, %cst_9 {dimension_numbers = #tpu.dot_dimension_numbers<[1], [0], [0], [1], [0, 0, 1, 1], [], []>} : vector<8x4xf32>, vector<4x160xf32>, vector<8x160xf32> -> vector<8x160xf32>
    %8 = arith.addf %3, %7 : vector<8x160xf32>
    %c0_10 = arith.constant 0 : index
    %c0_11 = arith.constant 0 : index
    %9 = vector.load %arg9[%c0_10, %c0_11] : memref<8x1xf32, #tpu.memory_space<vmem>>, vector<8x1xf32>
    %10 = vector.broadcast %9 : vector<8x1xf32> to vector<8x160xf32>
    %11 = arith.addf %8, %10 : vector<8x160xf32>
    %cst_12 = arith.constant 0.000000e+00 : f32
    %12 = vector.broadcast %cst_12 : f32 to vector<8x160xf32>
    %13 = arith.maximumf %11, %12 : vector<8x160xf32>
    %c0_13 = arith.constant 0 : index
    %c0_14 = arith.constant 0 : index
    %c0_15 = arith.constant 0 : index
    %14 = vector.load %arg11[%c0_13, %c0_14, %c0_15] : memref<1x8x160xf32, #tpu.memory_space<vmem>>, vector<1x8x160xf32>
    %15 = vector.shape_cast %14 : vector<1x8x160xf32> to vector<8x160xf32>
    %16 = vector.shape_cast %13 : vector<8x160xf32> to vector<1x8x160xf32>
    tpu.vector_store %arg11[%c0_13, %c0_14, %c0_15], %16 {strides = array<i32>} : memref<1x8x160xf32, #tpu.memory_space<vmem>>, vector<1x8x160xf32>,
    %c0_16 = arith.constant 0 : index
    %c0_17 = arith.constant 0 : index
    %17 = vector.load %arg7[%c0_16, %c0_17] : memref<8x4xf32, #tpu.memory_space<vmem>>, vector<8x4xf32>
    %c0_18 = arith.constant 0 : index
    %c0_19 = arith.constant 0 : index
    %c0_20 = arith.constant 0 : index
    %18 = vector.load %arg3[%c0_18, %c0_19, %c0_20] : memref<1x4x48xf32, #tpu.memory_space<vmem>>, vector<1x4x48xf32>
    %19 = vector.shape_cast %18 : vector<1x4x48xf32> to vector<4x48xf32>
    %cst_21 = arith.constant dense<0.000000e+00> : vector<8x48xf32>
    %20 = tpu.matmul %17, %19, %cst_21 {dimension_numbers = #tpu.dot_dimension_numbers<[1], [0], [0], [1], [0, 0, 1, 1], [], []>} : vector<8x4xf32>, vector<4x48xf32>, vector<8x48xf32> -> vector<8x48xf32>
    %c0_22 = arith.constant 0 : index
    %c0_23 = arith.constant 0 : index
    %21 = vector.load %arg8[%c0_22, %c0_23] : memref<8x4xf32, #tpu.memory_space<vmem>>, vector<8x4xf32>
    %c0_24 = arith.constant 0 : index
    %c0_25 = arith.constant 0 : index
    %c0_26 = arith.constant 0 : index
    %22 = vector.load %arg4[%c0_24, %c0_25, %c0_26] : memref<1x4x48xf32, #tpu.memory_space<vmem>>, vector<1x4x48xf32>
    %23 = vector.shape_cast %22 : vector<1x4x48xf32> to vector<4x48xf32>
    %cst_27 = arith.constant dense<0.000000e+00> : vector<8x48xf32>
    %24 = tpu.matmul %21, %23, %cst_27 {dimension_numbers = #tpu.dot_dimension_numbers<[1], [0], [0], [1], [0, 0, 1, 1], [], []>} : vector<8x4xf32>, vector<4x48xf32>, vector<8x48xf32> -> vector<8x48xf32>
    %25 = arith.addf %20, %24 : vector<8x48xf32>
    %c0_28 = arith.constant 0 : index
    %c0_29 = arith.constant 0 : index
    %26 = vector.load %arg10[%c0_28, %c0_29] : memref<8x1xf32, #tpu.memory_space<vmem>>, vector<8x1xf32>
    %27 = vector.broadcast %26 : vector<8x1xf32> to vector<8x48xf32>
    %28 = arith.addf %25, %27 : vector<8x48xf32>
    %cst_30 = arith.constant 0.000000e+00 : f32
    %29 = vector.broadcast %cst_30 : f32 to vector<8x48xf32>
    %30 = arith.maximumf %28, %29 : vector<8x48xf32>
    %c0_31 = arith.constant 0 : index
    %c0_32 = arith.constant 0 : index
    %c0_33 = arith.constant 0 : index
    %31 = vector.load %arg12[%c0_31, %c0_32, %c0_33] : memref<1x8x48xf32, #tpu.memory_space<vmem>>, vector<1x8x48xf32>
    %32 = vector.shape_cast %31 : vector<1x8x48xf32> to vector<8x48xf32>
    %33 = vector.shape_cast %30 : vector<8x48xf32> to vector<1x8x48xf32>
    tpu.vector_store %arg12[%c0_31, %c0_32, %c0_33], %33 {strides = array<i32>} : memref<1x8x48xf32, #tpu.memory_space<vmem>>, vector<1x8x48xf32>,
    return
  }
  func.func @transform_0(%arg0: i32) -> (i32, i32, i32) {
    %c0_i32 = arith.constant 0 : i32
    %c0_i32_0 = arith.constant 0 : i32
    %c0_i32_1 = arith.constant 0 : i32
    return %arg0, %c0_i32, %c0_i32_0 : i32, i32, i32
  }
  func.func @transform_1(%arg0: i32) -> (i32, i32, i32) {
    %c0_i32 = arith.constant 0 : i32
    %c0_i32_0 = arith.constant 0 : i32
    %c0_i32_1 = arith.constant 0 : i32
    return %arg0, %c0_i32, %c0_i32_0 : i32, i32, i32
  }
  func.func @transform_2(%arg0: i32) -> (i32, i32, i32) {
    %c0_i32 = arith.constant 0 : i32
    %c0_i32_0 = arith.constant 0 : i32
    %c0_i32_1 = arith.constant 0 : i32
    return %arg0, %c0_i32, %c0_i32_0 : i32, i32, i32
  }
  func.func @transform_3(%arg0: i32) -> (i32, i32, i32) {
    %c0_i32 = arith.constant 0 : i32
    %c0_i32_0 = arith.constant 0 : i32
    %c0_i32_1 = arith.constant 0 : i32
    return %arg0, %c0_i32, %c0_i32_0 : i32, i32, i32
  }
  func.func @transform_4(%arg0: i32) -> (i32, i32) {
    %c0_i32 = arith.constant 0 : i32
    %c0_i32_0 = arith.constant 0 : i32
    %c0_i32_1 = arith.constant 0 : i32
    return %c0_i32, %c0_i32_0 : i32, i32
  }
  func.func @transform_5(%arg0: i32) -> (i32, i32) {
    %c0_i32 = arith.constant 0 : i32
    %c0_i32_0 = arith.constant 0 : i32
    %c0_i32_1 = arith.constant 0 : i32
    return %c0_i32, %c0_i32_0 : i32, i32
  }
  func.func @transform_6(%arg0: i32) -> (i32, i32) {
    %c0_i32 = arith.constant 0 : i32
    %c0_i32_0 = arith.constant 0 : i32
    %c0_i32_1 = arith.constant 0 : i32
    return %c0_i32, %c0_i32_0 : i32, i32
  }
  func.func @transform_7(%arg0: i32) -> (i32, i32) {
    %c0_i32 = arith.constant 0 : i32
    %c0_i32_0 = arith.constant 0 : i32
    %c0_i32_1 = arith.constant 0 : i32
    return %c0_i32, %c0_i32_0 : i32, i32
  }
  func.func @transform_8(%arg0: i32) -> (i32, i32) {
    %c0_i32 = arith.constant 0 : i32
    %c0_i32_0 = arith.constant 0 : i32
    %c0_i32_1 = arith.constant 0 : i32
    return %c0_i32, %c0_i32_0 : i32, i32
  }
  func.func @transform_9(%arg0: i32) -> (i32, i32) {
    %c0_i32 = arith.constant 0 : i32
    %c0_i32_0 = arith.constant 0 : i32
    %c0_i32_1 = arith.constant 0 : i32
    return %c0_i32, %c0_i32_0 : i32, i32
  }
  func.func @transform_10(%arg0: i32) -> (i32, i32, i32) {
    %c0_i32 = arith.constant 0 : i32
    %c0_i32_0 = arith.constant 0 : i32
    %c0_i32_1 = arith.constant 0 : i32
    return %arg0, %c0_i32, %c0_i32_0 : i32, i32, i32
  }
  func.func @transform_11(%arg0: i32) -> (i32, i32, i32) {
    %c0_i32 = arith.constant 0 : i32
    %c0_i32_0 = arith.constant 0 : i32
    %c0_i32_1 = arith.constant 0 : i32
    return %arg0, %c0_i32, %c0_i32_0 : i32, i32, i32
  }
}

module attributes {stable_mosaic.version = 11 : i64} {
  func.func @_ffc_out_kernel(%arg0: i32, %arg1: i32, %arg2: memref<1x16x256xf32, #tpu.memory_space<vmem>>, %arg3: memref<1x4x256xf32, #tpu.memory_space<vmem>>, %arg4: memref<1x4x256xf32, #tpu.memory_space<vmem>>, %arg5: memref<1x4x256xf32, #tpu.memory_space<vmem>>, %arg6: memref<16x16xf32, #tpu.memory_space<vmem>>, %arg7: memref<8x4xf32, #tpu.memory_space<vmem>>, %arg8: memref<8x1xf32, #tpu.memory_space<vmem>>, %arg9: memref<8x1xf32, #tpu.memory_space<vmem>>, %arg10: memref<1x8x256xf32, #tpu.memory_space<vmem>>, %arg11: memref<1x8x256xf32, #tpu.memory_space<vmem>>) attributes {dimension_semantics = [#tpu.dimension_semantics<parallel>, #tpu.dimension_semantics<parallel>], iteration_bounds = array<i64: 2, 1>, scalar_prefetch = 0 : i64, scratch_operands = 0 : i64, tpu.core_type = #tpu.core_type<tc>, window_params = [{transform_indices = @transform_0, window_bounds = array<i64: 1, 16, 256>}, {transform_indices = @transform_1, window_bounds = array<i64: 1, 4, 256>}, {transform_indices = @transform_2, window_bounds = array<i64: 1, 4, 256>}, {transform_indices = @transform_3, window_bounds = array<i64: 1, 4, 256>}, {pipeline_mode = #tpu.pipeline_mode<synchronous>, transform_indices = @transform_4, window_bounds = array<i64: 16, 16>}, {pipeline_mode = #tpu.pipeline_mode<synchronous>, transform_indices = @transform_5, window_bounds = array<i64: 8, 4>}, {pipeline_mode = #tpu.pipeline_mode<synchronous>, transform_indices = @transform_6, window_bounds = array<i64: 8, 1>}, {pipeline_mode = #tpu.pipeline_mode<synchronous>, transform_indices = @transform_7, window_bounds = array<i64: 8, 1>}, {transform_indices = @transform_8, window_bounds = array<i64: 1, 8, 256>}, {transform_indices = @transform_9, window_bounds = array<i64: 1, 8, 256>}]} {
    %c0 = arith.constant 0 : index
    %c0_0 = arith.constant 0 : index
    %0 = vector.load %arg6[%c0, %c0_0] : memref<16x16xf32, #tpu.memory_space<vmem>>, vector<16x16xf32>
    %c0_1 = arith.constant 0 : index
    %c0_2 = arith.constant 0 : index
    %c0_3 = arith.constant 0 : index
    %1 = vector.load %arg2[%c0_1, %c0_2, %c0_3] : memref<1x16x256xf32, #tpu.memory_space<vmem>>, vector<1x16x256xf32>
    %2 = vector.shape_cast %1 : vector<1x16x256xf32> to vector<16x256xf32>
    %cst = arith.constant dense<0.000000e+00> : vector<16x256xf32>
    %3 = tpu.matmul %0, %2, %cst {dimension_numbers = #tpu.dot_dimension_numbers<[1], [0], [0], [1], [0, 0, 1, 1], [], []>} : vector<16x16xf32>, vector<16x256xf32>, vector<16x256xf32> -> vector<16x256xf32>
    %c0_4 = arith.constant 0 : index
    %c0_5 = arith.constant 0 : index
    %c0_6 = arith.constant 0 : index
    %4 = vector.load %arg3[%c0_4, %c0_5, %c0_6] : memref<1x4x256xf32, #tpu.memory_space<vmem>>, vector<1x4x256xf32>
    %5 = vector.shape_cast %4 : vector<1x4x256xf32> to vector<4x256xf32>
    %c0_7 = arith.constant 0 : index
    %c0_8 = arith.constant 0 : index
    %c0_9 = arith.constant 0 : index
    %6 = vector.load %arg4[%c0_7, %c0_8, %c0_9] : memref<1x4x256xf32, #tpu.memory_space<vmem>>, vector<1x4x256xf32>
    %7 = vector.shape_cast %6 : vector<1x4x256xf32> to vector<4x256xf32>
    %8 = arith.addf %5, %7 : vector<4x256xf32>
    %c0_10 = arith.constant 0 : index
    %c0_11 = arith.constant 0 : index
    %c0_12 = arith.constant 0 : index
    %9 = vector.load %arg5[%c0_10, %c0_11, %c0_12] : memref<1x4x256xf32, #tpu.memory_space<vmem>>, vector<1x4x256xf32>
    %10 = vector.shape_cast %9 : vector<1x4x256xf32> to vector<4x256xf32>
    %11 = arith.addf %8, %10 : vector<4x256xf32>
    %c0_13 = arith.constant 0 : index
    %c0_14 = arith.constant 0 : index
    %12 = vector.load %arg7[%c0_13, %c0_14] : memref<8x4xf32, #tpu.memory_space<vmem>>, vector<8x4xf32>
    %cst_15 = arith.constant dense<0.000000e+00> : vector<8x256xf32>
    %13 = tpu.matmul %12, %11, %cst_15 {dimension_numbers = #tpu.dot_dimension_numbers<[1], [0], [0], [1], [0, 0, 1, 1], [], []>} : vector<8x4xf32>, vector<4x256xf32>, vector<8x256xf32> -> vector<8x256xf32>
    %14 = vector.extract_strided_slice %3 {offsets = [0, 0], sizes = [8, 256], strides = [1, 1]} : vector<16x256xf32> to vector<8x256xf32>
    %c0_16 = arith.constant 0 : index
    %c0_17 = arith.constant 0 : index
    %15 = vector.load %arg8[%c0_16, %c0_17] : memref<8x1xf32, #tpu.memory_space<vmem>>, vector<8x1xf32>
    %16 = vector.broadcast %15 : vector<8x1xf32> to vector<8x256xf32>
    %17 = arith.addf %14, %16 : vector<8x256xf32>
    %cst_18 = arith.constant 0.000000e+00 : f32
    %18 = vector.broadcast %cst_18 : f32 to vector<8x256xf32>
    %19 = arith.maximumf %17, %18 : vector<8x256xf32>
    %c0_19 = arith.constant 0 : index
    %c0_20 = arith.constant 0 : index
    %c0_21 = arith.constant 0 : index
    %20 = vector.load %arg10[%c0_19, %c0_20, %c0_21] : memref<1x8x256xf32, #tpu.memory_space<vmem>>, vector<1x8x256xf32>
    %21 = vector.shape_cast %20 : vector<1x8x256xf32> to vector<8x256xf32>
    %22 = vector.shape_cast %19 : vector<8x256xf32> to vector<1x8x256xf32>
    tpu.vector_store %arg10[%c0_19, %c0_20, %c0_21], %22 {strides = array<i32>} : memref<1x8x256xf32, #tpu.memory_space<vmem>>, vector<1x8x256xf32>,
    %23 = vector.extract_strided_slice %3 {offsets = [8, 0], sizes = [8, 256], strides = [1, 1]} : vector<16x256xf32> to vector<8x256xf32>
    %24 = arith.addf %23, %13 : vector<8x256xf32>
    %c0_22 = arith.constant 0 : index
    %c0_23 = arith.constant 0 : index
    %25 = vector.load %arg9[%c0_22, %c0_23] : memref<8x1xf32, #tpu.memory_space<vmem>>, vector<8x1xf32>
    %26 = vector.broadcast %25 : vector<8x1xf32> to vector<8x256xf32>
    %27 = arith.addf %24, %26 : vector<8x256xf32>
    %cst_24 = arith.constant 0.000000e+00 : f32
    %28 = vector.broadcast %cst_24 : f32 to vector<8x256xf32>
    %29 = arith.maximumf %27, %28 : vector<8x256xf32>
    %c0_25 = arith.constant 0 : index
    %c0_26 = arith.constant 0 : index
    %c0_27 = arith.constant 0 : index
    %30 = vector.load %arg11[%c0_25, %c0_26, %c0_27] : memref<1x8x256xf32, #tpu.memory_space<vmem>>, vector<1x8x256xf32>
    %31 = vector.shape_cast %30 : vector<1x8x256xf32> to vector<8x256xf32>
    %32 = vector.shape_cast %29 : vector<8x256xf32> to vector<1x8x256xf32>
    tpu.vector_store %arg11[%c0_25, %c0_26, %c0_27], %32 {strides = array<i32>} : memref<1x8x256xf32, #tpu.memory_space<vmem>>, vector<1x8x256xf32>,
    return
  }
  func.func @transform_0(%arg0: i32, %arg1: i32) -> (i32, i32, i32) {
    %c0_i32 = arith.constant 0 : i32
    %c0_i32_0 = arith.constant 0 : i32
    return %arg0, %c0_i32, %arg1 : i32, i32, i32
  }
  func.func @transform_1(%arg0: i32, %arg1: i32) -> (i32, i32, i32) {
    %c0_i32 = arith.constant 0 : i32
    %c0_i32_0 = arith.constant 0 : i32
    return %arg0, %c0_i32, %arg1 : i32, i32, i32
  }
  func.func @transform_2(%arg0: i32, %arg1: i32) -> (i32, i32, i32) {
    %c0_i32 = arith.constant 0 : i32
    %c0_i32_0 = arith.constant 0 : i32
    return %arg0, %c0_i32, %arg1 : i32, i32, i32
  }
  func.func @transform_3(%arg0: i32, %arg1: i32) -> (i32, i32, i32) {
    %c0_i32 = arith.constant 0 : i32
    %c0_i32_0 = arith.constant 0 : i32
    return %arg0, %c0_i32, %arg1 : i32, i32, i32
  }
  func.func @transform_4(%arg0: i32, %arg1: i32) -> (i32, i32) {
    %c0_i32 = arith.constant 0 : i32
    %c0_i32_0 = arith.constant 0 : i32
    %c0_i32_1 = arith.constant 0 : i32
    return %c0_i32, %c0_i32_0 : i32, i32
  }
  func.func @transform_5(%arg0: i32, %arg1: i32) -> (i32, i32) {
    %c0_i32 = arith.constant 0 : i32
    %c0_i32_0 = arith.constant 0 : i32
    %c0_i32_1 = arith.constant 0 : i32
    return %c0_i32, %c0_i32_0 : i32, i32
  }
  func.func @transform_6(%arg0: i32, %arg1: i32) -> (i32, i32) {
    %c0_i32 = arith.constant 0 : i32
    %c0_i32_0 = arith.constant 0 : i32
    %c0_i32_1 = arith.constant 0 : i32
    return %c0_i32, %c0_i32_0 : i32, i32
  }
  func.func @transform_7(%arg0: i32, %arg1: i32) -> (i32, i32) {
    %c0_i32 = arith.constant 0 : i32
    %c0_i32_0 = arith.constant 0 : i32
    %c0_i32_1 = arith.constant 0 : i32
    return %c0_i32, %c0_i32_0 : i32, i32
  }
  func.func @transform_8(%arg0: i32, %arg1: i32) -> (i32, i32, i32) {
    %c0_i32 = arith.constant 0 : i32
    %c0_i32_0 = arith.constant 0 : i32
    return %arg0, %c0_i32, %arg1 : i32, i32, i32
  }
  func.func @transform_9(%arg0: i32, %arg1: i32) -> (i32, i32, i32) {
    %c0_i32 = arith.constant 0 : i32
    %c0_i32_0 = arith.constant 0 : i32
    return %arg0, %c0_i32, %arg1 : i32, i32, i32
  }
}

</mosaic_0001>

<llo_original>
// kernel: ffc_bn_act_forward.3
$region0: #{ffc_bn_act_forward.3}
  #allocation0 [shape = 'u32[]', space=smem, size = 0x4, offset = 0x4, fixed_abs, tag = 'smem constant byte address 0x4 - core index']
  #allocation1 [shape = 'u32[72,128]{1,0:T(1,128)}', space=vmem, size = 0x9000, scoped, tag = 'internal scratch']
  %s0 = inlined_call_operand.vmem [shape: f32[2,16,256], index: 0, kind: input, shape index: {}]
  %s1 = inlined_call_operand.vmem [shape: f32[4,8], index: 1, kind: input, shape index: {}]
  %s2 = inlined_call_operand.vmem [shape: f32[4,1], index: 2, kind: input, shape index: {}]
  %s3 = inlined_call_operand.vmem [shape: f32[2,4,256], index: 3, kind: output, shape index: {}]
  %s4 = sld [smem:[#allocation0]]
  $region45: #{ffc_bn_act_forward.3} parent=0
    _
  %s6 = ssub.s32 1, %s4
  %s7 = scalar_select 0, %s6, %s4
  loop: start=0, step=1, limit=4
  $region2: #{ffc_bn_act_forward.3} parent=0 // loop_pre_header
    _
  $region3: #{ffc_bn_act_forward.3} parent=0 // loop_header
    %s9 = sphi 0, %s13
    %p10 = scmp.ge.s32.totalorder %s9, 4
    %s16 = sphi 0, %s28
    %s17 = sphi 0, %s24
    %s18 = sphi 0, %s16
    %s19 = sphi 0, %s17
    %s20 = sphi 0, %s18
    %s21 = sphi 0, %s19
    %s33 = sphi 0, %s35
    %s36 = sphi 0, %s33
    %s37 = sphi 0, %s36
    %s53 = sphi 0, %s37
    %s57 = sphi 0, %s57
    %s59 = sphi 0, %s57
    %s60 = sphi 0, %s59
    %s74 = sphi 0, %s60
    %s78 = sphi 0, %s78
    %s80 = sphi 0, %s78
    %s81 = sphi 0, %s80
    %s95 = sphi 0, %s81
    %s103 = sphi 0, %s105
    %s106 = sphi 0, %s103
    %s107 = sphi 0, %s106
    %s123 = sphi 0, %s107
  $region4: #{ffc_bn_act_forward.3} parent=0 // loop_header_branch
    %12 = sbr.rel (%p10) target = $region8
  $region5: #{ffc_bn_act_forward.3} parent=0 // loop_body
    %s14 = ssub.s32 %s9, 1
    %s15 = ssub.s32 %s9, 2
    %s22 = sadd.s32 1, %s17
    %p23 = scmp.ge.s32.totalorder %s22, 1
    %s24 = scalar_select %p23, 0, %s22
    %s25 = sadd.s32 1, %s16
    %s26 = scalar_select %p23, %s25, %s16
    %p27 = scmp.ge.s32.totalorder %s26, 2
    %s28 = scalar_select %p27, 0, %s26
    %s29 = ssub.s32 %s16, %s28
    %s30 = ssub.s32 %s17, %s24
    %s31 = sor.u32 %s29, %s30
    %p32 = scmp.eq.s32.totalorder %s31, 0
    %s34 = sadd.s32 %s33, 1
    %s35 = scalar_select %p32, %s33, %s34
    %p38 = pneg %p32
    %p39 = scmp.eq.s32.totalorder %s9, 1
    %p40 = por %p38, %p39
    %p41 = scmp.ne.s32.totalorder %s33, %s36
    %p42 = scmp.eq.s32.totalorder %s9, 0
    %p43 = por %p41, %p42
    %p44 = scmp.ne.s32.totalorder %s33, %s36
    %p45 = scmp.eq.s32.totalorder %s14, 1
    %p46 = por %p44, %p45
    %p47 = scmp.ne.s32.totalorder %s36, %s37
    %p48 = scmp.eq.s32.totalorder %s14, 0
    %p49 = por %p47, %p48
    %p50 = scmp.ne.s32.totalorder %s36, %s37
    %p51 = scmp.eq.s32.totalorder %s15, 1
    %p52 = por %p50, %p51
    %p54 = scmp.ne.s32.totalorder %s37, %s53
    %p55 = scmp.eq.s32.totalorder %s15, 0
    %p56 = por %p54, %p55
    %s58 = sadd.s32 %s57, 1
    %p61 = scmp.eq.s32.totalorder %s9, 1
    %p62 = scmp.ne.s32.totalorder %s57, %s59
    %p63 = scmp.eq.s32.totalorder %s9, 0
    %p64 = por %p62, %p63
    %p65 = scmp.ne.s32.totalorder %s57, %s59
    %p66 = scmp.eq.s32.totalorder %s14, 1
    %p67 = por %p65, %p66
    %p68 = scmp.ne.s32.totalorder %s59, %s60
    %p69 = scmp.eq.s32.totalorder %s14, 0
    %p70 = por %p68, %p69
    %p71 = scmp.ne.s32.totalorder %s59, %s60
    %p72 = scmp.eq.s32.totalorder %s15, 1
    %p73 = por %p71, %p72
    %p75 = scmp.ne.s32.totalorder %s60, %s74
    %p76 = scmp.eq.s32.totalorder %s15, 0
    %p77 = por %p75, %p76
    %s79 = sadd.s32 %s78, 1
    %p82 = scmp.eq.s32.totalorder %s9, 1
    %p83 = scmp.ne.s32.totalorder %s78, %s80
    %p84 = scmp.eq.s32.totalorder %s9, 0
    %p85 = por %p83, %p84
    %p86 = scmp.ne.s32.totalorder %s78, %s80
    %p87 = scmp.eq.s32.totalorder %s14, 1
    %p88 = por %p86, %p87
    %p89 = scmp.ne.s32.totalorder %s80, %s81
    %p90 = scmp.eq.s32.totalorder %s14, 0
    %p91 = por %p89, %p90
    %p92 = scmp.ne.s32.totalorder %s80, %s81
    %p93 = scmp.eq.s32.totalorder %s15, 1
    %p94 = por %p92, %p93
    %p96 = scmp.ne.s32.totalorder %s81, %s95
    %p97 = scmp.eq.s32.totalorder %s15, 0
    %p98 = por %p96, %p97
    %s99 = ssub.s32 %s16, %s28
    %s100 = ssub.s32 %s17, %s24
    %s101 = sor.u32 %s99, %s100
    %p102 = scmp.eq.s32.totalorder %s101, 0
    %s104 = sadd.s32 %s103, 1
    %s105 = scalar_select %p102, %s103, %s104
    %p108 = pneg %p102
    %p109 = scmp.eq.s32.totalorder %s9, 1
    %p110 = por %p108, %p109
    %p111 = scmp.ne.s32.totalorder %s103, %s106
    %p112 = scmp.eq.s32.totalorder %s9, 0
    %p113 = por %p111, %p112
    %p114 = scmp.ne.s32.totalorder %s103, %s106
    %p115 = scmp.eq.s32.totalorder %s14, 1
    %p116 = por %p114, %p115
    %p117 = scmp.ne.s32.totalorder %s106, %s107
    %p118 = scmp.eq.s32.totalorder %s14, 0
    %p119 = por %p117, %p118
    %p120 = scmp.ne.s32.totalorder %s106, %s107
    %p121 = scmp.eq.s32.totalorder %s15, 1
    %p122 = por %p120, %p121
    %p124 = scmp.ne.s32.totalorder %s107, %s123
    %p125 = scmp.eq.s32.totalorder %s15, 0
    %p126 = por %p124, %p125
    %p127 = scmp.le.s32.totalorder 1, %s9
    %p128 = scmp.lt.s32.totalorder %s9, 3
    %p129 = pnand %p127, %p128
    %p130 = pneg %p129
    // Predicated region
    $region9: #{ffc_bn_act_forward.3} parent=5 // pred_check
      _
    $region10: #{ffc_bn_act_forward.3} parent=5 // pred_check_branch
      %132 = sbr.rel (%p129) target = $region12
    $region11: #{ffc_bn_act_forward.3} parent=5 // pred_region
      %s133 = ssub.s32 %s9, 1
      // Predicated region
      $region13: #{ffc_bn_act_forward.3} parent=11 // pred_check
        %p134 = pneg %p70
      $region14: #{ffc_bn_act_forward.3} parent=11 // pred_check_branch
        %136 = sbr.rel (%p134) target = $region16
      $region15: #{ffc_bn_act_forward.3} parent=11 // pred_region
        _
      $region16: #{ffc_bn_act_forward.3} parent=11 // pred_fallthru
        _
      // Predicated region
      $region17: #{ffc_bn_act_forward.3} parent=11 // pred_check
        %p137 = pneg %p91
      $region18: #{ffc_bn_act_forward.3} parent=11 // pred_check_branch
        %139 = sbr.rel (%p137) target = $region20
      $region19: #{ffc_bn_act_forward.3} parent=11 // pred_region
        _
      $region20: #{ffc_bn_act_forward.3} parent=11 // pred_fallthru
        _
    $region12: #{ffc_bn_act_forward.3} parent=5 // pred_fallthru
      _
    %p140 = scmp.lt.s32.totalorder %s9, 2
    // Predicated region
    $region21: #{ffc_bn_act_forward.3} parent=5 // pred_check
      %p141 = pneg %p140
    $region22: #{ffc_bn_act_forward.3} parent=5 // pred_check_branch
      %143 = sbr.rel (%p141) target = $region24
    $region23: #{ffc_bn_act_forward.3} parent=5 // pred_region
      // Predicated region
      $region25: #{ffc_bn_act_forward.3} parent=23 // pred_check
        %p144 = pneg %p43
      $region26: #{ffc_bn_act_forward.3} parent=23 // pred_check_branch
        %146 = sbr.rel (%p144) target = $region28
      $region27: #{ffc_bn_act_forward.3} parent=23 // pred_region
        %s147 = smul.u32 2, %s17
        %p148 = scmp.lt.s32.totalorder %s16, 1
        %s149 = scalar_select %p148, %s16, 1
        %p150 = scmp.lt.s32.totalorder %s147, 1
        %s151 = scalar_select %p150, %s147, 1
        %s152 = sadd.s32 %s151, 2
        %s153 = smul.addr %s149, 4
        %s154 = sadd.s32 %s152, %s153
        %s155 = smul.addr %s154, 8
        %s156 = scalar_lea.vmem %s0, %s155
        %s157 = smul.u32 2, %s17
      $region28: #{ffc_bn_act_forward.3} parent=23 // pred_fallthru
        _
    $region24: #{ffc_bn_act_forward.3} parent=5 // pred_fallthru
      _
    %p158 = scmp.le.s32.totalorder 1, %s9
    %p159 = scmp.lt.s32.totalorder %s9, 3
    %p160 = pnand %p158, %p159
    %p161 = pneg %p160
    // Predicated region
    $region29: #{ffc_bn_act_forward.3} parent=5 // pred_check
      _
    $region30: #{ffc_bn_act_forward.3} parent=5 // pred_check_branch
      %163 = sbr.rel (%p160) target = $region32
    $region31: #{ffc_bn_act_forward.3} parent=5 // pred_region
      %s164 = ssub.s32 %s9, 1
      %s165 = smul.u32 2, %s19
      %p166 = scmp.lt.s32.totalorder %s18, 1
      %s167 = scalar_select %p166, %s18, 1
      %p168 = scmp.lt.s32.totalorder %s165, 1
      %s169 = scalar_select %p168, %s165, 1
      %s170 = sadd.s32 %s169, 2
      %s171 = smul.addr %s167, 4
      %s172 = sadd.s32 %s170, %s171
      %s173 = smul.addr %s172, 8
      %s174 = scalar_lea.vmem %s0, %s173
      %p175 = pneg %p49
      %p176 = pneg %p46
      %p177 = pneg %p70
      %p178 = pneg %p67
      %p179 = pneg %p91
      %p180 = pneg %p88
      %p181 = pneg %p119
      %p182 = pneg %p116
      %s183 = smul.u32 2, %s19
      %p184 = scmp.lt.s32.totalorder %s18, 1
      %s185 = scalar_select %p184, %s18, 1
      %p186 = scmp.lt.s32.totalorder %s183, 1
      %s187 = scalar_select %p186, %s183, 1
      %s188 = smul.addr %s185, 2
      %s189 = sadd.s32 %s187, %s188
      %s190 = smul.addr %s189, 4
      %s191 = scalar_lea.vmem %s3, %s190
      %s192 = smul.u32 2, %s19
      %p193 = scmp.lt.s32.totalorder %s18, 1
      %s194 = scalar_select %p193, %s18, 1
      %p195 = scmp.lt.s32.totalorder %s192, 1
      %s196 = scalar_select %p195, %s192, 1
      %s197 = sadd.s32 %s196, 2
      %s198 = smul.addr %s194, 4
      %s199 = sadd.s32 %s197, %s198
      %s200 = smul.addr %s199, 8
      %s201 = scalar_lea.vmem %s0, %s200
      %s202 = smul.u32 2, %s19
      %s203 = smul.u32 2, %s19
      %p204 = scmp.lt.s32.totalorder %s18, 1
      %s205 = scalar_select %p204, %s18, 1
      %p206 = scmp.lt.s32.totalorder %s203, 1
      %s207 = scalar_select %p206, %s203, 1
      %s208 = smul.addr %s205, 2
      %s209 = sadd.s32 %s207, %s208
      %s210 = smul.addr %s209, 4
      %s211 = scalar_lea.vmem %s3, %s210
      %s212 = smul.u32 2, %s19
      %v213 = vld [vmem:[%s1] sm:$0xf]
      %v214 = vld [vmem:[%s201] sm:$0xff]
      %v215 = vld [vmem:[%s201 + $0x8] sm:$0xff]
      %v216 = vld [vmem:[%s2] sm:$0xf]
      %218 = vset.pattern.permute.xlu0 0
      %219 = vperm.xlu0 %218, %v216
      %v220 = vpop.permute.xlu0 %219
      %vm222 = vcmask 64512
      %v224 = vsel %vm222, %v213, 0
      %226 = vmatpush.msra.mxu0 0.0
      %227 = vmatpush.msra.mxu0 0.0
      %228 = vmatpush.msra.mxu0 0.0
      %229 = vmatpush.msra.mxu0 0.0
      %230 = vmatpush.msra.mxu0 0.0
      %231 = vmatpush.msra.mxu0 0.0
      %232 = vmatpush.msra.mxu0 0.0
      %233 = vmatpush.msra.mxu0 0.0
      %234 = vmatpush.msra.mxu0 0.0
      %235 = vmatpush.msra.mxu0 0.0
      %236 = vmatpush.msra.mxu0 0.0
      %237 = vmatpush.msra.mxu0 0.0
      %238 = vmatpush.msra.mxu0 0.0
      %239 = vmatpush.msra.mxu0 0.0
      %240 = vmatpush.msra.mxu0 0.0
      %241 = vmatpush.msra.mxu0 %v214
      %242 = vmatmul.f32.gmra.mxu0 %v224
      %v243 = vpop.f32.mrf.mxu0
      %v244 = vadd.f32 %v220, %v243
      %245 = vdwg.mxu0
      %246 = vmatpush.msra.mxu0 0.0
      %247 = vmatpush.msra.mxu0 0.0
      %248 = vmatpush.msra.mxu0 0.0
      %249 = vmatpush.msra.mxu0 0.0
      %250 = vmatpush.msra.mxu0 0.0
      %251 = vmatpush.msra.mxu0 0.0
      %252 = vmatpush.msra.mxu0 0.0
      %253 = vmatpush.msra.mxu0 0.0
      %254 = vmatpush.msra.mxu0 0.0
      %255 = vmatpush.msra.mxu0 0.0
      %256 = vmatpush.msra.mxu0 0.0
      %257 = vmatpush.msra.mxu0 0.0
      %258 = vmatpush.msra.mxu0 0.0
      %259 = vmatpush.msra.mxu0 0.0
      %260 = vmatpush.msra.mxu0 0.0
      %261 = vmatpush.msra.mxu0 %v215
      %262 = vmatmul.f32.gmra.mxu0 %v224
      %v263 = vpop.f32.mrf.mxu0
      %v264 = vadd.f32 %v220, %v263
      %265 = vdwg.mxu0
      %v266 = vmax.f32 %v244, 0.0
      %v267 = vmax.f32 %v264, 0.0
      %v270 = vrot.slane %v267, 4
      %vm271 = vcmask 1043456
      %v272 = vsel %vm271, %v266, %v270
      %274 = vst [vmem:[%s211] sm:$0xff] %v272
      %s275 = smul.u32 2, %s19
      %p276 = scmp.lt.s32.totalorder %s18, 1
      %s277 = scalar_select %p276, %s18, 1
      %p278 = scmp.lt.s32.totalorder %s275, 1
      %s279 = scalar_select %p278, %s275, 1
      %s280 = smul.addr %s277, 2
      %s281 = sadd.s32 %s279, %s280
      %s282 = smul.addr %s281, 4
      %s283 = scalar_lea.vmem %s3, %s282
      // Predicated region
      $region33: #{ffc_bn_act_forward.3} parent=31 // pred_check
        %p284 = pneg %p116
      $region34: #{ffc_bn_act_forward.3} parent=31 // pred_check_branch
        %286 = sbr.rel (%p284) target = $region36
      $region35: #{ffc_bn_act_forward.3} parent=31 // pred_region
        %s287 = smul.u32 2, %s19
      $region36: #{ffc_bn_act_forward.3} parent=31 // pred_fallthru
        _
    $region32: #{ffc_bn_act_forward.3} parent=5 // pred_fallthru
      _
    %p288 = scmp.le.s32.totalorder 2, %s9
    // Predicated region
    $region37: #{ffc_bn_act_forward.3} parent=5 // pred_check
      %p289 = pneg %p288
    $region38: #{ffc_bn_act_forward.3} parent=5 // pred_check_branch
      %291 = sbr.rel (%p289) target = $region40
    $region39: #{ffc_bn_act_forward.3} parent=5 // pred_region
      %s292 = ssub.s32 %s9, 2
      // Predicated region
      $region41: #{ffc_bn_act_forward.3} parent=39 // pred_check
        %p293 = pneg %p122
      $region42: #{ffc_bn_act_forward.3} parent=39 // pred_check_branch
        %295 = sbr.rel (%p293) target = $region44
      $region43: #{ffc_bn_act_forward.3} parent=39 // pred_region
        %s296 = smul.u32 2, %s21
        %p297 = scmp.lt.s32.totalorder %s20, 1
        %s298 = scalar_select %p297, %s20, 1
        %p299 = scmp.lt.s32.totalorder %s296, 1
        %s300 = scalar_select %p299, %s296, 1
        %s301 = smul.addr %s298, 2
        %s302 = sadd.s32 %s300, %s301
        %s303 = smul.addr %s302, 4
        %s304 = scalar_lea.vmem %s3, %s303
      $region44: #{ffc_bn_act_forward.3} parent=39 // pred_fallthru
        _
    $region40: #{ffc_bn_act_forward.3} parent=5 // pred_fallthru
      _
  $region6: #{ffc_bn_act_forward.3} parent=0 // loop_footer
    %s13 = sadd.s32 1, %s9
  $region7: #{ffc_bn_act_forward.3} parent=0 // loop_footer_branch
    %8 = sbr.rel target = $region3
  $region8: #{ffc_bn_act_forward.3} parent=0 // loop_exit
    _

// kernel: ffc_bn_act_forward.4
$region0: #{ffc_bn_act_forward.4}
  #allocation0 [shape = 'u32[]', space=smem, size = 0x4, offset = 0x4, fixed_abs, tag = 'smem constant byte address 0x4 - core index']
  #allocation1 [shape = 'u32[72,128]{1,0:T(1,128)}', space=vmem, size = 0x9000, scoped, tag = 'internal scratch']
  %s0 = inlined_call_operand.vmem [shape: f32[2,4,160], index: 0, kind: input, shape index: {}]
  %s1 = inlined_call_operand.vmem [shape: f32[2,4,160], index: 1, kind: input, shape index: {}]
  %s2 = inlined_call_operand.vmem [shape: f32[2,4,48], index: 2, kind: input, shape index: {}]
  %s3 = inlined_call_operand.vmem [shape: f32[2,4,48], index: 3, kind: input, shape index: {}]
  %s4 = inlined_call_operand.vmem [shape: f32[8,4], index: 4, kind: input, shape index: {}]
  %s5 = inlined_call_operand.vmem [shape: f32[8,4], index: 5, kind: input, shape index: {}]
  %s6 = inlined_call_operand.vmem [shape: f32[8,4], index: 6, kind: input, shape index: {}]
  %s7 = inlined_call_operand.vmem [shape: f32[8,4], index: 7, kind: input, shape index: {}]
  %s8 = inlined_call_operand.vmem [shape: f32[8,1], index: 8, kind: input, shape index: {}]
  %s9 = inlined_call_operand.vmem [shape: f32[8,1], index: 9, kind: input, shape index: {}]
  %s10 = inlined_call_operand.vmem [shape: f32[2,8,160], index: 10, kind: output, shape index: {0}]
  %s11 = inlined_call_operand.vmem [shape: f32[2,8,48], index: 11, kind: output, shape index: {1}]
  %12 = xla_tuple %s10, %s11
  %s13 = sld [smem:[#allocation0]]
  $region81: #{ffc_bn_act_forward.4} parent=0
    _
  %s15 = ssub.s32 1, %s13
  %s16 = scalar_select 0, %s15, %s13
  loop: start=0, step=1, limit=4
  $region2: #{ffc_bn_act_forward.4} parent=0 // loop_pre_header
    _
  $region3: #{ffc_bn_act_forward.4} parent=0 // loop_header
    %s18 = sphi 0, %s22
    %p19 = scmp.ge.s32.totalorder %s18, 4
    %s28 = sphi 0, %s30
    %s31 = sphi 0, %s28
    %s32 = sphi 0, %s31
    %s48 = sphi 0, %s32
    %s54 = sphi 0, %s56
    %s57 = sphi 0, %s54
    %s58 = sphi 0, %s57
    %s74 = sphi 0, %s58
    %s80 = sphi 0, %s82
    %s83 = sphi 0, %s80
    %s84 = sphi 0, %s83
    %s100 = sphi 0, %s84
    %s106 = sphi 0, %s108
    %s109 = sphi 0, %s106
    %s110 = sphi 0, %s109
    %s126 = sphi 0, %s110
    %s130 = sphi 0, %s130
    %s132 = sphi 0, %s130
    %s133 = sphi 0, %s132
    %s147 = sphi 0, %s133
    %s151 = sphi 0, %s151
    %s153 = sphi 0, %s151
    %s154 = sphi 0, %s153
    %s168 = sphi 0, %s154
    %s172 = sphi 0, %s172
    %s174 = sphi 0, %s172
    %s175 = sphi 0, %s174
    %s189 = sphi 0, %s175
    %s193 = sphi 0, %s193
    %s195 = sphi 0, %s193
    %s196 = sphi 0, %s195
    %s210 = sphi 0, %s196
    %s214 = sphi 0, %s214
    %s216 = sphi 0, %s214
    %s217 = sphi 0, %s216
    %s231 = sphi 0, %s217
    %s235 = sphi 0, %s235
    %s237 = sphi 0, %s235
    %s238 = sphi 0, %s237
    %s252 = sphi 0, %s238
    %s258 = sphi 0, %s260
    %s261 = sphi 0, %s258
    %s262 = sphi 0, %s261
    %s278 = sphi 0, %s262
    %s284 = sphi 0, %s286
    %s287 = sphi 0, %s284
    %s288 = sphi 0, %s287
    %s304 = sphi 0, %s288
  $region4: #{ffc_bn_act_forward.4} parent=0 // loop_header_branch
    %21 = sbr.rel (%p19) target = $region8
  $region5: #{ffc_bn_act_forward.4} parent=0 // loop_body
    %s23 = ssub.s32 %s18, 1
    %s24 = ssub.s32 %s18, 2
    %s25 = sadd.s32 %s18, 1
    %s26 = ssub.s32 %s18, %s25
    %p27 = scmp.eq.s32.totalorder %s26, 0
    %s29 = sadd.s32 %s28, 1
    %s30 = scalar_select %p27, %s28, %s29
    %p33 = pneg %p27
    %p34 = scmp.eq.s32.totalorder %s18, 1
    %p35 = por %p33, %p34
    %p36 = scmp.ne.s32.totalorder %s28, %s31
    %p37 = scmp.eq.s32.totalorder %s18, 0
    %p38 = por %p36, %p37
    %p39 = scmp.ne.s32.totalorder %s28, %s31
    %p40 = scmp.eq.s32.totalorder %s23, 1
    %p41 = por %p39, %p40
    %p42 = scmp.ne.s32.totalorder %s31, %s32
    %p43 = scmp.eq.s32.totalorder %s23, 0
    %p44 = por %p42, %p43
    %p45 = scmp.ne.s32.totalorder %s31, %s32
    %p46 = scmp.eq.s32.totalorder %s24, 1
    %p47 = por %p45, %p46
    %p49 = scmp.ne.s32.totalorder %s32, %s48
    %p50 = scmp.eq.s32.totalorder %s24, 0
    %p51 = por %p49, %p50
    %s52 = ssub.s32 %s18, %s25
    %p53 = scmp.eq.s32.totalorder %s52, 0
    %s55 = sadd.s32 %s54, 1
    %s56 = scalar_select %p53, %s54, %s55
    %p59 = pneg %p53
    %p60 = scmp.eq.s32.totalorder %s18, 1
    %p61 = por %p59, %p60
    %p62 = scmp.ne.s32.totalorder %s54, %s57
    %p63 = scmp.eq.s32.totalorder %s18, 0
    %p64 = por %p62, %p63
    %p65 = scmp.ne.s32.totalorder %s54, %s57
    %p66 = scmp.eq.s32.totalorder %s23, 1
    %p67 = por %p65, %p66
    %p68 = scmp.ne.s32.totalorder %s57, %s58
    %p69 = scmp.eq.s32.totalorder %s23, 0
    %p70 = por %p68, %p69
    %p71 = scmp.ne.s32.totalorder %s57, %s58
    %p72 = scmp.eq.s32.totalorder %s24, 1
    %p73 = por %p71, %p72
    %p75 = scmp.ne.s32.totalorder %s58, %s74
    %p76 = scmp.eq.s32.totalorder %s24, 0
    %p77 = por %p75, %p76
    %s78 = ssub.s32 %s18, %s25
    %p79 = scmp.eq.s32.totalorder %s78, 0
    %s81 = sadd.s32 %s80, 1
    %s82 = scalar_select %p79, %s80, %s81
    %p85 = pneg %p79
    %p86 = scmp.eq.s32.totalorder %s18, 1
    %p87 = por %p85, %p86
    %p88 = scmp.ne.s32.totalorder %s80, %s83
    %p89 = scmp.eq.s32.totalorder %s18, 0
    %p90 = por %p88, %p89
    %p91 = scmp.ne.s32.totalorder %s80, %s83
    %p92 = scmp.eq.s32.totalorder %s23, 1
    %p93 = por %p91, %p92
    %p94 = scmp.ne.s32.totalorder %s83, %s84
    %p95 = scmp.eq.s32.totalorder %s23, 0
    %p96 = por %p94, %p95
    %p97 = scmp.ne.s32.totalorder %s83, %s84
    %p98 = scmp.eq.s32.totalorder %s24, 1
    %p99 = por %p97, %p98
    %p101 = scmp.ne.s32.totalorder %s84, %s100
    %p102 = scmp.eq.s32.totalorder %s24, 0
    %p103 = por %p101, %p102
    %s104 = ssub.s32 %s18, %s25
    %p105 = scmp.eq.s32.totalorder %s104, 0
    %s107 = sadd.s32 %s106, 1
    %s108 = scalar_select %p105, %s106, %s107
    %p111 = pneg %p105
    %p112 = scmp.eq.s32.totalorder %s18, 1
    %p113 = por %p111, %p112
    %p114 = scmp.ne.s32.totalorder %s106, %s109
    %p115 = scmp.eq.s32.totalorder %s18, 0
    %p116 = por %p114, %p115
    %p117 = scmp.ne.s32.totalorder %s106, %s109
    %p118 = scmp.eq.s32.totalorder %s23, 1
    %p119 = por %p117, %p118
    %p120 = scmp.ne.s32.totalorder %s109, %s110
    %p121 = scmp.eq.s32.totalorder %s23, 0
    %p122 = por %p120, %p121
    %p123 = scmp.ne.s32.totalorder %s109, %s110
    %p124 = scmp.eq.s32.totalorder %s24, 1
    %p125 = por %p123, %p124
    %p127 = scmp.ne.s32.totalorder %s110, %s126
    %p128 = scmp.eq.s32.totalorder %s24, 0
    %p129 = por %p127, %p128
    %s131 = sadd.s32 %s130, 1
    %p134 = scmp.eq.s32.totalorder %s18, 1
    %p135 = scmp.ne.s32.totalorder %s130, %s132
    %p136 = scmp.eq.s32.totalorder %s18, 0
    %p137 = por %p135, %p136
    %p138 = scmp.ne.s32.totalorder %s130, %s132
    %p139 = scmp.eq.s32.totalorder %s23, 1
    %p140 = por %p138, %p139
    %p141 = scmp.ne.s32.totalorder %s132, %s133
    %p142 = scmp.eq.s32.totalorder %s23, 0
    %p143 = por %p141, %p142
    %p144 = scmp.ne.s32.totalorder %s132, %s133
    %p145 = scmp.eq.s32.totalorder %s24, 1
    %p146 = por %p144, %p145
    %p148 = scmp.ne.s32.totalorder %s133, %s147
    %p149 = scmp.eq.s32.totalorder %s24, 0
    %p150 = por %p148, %p149
    %s152 = sadd.s32 %s151, 1
    %p155 = scmp.eq.s32.totalorder %s18, 1
    %p156 = scmp.ne.s32.totalorder %s151, %s153
    %p157 = scmp.eq.s32.totalorder %s18, 0
    %p158 = por %p156, %p157
    %p159 = scmp.ne.s32.totalorder %s151, %s153
    %p160 = scmp.eq.s32.totalorder %s23, 1
    %p161 = por %p159, %p160
    %p162 = scmp.ne.s32.totalorder %s153, %s154
    %p163 = scmp.eq.s32.totalorder %s23, 0
    %p164 = por %p162, %p163
    %p165 = scmp.ne.s32.totalorder %s153, %s154
    %p166 = scmp.eq.s32.totalorder %s24, 1
    %p167 = por %p165, %p166
    %p169 = scmp.ne.s32.totalorder %s154, %s168
    %p170 = scmp.eq.s32.totalorder %s24, 0
    %p171 = por %p169, %p170
    %s173 = sadd.s32 %s172, 1
    %p176 = scmp.eq.s32.totalorder %s18, 1
    %p177 = scmp.ne.s32.totalorder %s172, %s174
    %p178 = scmp.eq.s32.totalorder %s18, 0
    %p179 = por %p177, %p178
    %p180 = scmp.ne.s32.totalorder %s172, %s174
    %p181 = scmp.eq.s32.totalorder %s23, 1
    %p182 = por %p180, %p181
    %p183 = scmp.ne.s32.totalorder %s174, %s175
    %p184 = scmp.eq.s32.totalorder %s23, 0
    %p185 = por %p183, %p184
    %p186 = scmp.ne.s32.totalorder %s174, %s175
    %p187 = scmp.eq.s32.totalorder %s24, 1
    %p188 = por %p186, %p187
    %p190 = scmp.ne.s32.totalorder %s175, %s189
    %p191 = scmp.eq.s32.totalorder %s24, 0
    %p192 = por %p190, %p191
    %s194 = sadd.s32 %s193, 1
    %p197 = scmp.eq.s32.totalorder %s18, 1
    %p198 = scmp.ne.s32.totalorder %s193, %s195
    %p199 = scmp.eq.s32.totalorder %s18, 0
    %p200 = por %p198, %p199
    %p201 = scmp.ne.s32.totalorder %s193, %s195
    %p202 = scmp.eq.s32.totalorder %s23, 1
    %p203 = por %p201, %p202
    %p204 = scmp.ne.s32.totalorder %s195, %s196
    %p205 = scmp.eq.s32.totalorder %s23, 0
    %p206 = por %p204, %p205
    %p207 = scmp.ne.s32.totalorder %s195, %s196
    %p208 = scmp.eq.s32.totalorder %s24, 1
    %p209 = por %p207, %p208
    %p211 = scmp.ne.s32.totalorder %s196, %s210
    %p212 = scmp.eq.s32.totalorder %s24, 0
    %p213 = por %p211, %p212
    %s215 = sadd.s32 %s214, 1
    %p218 = scmp.eq.s32.totalorder %s18, 1
    %p219 = scmp.ne.s32.totalorder %s214, %s216
    %p220 = scmp.eq.s32.totalorder %s18, 0
    %p221 = por %p219, %p220
    %p222 = scmp.ne.s32.totalorder %s214, %s216
    %p223 = scmp.eq.s32.totalorder %s23, 1
    %p224 = por %p222, %p223
    %p225 = scmp.ne.s32.totalorder %s216, %s217
    %p226 = scmp.eq.s32.totalorder %s23, 0
    %p227 = por %p225, %p226
    %p228 = scmp.ne.s32.totalorder %s216, %s217
    %p229 = scmp.eq.s32.totalorder %s24, 1
    %p230 = por %p228, %p229
    %p232 = scmp.ne.s32.totalorder %s217, %s231
    %p233 = scmp.eq.s32.totalorder %s24, 0
    %p234 = por %p232, %p233
    %s236 = sadd.s32 %s235, 1
    %p239 = scmp.eq.s32.totalorder %s18, 1
    %p240 = scmp.ne.s32.totalorder %s235, %s237
    %p241 = scmp.eq.s32.totalorder %s18, 0
    %p242 = por %p240, %p241
    %p243 = scmp.ne.s32.totalorder %s235, %s237
    %p244 = scmp.eq.s32.totalorder %s23, 1
    %p245 = por %p243, %p244
    %p246 = scmp.ne.s32.totalorder %s237, %s238
    %p247 = scmp.eq.s32.totalorder %s23, 0
    %p248 = por %p246, %p247
    %p249 = scmp.ne.s32.totalorder %s237, %s238
    %p250 = scmp.eq.s32.totalorder %s24, 1
    %p251 = por %p249, %p250
    %p253 = scmp.ne.s32.totalorder %s238, %s252
    %p254 = scmp.eq.s32.totalorder %s24, 0
    %p255 = por %p253, %p254
    %s256 = ssub.s32 %s18, %s25
    %p257 = scmp.eq.s32.totalorder %s256, 0
    %s259 = sadd.s32 %s258, 1
    %s260 = scalar_select %p257, %s258, %s259
    %p263 = pneg %p257
    %p264 = scmp.eq.s32.totalorder %s18, 1
    %p265 = por %p263, %p264
    %p266 = scmp.ne.s32.totalorder %s258, %s261
    %p267 = scmp.eq.s32.totalorder %s18, 0
    %p268 = por %p266, %p267
    %p269 = scmp.ne.s32.totalorder %s258, %s261
    %p270 = scmp.eq.s32.totalorder %s23, 1
    %p271 = por %p269, %p270
    %p272 = scmp.ne.s32.totalorder %s261, %s262
    %p273 = scmp.eq.s32.totalorder %s23, 0
    %p274 = por %p272, %p273
    %p275 = scmp.ne.s32.totalorder %s261, %s262
    %p276 = scmp.eq.s32.totalorder %s24, 1
    %p277 = por %p275, %p276
    %p279 = scmp.ne.s32.totalorder %s262, %s278
    %p280 = scmp.eq.s32.totalorder %s24, 0
    %p281 = por %p279, %p280
    %s282 = ssub.s32 %s18, %s25
    %p283 = scmp.eq.s32.totalorder %s282, 0
    %s285 = sadd.s32 %s284, 1
    %s286 = scalar_select %p283, %s284, %s285
    %p289 = pneg %p283
    %p290 = scmp.eq.s32.totalorder %s18, 1
    %p291 = por %p289, %p290
    %p292 = scmp.ne.s32.totalorder %s284, %s287
    %p293 = scmp.eq.s32.totalorder %s18, 0
    %p294 = por %p292, %p293
    %p295 = scmp.ne.s32.totalorder %s284, %s287
    %p296 = scmp.eq.s32.totalorder %s23, 1
    %p297 = por %p295, %p296
    %p298 = scmp.ne.s32.totalorder %s287, %s288
    %p299 = scmp.eq.s32.totalorder %s23, 0
    %p300 = por %p298, %p299
    %p301 = scmp.ne.s32.totalorder %s287, %s288
    %p302 = scmp.eq.s32.totalorder %s24, 1
    %p303 = por %p301, %p302
    %p305 = scmp.ne.s32.totalorder %s288, %s304
    %p306 = scmp.eq.s32.totalorder %s24, 0
    %p307 = por %p305, %p306
    %p308 = scmp.le.s32.totalorder 1, %s18
    %p309 = scmp.lt.s32.totalorder %s18, 3
    %p310 = pnand %p308, %p309
    %p311 = pneg %p310
    // Predicated region
    $region9: #{ffc_bn_act_forward.4} parent=5 // pred_check
      _
    $region10: #{ffc_bn_act_forward.4} parent=5 // pred_check_branch
      %313 = sbr.rel (%p310) target = $region12
    $region11: #{ffc_bn_act_forward.4} parent=5 // pred_region
      %s314 = ssub.s32 %s18, 1
      // Predicated region
      $region13: #{ffc_bn_act_forward.4} parent=11 // pred_check
        %p315 = pneg %p143
      $region14: #{ffc_bn_act_forward.4} parent=11 // pred_check_branch
        %317 = sbr.rel (%p315) target = $region16
      $region15: #{ffc_bn_act_forward.4} parent=11 // pred_region
        _
      $region16: #{ffc_bn_act_forward.4} parent=11 // pred_fallthru
        _
      // Predicated region
      $region17: #{ffc_bn_act_forward.4} parent=11 // pred_check
        %p318 = pneg %p164
      $region18: #{ffc_bn_act_forward.4} parent=11 // pred_check_branch
        %320 = sbr.rel (%p318) target = $region20
      $region19: #{ffc_bn_act_forward.4} parent=11 // pred_region
        _
      $region20: #{ffc_bn_act_forward.4} parent=11 // pred_fallthru
        _
      // Predicated region
      $region21: #{ffc_bn_act_forward.4} parent=11 // pred_check
        %p321 = pneg %p185
      $region22: #{ffc_bn_act_forward.4} parent=11 // pred_check_branch
        %323 = sbr.rel (%p321) target = $region24
      $region23: #{ffc_bn_act_forward.4} parent=11 // pred_region
        _
      $region24: #{ffc_bn_act_forward.4} parent=11 // pred_fallthru
        _
      // Predicated region
      $region25: #{ffc_bn_act_forward.4} parent=11 // pred_check
        %p324 = pneg %p206
      $region26: #{ffc_bn_act_forward.4} parent=11 // pred_check_branch
        %326 = sbr.rel (%p324) target = $region28
      $region27: #{ffc_bn_act_forward.4} parent=11 // pred_region
        _
      $region28: #{ffc_bn_act_forward.4} parent=11 // pred_fallthru
        _
      // Predicated region
      $region29: #{ffc_bn_act_forward.4} parent=11 // pred_check
        %p327 = pneg %p227
      $region30: #{ffc_bn_act_forward.4} parent=11 // pred_check_branch
        %329 = sbr.rel (%p327) target = $region32
      $region31: #{ffc_bn_act_forward.4} parent=11 // pred_region
        _
      $region32: #{ffc_bn_act_forward.4} parent=11 // pred_fallthru
        _
      // Predicated region
      $region33: #{ffc_bn_act_forward.4} parent=11 // pred_check
        %p330 = pneg %p248
      $region34: #{ffc_bn_act_forward.4} parent=11 // pred_check_branch
        %332 = sbr.rel (%p330) target = $region36
      $region35: #{ffc_bn_act_forward.4} parent=11 // pred_region
        _
      $region36: #{ffc_bn_act_forward.4} parent=11 // pred_fallthru
        _
    $region12: #{ffc_bn_act_forward.4} parent=5 // pred_fallthru
      _
    %p333 = scmp.lt.s32.totalorder %s18, 2
    // Predicated region
    $region37: #{ffc_bn_act_forward.4} parent=5 // pred_check
      %p334 = pneg %p333
    $region38: #{ffc_bn_act_forward.4} parent=5 // pred_check_branch
      %336 = sbr.rel (%p334) target = $region40
    $region39: #{ffc_bn_act_forward.4} parent=5 // pred_region
      // Predicated region
      $region41: #{ffc_bn_act_forward.4} parent=39 // pred_check
        %p337 = pneg %p38
      $region42: #{ffc_bn_act_forward.4} parent=39 // pred_check_branch
        %339 = sbr.rel (%p337) target = $region44
      $region43: #{ffc_bn_act_forward.4} parent=39 // pred_region
        %p340 = scmp.lt.s32.totalorder %s18, 1
        %s341 = scalar_select %p340, %s18, 1
        %s342 = smul.addr %s341, 2
        %s343 = smul.addr %s342, 4
        %s344 = scalar_lea.vmem %s0, %s343
      $region44: #{ffc_bn_act_forward.4} parent=39 // pred_fallthru
        _
      // Predicated region
      $region45: #{ffc_bn_act_forward.4} parent=39 // pred_check
        %p345 = pneg %p64
      $region46: #{ffc_bn_act_forward.4} parent=39 // pred_check_branch
        %347 = sbr.rel (%p345) target = $region48
      $region47: #{ffc_bn_act_forward.4} parent=39 // pred_region
        %p348 = scmp.lt.s32.totalorder %s18, 1
        %s349 = scalar_select %p348, %s18, 1
        %s350 = smul.addr %s349, 2
        %s351 = smul.addr %s350, 4
        %s352 = scalar_lea.vmem %s1, %s351
      $region48: #{ffc_bn_act_forward.4} parent=39 // pred_fallthru
        _
      // Predicated region
      $region49: #{ffc_bn_act_forward.4} parent=39 // pred_check
        %p353 = pneg %p90
      $region50: #{ffc_bn_act_forward.4} parent=39 // pred_check_branch
        %355 = sbr.rel (%p353) target = $region52
      $region51: #{ffc_bn_act_forward.4} parent=39 // pred_region
        %p356 = scmp.lt.s32.totalorder %s18, 1
        %s357 = scalar_select %p356, %s18, 1
        %s358 = smul.addr %s357, 4
        %s359 = scalar_lea.vmem %s2, %s358
      $region52: #{ffc_bn_act_forward.4} parent=39 // pred_fallthru
        _
      // Predicated region
      $region53: #{ffc_bn_act_forward.4} parent=39 // pred_check
        %p360 = pneg %p116
      $region54: #{ffc_bn_act_forward.4} parent=39 // pred_check_branch
        %362 = sbr.rel (%p360) target = $region56
      $region55: #{ffc_bn_act_forward.4} parent=39 // pred_region
        %p363 = scmp.lt.s32.totalorder %s18, 1
        %s364 = scalar_select %p363, %s18, 1
        %s365 = smul.addr %s364, 4
        %s366 = scalar_lea.vmem %s3, %s365
      $region56: #{ffc_bn_act_forward.4} parent=39 // pred_fallthru
        _
    $region40: #{ffc_bn_act_forward.4} parent=5 // pred_fallthru
      _
    %p367 = scmp.le.s32.totalorder 1, %s18
    %p368 = scmp.lt.s32.totalorder %s18, 3
    %p369 = pnand %p367, %p368
    %p370 = pneg %p369
    // Predicated region
    $region57: #{ffc_bn_act_forward.4} parent=5 // pred_check
      _
    $region58: #{ffc_bn_act_forward.4} parent=5 // pred_check_branch
      %372 = sbr.rel (%p369) target = $region60
    $region59: #{ffc_bn_act_forward.4} parent=5 // pred_region
      %s373 = ssub.s32 %s18, 1
      %p374 = scmp.lt.s32.totalorder %s23, 1
      %s375 = scalar_select %p374, %s23, 1
      %s376 = smul.addr %s375, 2
      %s377 = smul.addr %s376, 4
      %s378 = scalar_lea.vmem %s0, %s377
      %p379 = pneg %p44
      %p380 = pneg %p41
      %p381 = scmp.lt.s32.totalorder %s23, 1
      %s382 = scalar_select %p381, %s23, 1
      %s383 = smul.addr %s382, 2
      %s384 = smul.addr %s383, 4
      %s385 = scalar_lea.vmem %s1, %s384
      %p386 = pneg %p70
      %p387 = pneg %p67
      %p388 = scmp.lt.s32.totalorder %s23, 1
      %s389 = scalar_select %p388, %s23, 1
      %s390 = smul.addr %s389, 4
      %s391 = scalar_lea.vmem %s2, %s390
      %p392 = pneg %p96
      %p393 = pneg %p93
      %p394 = scmp.lt.s32.totalorder %s23, 1
      %s395 = scalar_select %p394, %s23, 1
      %s396 = smul.addr %s395, 4
      %s397 = scalar_lea.vmem %s3, %s396
      %p398 = pneg %p122
      %p399 = pneg %p119
      %p400 = pneg %p143
      %p401 = pneg %p140
      %p402 = pneg %p164
      %p403 = pneg %p161
      %p404 = pneg %p185
      %p405 = pneg %p182
      %p406 = pneg %p206
      %p407 = pneg %p203
      %p408 = pneg %p227
      %p409 = pneg %p224
      %p410 = pneg %p248
      %p411 = pneg %p245
      %p412 = pneg %p274
      %p413 = pneg %p271
      %p414 = scmp.lt.s32.totalorder %s23, 1
      %s415 = scalar_select %p414, %s23, 1
      %s416 = smul.addr %s415, 2
      %s417 = smul.addr %s416, 8
      %s418 = scalar_lea.vmem %s10, %s417
      %p419 = pneg %p300
      %p420 = pneg %p297
      %p421 = scmp.lt.s32.totalorder %s23, 1
      %s422 = scalar_select %p421, %s23, 1
      %s423 = smul.addr %s422, 8
      %s424 = scalar_lea.vmem %s11, %s423
      %p425 = scmp.lt.s32.totalorder %s23, 1
      %s426 = scalar_select %p425, %s23, 1
      %s427 = smul.addr %s426, 2
      %s428 = smul.addr %s427, 4
      %s429 = scalar_lea.vmem %s0, %s428
      %p430 = scmp.lt.s32.totalorder %s23, 1
      %s431 = scalar_select %p430, %s23, 1
      %s432 = smul.addr %s431, 2
      %s433 = smul.addr %s432, 4
      %s434 = scalar_lea.vmem %s1, %s433
      %p435 = scmp.lt.s32.totalorder %s23, 1
      %s436 = scalar_select %p435, %s23, 1
      %s437 = smul.addr %s436, 4
      %s438 = scalar_lea.vmem %s2, %s437
      %p439 = scmp.lt.s32.totalorder %s23, 1
      %s440 = scalar_select %p439, %s23, 1
      %s441 = smul.addr %s440, 4
      %s442 = scalar_lea.vmem %s3, %s441
      %p443 = scmp.lt.s32.totalorder %s23, 1
      %s444 = scalar_select %p443, %s23, 1
      %s445 = smul.addr %s444, 2
      %s446 = smul.addr %s445, 8
      %s447 = scalar_lea.vmem %s10, %s446
      %p448 = scmp.lt.s32.totalorder %s23, 1
      %s449 = scalar_select %p448, %s23, 1
      %s450 = smul.addr %s449, 8
      %s451 = scalar_lea.vmem %s11, %s450
      %v452 = vld [vmem:[%s4] sm:$0xff]
      %v453 = vld [vmem:[%s429] sm:$0xff]
      %v454 = vld [vmem:[%s5] sm:$0xff]
      %v455 = vld [vmem:[%s434] sm:$0xff]
      %457 = vst [vmem:[#allocation1] ss:$2 sm:$0xff] %v455
      %v458 = vld.sshfl [vmem:[#allocation1] sm:$0xff pattern:$0x75316420]
      %v459 = vld.sshfl [vmem:[#allocation1 + $0x8] sm:$0xff pattern:$0x75316420]
      %vm460 = vcmask 31744
      %v462 = vsel %vm460, %v454, 0
      %vm464 = vcmask 1043456
      %v465 = vsel %vm464, %v458, 0
      %v467 = vsel %vm464, %v459, 0
      %469 = vmatpush.msra.mxu0 0.0
      %470 = vmatpush.msra.mxu0 0.0
      %471 = vmatpush.msra.mxu0 0.0
      %472 = vmatpush.msra.mxu0 0.0
      %473 = vmatpush.msra.mxu0 0.0
      %474 = vmatpush.msra.mxu0 0.0
      %475 = vmatpush.msra.mxu0 0.0
      %476 = vmatpush.msra.mxu0 0.0
      %477 = vmatpush.msra.mxu0 0.0
      %478 = vmatpush.msra.mxu0 0.0
      %479 = vmatpush.msra.mxu0 0.0
      %480 = vmatpush.msra.mxu0 0.0
      %481 = vmatpush.msra.mxu0 0.0
      %482 = vmatpush.msra.mxu0 0.0
      %483 = vmatpush.msra.mxu0 0.0
      %484 = vmatpush.msra.mxu0 %v465
      %485 = vmatmul.f32.gmra.mxu0 %v462
      %v486 = vpop.f32.mrf.mxu0
      %v487 = vadd.f32 0.0, %v486
      %488 = vdwg.mxu0
      %489 = vmatpush.msra.mxu0 0.0
      %490 = vmatpush.msra.mxu0 0.0
      %491 = vmatpush.msra.mxu0 0.0
      %492 = vmatpush.msra.mxu0 0.0
      %493 = vmatpush.msra.mxu0 0.0
      %494 = vmatpush.msra.mxu0 0.0
      %495 = vmatpush.msra.mxu0 0.0
      %496 = vmatpush.msra.mxu0 0.0
      %497 = vmatpush.msra.mxu0 0.0
      %498 = vmatpush.msra.mxu0 0.0
      %499 = vmatpush.msra.mxu0 0.0
      %500 = vmatpush.msra.mxu0 0.0
      %501 = vmatpush.msra.mxu0 0.0
      %502 = vmatpush.msra.mxu0 0.0
      %503 = vmatpush.msra.mxu0 0.0
      %504 = vmatpush.msra.mxu0 %v467
      %505 = vmatmul.f32.gmra.mxu0 %v462
      %v506 = vpop.f32.mrf.mxu0
      %v507 = vadd.f32 0.0, %v506
      %508 = vdwg.mxu0
      %510 = vst [vmem:[#allocation1] ss:$2 sm:$0xff] %v453
      %v511 = vld.sshfl [vmem:[#allocation1] sm:$0xff pattern:$0x75316420]
      %v512 = vld.sshfl [vmem:[#allocation1 + $0x8] sm:$0xff pattern:$0x75316420]
      %v514 = vsel %vm460, %v452, 0
      %v516 = vsel %vm464, %v511, 0
      %v518 = vsel %vm464, %v512, 0
      %520 = vmatpush.msra.mxu0 0.0
      %521 = vmatpush.msra.mxu0 0.0
      %522 = vmatpush.msra.mxu0 0.0
      %523 = vmatpush.msra.mxu0 0.0
      %524 = vmatpush.msra.mxu0 0.0
      %525 = vmatpush.msra.mxu0 0.0
      %526 = vmatpush.msra.mxu0 0.0
      %527 = vmatpush.msra.mxu0 0.0
      %528 = vmatpush.msra.mxu0 0.0
      %529 = vmatpush.msra.mxu0 0.0
      %530 = vmatpush.msra.mxu0 0.0
      %531 = vmatpush.msra.mxu0 0.0
      %532 = vmatpush.msra.mxu0 0.0
      %533 = vmatpush.msra.mxu0 0.0
      %534 = vmatpush.msra.mxu0 0.0
      %535 = vmatpush.msra.mxu0 %v516
      %536 = vmatmul.f32.gmra.mxu0 %v514
      %v537 = vpop.f32.mrf.mxu0
      %v538 = vadd.f32 %v487, %v537
      %539 = vdwg.mxu0
      %540 = vmatpush.msra.mxu0 0.0
      %541 = vmatpush.msra.mxu0 0.0
      %542 = vmatpush.msra.mxu0 0.0
      %543 = vmatpush.msra.mxu0 0.0
      %544 = vmatpush.msra.mxu0 0.0
      %545 = vmatpush.msra.mxu0 0.0
      %546 = vmatpush.msra.mxu0 0.0
      %547 = vmatpush.msra.mxu0 0.0
      %548 = vmatpush.msra.mxu0 0.0
      %549 = vmatpush.msra.mxu0 0.0
      %550 = vmatpush.msra.mxu0 0.0
      %551 = vmatpush.msra.mxu0 0.0
      %552 = vmatpush.msra.mxu0 0.0
      %553 = vmatpush.msra.mxu0 0.0
      %554 = vmatpush.msra.mxu0 0.0
      %555 = vmatpush.msra.mxu0 %v518
      %556 = vmatmul.f32.gmra.mxu0 %v514
      %v557 = vpop.f32.mrf.mxu0
      %v558 = vadd.f32 %v507, %v557
      %559 = vdwg.mxu0
      %v560 = vld [vmem:[%s8] sm:$0xff]
      %562 = vset.pattern.permute.xlu0 0
      %563 = vperm.xlu0 %562, %v560
      %v564 = vpop.permute.xlu0 %563
      %v566 = vadd.f32 %v538, %v564
      %v567 = vadd.f32 %v558, %v564
      %v568 = vmax.f32 %v566, 0.0
      %v569 = vmax.f32 %v567, 0.0
      %570 = vst [vmem:[%s447] sm:$0xff] %v568
      %vm571 = vcmask 261120
      %572 = vst.msk [vmem:[%s447 + $0x8] sm:$0xff] %vm571, %v569
      %v573 = vld [vmem:[%s6] sm:$0xff]
      %v574 = vld [vmem:[%s438] sm:$0xf]
      %v575 = vld [vmem:[%s7] sm:$0xff]
      %v576 = vld [vmem:[%s442] sm:$0xf]
      %v578 = vsel %vm460, %v575, 0
      %v581 = vsel %vm464, %v576, 0
      %583 = vmatpush.msra.mxu0 0.0
      %584 = vmatpush.msra.mxu0 0.0
      %585 = vmatpush.msra.mxu0 0.0
      %586 = vmatpush.msra.mxu0 0.0
      %587 = vmatpush.msra.mxu0 0.0
      %588 = vmatpush.msra.mxu0 0.0
      %589 = vmatpush.msra.mxu0 0.0
      %590 = vmatpush.msra.mxu0 0.0
      %591 = vmatpush.msra.mxu0 0.0
      %592 = vmatpush.msra.mxu0 0.0
      %593 = vmatpush.msra.mxu0 0.0
      %594 = vmatpush.msra.mxu0 0.0
      %595 = vmatpush.msra.mxu0 0.0
      %596 = vmatpush.msra.mxu0 0.0
      %597 = vmatpush.msra.mxu0 0.0
      %598 = vmatpush.msra.mxu0 %v581
      %599 = vmatmul.f32.gmra.mxu0 %v578
      %v600 = vpop.f32.mrf.mxu0
      %v601 = vadd.f32 0.0, %v600
      %602 = vdwg.mxu0
      %v604 = vsel %vm460, %v573, 0
      %v607 = vsel %vm464, %v574, 0
      %609 = vmatpush.msra.mxu0 0.0
      %610 = vmatpush.msra.mxu0 0.0
      %611 = vmatpush.msra.mxu0 0.0
      %612 = vmatpush.msra.mxu0 0.0
      %613 = vmatpush.msra.mxu0 0.0
      %614 = vmatpush.msra.mxu0 0.0
      %615 = vmatpush.msra.mxu0 0.0
      %616 = vmatpush.msra.mxu0 0.0
      %617 = vmatpush.msra.mxu0 0.0
      %618 = vmatpush.msra.mxu0 0.0
      %619 = vmatpush.msra.mxu0 0.0
      %620 = vmatpush.msra.mxu0 0.0
      %621 = vmatpush.msra.mxu0 0.0
      %622 = vmatpush.msra.mxu0 0.0
      %623 = vmatpush.msra.mxu0 0.0
      %624 = vmatpush.msra.mxu0 %v607
      %625 = vmatmul.f32.gmra.mxu0 %v604
      %v626 = vpop.f32.mrf.mxu0
      %v627 = vadd.f32 %v601, %v626
      %628 = vdwg.mxu0
      %v629 = vld [vmem:[%s9] sm:$0xff]
      %631 = vset.pattern.permute.xlu0 0
      %632 = vperm.xlu0 %631, %v629
      %v633 = vpop.permute.xlu0 %632
      %v635 = vadd.f32 %v627, %v633
      %v636 = vmax.f32 %v635, 0.0
      %vm637 = vcmask 392192
      %638 = vst.msk [vmem:[%s451] sm:$0xff] %vm637, %v636
      %p639 = scmp.lt.s32.totalorder %s23, 1
      %s640 = scalar_select %p639, %s23, 1
      %s641 = smul.addr %s640, 2
      %s642 = smul.addr %s641, 8
      %s643 = scalar_lea.vmem %s10, %s642
      %p644 = scmp.lt.s32.totalorder %s23, 1
      %s645 = scalar_select %p644, %s23, 1
      %s646 = smul.addr %s645, 8
      %s647 = scalar_lea.vmem %s11, %s646
      // Predicated region
      $region61: #{ffc_bn_act_forward.4} parent=59 // pred_check
        %p648 = pneg %p271
      $region62: #{ffc_bn_act_forward.4} parent=59 // pred_check_branch
        %650 = sbr.rel (%p648) target = $region64
      $region63: #{ffc_bn_act_forward.4} parent=59 // pred_region
        _
      $region64: #{ffc_bn_act_forward.4} parent=59 // pred_fallthru
        _
      // Predicated region
      $region65: #{ffc_bn_act_forward.4} parent=59 // pred_check
        %p651 = pneg %p297
      $region66: #{ffc_bn_act_forward.4} parent=59 // pred_check_branch
        %653 = sbr.rel (%p651) target = $region68
      $region67: #{ffc_bn_act_forward.4} parent=59 // pred_region
        _
      $region68: #{ffc_bn_act_forward.4} parent=59 // pred_fallthru
        _
    $region60: #{ffc_bn_act_forward.4} parent=5 // pred_fallthru
      _
    %p654 = scmp.le.s32.totalorder 2, %s18
    // Predicated region
    $region69: #{ffc_bn_act_forward.4} parent=5 // pred_check
      %p655 = pneg %p654
    $region70: #{ffc_bn_act_forward.4} parent=5 // pred_check_branch
      %657 = sbr.rel (%p655) target = $region72
    $region71: #{ffc_bn_act_forward.4} parent=5 // pred_region
      %s658 = ssub.s32 %s18, 2
      // Predicated region
      $region73: #{ffc_bn_act_forward.4} parent=71 // pred_check
        %p659 = pneg %p277
      $region74: #{ffc_bn_act_forward.4} parent=71 // pred_check_branch
        %661 = sbr.rel (%p659) target = $region76
      $region75: #{ffc_bn_act_forward.4} parent=71 // pred_region
        %p662 = scmp.lt.s32.totalorder %s24, 1
        %s663 = scalar_select %p662, %s24, 1
        %s664 = smul.addr %s663, 2
        %s665 = smul.addr %s664, 8
        %s666 = scalar_lea.vmem %s10, %s665
      $region76: #{ffc_bn_act_forward.4} parent=71 // pred_fallthru
        _
      // Predicated region
      $region77: #{ffc_bn_act_forward.4} parent=71 // pred_check
        %p667 = pneg %p303
      $region78: #{ffc_bn_act_forward.4} parent=71 // pred_check_branch
        %669 = sbr.rel (%p667) target = $region80
      $region79: #{ffc_bn_act_forward.4} parent=71 // pred_region
        %p670 = scmp.lt.s32.totalorder %s24, 1
        %s671 = scalar_select %p670, %s24, 1
        %s672 = smul.addr %s671, 8
        %s673 = scalar_lea.vmem %s11, %s672
      $region80: #{ffc_bn_act_forward.4} parent=71 // pred_fallthru
        _
    $region72: #{ffc_bn_act_forward.4} parent=5 // pred_fallthru
      _
  $region6: #{ffc_bn_act_forward.4} parent=0 // loop_footer
    %s22 = sadd.s32 1, %s18
  $region7: #{ffc_bn_act_forward.4} parent=0 // loop_footer_branch
    %17 = sbr.rel target = $region3
  $region8: #{ffc_bn_act_forward.4} parent=0 // loop_exit
    _

// kernel: tile.9
$region0: #{tile.9}
  %s0 = inlined_call_operand.vmem [shape: f32[2,4,4,2,4,2,4], index: 0, kind: input, shape index: {}]
  %s1 = inlined_call_operand.vmem [shape: f32[2,4,256], index: 1, kind: output, shape index: {}]
  $region1: #{tile.9} parent=0
    #allocation0 [shape = 'u8[16384]{0}', space=vmem, size = 0x4000, scoped, tag = 'scoped mem for output reshape']
    #allocation1 [shape = 'u8[1048576]{0}', space=vmem, size = 0x100000, scoped, tag = 'scoped mem for input reshape']
    %s3 = ssub.s32 4, 1
    %s4 = scalar_lea.vmem %s0, 510
    %v5 = vld [vmem:[%s4] sm:%s3]
    %s6 = scalar_lea.vmem [#allocation1], 2040
    %7 = vst [vmem:[%s6] sm:%s3] %v5
    %s8 = scalar_lea.vmem %s0, 508
    %v9 = vld [vmem:[%s8] sm:%s3]
    %s10 = scalar_lea.vmem [#allocation1], 2032
    %11 = vst [vmem:[%s10] sm:%s3] %v9
    %s12 = scalar_lea.vmem %s0, 506
    %v13 = vld [vmem:[%s12] sm:%s3]
    %s14 = scalar_lea.vmem [#allocation1], 2024
    %15 = vst [vmem:[%s14] sm:%s3] %v13
    %s16 = scalar_lea.vmem %s0, 504
    %v17 = vld [vmem:[%s16] sm:%s3]
    %s18 = scalar_lea.vmem [#allocation1], 2016
    %19 = vst [vmem:[%s18] sm:%s3] %v17
    %s20 = scalar_lea.vmem %s0, 502
    %v21 = vld [vmem:[%s20] sm:%s3]
    %s22 = scalar_lea.vmem [#allocation1], 2008
    %23 = vst [vmem:[%s22] sm:%s3] %v21
    %s24 = scalar_lea.vmem %s0, 500
    %v25 = vld [vmem:[%s24] sm:%s3]
    %s26 = scalar_lea.vmem [#allocation1], 2000
    %27 = vst [vmem:[%s26] sm:%s3] %v25
    %s28 = scalar_lea.vmem %s0, 498
    %v29 = vld [vmem:[%s28] sm:%s3]
    %s30 = scalar_lea.vmem [#allocation1], 1992
    %31 = vst [vmem:[%s30] sm:%s3] %v29
    %s32 = scalar_lea.vmem %s0, 496
    %v33 = vld [vmem:[%s32] sm:%s3]
    %s34 = scalar_lea.vmem [#allocation1], 1984
    %35 = vst [vmem:[%s34] sm:%s3] %v33
    %s36 = scalar_lea.vmem %s0, 494
    %v37 = vld [vmem:[%s36] sm:%s3]
    %s38 = scalar_lea.vmem [#allocation1], 1976
    %39 = vst [vmem:[%s38] sm:%s3] %v37
    %s40 = scalar_lea.vmem %s0, 492
    %v41 = vld [vmem:[%s40] sm:%s3]
    %s42 = scalar_lea.vmem [#allocation1], 1968
    %43 = vst [vmem:[%s42] sm:%s3] %v41
    %s44 = scalar_lea.vmem %s0, 490
    %v45 = vld [vmem:[%s44] sm:%s3]
    %s46 = scalar_lea.vmem [#allocation1], 1960
    %47 = vst [vmem:[%s46] sm:%s3] %v45
    %s48 = scalar_lea.vmem %s0, 488
    %v49 = vld [vmem:[%s48] sm:%s3]
    %s50 = scalar_lea.vmem [#allocation1], 1952
    %51 = vst [vmem:[%s50] sm:%s3] %v49
    %s52 = scalar_lea.vmem %s0, 486
    %v53 = vld [vmem:[%s52] sm:%s3]
    %s54 = scalar_lea.vmem [#allocation1], 1944
    %55 = vst [vmem:[%s54] sm:%s3] %v53
    %s56 = scalar_lea.vmem %s0, 484
    %v57 = vld [vmem:[%s56] sm:%s3]
    %s58 = scalar_lea.vmem [#allocation1], 1936
    %59 = vst [vmem:[%s58] sm:%s3] %v57
    %s60 = scalar_lea.vmem %s0, 482
    %v61 = vld [vmem:[%s60] sm:%s3]
    %s62 = scalar_lea.vmem [#allocation1], 1928
    %63 = vst [vmem:[%s62] sm:%s3] %v61
    %s64 = scalar_lea.vmem %s0, 480
    %v65 = vld [vmem:[%s64] sm:%s3]
    %s66 = scalar_lea.vmem [#allocation1], 1920
    %67 = vst [vmem:[%s66] sm:%s3] %v65
    %s68 = scalar_lea.vmem %s0, 478
    %v69 = vld [vmem:[%s68] sm:%s3]
    %s70 = scalar_lea.vmem [#allocation1], 1912
    %71 = vst [vmem:[%s70] sm:%s3] %v69
    %s72 = scalar_lea.vmem %s0, 476
    %v73 = vld [vmem:[%s72] sm:%s3]
    %s74 = scalar_lea.vmem [#allocation1], 1904
    %75 = vst [vmem:[%s74] sm:%s3] %v73
    %s76 = scalar_lea.vmem %s0, 474
    %v77 = vld [vmem:[%s76] sm:%s3]
    %s78 = scalar_lea.vmem [#allocation1], 1896
    %79 = vst [vmem:[%s78] sm:%s3] %v77
    %s80 = scalar_lea.vmem %s0, 472
    %v81 = vld [vmem:[%s80] sm:%s3]
    %s82 = scalar_lea.vmem [#allocation1], 1888
    %83 = vst [vmem:[%s82] sm:%s3] %v81
    %s84 = scalar_lea.vmem %s0, 470
    %v85 = vld [vmem:[%s84] sm:%s3]
    %s86 = scalar_lea.vmem [#allocation1], 1880
    %87 = vst [vmem:[%s86] sm:%s3] %v85
    %s88 = scalar_lea.vmem %s0, 468
    %v89 = vld [vmem:[%s88] sm:%s3]
    %s90 = scalar_lea.vmem [#allocation1], 1872
    %91 = vst [vmem:[%s90] sm:%s3] %v89
    %s92 = scalar_lea.vmem %s0, 466
    %v93 = vld [vmem:[%s92] sm:%s3]
    %s94 = scalar_lea.vmem [#allocation1], 1864
    %95 = vst [vmem:[%s94] sm:%s3] %v93
    %s96 = scalar_lea.vmem %s0, 464
    %v97 = vld [vmem:[%s96] sm:%s3]
    %s98 = scalar_lea.vmem [#allocation1], 1856
    %99 = vst [vmem:[%s98] sm:%s3] %v97
    %s100 = scalar_lea.vmem %s0, 462
    %v101 = vld [vmem:[%s100] sm:%s3]
    %s102 = scalar_lea.vmem [#allocation1], 1848
    %103 = vst [vmem:[%s102] sm:%s3] %v101
    %s104 = scalar_lea.vmem %s0, 460
    %v105 = vld [vmem:[%s104] sm:%s3]
    %s106 = scalar_lea.vmem [#allocation1], 1840
    %107 = vst [vmem:[%s106] sm:%s3] %v105
    %s108 = scalar_lea.vmem %s0, 458
    %v109 = vld [vmem:[%s108] sm:%s3]
    %s110 = scalar_lea.vmem [#allocation1], 1832
    %111 = vst [vmem:[%s110] sm:%s3] %v109
    %s112 = scalar_lea.vmem %s0, 456
    %v113 = vld [vmem:[%s112] sm:%s3]
    %s114 = scalar_lea.vmem [#allocation1], 1824
    %115 = vst [vmem:[%s114] sm:%s3] %v113
    %s116 = scalar_lea.vmem %s0, 454
    %v117 = vld [vmem:[%s116] sm:%s3]
    %s118 = scalar_lea.vmem [#allocation1], 1816
    %119 = vst [vmem:[%s118] sm:%s3] %v117
    %s120 = scalar_lea.vmem %s0, 452
    %v121 = vld [vmem:[%s120] sm:%s3]
    %s122 = scalar_lea.vmem [#allocation1], 1808
    %123 = vst [vmem:[%s122] sm:%s3] %v121
    %s124 = scalar_lea.vmem %s0, 450
    %v125 = vld [vmem:[%s124] sm:%s3]
    %s126 = scalar_lea.vmem [#allocation1], 1800
    %127 = vst [vmem:[%s126] sm:%s3] %v125
    %s128 = scalar_lea.vmem %s0, 448
    %v129 = vld [vmem:[%s128] sm:%s3]
    %s130 = scalar_lea.vmem [#allocation1], 1792
    %131 = vst [vmem:[%s130] sm:%s3] %v129
    %s132 = scalar_lea.vmem %s0, 446
    %v133 = vld [vmem:[%s132] sm:%s3]
    %s134 = scalar_lea.vmem [#allocation1], 1784
    %135 = vst [vmem:[%s134] sm:%s3] %v133
    %s136 = scalar_lea.vmem %s0, 444
    %v137 = vld [vmem:[%s136] sm:%s3]
    %s138 = scalar_lea.vmem [#allocation1], 1776
    %139 = vst [vmem:[%s138] sm:%s3] %v137
    %s140 = scalar_lea.vmem %s0, 442
    %v141 = vld [vmem:[%s140] sm:%s3]
    %s142 = scalar_lea.vmem [#allocation1], 1768
    %143 = vst [vmem:[%s142] sm:%s3] %v141
    %s144 = scalar_lea.vmem %s0, 440
    %v145 = vld [vmem:[%s144] sm:%s3]
    %s146 = scalar_lea.vmem [#allocation1], 1760
    %147 = vst [vmem:[%s146] sm:%s3] %v145
    %s148 = scalar_lea.vmem %s0, 438
    %v149 = vld [vmem:[%s148] sm:%s3]
    %s150 = scalar_lea.vmem [#allocation1], 1752
    %151 = vst [vmem:[%s150] sm:%s3] %v149
    %s152 = scalar_lea.vmem %s0, 436
    %v153 = vld [vmem:[%s152] sm:%s3]
    %s154 = scalar_lea.vmem [#allocation1], 1744
    %155 = vst [vmem:[%s154] sm:%s3] %v153
    %s156 = scalar_lea.vmem %s0, 434
    %v157 = vld [vmem:[%s156] sm:%s3]
    %s158 = scalar_lea.vmem [#allocation1], 1736
    %159 = vst [vmem:[%s158] sm:%s3] %v157
    %s160 = scalar_lea.vmem %s0, 432
    %v161 = vld [vmem:[%s160] sm:%s3]
    %s162 = scalar_lea.vmem [#allocation1], 1728
    %163 = vst [vmem:[%s162] sm:%s3] %v161
    %s164 = scalar_lea.vmem %s0, 430
    %v165 = vld [vmem:[%s164] sm:%s3]
    %s166 = scalar_lea.vmem [#allocation1], 1720
    %167 = vst [vmem:[%s166] sm:%s3] %v165
    %s168 = scalar_lea.vmem %s0, 428
    %v169 = vld [vmem:[%s168] sm:%s3]
    %s170 = scalar_lea.vmem [#allocation1], 1712
    %171 = vst [vmem:[%s170] sm:%s3] %v169
    %s172 = scalar_lea.vmem %s0, 426
    %v173 = vld [vmem:[%s172] sm:%s3]
    %s174 = scalar_lea.vmem [#allocation1], 1704
    %175 = vst [vmem:[%s174] sm:%s3] %v173
    %s176 = scalar_lea.vmem %s0, 424
    %v177 = vld [vmem:[%s176] sm:%s3]
    %s178 = scalar_lea.vmem [#allocation1], 1696
    %179 = vst [vmem:[%s178] sm:%s3] %v177
    %s180 = scalar_lea.vmem %s0, 422
    %v181 = vld [vmem:[%s180] sm:%s3]
    %s182 = scalar_lea.vmem [#allocation1], 1688
    %183 = vst [vmem:[%s182] sm:%s3] %v181
    %s184 = scalar_lea.vmem %s0, 420
    %v185 = vld [vmem:[%s184] sm:%s3]
    %s186 = scalar_lea.vmem [#allocation1], 1680
    %187 = vst [vmem:[%s186] sm:%s3] %v185
    %s188 = scalar_lea.vmem %s0, 418
    %v189 = vld [vmem:[%s188] sm:%s3]
    %s190 = scalar_lea.vmem [#allocation1], 1672
    %191 = vst [vmem:[%s190] sm:%s3] %v189
    %s192 = scalar_lea.vmem %s0, 416
    %v193 = vld [vmem:[%s192] sm:%s3]
    %s194 = scalar_lea.vmem [#allocation1], 1664
    %195 = vst [vmem:[%s194] sm:%s3] %v193
    %s196 = scalar_lea.vmem %s0, 414
    %v197 = vld [vmem:[%s196] sm:%s3]
    %s198 = scalar_lea.vmem [#allocation1], 1656
    %199 = vst [vmem:[%s198] sm:%s3] %v197
    %s200 = scalar_lea.vmem %s0, 412
    %v201 = vld [vmem:[%s200] sm:%s3]
    %s202 = scalar_lea.vmem [#allocation1], 1648
    %203 = vst [vmem:[%s202] sm:%s3] %v201
    %s204 = scalar_lea.vmem %s0, 410
    %v205 = vld [vmem:[%s204] sm:%s3]
    %s206 = scalar_lea.vmem [#allocation1], 1640
    %207 = vst [vmem:[%s206] sm:%s3] %v205
    %s208 = scalar_lea.vmem %s0, 408
    %v209 = vld [vmem:[%s208] sm:%s3]
    %s210 = scalar_lea.vmem [#allocation1], 1632
    %211 = vst [vmem:[%s210] sm:%s3] %v209
    %s212 = scalar_lea.vmem %s0, 406
    %v213 = vld [vmem:[%s212] sm:%s3]
    %s214 = scalar_lea.vmem [#allocation1], 1624
    %215 = vst [vmem:[%s214] sm:%s3] %v213
    %s216 = scalar_lea.vmem %s0, 404
    %v217 = vld [vmem:[%s216] sm:%s3]
    %s218 = scalar_lea.vmem [#allocation1], 1616
    %219 = vst [vmem:[%s218] sm:%s3] %v217
    %s220 = scalar_lea.vmem %s0, 402
    %v221 = vld [vmem:[%s220] sm:%s3]
    %s222 = scalar_lea.vmem [#allocation1], 1608
    %223 = vst [vmem:[%s222] sm:%s3] %v221
    %s224 = scalar_lea.vmem %s0, 400
    %v225 = vld [vmem:[%s224] sm:%s3]
    %s226 = scalar_lea.vmem [#allocation1], 1600
    %227 = vst [vmem:[%s226] sm:%s3] %v225
    %s228 = scalar_lea.vmem %s0, 398
    %v229 = vld [vmem:[%s228] sm:%s3]
    %s230 = scalar_lea.vmem [#allocation1], 1592
    %231 = vst [vmem:[%s230] sm:%s3] %v229
    %s232 = scalar_lea.vmem %s0, 396
    %v233 = vld [vmem:[%s232] sm:%s3]
    %s234 = scalar_lea.vmem [#allocation1], 1584
    %235 = vst [vmem:[%s234] sm:%s3] %v233
    %s236 = scalar_lea.vmem %s0, 394
    %v237 = vld [vmem:[%s236] sm:%s3]
    %s238 = scalar_lea.vmem [#allocation1], 1576
    %239 = vst [vmem:[%s238] sm:%s3] %v237
    %s240 = scalar_lea.vmem %s0, 392
    %v241 = vld [vmem:[%s240] sm:%s3]
    %s242 = scalar_lea.vmem [#allocation1], 1568
    %243 = vst [vmem:[%s242] sm:%s3] %v241
    %s244 = scalar_lea.vmem %s0, 390
    %v245 = vld [vmem:[%s244] sm:%s3]
    %s246 = scalar_lea.vmem [#allocation1], 1560
    %247 = vst [vmem:[%s246] sm:%s3] %v245
    %s248 = scalar_lea.vmem %s0, 388
    %v249 = vld [vmem:[%s248] sm:%s3]
    %s250 = scalar_lea.vmem [#allocation1], 1552
    %251 = vst [vmem:[%s250] sm:%s3] %v249
    %s252 = scalar_lea.vmem %s0, 386
    %v253 = vld [vmem:[%s252] sm:%s3]
    %s254 = scalar_lea.vmem [#allocation1], 1544
    %255 = vst [vmem:[%s254] sm:%s3] %v253
    %s256 = scalar_lea.vmem %s0, 384
    %v257 = vld [vmem:[%s256] sm:%s3]
    %s258 = scalar_lea.vmem [#allocation1], 1536
    %259 = vst [vmem:[%s258] sm:%s3] %v257
    %s260 = scalar_lea.vmem %s0, 382
    %v261 = vld [vmem:[%s260] sm:%s3]
    %s262 = scalar_lea.vmem [#allocation1], 1528
    %263 = vst [vmem:[%s262] sm:%s3] %v261
    %s264 = scalar_lea.vmem %s0, 380
    %v265 = vld [vmem:[%s264] sm:%s3]
    %s266 = scalar_lea.vmem [#allocation1], 1520
    %267 = vst [vmem:[%s266] sm:%s3] %v265
    %s268 = scalar_lea.vmem %s0, 378
    %v269 = vld [vmem:[%s268] sm:%s3]
    %s270 = scalar_lea.vmem [#allocation1], 1512
    %271 = vst [vmem:[%s270] sm:%s3] %v269
    %s272 = scalar_lea.vmem %s0, 376
    %v273 = vld [vmem:[%s272] sm:%s3]
    %s274 = scalar_lea.vmem [#allocation1], 1504
    %275 = vst [vmem:[%s274] sm:%s3] %v273
    %s276 = scalar_lea.vmem %s0, 374
    %v277 = vld [vmem:[%s276] sm:%s3]
    %s278 = scalar_lea.vmem [#allocation1], 1496
    %279 = vst [vmem:[%s278] sm:%s3] %v277
    %s280 = scalar_lea.vmem %s0, 372
    %v281 = vld [vmem:[%s280] sm:%s3]
    %s282 = scalar_lea.vmem [#allocation1], 1488
    %283 = vst [vmem:[%s282] sm:%s3] %v281
    %s284 = scalar_lea.vmem %s0, 370
    %v285 = vld [vmem:[%s284] sm:%s3]
    %s286 = scalar_lea.vmem [#allocation1], 1480
    %287 = vst [vmem:[%s286] sm:%s3] %v285
    %s288 = scalar_lea.vmem %s0, 368
    %v289 = vld [vmem:[%s288] sm:%s3]
    %s290 = scalar_lea.vmem [#allocation1], 1472
    %291 = vst [vmem:[%s290] sm:%s3] %v289
    %s292 = scalar_lea.vmem %s0, 366
    %v293 = vld [vmem:[%s292] sm:%s3]
    %s294 = scalar_lea.vmem [#allocation1], 1464
    %295 = vst [vmem:[%s294] sm:%s3] %v293
    %s296 = scalar_lea.vmem %s0, 364
    %v297 = vld [vmem:[%s296] sm:%s3]
    %s298 = scalar_lea.vmem [#allocation1], 1456
    %299 = vst [vmem:[%s298] sm:%s3] %v297
    %s300 = scalar_lea.vmem %s0, 362
    %v301 = vld [vmem:[%s300] sm:%s3]
    %s302 = scalar_lea.vmem [#allocation1], 1448
    %303 = vst [vmem:[%s302] sm:%s3] %v301
    %s304 = scalar_lea.vmem %s0, 360
    %v305 = vld [vmem:[%s304] sm:%s3]
    %s306 = scalar_lea.vmem [#allocation1], 1440
    %307 = vst [vmem:[%s306] sm:%s3] %v305
    %s308 = scalar_lea.vmem %s0, 358
    %v309 = vld [vmem:[%s308] sm:%s3]
    %s310 = scalar_lea.vmem [#allocation1], 1432
    %311 = vst [vmem:[%s310] sm:%s3] %v309
    %s312 = scalar_lea.vmem %s0, 356
    %v313 = vld [vmem:[%s312] sm:%s3]
    %s314 = scalar_lea.vmem [#allocation1], 1424
    %315 = vst [vmem:[%s314] sm:%s3] %v313
    %s316 = scalar_lea.vmem %s0, 354
    %v317 = vld [vmem:[%s316] sm:%s3]
    %s318 = scalar_lea.vmem [#allocation1], 1416
    %319 = vst [vmem:[%s318] sm:%s3] %v317
    %s320 = scalar_lea.vmem %s0, 352
    %v321 = vld [vmem:[%s320] sm:%s3]
    %s322 = scalar_lea.vmem [#allocation1], 1408
    %323 = vst [vmem:[%s322] sm:%s3] %v321
    %s324 = scalar_lea.vmem %s0, 350
    %v325 = vld [vmem:[%s324] sm:%s3]
    %s326 = scalar_lea.vmem [#allocation1], 1400
    %327 = vst [vmem:[%s326] sm:%s3] %v325
    %s328 = scalar_lea.vmem %s0, 348
    %v329 = vld [vmem:[%s328] sm:%s3]
    %s330 = scalar_lea.vmem [#allocation1], 1392
    %331 = vst [vmem:[%s330] sm:%s3] %v329
    %s332 = scalar_lea.vmem %s0, 346
    %v333 = vld [vmem:[%s332] sm:%s3]
    %s334 = scalar_lea.vmem [#allocation1], 1384
    %335 = vst [vmem:[%s334] sm:%s3] %v333
    %s336 = scalar_lea.vmem %s0, 344
    %v337 = vld [vmem:[%s336] sm:%s3]
    %s338 = scalar_lea.vmem [#allocation1], 1376
    %339 = vst [vmem:[%s338] sm:%s3] %v337
    %s340 = scalar_lea.vmem %s0, 342
    %v341 = vld [vmem:[%s340] sm:%s3]
    %s342 = scalar_lea.vmem [#allocation1], 1368
    %343 = vst [vmem:[%s342] sm:%s3] %v341
    %s344 = scalar_lea.vmem %s0, 340
    %v345 = vld [vmem:[%s344] sm:%s3]
    %s346 = scalar_lea.vmem [#allocation1], 1360
    %347 = vst [vmem:[%s346] sm:%s3] %v345
    %s348 = scalar_lea.vmem %s0, 338
    %v349 = vld [vmem:[%s348] sm:%s3]
    %s350 = scalar_lea.vmem [#allocation1], 1352
    %351 = vst [vmem:[%s350] sm:%s3] %v349
    %s352 = scalar_lea.vmem %s0, 336
    %v353 = vld [vmem:[%s352] sm:%s3]
    %s354 = scalar_lea.vmem [#allocation1], 1344
    %355 = vst [vmem:[%s354] sm:%s3] %v353
    %s356 = scalar_lea.vmem %s0, 334
    %v357 = vld [vmem:[%s356] sm:%s3]
    %s358 = scalar_lea.vmem [#allocation1], 1336
    %359 = vst [vmem:[%s358] sm:%s3] %v357
    %s360 = scalar_lea.vmem %s0, 332
    %v361 = vld [vmem:[%s360] sm:%s3]
    %s362 = scalar_lea.vmem [#allocation1], 1328
    %363 = vst [vmem:[%s362] sm:%s3] %v361
    %s364 = scalar_lea.vmem %s0, 330
    %v365 = vld [vmem:[%s364] sm:%s3]
    %s366 = scalar_lea.vmem [#allocation1], 1320
    %367 = vst [vmem:[%s366] sm:%s3] %v365
    %s368 = scalar_lea.vmem %s0, 328
    %v369 = vld [vmem:[%s368] sm:%s3]
    %s370 = scalar_lea.vmem [#allocation1], 1312
    %371 = vst [vmem:[%s370] sm:%s3] %v369
    %s372 = scalar_lea.vmem %s0, 326
    %v373 = vld [vmem:[%s372] sm:%s3]
    %s374 = scalar_lea.vmem [#allocation1], 1304
    %375 = vst [vmem:[%s374] sm:%s3] %v373
    %s376 = scalar_lea.vmem %s0, 324
    %v377 = vld [vmem:[%s376] sm:%s3]
    %s378 = scalar_lea.vmem [#allocation1], 1296
    %379 = vst [vmem:[%s378] sm:%s3] %v377
    %s380 = scalar_lea.vmem %s0, 322
    %v381 = vld [vmem:[%s380] sm:%s3]
    %s382 = scalar_lea.vmem [#allocation1], 1288
    %383 = vst [vmem:[%s382] sm:%s3] %v381
    %s384 = scalar_lea.vmem %s0, 320
    %v385 = vld [vmem:[%s384] sm:%s3]
    %s386 = scalar_lea.vmem [#allocation1], 1280
    %387 = vst [vmem:[%s386] sm:%s3] %v385
    %s388 = scalar_lea.vmem %s0, 318
    %v389 = vld [vmem:[%s388] sm:%s3]
    %s390 = scalar_lea.vmem [#allocation1], 1272
    %391 = vst [vmem:[%s390] sm:%s3] %v389
    %s392 = scalar_lea.vmem %s0, 316
    %v393 = vld [vmem:[%s392] sm:%s3]
    %s394 = scalar_lea.vmem [#allocation1], 1264
    %395 = vst [vmem:[%s394] sm:%s3] %v393
    %s396 = scalar_lea.vmem %s0, 314
    %v397 = vld [vmem:[%s396] sm:%s3]
    %s398 = scalar_lea.vmem [#allocation1], 1256
    %399 = vst [vmem:[%s398] sm:%s3] %v397
    %s400 = scalar_lea.vmem %s0, 312
    %v401 = vld [vmem:[%s400] sm:%s3]
    %s402 = scalar_lea.vmem [#allocation1], 1248
    %403 = vst [vmem:[%s402] sm:%s3] %v401
    %s404 = scalar_lea.vmem %s0, 310
    %v405 = vld [vmem:[%s404] sm:%s3]
    %s406 = scalar_lea.vmem [#allocation1], 1240
    %407 = vst [vmem:[%s406] sm:%s3] %v405
    %s408 = scalar_lea.vmem %s0, 308
    %v409 = vld [vmem:[%s408] sm:%s3]
    %s410 = scalar_lea.vmem [#allocation1], 1232
    %411 = vst [vmem:[%s410] sm:%s3] %v409
    %s412 = scalar_lea.vmem %s0, 306
    %v413 = vld [vmem:[%s412] sm:%s3]
    %s414 = scalar_lea.vmem [#allocation1], 1224
    %415 = vst [vmem:[%s414] sm:%s3] %v413
    %s416 = scalar_lea.vmem %s0, 304
    %v417 = vld [vmem:[%s416] sm:%s3]
    %s418 = scalar_lea.vmem [#allocation1], 1216
    %419 = vst [vmem:[%s418] sm:%s3] %v417
    %s420 = scalar_lea.vmem %s0, 302
    %v421 = vld [vmem:[%s420] sm:%s3]
    %s422 = scalar_lea.vmem [#allocation1], 1208
    %423 = vst [vmem:[%s422] sm:%s3] %v421
    %s424 = scalar_lea.vmem %s0, 300
    %v425 = vld [vmem:[%s424] sm:%s3]
    %s426 = scalar_lea.vmem [#allocation1], 1200
    %427 = vst [vmem:[%s426] sm:%s3] %v425
    %s428 = scalar_lea.vmem %s0, 298
    %v429 = vld [vmem:[%s428] sm:%s3]
    %s430 = scalar_lea.vmem [#allocation1], 1192
    %431 = vst [vmem:[%s430] sm:%s3] %v429
    %s432 = scalar_lea.vmem %s0, 296
    %v433 = vld [vmem:[%s432] sm:%s3]
    %s434 = scalar_lea.vmem [#allocation1], 1184
    %435 = vst [vmem:[%s434] sm:%s3] %v433
    %s436 = scalar_lea.vmem %s0, 294
    %v437 = vld [vmem:[%s436] sm:%s3]
    %s438 = scalar_lea.vmem [#allocation1], 1176
    %439 = vst [vmem:[%s438] sm:%s3] %v437
    %s440 = scalar_lea.vmem %s0, 292
    %v441 = vld [vmem:[%s440] sm:%s3]
    %s442 = scalar_lea.vmem [#allocation1], 1168
    %443 = vst [vmem:[%s442] sm:%s3] %v441
    %s444 = scalar_lea.vmem %s0, 290
    %v445 = vld [vmem:[%s444] sm:%s3]
    %s446 = scalar_lea.vmem [#allocation1], 1160
    %447 = vst [vmem:[%s446] sm:%s3] %v445
    %s448 = scalar_lea.vmem %s0, 288
    %v449 = vld [vmem:[%s448] sm:%s3]
    %s450 = scalar_lea.vmem [#allocation1], 1152
    %451 = vst [vmem:[%s450] sm:%s3] %v449
    %s452 = scalar_lea.vmem %s0, 286
    %v453 = vld [vmem:[%s452] sm:%s3]
    %s454 = scalar_lea.vmem [#allocation1], 1144
    %455 = vst [vmem:[%s454] sm:%s3] %v453
    %s456 = scalar_lea.vmem %s0, 284
    %v457 = vld [vmem:[%s456] sm:%s3]
    %s458 = scalar_lea.vmem [#allocation1], 1136
    %459 = vst [vmem:[%s458] sm:%s3] %v457
    %s460 = scalar_lea.vmem %s0, 282
    %v461 = vld [vmem:[%s460] sm:%s3]
    %s462 = scalar_lea.vmem [#allocation1], 1128
    %463 = vst [vmem:[%s462] sm:%s3] %v461
    %s464 = scalar_lea.vmem %s0, 280
    %v465 = vld [vmem:[%s464] sm:%s3]
    %s466 = scalar_lea.vmem [#allocation1], 1120
    %467 = vst [vmem:[%s466] sm:%s3] %v465
    %s468 = scalar_lea.vmem %s0, 278
    %v469 = vld [vmem:[%s468] sm:%s3]
    %s470 = scalar_lea.vmem [#allocation1], 1112
    %471 = vst [vmem:[%s470] sm:%s3] %v469
    %s472 = scalar_lea.vmem %s0, 276
    %v473 = vld [vmem:[%s472] sm:%s3]
    %s474 = scalar_lea.vmem [#allocation1], 1104
    %475 = vst [vmem:[%s474] sm:%s3] %v473
    %s476 = scalar_lea.vmem %s0, 274
    %v477 = vld [vmem:[%s476] sm:%s3]
    %s478 = scalar_lea.vmem [#allocation1], 1096
    %479 = vst [vmem:[%s478] sm:%s3] %v477
    %s480 = scalar_lea.vmem %s0, 272
    %v481 = vld [vmem:[%s480] sm:%s3]
    %s482 = scalar_lea.vmem [#allocation1], 1088
    %483 = vst [vmem:[%s482] sm:%s3] %v481
    %s484 = scalar_lea.vmem %s0, 270
    %v485 = vld [vmem:[%s484] sm:%s3]
    %s486 = scalar_lea.vmem [#allocation1], 1080
    %487 = vst [vmem:[%s486] sm:%s3] %v485
    %s488 = scalar_lea.vmem %s0, 268
    %v489 = vld [vmem:[%s488] sm:%s3]
    %s490 = scalar_lea.vmem [#allocation1], 1072
    %491 = vst [vmem:[%s490] sm:%s3] %v489
    %s492 = scalar_lea.vmem %s0, 266
    %v493 = vld [vmem:[%s492] sm:%s3]
    %s494 = scalar_lea.vmem [#allocation1], 1064
    %495 = vst [vmem:[%s494] sm:%s3] %v493
    %s496 = scalar_lea.vmem %s0, 264
    %v497 = vld [vmem:[%s496] sm:%s3]
    %s498 = scalar_lea.vmem [#allocation1], 1056
    %499 = vst [vmem:[%s498] sm:%s3] %v497
    %s500 = scalar_lea.vmem %s0, 262
    %v501 = vld [vmem:[%s500] sm:%s3]
    %s502 = scalar_lea.vmem [#allocation1], 1048
    %503 = vst [vmem:[%s502] sm:%s3] %v501
    %s504 = scalar_lea.vmem %s0, 260
    %v505 = vld [vmem:[%s504] sm:%s3]
    %s506 = scalar_lea.vmem [#allocation1], 1040
    %507 = vst [vmem:[%s506] sm:%s3] %v505
    %s508 = scalar_lea.vmem %s0, 258
    %v509 = vld [vmem:[%s508] sm:%s3]
    %s510 = scalar_lea.vmem [#allocation1], 1032
    %511 = vst [vmem:[%s510] sm:%s3] %v509
    %s512 = scalar_lea.vmem %s0, 256
    %v513 = vld [vmem:[%s512] sm:%s3]
    %s514 = scalar_lea.vmem [#allocation1], 1024
    %515 = vst [vmem:[%s514] sm:%s3] %v513
    %s516 = scalar_lea.vmem %s0, 254
    %v517 = vld [vmem:[%s516] sm:%s3]
    %s518 = scalar_lea.vmem [#allocation1], 1016
    %519 = vst [vmem:[%s518] sm:%s3] %v517
    %s520 = scalar_lea.vmem %s0, 252
    %v521 = vld [vmem:[%s520] sm:%s3]
    %s522 = scalar_lea.vmem [#allocation1], 1008
    %523 = vst [vmem:[%s522] sm:%s3] %v521
    %s524 = scalar_lea.vmem %s0, 250
    %v525 = vld [vmem:[%s524] sm:%s3]
    %s526 = scalar_lea.vmem [#allocation1], 1000
    %527 = vst [vmem:[%s526] sm:%s3] %v525
    %s528 = scalar_lea.vmem %s0, 248
    %v529 = vld [vmem:[%s528] sm:%s3]
    %s530 = scalar_lea.vmem [#allocation1], 992
    %531 = vst [vmem:[%s530] sm:%s3] %v529
    %s532 = scalar_lea.vmem %s0, 246
    %v533 = vld [vmem:[%s532] sm:%s3]
    %s534 = scalar_lea.vmem [#allocation1], 984
    %535 = vst [vmem:[%s534] sm:%s3] %v533
    %s536 = scalar_lea.vmem %s0, 244
    %v537 = vld [vmem:[%s536] sm:%s3]
    %s538 = scalar_lea.vmem [#allocation1], 976
    %539 = vst [vmem:[%s538] sm:%s3] %v537
    %s540 = scalar_lea.vmem %s0, 242
    %v541 = vld [vmem:[%s540] sm:%s3]
    %s542 = scalar_lea.vmem [#allocation1], 968
    %543 = vst [vmem:[%s542] sm:%s3] %v541
    %s544 = scalar_lea.vmem %s0, 240
    %v545 = vld [vmem:[%s544] sm:%s3]
    %s546 = scalar_lea.vmem [#allocation1], 960
    %547 = vst [vmem:[%s546] sm:%s3] %v545
    %s548 = scalar_lea.vmem %s0, 238
    %v549 = vld [vmem:[%s548] sm:%s3]
    %s550 = scalar_lea.vmem [#allocation1], 952
    %551 = vst [vmem:[%s550] sm:%s3] %v549
    %s552 = scalar_lea.vmem %s0, 236
    %v553 = vld [vmem:[%s552] sm:%s3]
    %s554 = scalar_lea.vmem [#allocation1], 944
    %555 = vst [vmem:[%s554] sm:%s3] %v553
    %s556 = scalar_lea.vmem %s0, 234
    %v557 = vld [vmem:[%s556] sm:%s3]
    %s558 = scalar_lea.vmem [#allocation1], 936
    %559 = vst [vmem:[%s558] sm:%s3] %v557
    %s560 = scalar_lea.vmem %s0, 232
    %v561 = vld [vmem:[%s560] sm:%s3]
    %s562 = scalar_lea.vmem [#allocation1], 928
    %563 = vst [vmem:[%s562] sm:%s3] %v561
    %s564 = scalar_lea.vmem %s0, 230
    %v565 = vld [vmem:[%s564] sm:%s3]
    %s566 = scalar_lea.vmem [#allocation1], 920
    %567 = vst [vmem:[%s566] sm:%s3] %v565
    %s568 = scalar_lea.vmem %s0, 228
    %v569 = vld [vmem:[%s568] sm:%s3]
    %s570 = scalar_lea.vmem [#allocation1], 912
    %571 = vst [vmem:[%s570] sm:%s3] %v569
    %s572 = scalar_lea.vmem %s0, 226
    %v573 = vld [vmem:[%s572] sm:%s3]
    %s574 = scalar_lea.vmem [#allocation1], 904
    %575 = vst [vmem:[%s574] sm:%s3] %v573
    %s576 = scalar_lea.vmem %s0, 224
    %v577 = vld [vmem:[%s576] sm:%s3]
    %s578 = scalar_lea.vmem [#allocation1], 896
    %579 = vst [vmem:[%s578] sm:%s3] %v577
    %s580 = scalar_lea.vmem %s0, 222
    %v581 = vld [vmem:[%s580] sm:%s3]
    %s582 = scalar_lea.vmem [#allocation1], 888
    %583 = vst [vmem:[%s582] sm:%s3] %v581
    %s584 = scalar_lea.vmem %s0, 220
    %v585 = vld [vmem:[%s584] sm:%s3]
    %s586 = scalar_lea.vmem [#allocation1], 880
    %587 = vst [vmem:[%s586] sm:%s3] %v585
    %s588 = scalar_lea.vmem %s0, 218
    %v589 = vld [vmem:[%s588] sm:%s3]
    %s590 = scalar_lea.vmem [#allocation1], 872
    %591 = vst [vmem:[%s590] sm:%s3] %v589
    %s592 = scalar_lea.vmem %s0, 216
    %v593 = vld [vmem:[%s592] sm:%s3]
    %s594 = scalar_lea.vmem [#allocation1], 864
    %595 = vst [vmem:[%s594] sm:%s3] %v593
    %s596 = scalar_lea.vmem %s0, 214
    %v597 = vld [vmem:[%s596] sm:%s3]
    %s598 = scalar_lea.vmem [#allocation1], 856
    %599 = vst [vmem:[%s598] sm:%s3] %v597
    %s600 = scalar_lea.vmem %s0, 212
    %v601 = vld [vmem:[%s600] sm:%s3]
    %s602 = scalar_lea.vmem [#allocation1], 848
    %603 = vst [vmem:[%s602] sm:%s3] %v601
    %s604 = scalar_lea.vmem %s0, 210
    %v605 = vld [vmem:[%s604] sm:%s3]
    %s606 = scalar_lea.vmem [#allocation1], 840
    %607 = vst [vmem:[%s606] sm:%s3] %v605
    %s608 = scalar_lea.vmem %s0, 208
    %v609 = vld [vmem:[%s608] sm:%s3]
    %s610 = scalar_lea.vmem [#allocation1], 832
    %611 = vst [vmem:[%s610] sm:%s3] %v609
    %s612 = scalar_lea.vmem %s0, 206
    %v613 = vld [vmem:[%s612] sm:%s3]
    %s614 = scalar_lea.vmem [#allocation1], 824
    %615 = vst [vmem:[%s614] sm:%s3] %v613
    %s616 = scalar_lea.vmem %s0, 204
    %v617 = vld [vmem:[%s616] sm:%s3]
    %s618 = scalar_lea.vmem [#allocation1], 816
    %619 = vst [vmem:[%s618] sm:%s3] %v617
    %s620 = scalar_lea.vmem %s0, 202
    %v621 = vld [vmem:[%s620] sm:%s3]
    %s622 = scalar_lea.vmem [#allocation1], 808
    %623 = vst [vmem:[%s622] sm:%s3] %v621
    %s624 = scalar_lea.vmem %s0, 200
    %v625 = vld [vmem:[%s624] sm:%s3]
    %s626 = scalar_lea.vmem [#allocation1], 800
    %627 = vst [vmem:[%s626] sm:%s3] %v625
    %s628 = scalar_lea.vmem %s0, 198
    %v629 = vld [vmem:[%s628] sm:%s3]
    %s630 = scalar_lea.vmem [#allocation1], 792
    %631 = vst [vmem:[%s630] sm:%s3] %v629
    %s632 = scalar_lea.vmem %s0, 196
    %v633 = vld [vmem:[%s632] sm:%s3]
    %s634 = scalar_lea.vmem [#allocation1], 784
    %635 = vst [vmem:[%s634] sm:%s3] %v633
    %s636 = scalar_lea.vmem %s0, 194
    %v637 = vld [vmem:[%s636] sm:%s3]
    %s638 = scalar_lea.vmem [#allocation1], 776
    %639 = vst [vmem:[%s638] sm:%s3] %v637
    %s640 = scalar_lea.vmem %s0, 192
    %v641 = vld [vmem:[%s640] sm:%s3]
    %s642 = scalar_lea.vmem [#allocation1], 768
    %643 = vst [vmem:[%s642] sm:%s3] %v641
    %s644 = scalar_lea.vmem %s0, 190
    %v645 = vld [vmem:[%s644] sm:%s3]
    %s646 = scalar_lea.vmem [#allocation1], 760
    %647 = vst [vmem:[%s646] sm:%s3] %v645
    %s648 = scalar_lea.vmem %s0, 188
    %v649 = vld [vmem:[%s648] sm:%s3]
    %s650 = scalar_lea.vmem [#allocation1], 752
    %651 = vst [vmem:[%s650] sm:%s3] %v649
    %s652 = scalar_lea.vmem %s0, 186
    %v653 = vld [vmem:[%s652] sm:%s3]
    %s654 = scalar_lea.vmem [#allocation1], 744
    %655 = vst [vmem:[%s654] sm:%s3] %v653
    %s656 = scalar_lea.vmem %s0, 184
    %v657 = vld [vmem:[%s656] sm:%s3]
    %s658 = scalar_lea.vmem [#allocation1], 736
    %659 = vst [vmem:[%s658] sm:%s3] %v657
    %s660 = scalar_lea.vmem %s0, 182
    %v661 = vld [vmem:[%s660] sm:%s3]
    %s662 = scalar_lea.vmem [#allocation1], 728
    %663 = vst [vmem:[%s662] sm:%s3] %v661
    %s664 = scalar_lea.vmem %s0, 180
    %v665 = vld [vmem:[%s664] sm:%s3]
    %s666 = scalar_lea.vmem [#allocation1], 720
    %667 = vst [vmem:[%s666] sm:%s3] %v665
    %s668 = scalar_lea.vmem %s0, 178
    %v669 = vld [vmem:[%s668] sm:%s3]
    %s670 = scalar_lea.vmem [#allocation1], 712
    %671 = vst [vmem:[%s670] sm:%s3] %v669
    %s672 = scalar_lea.vmem %s0, 176
    %v673 = vld [vmem:[%s672] sm:%s3]
    %s674 = scalar_lea.vmem [#allocation1], 704
    %675 = vst [vmem:[%s674] sm:%s3] %v673
    %s676 = scalar_lea.vmem %s0, 174
    %v677 = vld [vmem:[%s676] sm:%s3]
    %s678 = scalar_lea.vmem [#allocation1], 696
    %679 = vst [vmem:[%s678] sm:%s3] %v677
    %s680 = scalar_lea.vmem %s0, 172
    %v681 = vld [vmem:[%s680] sm:%s3]
    %s682 = scalar_lea.vmem [#allocation1], 688
    %683 = vst [vmem:[%s682] sm:%s3] %v681
    %s684 = scalar_lea.vmem %s0, 170
    %v685 = vld [vmem:[%s684] sm:%s3]
    %s686 = scalar_lea.vmem [#allocation1], 680
    %687 = vst [vmem:[%s686] sm:%s3] %v685
    %s688 = scalar_lea.vmem %s0, 168
    %v689 = vld [vmem:[%s688] sm:%s3]
    %s690 = scalar_lea.vmem [#allocation1], 672
    %691 = vst [vmem:[%s690] sm:%s3] %v689
    %s692 = scalar_lea.vmem %s0, 166
    %v693 = vld [vmem:[%s692] sm:%s3]
    %s694 = scalar_lea.vmem [#allocation1], 664
    %695 = vst [vmem:[%s694] sm:%s3] %v693
    %s696 = scalar_lea.vmem %s0, 164
    %v697 = vld [vmem:[%s696] sm:%s3]
    %s698 = scalar_lea.vmem [#allocation1], 656
    %699 = vst [vmem:[%s698] sm:%s3] %v697
    %s700 = scalar_lea.vmem %s0, 162
    %v701 = vld [vmem:[%s700] sm:%s3]
    %s702 = scalar_lea.vmem [#allocation1], 648
    %703 = vst [vmem:[%s702] sm:%s3] %v701
    %s704 = scalar_lea.vmem %s0, 160
    %v705 = vld [vmem:[%s704] sm:%s3]
    %s706 = scalar_lea.vmem [#allocation1], 640
    %707 = vst [vmem:[%s706] sm:%s3] %v705
    %s708 = scalar_lea.vmem %s0, 158
    %v709 = vld [vmem:[%s708] sm:%s3]
    %s710 = scalar_lea.vmem [#allocation1], 632
    %711 = vst [vmem:[%s710] sm:%s3] %v709
    %s712 = scalar_lea.vmem %s0, 156
    %v713 = vld [vmem:[%s712] sm:%s3]
    %s714 = scalar_lea.vmem [#allocation1], 624
    %715 = vst [vmem:[%s714] sm:%s3] %v713
    %s716 = scalar_lea.vmem %s0, 154
    %v717 = vld [vmem:[%s716] sm:%s3]
    %s718 = scalar_lea.vmem [#allocation1], 616
    %719 = vst [vmem:[%s718] sm:%s3] %v717
    %s720 = scalar_lea.vmem %s0, 152
    %v721 = vld [vmem:[%s720] sm:%s3]
    %s722 = scalar_lea.vmem [#allocation1], 608
    %723 = vst [vmem:[%s722] sm:%s3] %v721
    %s724 = scalar_lea.vmem %s0, 150
    %v725 = vld [vmem:[%s724] sm:%s3]
    %s726 = scalar_lea.vmem [#allocation1], 600
    %727 = vst [vmem:[%s726] sm:%s3] %v725
    %s728 = scalar_lea.vmem %s0, 148
    %v729 = vld [vmem:[%s728] sm:%s3]
    %s730 = scalar_lea.vmem [#allocation1], 592
    %731 = vst [vmem:[%s730] sm:%s3] %v729
    %s732 = scalar_lea.vmem %s0, 146
    %v733 = vld [vmem:[%s732] sm:%s3]
    %s734 = scalar_lea.vmem [#allocation1], 584
    %735 = vst [vmem:[%s734] sm:%s3] %v733
    %s736 = scalar_lea.vmem %s0, 144
    %v737 = vld [vmem:[%s736] sm:%s3]
    %s738 = scalar_lea.vmem [#allocation1], 576
    %739 = vst [vmem:[%s738] sm:%s3] %v737
    %s740 = scalar_lea.vmem %s0, 142
    %v741 = vld [vmem:[%s740] sm:%s3]
    %s742 = scalar_lea.vmem [#allocation1], 568
    %743 = vst [vmem:[%s742] sm:%s3] %v741
    %s744 = scalar_lea.vmem %s0, 140
    %v745 = vld [vmem:[%s744] sm:%s3]
    %s746 = scalar_lea.vmem [#allocation1], 560
    %747 = vst [vmem:[%s746] sm:%s3] %v745
    %s748 = scalar_lea.vmem %s0, 138
    %v749 = vld [vmem:[%s748] sm:%s3]
    %s750 = scalar_lea.vmem [#allocation1], 552
    %751 = vst [vmem:[%s750] sm:%s3] %v749
    %s752 = scalar_lea.vmem %s0, 136
    %v753 = vld [vmem:[%s752] sm:%s3]
    %s754 = scalar_lea.vmem [#allocation1], 544
    %755 = vst [vmem:[%s754] sm:%s3] %v753
    %s756 = scalar_lea.vmem %s0, 134
    %v757 = vld [vmem:[%s756] sm:%s3]
    %s758 = scalar_lea.vmem [#allocation1], 536
    %759 = vst [vmem:[%s758] sm:%s3] %v757
    %s760 = scalar_lea.vmem %s0, 132
    %v761 = vld [vmem:[%s760] sm:%s3]
    %s762 = scalar_lea.vmem [#allocation1], 528
    %763 = vst [vmem:[%s762] sm:%s3] %v761
    %s764 = scalar_lea.vmem %s0, 130
    %v765 = vld [vmem:[%s764] sm:%s3]
    %s766 = scalar_lea.vmem [#allocation1], 520
    %767 = vst [vmem:[%s766] sm:%s3] %v765
    %s768 = scalar_lea.vmem %s0, 128
    %v769 = vld [vmem:[%s768] sm:%s3]
    %s770 = scalar_lea.vmem [#allocation1], 512
    %771 = vst [vmem:[%s770] sm:%s3] %v769
    %s772 = scalar_lea.vmem %s0, 126
    %v773 = vld [vmem:[%s772] sm:%s3]
    %s774 = scalar_lea.vmem [#allocation1], 504
    %775 = vst [vmem:[%s774] sm:%s3] %v773
    %s776 = scalar_lea.vmem %s0, 124
    %v777 = vld [vmem:[%s776] sm:%s3]
    %s778 = scalar_lea.vmem [#allocation1], 496
    %779 = vst [vmem:[%s778] sm:%s3] %v777
    %s780 = scalar_lea.vmem %s0, 122
    %v781 = vld [vmem:[%s780] sm:%s3]
    %s782 = scalar_lea.vmem [#allocation1], 488
    %783 = vst [vmem:[%s782] sm:%s3] %v781
    %s784 = scalar_lea.vmem %s0, 120
    %v785 = vld [vmem:[%s784] sm:%s3]
    %s786 = scalar_lea.vmem [#allocation1], 480
    %787 = vst [vmem:[%s786] sm:%s3] %v785
    %s788 = scalar_lea.vmem %s0, 118
    %v789 = vld [vmem:[%s788] sm:%s3]
    %s790 = scalar_lea.vmem [#allocation1], 472
    %791 = vst [vmem:[%s790] sm:%s3] %v789
    %s792 = scalar_lea.vmem %s0, 116
    %v793 = vld [vmem:[%s792] sm:%s3]
    %s794 = scalar_lea.vmem [#allocation1], 464
    %795 = vst [vmem:[%s794] sm:%s3] %v793
    %s796 = scalar_lea.vmem %s0, 114
    %v797 = vld [vmem:[%s796] sm:%s3]
    %s798 = scalar_lea.vmem [#allocation1], 456
    %799 = vst [vmem:[%s798] sm:%s3] %v797
    %s800 = scalar_lea.vmem %s0, 112
    %v801 = vld [vmem:[%s800] sm:%s3]
    %s802 = scalar_lea.vmem [#allocation1], 448
    %803 = vst [vmem:[%s802] sm:%s3] %v801
    %s804 = scalar_lea.vmem %s0, 110
    %v805 = vld [vmem:[%s804] sm:%s3]
    %s806 = scalar_lea.vmem [#allocation1], 440
    %807 = vst [vmem:[%s806] sm:%s3] %v805
    %s808 = scalar_lea.vmem %s0, 108
    %v809 = vld [vmem:[%s808] sm:%s3]
    %s810 = scalar_lea.vmem [#allocation1], 432
    %811 = vst [vmem:[%s810] sm:%s3] %v809
    %s812 = scalar_lea.vmem %s0, 106
    %v813 = vld [vmem:[%s812] sm:%s3]
    %s814 = scalar_lea.vmem [#allocation1], 424
    %815 = vst [vmem:[%s814] sm:%s3] %v813
    %s816 = scalar_lea.vmem %s0, 104
    %v817 = vld [vmem:[%s816] sm:%s3]
    %s818 = scalar_lea.vmem [#allocation1], 416
    %819 = vst [vmem:[%s818] sm:%s3] %v817
    %s820 = scalar_lea.vmem %s0, 102
    %v821 = vld [vmem:[%s820] sm:%s3]
    %s822 = scalar_lea.vmem [#allocation1], 408
    %823 = vst [vmem:[%s822] sm:%s3] %v821
    %s824 = scalar_lea.vmem %s0, 100
    %v825 = vld [vmem:[%s824] sm:%s3]
    %s826 = scalar_lea.vmem [#allocation1], 400
    %827 = vst [vmem:[%s826] sm:%s3] %v825
    %s828 = scalar_lea.vmem %s0, 98
    %v829 = vld [vmem:[%s828] sm:%s3]
    %s830 = scalar_lea.vmem [#allocation1], 392
    %831 = vst [vmem:[%s830] sm:%s3] %v829
    %s832 = scalar_lea.vmem %s0, 96
    %v833 = vld [vmem:[%s832] sm:%s3]
    %s834 = scalar_lea.vmem [#allocation1], 384
    %835 = vst [vmem:[%s834] sm:%s3] %v833
    %s836 = scalar_lea.vmem %s0, 94
    %v837 = vld [vmem:[%s836] sm:%s3]
    %s838 = scalar_lea.vmem [#allocation1], 376
    %839 = vst [vmem:[%s838] sm:%s3] %v837
    %s840 = scalar_lea.vmem %s0, 92
    %v841 = vld [vmem:[%s840] sm:%s3]
    %s842 = scalar_lea.vmem [#allocation1], 368
    %843 = vst [vmem:[%s842] sm:%s3] %v841
    %s844 = scalar_lea.vmem %s0, 90
    %v845 = vld [vmem:[%s844] sm:%s3]
    %s846 = scalar_lea.vmem [#allocation1], 360
    %847 = vst [vmem:[%s846] sm:%s3] %v845
    %s848 = scalar_lea.vmem %s0, 88
    %v849 = vld [vmem:[%s848] sm:%s3]
    %s850 = scalar_lea.vmem [#allocation1], 352
    %851 = vst [vmem:[%s850] sm:%s3] %v849
    %s852 = scalar_lea.vmem %s0, 86
    %v853 = vld [vmem:[%s852] sm:%s3]
    %s854 = scalar_lea.vmem [#allocation1], 344
    %855 = vst [vmem:[%s854] sm:%s3] %v853
    %s856 = scalar_lea.vmem %s0, 84
    %v857 = vld [vmem:[%s856] sm:%s3]
    %s858 = scalar_lea.vmem [#allocation1], 336
    %859 = vst [vmem:[%s858] sm:%s3] %v857
    %s860 = scalar_lea.vmem %s0, 82
    %v861 = vld [vmem:[%s860] sm:%s3]
    %s862 = scalar_lea.vmem [#allocation1], 328
    %863 = vst [vmem:[%s862] sm:%s3] %v861
    %s864 = scalar_lea.vmem %s0, 80
    %v865 = vld [vmem:[%s864] sm:%s3]
    %s866 = scalar_lea.vmem [#allocation1], 320
    %867 = vst [vmem:[%s866] sm:%s3] %v865
    %s868 = scalar_lea.vmem %s0, 78
    %v869 = vld [vmem:[%s868] sm:%s3]
    %s870 = scalar_lea.vmem [#allocation1], 312
    %871 = vst [vmem:[%s870] sm:%s3] %v869
    %s872 = scalar_lea.vmem %s0, 76
    %v873 = vld [vmem:[%s872] sm:%s3]
    %s874 = scalar_lea.vmem [#allocation1], 304
    %875 = vst [vmem:[%s874] sm:%s3] %v873
    %s876 = scalar_lea.vmem %s0, 74
    %v877 = vld [vmem:[%s876] sm:%s3]
    %s878 = scalar_lea.vmem [#allocation1], 296
    %879 = vst [vmem:[%s878] sm:%s3] %v877
    %s880 = scalar_lea.vmem %s0, 72
    %v881 = vld [vmem:[%s880] sm:%s3]
    %s882 = scalar_lea.vmem [#allocation1], 288
    %883 = vst [vmem:[%s882] sm:%s3] %v881
    %s884 = scalar_lea.vmem %s0, 70
    %v885 = vld [vmem:[%s884] sm:%s3]
    %s886 = scalar_lea.vmem [#allocation1], 280
    %887 = vst [vmem:[%s886] sm:%s3] %v885
    %s888 = scalar_lea.vmem %s0, 68
    %v889 = vld [vmem:[%s888] sm:%s3]
    %s890 = scalar_lea.vmem [#allocation1], 272
    %891 = vst [vmem:[%s890] sm:%s3] %v889
    %s892 = scalar_lea.vmem %s0, 66
    %v893 = vld [vmem:[%s892] sm:%s3]
    %s894 = scalar_lea.vmem [#allocation1], 264
    %895 = vst [vmem:[%s894] sm:%s3] %v893
    %s896 = scalar_lea.vmem %s0, 64
    %v897 = vld [vmem:[%s896] sm:%s3]
    %s898 = scalar_lea.vmem [#allocation1], 256
    %899 = vst [vmem:[%s898] sm:%s3] %v897
    %s900 = scalar_lea.vmem %s0, 62
    %v901 = vld [vmem:[%s900] sm:%s3]
    %s902 = scalar_lea.vmem [#allocation1], 248
    %903 = vst [vmem:[%s902] sm:%s3] %v901
    %s904 = scalar_lea.vmem %s0, 60
    %v905 = vld [vmem:[%s904] sm:%s3]
    %s906 = scalar_lea.vmem [#allocation1], 240
    %907 = vst [vmem:[%s906] sm:%s3] %v905
    %s908 = scalar_lea.vmem %s0, 58
    %v909 = vld [vmem:[%s908] sm:%s3]
    %s910 = scalar_lea.vmem [#allocation1], 232
    %911 = vst [vmem:[%s910] sm:%s3] %v909
    %s912 = scalar_lea.vmem %s0, 56
    %v913 = vld [vmem:[%s912] sm:%s3]
    %s914 = scalar_lea.vmem [#allocation1], 224
    %915 = vst [vmem:[%s914] sm:%s3] %v913
    %s916 = scalar_lea.vmem %s0, 54
    %v917 = vld [vmem:[%s916] sm:%s3]
    %s918 = scalar_lea.vmem [#allocation1], 216
    %919 = vst [vmem:[%s918] sm:%s3] %v917
    %s920 = scalar_lea.vmem %s0, 52
    %v921 = vld [vmem:[%s920] sm:%s3]
    %s922 = scalar_lea.vmem [#allocation1], 208
    %923 = vst [vmem:[%s922] sm:%s3] %v921
    %s924 = scalar_lea.vmem %s0, 50
    %v925 = vld [vmem:[%s924] sm:%s3]
    %s926 = scalar_lea.vmem [#allocation1], 200
    %927 = vst [vmem:[%s926] sm:%s3] %v925
    %s928 = scalar_lea.vmem %s0, 48
    %v929 = vld [vmem:[%s928] sm:%s3]
    %s930 = scalar_lea.vmem [#allocation1], 192
    %931 = vst [vmem:[%s930] sm:%s3] %v929
    %s932 = scalar_lea.vmem %s0, 46
    %v933 = vld [vmem:[%s932] sm:%s3]
    %s934 = scalar_lea.vmem [#allocation1], 184
    %935 = vst [vmem:[%s934] sm:%s3] %v933
    %s936 = scalar_lea.vmem %s0, 44
    %v937 = vld [vmem:[%s936] sm:%s3]
    %s938 = scalar_lea.vmem [#allocation1], 176
    %939 = vst [vmem:[%s938] sm:%s3] %v937
    %s940 = scalar_lea.vmem %s0, 42
    %v941 = vld [vmem:[%s940] sm:%s3]
    %s942 = scalar_lea.vmem [#allocation1], 168
    %943 = vst [vmem:[%s942] sm:%s3] %v941
    %s944 = scalar_lea.vmem %s0, 40
    %v945 = vld [vmem:[%s944] sm:%s3]
    %s946 = scalar_lea.vmem [#allocation1], 160
    %947 = vst [vmem:[%s946] sm:%s3] %v945
    %s948 = scalar_lea.vmem %s0, 38
    %v949 = vld [vmem:[%s948] sm:%s3]
    %s950 = scalar_lea.vmem [#allocation1], 152
    %951 = vst [vmem:[%s950] sm:%s3] %v949
    %s952 = scalar_lea.vmem %s0, 36
    %v953 = vld [vmem:[%s952] sm:%s3]
    %s954 = scalar_lea.vmem [#allocation1], 144
    %955 = vst [vmem:[%s954] sm:%s3] %v953
    %s956 = scalar_lea.vmem %s0, 34
    %v957 = vld [vmem:[%s956] sm:%s3]
    %s958 = scalar_lea.vmem [#allocation1], 136
    %959 = vst [vmem:[%s958] sm:%s3] %v957
    %s960 = scalar_lea.vmem %s0, 32
    %v961 = vld [vmem:[%s960] sm:%s3]
    %s962 = scalar_lea.vmem [#allocation1], 128
    %963 = vst [vmem:[%s962] sm:%s3] %v961
    %s964 = scalar_lea.vmem %s0, 30
    %v965 = vld [vmem:[%s964] sm:%s3]
    %s966 = scalar_lea.vmem [#allocation1], 120
    %967 = vst [vmem:[%s966] sm:%s3] %v965
    %s968 = scalar_lea.vmem %s0, 28
    %v969 = vld [vmem:[%s968] sm:%s3]
    %s970 = scalar_lea.vmem [#allocation1], 112
    %971 = vst [vmem:[%s970] sm:%s3] %v969
    %s972 = scalar_lea.vmem %s0, 26
    %v973 = vld [vmem:[%s972] sm:%s3]
    %s974 = scalar_lea.vmem [#allocation1], 104
    %975 = vst [vmem:[%s974] sm:%s3] %v973
    %s976 = scalar_lea.vmem %s0, 24
    %v977 = vld [vmem:[%s976] sm:%s3]
    %s978 = scalar_lea.vmem [#allocation1], 96
    %979 = vst [vmem:[%s978] sm:%s3] %v977
    %s980 = scalar_lea.vmem %s0, 22
    %v981 = vld [vmem:[%s980] sm:%s3]
    %s982 = scalar_lea.vmem [#allocation1], 88
    %983 = vst [vmem:[%s982] sm:%s3] %v981
    %s984 = scalar_lea.vmem %s0, 20
    %v985 = vld [vmem:[%s984] sm:%s3]
    %s986 = scalar_lea.vmem [#allocation1], 80
    %987 = vst [vmem:[%s986] sm:%s3] %v985
    %s988 = scalar_lea.vmem %s0, 18
    %v989 = vld [vmem:[%s988] sm:%s3]
    %s990 = scalar_lea.vmem [#allocation1], 72
    %991 = vst [vmem:[%s990] sm:%s3] %v989
    %s992 = scalar_lea.vmem %s0, 16
    %v993 = vld [vmem:[%s992] sm:%s3]
    %s994 = scalar_lea.vmem [#allocation1], 64
    %995 = vst [vmem:[%s994] sm:%s3] %v993
    %s996 = scalar_lea.vmem %s0, 14
    %v997 = vld [vmem:[%s996] sm:%s3]
    %s998 = scalar_lea.vmem [#allocation1], 56
    %999 = vst [vmem:[%s998] sm:%s3] %v997
    %s1000 = scalar_lea.vmem %s0, 12
    %v1001 = vld [vmem:[%s1000] sm:%s3]
    %s1002 = scalar_lea.vmem [#allocation1], 48
    %1003 = vst [vmem:[%s1002] sm:%s3] %v1001
    %s1004 = scalar_lea.vmem %s0, 10
    %v1005 = vld [vmem:[%s1004] sm:%s3]
    %s1006 = scalar_lea.vmem [#allocation1], 40
    %1007 = vst [vmem:[%s1006] sm:%s3] %v1005
    %s1008 = scalar_lea.vmem %s0, 8
    %v1009 = vld [vmem:[%s1008] sm:%s3]
    %s1010 = scalar_lea.vmem [#allocation1], 32
    %1011 = vst [vmem:[%s1010] sm:%s3] %v1009
    %s1012 = scalar_lea.vmem %s0, 6
    %v1013 = vld [vmem:[%s1012] sm:%s3]
    %s1014 = scalar_lea.vmem [#allocation1], 24
    %1015 = vst [vmem:[%s1014] sm:%s3] %v1013
    %s1016 = scalar_lea.vmem %s0, 4
    %v1017 = vld [vmem:[%s1016] sm:%s3]
    %s1018 = scalar_lea.vmem [#allocation1], 16
    %1019 = vst [vmem:[%s1018] sm:%s3] %v1017
    %s1020 = scalar_lea.vmem %s0, 2
    %v1021 = vld [vmem:[%s1020] sm:%s3]
    %s1022 = scalar_lea.vmem [#allocation1], 8
    %1023 = vst [vmem:[%s1022] sm:%s3] %v1021
    %v1024 = vld [vmem:[%s0] sm:%s3]
    %1025 = vst [vmem:[#allocation1] sm:%s3] %v1024
    %v1026 = vld [vmem:[#allocation1] sm:$0x1]
    %s1027 = scalar_lea.vmem [#allocation1], 127
    %v1028 = vld [vmem:[%s1027] sm:$0x2]
    %vm1029 = vcmask 1041409
    %v1030 = vsel %vm1029, %v1028, %v1026
    %s1031 = scalar_lea.vmem [#allocation1], 254
    %v1032 = vld [vmem:[%s1031] sm:$0x4]
    %vm1033 = vcmask 1042434
    %v1034 = vsel %vm1033, %v1032, %v1030
    %s1035 = scalar_lea.vmem [#allocation1], 381
    %v1036 = vld [vmem:[%s1035] sm:$0x8]
    %vm1037 = vcmask 1043459
    %v1038 = vsel %vm1037, %v1036, %v1034
    %s1039 = scalar_lea.vmem [#allocation1], 508
    %v1040 = vld [vmem:[%s1039] sm:$0x10]
    %vm1041 = vcmask 1044484
    %v1042 = vsel %vm1041, %v1040, %v1038
    %s1043 = scalar_lea.vmem [#allocation1], 635
    %v1044 = vld [vmem:[%s1043] sm:$0x20]
    %vm1045 = vcmask 1045509
    %v1046 = vsel %vm1045, %v1044, %v1042
    %s1047 = scalar_lea.vmem [#allocation1], 762
    %v1048 = vld [vmem:[%s1047] sm:$0x40]
    %vm1049 = vcmask 1046534
    %v1050 = vsel %vm1049, %v1048, %v1046
    %s1051 = scalar_lea.vmem [#allocation1], 889
    %v1052 = vld [vmem:[%s1051] sm:$0x80]
    %vm1053 = vcmask 1047559
    %v1054 = vsel %vm1053, %v1052, %v1050
    %vm1055 = vcmask 31744
    %1056 = vst.msk [vmem:[#allocation0] ss:$8 sm:$0x3] %vm1055, %v1054
    %s1057 = scalar_lea.vmem [#allocation0], 4294967281
    %1058 = vst.msk [vmem:[%s1057] ss:$8 sm:$0xc] %vm1055, %v1054
    %s1059 = scalar_lea.vmem [#allocation0], 4294967266
    %1060 = vst.msk [vmem:[%s1059] ss:$8 sm:$0x30] %vm1055, %v1054
    %s1061 = scalar_lea.vmem [#allocation0], 4294967251
    %1062 = vst.msk [vmem:[%s1061] ss:$8 sm:$0xc0] %vm1055, %v1054
    %s1063 = scalar_lea.vmem [#allocation1], 1024
    %v1064 = vld [vmem:[%s1063] sm:$0x1]
    %s1065 = scalar_lea.vmem [#allocation1], 1151
    %v1066 = vld [vmem:[%s1065] sm:$0x2]
    %vm1067 = vcmask 1041409
    %v1068 = vsel %vm1067, %v1066, %v1064
    %s1069 = scalar_lea.vmem [#allocation1], 1278
    %v1070 = vld [vmem:[%s1069] sm:$0x4]
    %vm1071 = vcmask 1042434
    %v1072 = vsel %vm1071, %v1070, %v1068
    %s1073 = scalar_lea.vmem [#allocation1], 1405
    %v1074 = vld [vmem:[%s1073] sm:$0x8]
    %vm1075 = vcmask 1043459
    %v1076 = vsel %vm1075, %v1074, %v1072
    %s1077 = scalar_lea.vmem [#allocation1], 1532
    %v1078 = vld [vmem:[%s1077] sm:$0x10]
    %vm1079 = vcmask 1044484
    %v1080 = vsel %vm1079, %v1078, %v1076
    %s1081 = scalar_lea.vmem [#allocation1], 1659
    %v1082 = vld [vmem:[%s1081] sm:$0x20]
    %vm1083 = vcmask 1045509
    %v1084 = vsel %vm1083, %v1082, %v1080
    %s1085 = scalar_lea.vmem [#allocation1], 1786
    %v1086 = vld [vmem:[%s1085] sm:$0x40]
    %vm1087 = vcmask 1046534
    %v1088 = vsel %vm1087, %v1086, %v1084
    %s1089 = scalar_lea.vmem [#allocation1], 1913
    %v1090 = vld [vmem:[%s1089] sm:$0x80]
    %vm1091 = vcmask 1047559
    %v1092 = vsel %vm1091, %v1090, %v1088
    %vm1093 = vcmask 31744
    %s1094 = scalar_lea.vmem [#allocation0], 16
    %1095 = vst.msk [vmem:[%s1094] ss:$8 sm:$0x3] %vm1093, %v1092
    %s1096 = scalar_lea.vmem [#allocation0], 1
    %1097 = vst.msk [vmem:[%s1096] ss:$8 sm:$0xc] %vm1093, %v1092
    %s1098 = scalar_lea.vmem [#allocation0], 4294967282
    %1099 = vst.msk [vmem:[%s1098] ss:$8 sm:$0x30] %vm1093, %v1092
    %s1100 = scalar_lea.vmem [#allocation0], 4294967267
    %1101 = vst.msk [vmem:[%s1100] ss:$8 sm:$0xc0] %vm1093, %v1092
    %s1102 = scalar_lea.vmem [#allocation1], 121
    %v1103 = vld [vmem:[%s1102] sm:$0x1]
    %s1104 = scalar_lea.vmem [#allocation1], 376
    %v1105 = vld [vmem:[%s1104] sm:$0x2]
    %vm1106 = vcmask 1041409
    %v1107 = vsel %vm1106, %v1105, %v1103
    %s1108 = scalar_lea.vmem [#allocation1], 631
    %v1109 = vld [vmem:[%s1108] sm:$0x4]
    %vm1110 = vcmask 1042434
    %v1111 = vsel %vm1110, %v1109, %v1107
    %s1112 = scalar_lea.vmem [#allocation1], 886
    %v1113 = vld [vmem:[%s1112] sm:$0x8]
    %vm1114 = vcmask 1043459
    %v1115 = vsel %vm1114, %v1113, %v1111
    %s1116 = scalar_lea.vmem [#allocation1], 245
    %v1117 = vld [vmem:[%s1116] sm:$0x10]
    %vm1118 = vcmask 1044484
    %v1119 = vsel %vm1118, %v1117, %v1115
    %s1120 = scalar_lea.vmem [#allocation1], 500
    %v1121 = vld [vmem:[%s1120] sm:$0x20]
    %vm1122 = vcmask 1045509
    %v1123 = vsel %vm1122, %v1121, %v1119
    %s1124 = scalar_lea.vmem [#allocation1], 755
    %v1125 = vld [vmem:[%s1124] sm:$0x40]
    %vm1126 = vcmask 1046534
    %v1127 = vsel %vm1126, %v1125, %v1123
    %s1128 = scalar_lea.vmem [#allocation1], 1010
    %v1129 = vld [vmem:[%s1128] sm:$0x80]
    %vm1130 = vcmask 1047559
    %v1131 = vsel %vm1130, %v1129, %v1127
    %1132 = vrot.lane.b32.xlu0 %v1131, 124
    %v1133 = vpop.permute.xlu0 %1132
    %vm1134 = vcmask 1048544
    %1135 = vst.msk [vmem:[#allocation0] sm:$0xf] %vm1134, %v1133
    %s1136 = scalar_lea.vmem [#allocation0], 4
    %1137 = vst.msk [vmem:[%s1136] sm:$0xf0] %vm1134, %v1133
    %s1138 = scalar_lea.vmem [#allocation1], 1145
    %v1139 = vld [vmem:[%s1138] sm:$0x1]
    %s1140 = scalar_lea.vmem [#allocation1], 1400
    %v1141 = vld [vmem:[%s1140] sm:$0x2]
    %vm1142 = vcmask 1041409
    %v1143 = vsel %vm1142, %v1141, %v1139
    %s1144 = scalar_lea.vmem [#allocation1], 1655
    %v1145 = vld [vmem:[%s1144] sm:$0x4]
    %vm1146 = vcmask 1042434
    %v1147 = vsel %vm1146, %v1145, %v1143
    %s1148 = scalar_lea.vmem [#allocation1], 1910
    %v1149 = vld [vmem:[%s1148] sm:$0x8]
    %vm1150 = vcmask 1043459
    %v1151 = vsel %vm1150, %v1149, %v1147
    %s1152 = scalar_lea.vmem [#allocation1], 1269
    %v1153 = vld [vmem:[%s1152] sm:$0x10]
    %vm1154 = vcmask 1044484
    %v1155 = vsel %vm1154, %v1153, %v1151
    %s1156 = scalar_lea.vmem [#allocation1], 1524
    %v1157 = vld [vmem:[%s1156] sm:$0x20]
    %vm1158 = vcmask 1045509
    %v1159 = vsel %vm1158, %v1157, %v1155
    %s1160 = scalar_lea.vmem [#allocation1], 1779
    %v1161 = vld [vmem:[%s1160] sm:$0x40]
    %vm1162 = vcmask 1046534
    %v1163 = vsel %vm1162, %v1161, %v1159
    %s1164 = scalar_lea.vmem [#allocation1], 2034
    %v1165 = vld [vmem:[%s1164] sm:$0x80]
    %vm1166 = vcmask 1047559
    %v1167 = vsel %vm1166, %v1165, %v1163
    %1168 = vrot.lane.b32.xlu0 %v1167, 124
    %v1169 = vpop.permute.xlu0 %1168
    %vm1170 = vcmask 1048544
    %s1171 = scalar_lea.vmem [#allocation0], 16
    %1172 = vst.msk [vmem:[%s1171] sm:$0xf] %vm1170, %v1169
    %s1173 = scalar_lea.vmem [#allocation0], 20
    %1174 = vst.msk [vmem:[%s1173] sm:$0xf0] %vm1170, %v1169
    %s1175 = scalar_lea.vmem [#allocation1], 120
    %v1176 = vld [vmem:[%s1175] sm:$0x1]
    %s1177 = scalar_lea.vmem [#allocation1], 375
    %v1178 = vld [vmem:[%s1177] sm:$0x2]
    %vm1179 = vcmask 1041409
    %v1180 = vsel %vm1179, %v1178, %v1176
    %s1181 = scalar_lea.vmem [#allocation1], 630
    %v1182 = vld [vmem:[%s1181] sm:$0x4]
    %vm1183 = vcmask 1042434
    %v1184 = vsel %vm1183, %v1182, %v1180
    %s1185 = scalar_lea.vmem [#allocation1], 885
    %v1186 = vld [vmem:[%s1185] sm:$0x8]
    %vm1187 = vcmask 1043459
    %v1188 = vsel %vm1187, %v1186, %v1184
    %s1189 = scalar_lea.vmem [#allocation1], 244
    %v1190 = vld [vmem:[%s1189] sm:$0x10]
    %vm1191 = vcmask 1044484
    %v1192 = vsel %vm1191, %v1190, %v1188
    %s1193 = scalar_lea.vmem [#allocation1], 499
    %v1194 = vld [vmem:[%s1193] sm:$0x20]
    %vm1195 = vcmask 1045509
    %v1196 = vsel %vm1195, %v1194, %v1192
    %s1197 = scalar_lea.vmem [#allocation1], 754
    %v1198 = vld [vmem:[%s1197] sm:$0x40]
    %vm1199 = vcmask 1046534
    %v1200 = vsel %vm1199, %v1198, %v1196
    %s1201 = scalar_lea.vmem [#allocation1], 1009
    %v1202 = vld [vmem:[%s1201] sm:$0x80]
    %vm1203 = vcmask 1047559
    %v1204 = vsel %vm1203, %v1202, %v1200
    %1205 = vrot.lane.b32.xlu0 %v1204, 120
    %v1206 = vpop.permute.xlu0 %1205
    %vm1207 = vcmask 1015744
    %1208 = vst.msk [vmem:[#allocation0] sm:$0xf] %vm1207, %v1206
    %s1209 = scalar_lea.vmem [#allocation0], 4
    %1210 = vst.msk [vmem:[%s1209] sm:$0xf0] %vm1207, %v1206
    %s1211 = scalar_lea.vmem [#allocation1], 1144
    %v1212 = vld [vmem:[%s1211] sm:$0x1]
    %s1213 = scalar_lea.vmem [#allocation1], 1399
    %v1214 = vld [vmem:[%s1213] sm:$0x2]
    %vm1215 = vcmask 1041409
    %v1216 = vsel %vm1215, %v1214, %v1212
    %s1217 = scalar_lea.vmem [#allocation1], 1654
    %v1218 = vld [vmem:[%s1217] sm:$0x4]
    %vm1219 = vcmask 1042434
    %v1220 = vsel %vm1219, %v1218, %v1216
    %s1221 = scalar_lea.vmem [#allocation1], 1909
    %v1222 = vld [vmem:[%s1221] sm:$0x8]
    %vm1223 = vcmask 1043459
    %v1224 = vsel %vm1223, %v1222, %v1220
    %s1225 = scalar_lea.vmem [#allocation1], 1268
    %v1226 = vld [vmem:[%s1225] sm:$0x10]
    %vm1227 = vcmask 1044484
    %v1228 = vsel %vm1227, %v1226, %v1224
    %s1229 = scalar_lea.vmem [#allocation1], 1523
    %v1230 = vld [vmem:[%s1229] sm:$0x20]
    %vm1231 = vcmask 1045509
    %v1232 = vsel %vm1231, %v1230, %v1228
    %s1233 = scalar_lea.vmem [#allocation1], 1778
    %v1234 = vld [vmem:[%s1233] sm:$0x40]
    %vm1235 = vcmask 1046534
    %v1236 = vsel %vm1235, %v1234, %v1232
    %s1237 = scalar_lea.vmem [#allocation1], 2033
    %v1238 = vld [vmem:[%s1237] sm:$0x80]
    %vm1239 = vcmask 1047559
    %v1240 = vsel %vm1239, %v1238, %v1236
    %1241 = vrot.lane.b32.xlu0 %v1240, 120
    %v1242 = vpop.permute.xlu0 %1241
    %vm1243 = vcmask 1015744
    %s1244 = scalar_lea.vmem [#allocation0], 16
    %1245 = vst.msk [vmem:[%s1244] sm:$0xf] %vm1243, %v1242
    %s1246 = scalar_lea.vmem [#allocation0], 20
    %1247 = vst.msk [vmem:[%s1246] sm:$0xf0] %vm1243, %v1242
    %s1248 = scalar_lea.vmem [#allocation1], 113
    %v1249 = vld [vmem:[%s1248] sm:$0x1]
    %s1250 = scalar_lea.vmem [#allocation1], 368
    %v1251 = vld [vmem:[%s1250] sm:$0x2]
    %vm1252 = vcmask 1041409
    %v1253 = vsel %vm1252, %v1251, %v1249
    %s1254 = scalar_lea.vmem [#allocation1], 623
    %v1255 = vld [vmem:[%s1254] sm:$0x4]
    %vm1256 = vcmask 1042434
    %v1257 = vsel %vm1256, %v1255, %v1253
    %s1258 = scalar_lea.vmem [#allocation1], 878
    %v1259 = vld [vmem:[%s1258] sm:$0x8]
    %vm1260 = vcmask 1043459
    %v1261 = vsel %vm1260, %v1259, %v1257
    %s1262 = scalar_lea.vmem [#allocation1], 237
    %v1263 = vld [vmem:[%s1262] sm:$0x10]
    %vm1264 = vcmask 1044484
    %v1265 = vsel %vm1264, %v1263, %v1261
    %s1266 = scalar_lea.vmem [#allocation1], 492
    %v1267 = vld [vmem:[%s1266] sm:$0x20]
    %vm1268 = vcmask 1045509
    %v1269 = vsel %vm1268, %v1267, %v1265
    %s1270 = scalar_lea.vmem [#allocation1], 747
    %v1271 = vld [vmem:[%s1270] sm:$0x40]
    %vm1272 = vcmask 1046534
    %v1273 = vsel %vm1272, %v1271, %v1269
    %s1274 = scalar_lea.vmem [#allocation1], 1002
    %v1275 = vld [vmem:[%s1274] sm:$0x80]
    %vm1276 = vcmask 1047559
    %v1277 = vsel %vm1276, %v1275, %v1273
    %1278 = vrot.lane.b32.xlu0 %v1277, 116
    %v1279 = vpop.permute.xlu0 %1278
    %vm1280 = vcmask 982944
    %1281 = vst.msk [vmem:[#allocation0] sm:$0xf] %vm1280, %v1279
    %s1282 = scalar_lea.vmem [#allocation0], 4
    %1283 = vst.msk [vmem:[%s1282] sm:$0xf0] %vm1280, %v1279
    %s1284 = scalar_lea.vmem [#allocation1], 1137
    %v1285 = vld [vmem:[%s1284] sm:$0x1]
    %s1286 = scalar_lea.vmem [#allocation1], 1392
    %v1287 = vld [vmem:[%s1286] sm:$0x2]
    %vm1288 = vcmask 1041409
    %v1289 = vsel %vm1288, %v1287, %v1285
    %s1290 = scalar_lea.vmem [#allocation1], 1647
    %v1291 = vld [vmem:[%s1290] sm:$0x4]
    %vm1292 = vcmask 1042434
    %v1293 = vsel %vm1292, %v1291, %v1289
    %s1294 = scalar_lea.vmem [#allocation1], 1902
    %v1295 = vld [vmem:[%s1294] sm:$0x8]
    %vm1296 = vcmask 1043459
    %v1297 = vsel %vm1296, %v1295, %v1293
    %s1298 = scalar_lea.vmem [#allocation1], 1261
    %v1299 = vld [vmem:[%s1298] sm:$0x10]
    %vm1300 = vcmask 1044484
    %v1301 = vsel %vm1300, %v1299, %v1297
    %s1302 = scalar_lea.vmem [#allocation1], 1516
    %v1303 = vld [vmem:[%s1302] sm:$0x20]
    %vm1304 = vcmask 1045509
    %v1305 = vsel %vm1304, %v1303, %v1301
    %s1306 = scalar_lea.vmem [#allocation1], 1771
    %v1307 = vld [vmem:[%s1306] sm:$0x40]
    %vm1308 = vcmask 1046534
    %v1309 = vsel %vm1308, %v1307, %v1305
    %s1310 = scalar_lea.vmem [#allocation1], 2026
    %v1311 = vld [vmem:[%s1310] sm:$0x80]
    %vm1312 = vcmask 1047559
    %v1313 = vsel %vm1312, %v1311, %v1309
    %1314 = vrot.lane.b32.xlu0 %v1313, 116
    %v1315 = vpop.permute.xlu0 %1314
    %vm1316 = vcmask 982944
    %s1317 = scalar_lea.vmem [#allocation0], 16
    %1318 = vst.msk [vmem:[%s1317] sm:$0xf] %vm1316, %v1315
    %s1319 = scalar_lea.vmem [#allocation0], 20
    %1320 = vst.msk [vmem:[%s1319] sm:$0xf0] %vm1316, %v1315
    %s1321 = scalar_lea.vmem [#allocation1], 112
    %v1322 = vld [vmem:[%s1321] sm:$0x1]
    %s1323 = scalar_lea.vmem [#allocation1], 367
    %v1324 = vld [vmem:[%s1323] sm:$0x2]
    %vm1325 = vcmask 1041409
    %v1326 = vsel %vm1325, %v1324, %v1322
    %s1327 = scalar_lea.vmem [#allocation1], 622
    %v1328 = vld [vmem:[%s1327] sm:$0x4]
    %vm1329 = vcmask 1042434
    %v1330 = vsel %vm1329, %v1328, %v1326
    %s1331 = scalar_lea.vmem [#allocation1], 877
    %v1332 = vld [vmem:[%s1331] sm:$0x8]
    %vm1333 = vcmask 1043459
    %v1334 = vsel %vm1333, %v1332, %v1330
    %s1335 = scalar_lea.vmem [#allocation1], 236
    %v1336 = vld [vmem:[%s1335] sm:$0x10]
    %vm1337 = vcmask 1044484
    %v1338 = vsel %vm1337, %v1336, %v1334
    %s1339 = scalar_lea.vmem [#allocation1], 491
    %v1340 = vld [vmem:[%s1339] sm:$0x20]
    %vm1341 = vcmask 1045509
    %v1342 = vsel %vm1341, %v1340, %v1338
    %s1343 = scalar_lea.vmem [#allocation1], 746
    %v1344 = vld [vmem:[%s1343] sm:$0x40]
    %vm1345 = vcmask 1046534
    %v1346 = vsel %vm1345, %v1344, %v1342
    %s1347 = scalar_lea.vmem [#allocation1], 1001
    %v1348 = vld [vmem:[%s1347] sm:$0x80]
    %vm1349 = vcmask 1047559
    %v1350 = vsel %vm1349, %v1348, %v1346
    %1351 = vrot.lane.b32.xlu0 %v1350, 112
    %v1352 = vpop.permute.xlu0 %1351
    %vm1353 = vcmask 950144
    %1354 = vst.msk [vmem:[#allocation0] sm:$0xf] %vm1353, %v1352
    %s1355 = scalar_lea.vmem [#allocation0], 4
    %1356 = vst.msk [vmem:[%s1355] sm:$0xf0] %vm1353, %v1352
    %s1357 = scalar_lea.vmem [#allocation1], 1136
    %v1358 = vld [vmem:[%s1357] sm:$0x1]
    %s1359 = scalar_lea.vmem [#allocation1], 1391
    %v1360 = vld [vmem:[%s1359] sm:$0x2]
    %vm1361 = vcmask 1041409
    %v1362 = vsel %vm1361, %v1360, %v1358
    %s1363 = scalar_lea.vmem [#allocation1], 1646
    %v1364 = vld [vmem:[%s1363] sm:$0x4]
    %vm1365 = vcmask 1042434
    %v1366 = vsel %vm1365, %v1364, %v1362
    %s1367 = scalar_lea.vmem [#allocation1], 1901
    %v1368 = vld [vmem:[%s1367] sm:$0x8]
    %vm1369 = vcmask 1043459
    %v1370 = vsel %vm1369, %v1368, %v1366
    %s1371 = scalar_lea.vmem [#allocation1], 1260
    %v1372 = vld [vmem:[%s1371] sm:$0x10]
    %vm1373 = vcmask 1044484
    %v1374 = vsel %vm1373, %v1372, %v1370
    %s1375 = scalar_lea.vmem [#allocation1], 1515
    %v1376 = vld [vmem:[%s1375] sm:$0x20]
    %vm1377 = vcmask 1045509
    %v1378 = vsel %vm1377, %v1376, %v1374
    %s1379 = scalar_lea.vmem [#allocation1], 1770
    %v1380 = vld [vmem:[%s1379] sm:$0x40]
    %vm1381 = vcmask 1046534
    %v1382 = vsel %vm1381, %v1380, %v1378
    %s1383 = scalar_lea.vmem [#allocation1], 2025
    %v1384 = vld [vmem:[%s1383] sm:$0x80]
    %vm1385 = vcmask 1047559
    %v1386 = vsel %vm1385, %v1384, %v1382
    %1387 = vrot.lane.b32.xlu0 %v1386, 112
    %v1388 = vpop.permute.xlu0 %1387
    %vm1389 = vcmask 950144
    %s1390 = scalar_lea.vmem [#allocation0], 16
    %1391 = vst.msk [vmem:[%s1390] sm:$0xf] %vm1389, %v1388
    %s1392 = scalar_lea.vmem [#allocation0], 20
    %1393 = vst.msk [vmem:[%s1392] sm:$0xf0] %vm1389, %v1388
    %s1394 = scalar_lea.vmem [#allocation1], 105
    %v1395 = vld [vmem:[%s1394] sm:$0x1]
    %s1396 = scalar_lea.vmem [#allocation1], 360
    %v1397 = vld [vmem:[%s1396] sm:$0x2]
    %vm1398 = vcmask 1041409
    %v1399 = vsel %vm1398, %v1397, %v1395
    %s1400 = scalar_lea.vmem [#allocation1], 615
    %v1401 = vld [vmem:[%s1400] sm:$0x4]
    %vm1402 = vcmask 1042434
    %v1403 = vsel %vm1402, %v1401, %v1399
    %s1404 = scalar_lea.vmem [#allocation1], 870
    %v1405 = vld [vmem:[%s1404] sm:$0x8]
    %vm1406 = vcmask 1043459
    %v1407 = vsel %vm1406, %v1405, %v1403
    %s1408 = scalar_lea.vmem [#allocation1], 229
    %v1409 = vld [vmem:[%s1408] sm:$0x10]
    %vm1410 = vcmask 1044484
    %v1411 = vsel %vm1410, %v1409, %v1407
    %s1412 = scalar_lea.vmem [#allocation1], 484
    %v1413 = vld [vmem:[%s1412] sm:$0x20]
    %vm1414 = vcmask 1045509
    %v1415 = vsel %vm1414, %v1413, %v1411
    %s1416 = scalar_lea.vmem [#allocation1], 739
    %v1417 = vld [vmem:[%s1416] sm:$0x40]
    %vm1418 = vcmask 1046534
    %v1419 = vsel %vm1418, %v1417, %v1415
    %s1420 = scalar_lea.vmem [#allocation1], 994
    %v1421 = vld [vmem:[%s1420] sm:$0x80]
    %vm1422 = vcmask 1047559
    %v1423 = vsel %vm1422, %v1421, %v1419
    %1424 = vrot.lane.b32.xlu0 %v1423, 108
    %v1425 = vpop.permute.xlu0 %1424
    %vm1426 = vcmask 917344
    %1427 = vst.msk [vmem:[#allocation0] sm:$0xf] %vm1426, %v1425
    %s1428 = scalar_lea.vmem [#allocation0], 4
    %1429 = vst.msk [vmem:[%s1428] sm:$0xf0] %vm1426, %v1425
    %s1430 = scalar_lea.vmem [#allocation1], 1129
    %v1431 = vld [vmem:[%s1430] sm:$0x1]
    %s1432 = scalar_lea.vmem [#allocation1], 1384
    %v1433 = vld [vmem:[%s1432] sm:$0x2]
    %vm1434 = vcmask 1041409
    %v1435 = vsel %vm1434, %v1433, %v1431
    %s1436 = scalar_lea.vmem [#allocation1], 1639
    %v1437 = vld [vmem:[%s1436] sm:$0x4]
    %vm1438 = vcmask 1042434
    %v1439 = vsel %vm1438, %v1437, %v1435
    %s1440 = scalar_lea.vmem [#allocation1], 1894
    %v1441 = vld [vmem:[%s1440] sm:$0x8]
    %vm1442 = vcmask 1043459
    %v1443 = vsel %vm1442, %v1441, %v1439
    %s1444 = scalar_lea.vmem [#allocation1], 1253
    %v1445 = vld [vmem:[%s1444] sm:$0x10]
    %vm1446 = vcmask 1044484
    %v1447 = vsel %vm1446, %v1445, %v1443
    %s1448 = scalar_lea.vmem [#allocation1], 1508
    %v1449 = vld [vmem:[%s1448] sm:$0x20]
    %vm1450 = vcmask 1045509
    %v1451 = vsel %vm1450, %v1449, %v1447
    %s1452 = scalar_lea.vmem [#allocation1], 1763
    %v1453 = vld [vmem:[%s1452] sm:$0x40]
    %vm1454 = vcmask 1046534
    %v1455 = vsel %vm1454, %v1453, %v1451
    %s1456 = scalar_lea.vmem [#allocation1], 2018
    %v1457 = vld [vmem:[%s1456] sm:$0x80]
    %vm1458 = vcmask 1047559
    %v1459 = vsel %vm1458, %v1457, %v1455
    %1460 = vrot.lane.b32.xlu0 %v1459, 108
    %v1461 = vpop.permute.xlu0 %1460
    %vm1462 = vcmask 917344
    %s1463 = scalar_lea.vmem [#allocation0], 16
    %1464 = vst.msk [vmem:[%s1463] sm:$0xf] %vm1462, %v1461
    %s1465 = scalar_lea.vmem [#allocation0], 20
    %1466 = vst.msk [vmem:[%s1465] sm:$0xf0] %vm1462, %v1461
    %s1467 = scalar_lea.vmem [#allocation1], 104
    %v1468 = vld [vmem:[%s1467] sm:$0x1]
    %s1469 = scalar_lea.vmem [#allocation1], 359
    %v1470 = vld [vmem:[%s1469] sm:$0x2]
    %vm1471 = vcmask 1041409
    %v1472 = vsel %vm1471, %v1470, %v1468
    %s1473 = scalar_lea.vmem [#allocation1], 614
    %v1474 = vld [vmem:[%s1473] sm:$0x4]
    %vm1475 = vcmask 1042434
    %v1476 = vsel %vm1475, %v1474, %v1472
    %s1477 = scalar_lea.vmem [#allocation1], 869
    %v1478 = vld [vmem:[%s1477] sm:$0x8]
    %vm1479 = vcmask 1043459
    %v1480 = vsel %vm1479, %v1478, %v1476
    %s1481 = scalar_lea.vmem [#allocation1], 228
    %v1482 = vld [vmem:[%s1481] sm:$0x10]
    %vm1483 = vcmask 1044484
    %v1484 = vsel %vm1483, %v1482, %v1480
    %s1485 = scalar_lea.vmem [#allocation1], 483
    %v1486 = vld [vmem:[%s1485] sm:$0x20]
    %vm1487 = vcmask 1045509
    %v1488 = vsel %vm1487, %v1486, %v1484
    %s1489 = scalar_lea.vmem [#allocation1], 738
    %v1490 = vld [vmem:[%s1489] sm:$0x40]
    %vm1491 = vcmask 1046534
    %v1492 = vsel %vm1491, %v1490, %v1488
    %s1493 = scalar_lea.vmem [#allocation1], 993
    %v1494 = vld [vmem:[%s1493] sm:$0x80]
    %vm1495 = vcmask 1047559
    %v1496 = vsel %vm1495, %v1494, %v1492
    %1497 = vrot.lane.b32.xlu0 %v1496, 104
    %v1498 = vpop.permute.xlu0 %1497
    %vm1499 = vcmask 884544
    %1500 = vst.msk [vmem:[#allocation0] sm:$0xf] %vm1499, %v1498
    %s1501 = scalar_lea.vmem [#allocation0], 4
    %1502 = vst.msk [vmem:[%s1501] sm:$0xf0] %vm1499, %v1498
    %s1503 = scalar_lea.vmem [#allocation1], 1128
    %v1504 = vld [vmem:[%s1503] sm:$0x1]
    %s1505 = scalar_lea.vmem [#allocation1], 1383
    %v1506 = vld [vmem:[%s1505] sm:$0x2]
    %vm1507 = vcmask 1041409
    %v1508 = vsel %vm1507, %v1506, %v1504
    %s1509 = scalar_lea.vmem [#allocation1], 1638
    %v1510 = vld [vmem:[%s1509] sm:$0x4]
    %vm1511 = vcmask 1042434
    %v1512 = vsel %vm1511, %v1510, %v1508
    %s1513 = scalar_lea.vmem [#allocation1], 1893
    %v1514 = vld [vmem:[%s1513] sm:$0x8]
    %vm1515 = vcmask 1043459
    %v1516 = vsel %vm1515, %v1514, %v1512
    %s1517 = scalar_lea.vmem [#allocation1], 1252
    %v1518 = vld [vmem:[%s1517] sm:$0x10]
    %vm1519 = vcmask 1044484
    %v1520 = vsel %vm1519, %v1518, %v1516
    %s1521 = scalar_lea.vmem [#allocation1], 1507
    %v1522 = vld [vmem:[%s1521] sm:$0x20]
    %vm1523 = vcmask 1045509
    %v1524 = vsel %vm1523, %v1522, %v1520
    %s1525 = scalar_lea.vmem [#allocation1], 1762
    %v1526 = vld [vmem:[%s1525] sm:$0x40]
    %vm1527 = vcmask 1046534
    %v1528 = vsel %vm1527, %v1526, %v1524
    %s1529 = scalar_lea.vmem [#allocation1], 2017
    %v1530 = vld [vmem:[%s1529] sm:$0x80]
    %vm1531 = vcmask 1047559
    %v1532 = vsel %vm1531, %v1530, %v1528
    %1533 = vrot.lane.b32.xlu0 %v1532, 104
    %v1534 = vpop.permute.xlu0 %1533
    %vm1535 = vcmask 884544
    %s1536 = scalar_lea.vmem [#allocation0], 16
    %1537 = vst.msk [vmem:[%s1536] sm:$0xf] %vm1535, %v1534
    %s1538 = scalar_lea.vmem [#allocation0], 20
    %1539 = vst.msk [vmem:[%s1538] sm:$0xf0] %vm1535, %v1534
    %s1540 = scalar_lea.vmem [#allocation1], 97
    %v1541 = vld [vmem:[%s1540] sm:$0x1]
    %s1542 = scalar_lea.vmem [#allocation1], 352
    %v1543 = vld [vmem:[%s1542] sm:$0x2]
    %vm1544 = vcmask 1041409
    %v1545 = vsel %vm1544, %v1543, %v1541
    %s1546 = scalar_lea.vmem [#allocation1], 607
    %v1547 = vld [vmem:[%s1546] sm:$0x4]
    %vm1548 = vcmask 1042434
    %v1549 = vsel %vm1548, %v1547, %v1545
    %s1550 = scalar_lea.vmem [#allocation1], 862
    %v1551 = vld [vmem:[%s1550] sm:$0x8]
    %vm1552 = vcmask 1043459
    %v1553 = vsel %vm1552, %v1551, %v1549
    %s1554 = scalar_lea.vmem [#allocation1], 221
    %v1555 = vld [vmem:[%s1554] sm:$0x10]
    %vm1556 = vcmask 1044484
    %v1557 = vsel %vm1556, %v1555, %v1553
    %s1558 = scalar_lea.vmem [#allocation1], 476
    %v1559 = vld [vmem:[%s1558] sm:$0x20]
    %vm1560 = vcmask 1045509
    %v1561 = vsel %vm1560, %v1559, %v1557
    %s1562 = scalar_lea.vmem [#allocation1], 731
    %v1563 = vld [vmem:[%s1562] sm:$0x40]
    %vm1564 = vcmask 1046534
    %v1565 = vsel %vm1564, %v1563, %v1561
    %s1566 = scalar_lea.vmem [#allocation1], 986
    %v1567 = vld [vmem:[%s1566] sm:$0x80]
    %vm1568 = vcmask 1047559
    %v1569 = vsel %vm1568, %v1567, %v1565
    %1570 = vrot.lane.b32.xlu0 %v1569, 100
    %v1571 = vpop.permute.xlu0 %1570
    %vm1572 = vcmask 851744
    %1573 = vst.msk [vmem:[#allocation0] sm:$0xf] %vm1572, %v1571
    %s1574 = scalar_lea.vmem [#allocation0], 4
    %1575 = vst.msk [vmem:[%s1574] sm:$0xf0] %vm1572, %v1571
    %s1576 = scalar_lea.vmem [#allocation1], 1121
    %v1577 = vld [vmem:[%s1576] sm:$0x1]
    %s1578 = scalar_lea.vmem [#allocation1], 1376
    %v1579 = vld [vmem:[%s1578] sm:$0x2]
    %vm1580 = vcmask 1041409
    %v1581 = vsel %vm1580, %v1579, %v1577
    %s1582 = scalar_lea.vmem [#allocation1], 1631
    %v1583 = vld [vmem:[%s1582] sm:$0x4]
    %vm1584 = vcmask 1042434
    %v1585 = vsel %vm1584, %v1583, %v1581
    %s1586 = scalar_lea.vmem [#allocation1], 1886
    %v1587 = vld [vmem:[%s1586] sm:$0x8]
    %vm1588 = vcmask 1043459
    %v1589 = vsel %vm1588, %v1587, %v1585
    %s1590 = scalar_lea.vmem [#allocation1], 1245
    %v1591 = vld [vmem:[%s1590] sm:$0x10]
    %vm1592 = vcmask 1044484
    %v1593 = vsel %vm1592, %v1591, %v1589
    %s1594 = scalar_lea.vmem [#allocation1], 1500
    %v1595 = vld [vmem:[%s1594] sm:$0x20]
    %vm1596 = vcmask 1045509
    %v1597 = vsel %vm1596, %v1595, %v1593
    %s1598 = scalar_lea.vmem [#allocation1], 1755
    %v1599 = vld [vmem:[%s1598] sm:$0x40]
    %vm1600 = vcmask 1046534
    %v1601 = vsel %vm1600, %v1599, %v1597
    %s1602 = scalar_lea.vmem [#allocation1], 2010
    %v1603 = vld [vmem:[%s1602] sm:$0x80]
    %vm1604 = vcmask 1047559
    %v1605 = vsel %vm1604, %v1603, %v1601
    %1606 = vrot.lane.b32.xlu0 %v1605, 100
    %v1607 = vpop.permute.xlu0 %1606
    %vm1608 = vcmask 851744
    %s1609 = scalar_lea.vmem [#allocation0], 16
    %1610 = vst.msk [vmem:[%s1609] sm:$0xf] %vm1608, %v1607
    %s1611 = scalar_lea.vmem [#allocation0], 20
    %1612 = vst.msk [vmem:[%s1611] sm:$0xf0] %vm1608, %v1607
    %s1613 = scalar_lea.vmem [#allocation1], 96
    %v1614 = vld [vmem:[%s1613] sm:$0x1]
    %s1615 = scalar_lea.vmem [#allocation1], 351
    %v1616 = vld [vmem:[%s1615] sm:$0x2]
    %vm1617 = vcmask 1041409
    %v1618 = vsel %vm1617, %v1616, %v1614
    %s1619 = scalar_lea.vmem [#allocation1], 606
    %v1620 = vld [vmem:[%s1619] sm:$0x4]
    %vm1621 = vcmask 1042434
    %v1622 = vsel %vm1621, %v1620, %v1618
    %s1623 = scalar_lea.vmem [#allocation1], 861
    %v1624 = vld [vmem:[%s1623] sm:$0x8]
    %vm1625 = vcmask 1043459
    %v1626 = vsel %vm1625, %v1624, %v1622
    %s1627 = scalar_lea.vmem [#allocation1], 220
    %v1628 = vld [vmem:[%s1627] sm:$0x10]
    %vm1629 = vcmask 1044484
    %v1630 = vsel %vm1629, %v1628, %v1626
    %s1631 = scalar_lea.vmem [#allocation1], 475
    %v1632 = vld [vmem:[%s1631] sm:$0x20]
    %vm1633 = vcmask 1045509
    %v1634 = vsel %vm1633, %v1632, %v1630
    %s1635 = scalar_lea.vmem [#allocation1], 730
    %v1636 = vld [vmem:[%s1635] sm:$0x40]
    %vm1637 = vcmask 1046534
    %v1638 = vsel %vm1637, %v1636, %v1634
    %s1639 = scalar_lea.vmem [#allocation1], 985
    %v1640 = vld [vmem:[%s1639] sm:$0x80]
    %vm1641 = vcmask 1047559
    %v1642 = vsel %vm1641, %v1640, %v1638
    %1643 = vrot.lane.b32.xlu0 %v1642, 96
    %v1644 = vpop.permute.xlu0 %1643
    %vm1645 = vcmask 818944
    %1646 = vst.msk [vmem:[#allocation0] sm:$0xf] %vm1645, %v1644
    %s1647 = scalar_lea.vmem [#allocation0], 4
    %1648 = vst.msk [vmem:[%s1647] sm:$0xf0] %vm1645, %v1644
    %s1649 = scalar_lea.vmem [#allocation1], 1120
    %v1650 = vld [vmem:[%s1649] sm:$0x1]
    %s1651 = scalar_lea.vmem [#allocation1], 1375
    %v1652 = vld [vmem:[%s1651] sm:$0x2]
    %vm1653 = vcmask 1041409
    %v1654 = vsel %vm1653, %v1652, %v1650
    %s1655 = scalar_lea.vmem [#allocation1], 1630
    %v1656 = vld [vmem:[%s1655] sm:$0x4]
    %vm1657 = vcmask 1042434
    %v1658 = vsel %vm1657, %v1656, %v1654
    %s1659 = scalar_lea.vmem [#allocation1], 1885
    %v1660 = vld [vmem:[%s1659] sm:$0x8]
    %vm1661 = vcmask 1043459
    %v1662 = vsel %vm1661, %v1660, %v1658
    %s1663 = scalar_lea.vmem [#allocation1], 1244
    %v1664 = vld [vmem:[%s1663] sm:$0x10]
    %vm1665 = vcmask 1044484
    %v1666 = vsel %vm1665, %v1664, %v1662
    %s1667 = scalar_lea.vmem [#allocation1], 1499
    %v1668 = vld [vmem:[%s1667] sm:$0x20]
    %vm1669 = vcmask 1045509
    %v1670 = vsel %vm1669, %v1668, %v1666
    %s1671 = scalar_lea.vmem [#allocation1], 1754
    %v1672 = vld [vmem:[%s1671] sm:$0x40]
    %vm1673 = vcmask 1046534
    %v1674 = vsel %vm1673, %v1672, %v1670
    %s1675 = scalar_lea.vmem [#allocation1], 2009
    %v1676 = vld [vmem:[%s1675] sm:$0x80]
    %vm1677 = vcmask 1047559
    %v1678 = vsel %vm1677, %v1676, %v1674
    %1679 = vrot.lane.b32.xlu0 %v1678, 96
    %v1680 = vpop.permute.xlu0 %1679
    %vm1681 = vcmask 818944
    %s1682 = scalar_lea.vmem [#allocation0], 16
    %1683 = vst.msk [vmem:[%s1682] sm:$0xf] %vm1681, %v1680
    %s1684 = scalar_lea.vmem [#allocation0], 20
    %1685 = vst.msk [vmem:[%s1684] sm:$0xf0] %vm1681, %v1680
    %s1686 = scalar_lea.vmem [#allocation1], 89
    %v1687 = vld [vmem:[%s1686] sm:$0x1]
    %s1688 = scalar_lea.vmem [#allocation1], 344
    %v1689 = vld [vmem:[%s1688] sm:$0x2]
    %vm1690 = vcmask 1041409
    %v1691 = vsel %vm1690, %v1689, %v1687
    %s1692 = scalar_lea.vmem [#allocation1], 599
    %v1693 = vld [vmem:[%s1692] sm:$0x4]
    %vm1694 = vcmask 1042434
    %v1695 = vsel %vm1694, %v1693, %v1691
    %s1696 = scalar_lea.vmem [#allocation1], 854
    %v1697 = vld [vmem:[%s1696] sm:$0x8]
    %vm1698 = vcmask 1043459
    %v1699 = vsel %vm1698, %v1697, %v1695
    %s1700 = scalar_lea.vmem [#allocation1], 213
    %v1701 = vld [vmem:[%s1700] sm:$0x10]
    %vm1702 = vcmask 1044484
    %v1703 = vsel %vm1702, %v1701, %v1699
    %s1704 = scalar_lea.vmem [#allocation1], 468
    %v1705 = vld [vmem:[%s1704] sm:$0x20]
    %vm1706 = vcmask 1045509
    %v1707 = vsel %vm1706, %v1705, %v1703
    %s1708 = scalar_lea.vmem [#allocation1], 723
    %v1709 = vld [vmem:[%s1708] sm:$0x40]
    %vm1710 = vcmask 1046534
    %v1711 = vsel %vm1710, %v1709, %v1707
    %s1712 = scalar_lea.vmem [#allocation1], 978
    %v1713 = vld [vmem:[%s1712] sm:$0x80]
    %vm1714 = vcmask 1047559
    %v1715 = vsel %vm1714, %v1713, %v1711
    %1716 = vrot.lane.b32.xlu0 %v1715, 92
    %v1717 = vpop.permute.xlu0 %1716
    %vm1718 = vcmask 786144
    %1719 = vst.msk [vmem:[#allocation0] sm:$0xf] %vm1718, %v1717
    %s1720 = scalar_lea.vmem [#allocation0], 4
    %1721 = vst.msk [vmem:[%s1720] sm:$0xf0] %vm1718, %v1717
    %s1722 = scalar_lea.vmem [#allocation1], 1113
    %v1723 = vld [vmem:[%s1722] sm:$0x1]
    %s1724 = scalar_lea.vmem [#allocation1], 1368
    %v1725 = vld [vmem:[%s1724] sm:$0x2]
    %vm1726 = vcmask 1041409
    %v1727 = vsel %vm1726, %v1725, %v1723
    %s1728 = scalar_lea.vmem [#allocation1], 1623
    %v1729 = vld [vmem:[%s1728] sm:$0x4]
    %vm1730 = vcmask 1042434
    %v1731 = vsel %vm1730, %v1729, %v1727
    %s1732 = scalar_lea.vmem [#allocation1], 1878
    %v1733 = vld [vmem:[%s1732] sm:$0x8]
    %vm1734 = vcmask 1043459
    %v1735 = vsel %vm1734, %v1733, %v1731
    %s1736 = scalar_lea.vmem [#allocation1], 1237
    %v1737 = vld [vmem:[%s1736] sm:$0x10]
    %vm1738 = vcmask 1044484
    %v1739 = vsel %vm1738, %v1737, %v1735
    %s1740 = scalar_lea.vmem [#allocation1], 1492
    %v1741 = vld [vmem:[%s1740] sm:$0x20]
    %vm1742 = vcmask 1045509
    %v1743 = vsel %vm1742, %v1741, %v1739
    %s1744 = scalar_lea.vmem [#allocation1], 1747
    %v1745 = vld [vmem:[%s1744] sm:$0x40]
    %vm1746 = vcmask 1046534
    %v1747 = vsel %vm1746, %v1745, %v1743
    %s1748 = scalar_lea.vmem [#allocation1], 2002
    %v1749 = vld [vmem:[%s1748] sm:$0x80]
    %vm1750 = vcmask 1047559
    %v1751 = vsel %vm1750, %v1749, %v1747
    %1752 = vrot.lane.b32.xlu0 %v1751, 92
    %v1753 = vpop.permute.xlu0 %1752
    %vm1754 = vcmask 786144
    %s1755 = scalar_lea.vmem [#allocation0], 16
    %1756 = vst.msk [vmem:[%s1755] sm:$0xf] %vm1754, %v1753
    %s1757 = scalar_lea.vmem [#allocation0], 20
    %1758 = vst.msk [vmem:[%s1757] sm:$0xf0] %vm1754, %v1753
    %s1759 = scalar_lea.vmem [#allocation1], 88
    %v1760 = vld [vmem:[%s1759] sm:$0x1]
    %s1761 = scalar_lea.vmem [#allocation1], 343
    %v1762 = vld [vmem:[%s1761] sm:$0x2]
    %vm1763 = vcmask 1041409
    %v1764 = vsel %vm1763, %v1762, %v1760
    %s1765 = scalar_lea.vmem [#allocation1], 598
    %v1766 = vld [vmem:[%s1765] sm:$0x4]
    %vm1767 = vcmask 1042434
    %v1768 = vsel %vm1767, %v1766, %v1764
    %s1769 = scalar_lea.vmem [#allocation1], 853
    %v1770 = vld [vmem:[%s1769] sm:$0x8]
    %vm1771 = vcmask 1043459
    %v1772 = vsel %vm1771, %v1770, %v1768
    %s1773 = scalar_lea.vmem [#allocation1], 212
    %v1774 = vld [vmem:[%s1773] sm:$0x10]
    %vm1775 = vcmask 1044484
    %v1776 = vsel %vm1775, %v1774, %v1772
    %s1777 = scalar_lea.vmem [#allocation1], 467
    %v1778 = vld [vmem:[%s1777] sm:$0x20]
    %vm1779 = vcmask 1045509
    %v1780 = vsel %vm1779, %v1778, %v1776
    %s1781 = scalar_lea.vmem [#allocation1], 722
    %v1782 = vld [vmem:[%s1781] sm:$0x40]
    %vm1783 = vcmask 1046534
    %v1784 = vsel %vm1783, %v1782, %v1780
    %s1785 = scalar_lea.vmem [#allocation1], 977
    %v1786 = vld [vmem:[%s1785] sm:$0x80]
    %vm1787 = vcmask 1047559
    %v1788 = vsel %vm1787, %v1786, %v1784
    %1789 = vrot.lane.b32.xlu0 %v1788, 88
    %v1790 = vpop.permute.xlu0 %1789
    %vm1791 = vcmask 753344
    %1792 = vst.msk [vmem:[#allocation0] sm:$0xf] %vm1791, %v1790
    %s1793 = scalar_lea.vmem [#allocation0], 4
    %1794 = vst.msk [vmem:[%s1793] sm:$0xf0] %vm1791, %v1790
    %s1795 = scalar_lea.vmem [#allocation1], 1112
    %v1796 = vld [vmem:[%s1795] sm:$0x1]
    %s1797 = scalar_lea.vmem [#allocation1], 1367
    %v1798 = vld [vmem:[%s1797] sm:$0x2]
    %vm1799 = vcmask 1041409
    %v1800 = vsel %vm1799, %v1798, %v1796
    %s1801 = scalar_lea.vmem [#allocation1], 1622
    %v1802 = vld [vmem:[%s1801] sm:$0x4]
    %vm1803 = vcmask 1042434
    %v1804 = vsel %vm1803, %v1802, %v1800
    %s1805 = scalar_lea.vmem [#allocation1], 1877
    %v1806 = vld [vmem:[%s1805] sm:$0x8]
    %vm1807 = vcmask 1043459
    %v1808 = vsel %vm1807, %v1806, %v1804
    %s1809 = scalar_lea.vmem [#allocation1], 1236
    %v1810 = vld [vmem:[%s1809] sm:$0x10]
    %vm1811 = vcmask 1044484
    %v1812 = vsel %vm1811, %v1810, %v1808
    %s1813 = scalar_lea.vmem [#allocation1], 1491
    %v1814 = vld [vmem:[%s1813] sm:$0x20]
    %vm1815 = vcmask 1045509
    %v1816 = vsel %vm1815, %v1814, %v1812
    %s1817 = scalar_lea.vmem [#allocation1], 1746
    %v1818 = vld [vmem:[%s1817] sm:$0x40]
    %vm1819 = vcmask 1046534
    %v1820 = vsel %vm1819, %v1818, %v1816
    %s1821 = scalar_lea.vmem [#allocation1], 2001
    %v1822 = vld [vmem:[%s1821] sm:$0x80]
    %vm1823 = vcmask 1047559
    %v1824 = vsel %vm1823, %v1822, %v1820
    %1825 = vrot.lane.b32.xlu0 %v1824, 88
    %v1826 = vpop.permute.xlu0 %1825
    %vm1827 = vcmask 753344
    %s1828 = scalar_lea.vmem [#allocation0], 16
    %1829 = vst.msk [vmem:[%s1828] sm:$0xf] %vm1827, %v1826
    %s1830 = scalar_lea.vmem [#allocation0], 20
    %1831 = vst.msk [vmem:[%s1830] sm:$0xf0] %vm1827, %v1826
    %s1832 = scalar_lea.vmem [#allocation1], 81
    %v1833 = vld [vmem:[%s1832] sm:$0x1]
    %s1834 = scalar_lea.vmem [#allocation1], 336
    %v1835 = vld [vmem:[%s1834] sm:$0x2]
    %vm1836 = vcmask 1041409
    %v1837 = vsel %vm1836, %v1835, %v1833
    %s1838 = scalar_lea.vmem [#allocation1], 591
    %v1839 = vld [vmem:[%s1838] sm:$0x4]
    %vm1840 = vcmask 1042434
    %v1841 = vsel %vm1840, %v1839, %v1837
    %s1842 = scalar_lea.vmem [#allocation1], 846
    %v1843 = vld [vmem:[%s1842] sm:$0x8]
    %vm1844 = vcmask 1043459
    %v1845 = vsel %vm1844, %v1843, %v1841
    %s1846 = scalar_lea.vmem [#allocation1], 205
    %v1847 = vld [vmem:[%s1846] sm:$0x10]
    %vm1848 = vcmask 1044484
    %v1849 = vsel %vm1848, %v1847, %v1845
    %s1850 = scalar_lea.vmem [#allocation1], 460
    %v1851 = vld [vmem:[%s1850] sm:$0x20]
    %vm1852 = vcmask 1045509
    %v1853 = vsel %vm1852, %v1851, %v1849
    %s1854 = scalar_lea.vmem [#allocation1], 715
    %v1855 = vld [vmem:[%s1854] sm:$0x40]
    %vm1856 = vcmask 1046534
    %v1857 = vsel %vm1856, %v1855, %v1853
    %s1858 = scalar_lea.vmem [#allocation1], 970
    %v1859 = vld [vmem:[%s1858] sm:$0x80]
    %vm1860 = vcmask 1047559
    %v1861 = vsel %vm1860, %v1859, %v1857
    %1862 = vrot.lane.b32.xlu0 %v1861, 84
    %v1863 = vpop.permute.xlu0 %1862
    %vm1864 = vcmask 720544
    %1865 = vst.msk [vmem:[#allocation0] sm:$0xf] %vm1864, %v1863
    %s1866 = scalar_lea.vmem [#allocation0], 4
    %1867 = vst.msk [vmem:[%s1866] sm:$0xf0] %vm1864, %v1863
    %s1868 = scalar_lea.vmem [#allocation1], 1105
    %v1869 = vld [vmem:[%s1868] sm:$0x1]
    %s1870 = scalar_lea.vmem [#allocation1], 1360
    %v1871 = vld [vmem:[%s1870] sm:$0x2]
    %vm1872 = vcmask 1041409
    %v1873 = vsel %vm1872, %v1871, %v1869
    %s1874 = scalar_lea.vmem [#allocation1], 1615
    %v1875 = vld [vmem:[%s1874] sm:$0x4]
    %vm1876 = vcmask 1042434
    %v1877 = vsel %vm1876, %v1875, %v1873
    %s1878 = scalar_lea.vmem [#allocation1], 1870
    %v1879 = vld [vmem:[%s1878] sm:$0x8]
    %vm1880 = vcmask 1043459
    %v1881 = vsel %vm1880, %v1879, %v1877
    %s1882 = scalar_lea.vmem [#allocation1], 1229
    %v1883 = vld [vmem:[%s1882] sm:$0x10]
    %vm1884 = vcmask 1044484
    %v1885 = vsel %vm1884, %v1883, %v1881
    %s1886 = scalar_lea.vmem [#allocation1], 1484
    %v1887 = vld [vmem:[%s1886] sm:$0x20]
    %vm1888 = vcmask 1045509
    %v1889 = vsel %vm1888, %v1887, %v1885
    %s1890 = scalar_lea.vmem [#allocation1], 1739
    %v1891 = vld [vmem:[%s1890] sm:$0x40]
    %vm1892 = vcmask 1046534
    %v1893 = vsel %vm1892, %v1891, %v1889
    %s1894 = scalar_lea.vmem [#allocation1], 1994
    %v1895 = vld [vmem:[%s1894] sm:$0x80]
    %vm1896 = vcmask 1047559
    %v1897 = vsel %vm1896, %v1895, %v1893
    %1898 = vrot.lane.b32.xlu0 %v1897, 84
    %v1899 = vpop.permute.xlu0 %1898
    %vm1900 = vcmask 720544
    %s1901 = scalar_lea.vmem [#allocation0], 16
    %1902 = vst.msk [vmem:[%s1901] sm:$0xf] %vm1900, %v1899
    %s1903 = scalar_lea.vmem [#allocation0], 20
    %1904 = vst.msk [vmem:[%s1903] sm:$0xf0] %vm1900, %v1899
    %s1905 = scalar_lea.vmem [#allocation1], 80
    %v1906 = vld [vmem:[%s1905] sm:$0x1]
    %s1907 = scalar_lea.vmem [#allocation1], 335
    %v1908 = vld [vmem:[%s1907] sm:$0x2]
    %vm1909 = vcmask 1041409
    %v1910 = vsel %vm1909, %v1908, %v1906
    %s1911 = scalar_lea.vmem [#allocation1], 590
    %v1912 = vld [vmem:[%s1911] sm:$0x4]
    %vm1913 = vcmask 1042434
    %v1914 = vsel %vm1913, %v1912, %v1910
    %s1915 = scalar_lea.vmem [#allocation1], 845
    %v1916 = vld [vmem:[%s1915] sm:$0x8]
    %vm1917 = vcmask 1043459
    %v1918 = vsel %vm1917, %v1916, %v1914
    %s1919 = scalar_lea.vmem [#allocation1], 204
    %v1920 = vld [vmem:[%s1919] sm:$0x10]
    %vm1921 = vcmask 1044484
    %v1922 = vsel %vm1921, %v1920, %v1918
    %s1923 = scalar_lea.vmem [#allocation1], 459
    %v1924 = vld [vmem:[%s1923] sm:$0x20]
    %vm1925 = vcmask 1045509
    %v1926 = vsel %vm1925, %v1924, %v1922
    %s1927 = scalar_lea.vmem [#allocation1], 714
    %v1928 = vld [vmem:[%s1927] sm:$0x40]
    %vm1929 = vcmask 1046534
    %v1930 = vsel %vm1929, %v1928, %v1926
    %s1931 = scalar_lea.vmem [#allocation1], 969
    %v1932 = vld [vmem:[%s1931] sm:$0x80]
    %vm1933 = vcmask 1047559
    %v1934 = vsel %vm1933, %v1932, %v1930
    %1935 = vrot.lane.b32.xlu0 %v1934, 80
    %v1936 = vpop.permute.xlu0 %1935
    %vm1937 = vcmask 687744
    %1938 = vst.msk [vmem:[#allocation0] sm:$0xf] %vm1937, %v1936
    %s1939 = scalar_lea.vmem [#allocation0], 4
    %1940 = vst.msk [vmem:[%s1939] sm:$0xf0] %vm1937, %v1936
    %s1941 = scalar_lea.vmem [#allocation1], 1104
    %v1942 = vld [vmem:[%s1941] sm:$0x1]
    %s1943 = scalar_lea.vmem [#allocation1], 1359
    %v1944 = vld [vmem:[%s1943] sm:$0x2]
    %vm1945 = vcmask 1041409
    %v1946 = vsel %vm1945, %v1944, %v1942
    %s1947 = scalar_lea.vmem [#allocation1], 1614
    %v1948 = vld [vmem:[%s1947] sm:$0x4]
    %vm1949 = vcmask 1042434
    %v1950 = vsel %vm1949, %v1948, %v1946
    %s1951 = scalar_lea.vmem [#allocation1], 1869
    %v1952 = vld [vmem:[%s1951] sm:$0x8]
    %vm1953 = vcmask 1043459
    %v1954 = vsel %vm1953, %v1952, %v1950
    %s1955 = scalar_lea.vmem [#allocation1], 1228
    %v1956 = vld [vmem:[%s1955] sm:$0x10]
    %vm1957 = vcmask 1044484
    %v1958 = vsel %vm1957, %v1956, %v1954
    %s1959 = scalar_lea.vmem [#allocation1], 1483
    %v1960 = vld [vmem:[%s1959] sm:$0x20]
    %vm1961 = vcmask 1045509
    %v1962 = vsel %vm1961, %v1960, %v1958
    %s1963 = scalar_lea.vmem [#allocation1], 1738
    %v1964 = vld [vmem:[%s1963] sm:$0x40]
    %vm1965 = vcmask 1046534
    %v1966 = vsel %vm1965, %v1964, %v1962
    %s1967 = scalar_lea.vmem [#allocation1], 1993
    %v1968 = vld [vmem:[%s1967] sm:$0x80]
    %vm1969 = vcmask 1047559
    %v1970 = vsel %vm1969, %v1968, %v1966
    %1971 = vrot.lane.b32.xlu0 %v1970, 80
    %v1972 = vpop.permute.xlu0 %1971
    %vm1973 = vcmask 687744
    %s1974 = scalar_lea.vmem [#allocation0], 16
    %1975 = vst.msk [vmem:[%s1974] sm:$0xf] %vm1973, %v1972
    %s1976 = scalar_lea.vmem [#allocation0], 20
    %1977 = vst.msk [vmem:[%s1976] sm:$0xf0] %vm1973, %v1972
    %s1978 = scalar_lea.vmem [#allocation1], 73
    %v1979 = vld [vmem:[%s1978] sm:$0x1]
    %s1980 = scalar_lea.vmem [#allocation1], 328
    %v1981 = vld [vmem:[%s1980] sm:$0x2]
    %vm1982 = vcmask 1041409
    %v1983 = vsel %vm1982, %v1981, %v1979
    %s1984 = scalar_lea.vmem [#allocation1], 583
    %v1985 = vld [vmem:[%s1984] sm:$0x4]
    %vm1986 = vcmask 1042434
    %v1987 = vsel %vm1986, %v1985, %v1983
    %s1988 = scalar_lea.vmem [#allocation1], 838
    %v1989 = vld [vmem:[%s1988] sm:$0x8]
    %vm1990 = vcmask 1043459
    %v1991 = vsel %vm1990, %v1989, %v1987
    %s1992 = scalar_lea.vmem [#allocation1], 197
    %v1993 = vld [vmem:[%s1992] sm:$0x10]
    %vm1994 = vcmask 1044484
    %v1995 = vsel %vm1994, %v1993, %v1991
    %s1996 = scalar_lea.vmem [#allocation1], 452
    %v1997 = vld [vmem:[%s1996] sm:$0x20]
    %vm1998 = vcmask 1045509
    %v1999 = vsel %vm1998, %v1997, %v1995
    %s2000 = scalar_lea.vmem [#allocation1], 707
    %v2001 = vld [vmem:[%s2000] sm:$0x40]
    %vm2002 = vcmask 1046534
    %v2003 = vsel %vm2002, %v2001, %v1999
    %s2004 = scalar_lea.vmem [#allocation1], 962
    %v2005 = vld [vmem:[%s2004] sm:$0x80]
    %vm2006 = vcmask 1047559
    %v2007 = vsel %vm2006, %v2005, %v2003
    %2008 = vrot.lane.b32.xlu0 %v2007, 76
    %v2009 = vpop.permute.xlu0 %2008
    %vm2010 = vcmask 654944
    %2011 = vst.msk [vmem:[#allocation0] sm:$0xf] %vm2010, %v2009
    %s2012 = scalar_lea.vmem [#allocation0], 4
    %2013 = vst.msk [vmem:[%s2012] sm:$0xf0] %vm2010, %v2009
    %s2014 = scalar_lea.vmem [#allocation1], 1097
    %v2015 = vld [vmem:[%s2014] sm:$0x1]
    %s2016 = scalar_lea.vmem [#allocation1], 1352
    %v2017 = vld [vmem:[%s2016] sm:$0x2]
    %vm2018 = vcmask 1041409
    %v2019 = vsel %vm2018, %v2017, %v2015
    %s2020 = scalar_lea.vmem [#allocation1], 1607
    %v2021 = vld [vmem:[%s2020] sm:$0x4]
    %vm2022 = vcmask 1042434
    %v2023 = vsel %vm2022, %v2021, %v2019
    %s2024 = scalar_lea.vmem [#allocation1], 1862
    %v2025 = vld [vmem:[%s2024] sm:$0x8]
    %vm2026 = vcmask 1043459
    %v2027 = vsel %vm2026, %v2025, %v2023
    %s2028 = scalar_lea.vmem [#allocation1], 1221
    %v2029 = vld [vmem:[%s2028] sm:$0x10]
    %vm2030 = vcmask 1044484
    %v2031 = vsel %vm2030, %v2029, %v2027
    %s2032 = scalar_lea.vmem [#allocation1], 1476
    %v2033 = vld [vmem:[%s2032] sm:$0x20]
    %vm2034 = vcmask 1045509
    %v2035 = vsel %vm2034, %v2033, %v2031
    %s2036 = scalar_lea.vmem [#allocation1], 1731
    %v2037 = vld [vmem:[%s2036] sm:$0x40]
    %vm2038 = vcmask 1046534
    %v2039 = vsel %vm2038, %v2037, %v2035
    %s2040 = scalar_lea.vmem [#allocation1], 1986
    %v2041 = vld [vmem:[%s2040] sm:$0x80]
    %vm2042 = vcmask 1047559
    %v2043 = vsel %vm2042, %v2041, %v2039
    %2044 = vrot.lane.b32.xlu0 %v2043, 76
    %v2045 = vpop.permute.xlu0 %2044
    %vm2046 = vcmask 654944
    %s2047 = scalar_lea.vmem [#allocation0], 16
    %2048 = vst.msk [vmem:[%s2047] sm:$0xf] %vm2046, %v2045
    %s2049 = scalar_lea.vmem [#allocation0], 20
    %2050 = vst.msk [vmem:[%s2049] sm:$0xf0] %vm2046, %v2045
    %s2051 = scalar_lea.vmem [#allocation1], 72
    %v2052 = vld [vmem:[%s2051] sm:$0x1]
    %s2053 = scalar_lea.vmem [#allocation1], 327
    %v2054 = vld [vmem:[%s2053] sm:$0x2]
    %vm2055 = vcmask 1041409
    %v2056 = vsel %vm2055, %v2054, %v2052
    %s2057 = scalar_lea.vmem [#allocation1], 582
    %v2058 = vld [vmem:[%s2057] sm:$0x4]
    %vm2059 = vcmask 1042434
    %v2060 = vsel %vm2059, %v2058, %v2056
    %s2061 = scalar_lea.vmem [#allocation1], 837
    %v2062 = vld [vmem:[%s2061] sm:$0x8]
    %vm2063 = vcmask 1043459
    %v2064 = vsel %vm2063, %v2062, %v2060
    %s2065 = scalar_lea.vmem [#allocation1], 196
    %v2066 = vld [vmem:[%s2065] sm:$0x10]
    %vm2067 = vcmask 1044484
    %v2068 = vsel %vm2067, %v2066, %v2064
    %s2069 = scalar_lea.vmem [#allocation1], 451
    %v2070 = vld [vmem:[%s2069] sm:$0x20]
    %vm2071 = vcmask 1045509
    %v2072 = vsel %vm2071, %v2070, %v2068
    %s2073 = scalar_lea.vmem [#allocation1], 706
    %v2074 = vld [vmem:[%s2073] sm:$0x40]
    %vm2075 = vcmask 1046534
    %v2076 = vsel %vm2075, %v2074, %v2072
    %s2077 = scalar_lea.vmem [#allocation1], 961
    %v2078 = vld [vmem:[%s2077] sm:$0x80]
    %vm2079 = vcmask 1047559
    %v2080 = vsel %vm2079, %v2078, %v2076
    %2081 = vrot.lane.b32.xlu0 %v2080, 72
    %v2082 = vpop.permute.xlu0 %2081
    %vm2083 = vcmask 622144
    %2084 = vst.msk [vmem:[#allocation0] sm:$0xf] %vm2083, %v2082
    %s2085 = scalar_lea.vmem [#allocation0], 4
    %2086 = vst.msk [vmem:[%s2085] sm:$0xf0] %vm2083, %v2082
    %s2087 = scalar_lea.vmem [#allocation1], 1096
    %v2088 = vld [vmem:[%s2087] sm:$0x1]
    %s2089 = scalar_lea.vmem [#allocation1], 1351
    %v2090 = vld [vmem:[%s2089] sm:$0x2]
    %vm2091 = vcmask 1041409
    %v2092 = vsel %vm2091, %v2090, %v2088
    %s2093 = scalar_lea.vmem [#allocation1], 1606
    %v2094 = vld [vmem:[%s2093] sm:$0x4]
    %vm2095 = vcmask 1042434
    %v2096 = vsel %vm2095, %v2094, %v2092
    %s2097 = scalar_lea.vmem [#allocation1], 1861
    %v2098 = vld [vmem:[%s2097] sm:$0x8]
    %vm2099 = vcmask 1043459
    %v2100 = vsel %vm2099, %v2098, %v2096
    %s2101 = scalar_lea.vmem [#allocation1], 1220
    %v2102 = vld [vmem:[%s2101] sm:$0x10]
    %vm2103 = vcmask 1044484
    %v2104 = vsel %vm2103, %v2102, %v2100
    %s2105 = scalar_lea.vmem [#allocation1], 1475
    %v2106 = vld [vmem:[%s2105] sm:$0x20]
    %vm2107 = vcmask 1045509
    %v2108 = vsel %vm2107, %v2106, %v2104
    %s2109 = scalar_lea.vmem [#allocation1], 1730
    %v2110 = vld [vmem:[%s2109] sm:$0x40]
    %vm2111 = vcmask 1046534
    %v2112 = vsel %vm2111, %v2110, %v2108
    %s2113 = scalar_lea.vmem [#allocation1], 1985
    %v2114 = vld [vmem:[%s2113] sm:$0x80]
    %vm2115 = vcmask 1047559
    %v2116 = vsel %vm2115, %v2114, %v2112
    %2117 = vrot.lane.b32.xlu0 %v2116, 72
    %v2118 = vpop.permute.xlu0 %2117
    %vm2119 = vcmask 622144
    %s2120 = scalar_lea.vmem [#allocation0], 16
    %2121 = vst.msk [vmem:[%s2120] sm:$0xf] %vm2119, %v2118
    %s2122 = scalar_lea.vmem [#allocation0], 20
    %2123 = vst.msk [vmem:[%s2122] sm:$0xf0] %vm2119, %v2118
    %s2124 = scalar_lea.vmem [#allocation1], 65
    %v2125 = vld [vmem:[%s2124] sm:$0x1]
    %s2126 = scalar_lea.vmem [#allocation1], 320
    %v2127 = vld [vmem:[%s2126] sm:$0x2]
    %vm2128 = vcmask 1041409
    %v2129 = vsel %vm2128, %v2127, %v2125
    %s2130 = scalar_lea.vmem [#allocation1], 575
    %v2131 = vld [vmem:[%s2130] sm:$0x4]
    %vm2132 = vcmask 1042434
    %v2133 = vsel %vm2132, %v2131, %v2129
    %s2134 = scalar_lea.vmem [#allocation1], 830
    %v2135 = vld [vmem:[%s2134] sm:$0x8]
    %vm2136 = vcmask 1043459
    %v2137 = vsel %vm2136, %v2135, %v2133
    %s2138 = scalar_lea.vmem [#allocation1], 189
    %v2139 = vld [vmem:[%s2138] sm:$0x10]
    %vm2140 = vcmask 1044484
    %v2141 = vsel %vm2140, %v2139, %v2137
    %s2142 = scalar_lea.vmem [#allocation1], 444
    %v2143 = vld [vmem:[%s2142] sm:$0x20]
    %vm2144 = vcmask 1045509
    %v2145 = vsel %vm2144, %v2143, %v2141
    %s2146 = scalar_lea.vmem [#allocation1], 699
    %v2147 = vld [vmem:[%s2146] sm:$0x40]
    %vm2148 = vcmask 1046534
    %v2149 = vsel %vm2148, %v2147, %v2145
    %s2150 = scalar_lea.vmem [#allocation1], 954
    %v2151 = vld [vmem:[%s2150] sm:$0x80]
    %vm2152 = vcmask 1047559
    %v2153 = vsel %vm2152, %v2151, %v2149
    %2154 = vrot.lane.b32.xlu0 %v2153, 68
    %v2155 = vpop.permute.xlu0 %2154
    %vm2156 = vcmask 589344
    %2157 = vst.msk [vmem:[#allocation0] sm:$0xf] %vm2156, %v2155
    %s2158 = scalar_lea.vmem [#allocation0], 4
    %2159 = vst.msk [vmem:[%s2158] sm:$0xf0] %vm2156, %v2155
    %s2160 = scalar_lea.vmem [#allocation1], 1089
    %v2161 = vld [vmem:[%s2160] sm:$0x1]
    %s2162 = scalar_lea.vmem [#allocation1], 1344
    %v2163 = vld [vmem:[%s2162] sm:$0x2]
    %vm2164 = vcmask 1041409
    %v2165 = vsel %vm2164, %v2163, %v2161
    %s2166 = scalar_lea.vmem [#allocation1], 1599
    %v2167 = vld [vmem:[%s2166] sm:$0x4]
    %vm2168 = vcmask 1042434
    %v2169 = vsel %vm2168, %v2167, %v2165
    %s2170 = scalar_lea.vmem [#allocation1], 1854
    %v2171 = vld [vmem:[%s2170] sm:$0x8]
    %vm2172 = vcmask 1043459
    %v2173 = vsel %vm2172, %v2171, %v2169
    %s2174 = scalar_lea.vmem [#allocation1], 1213
    %v2175 = vld [vmem:[%s2174] sm:$0x10]
    %vm2176 = vcmask 1044484
    %v2177 = vsel %vm2176, %v2175, %v2173
    %s2178 = scalar_lea.vmem [#allocation1], 1468
    %v2179 = vld [vmem:[%s2178] sm:$0x20]
    %vm2180 = vcmask 1045509
    %v2181 = vsel %vm2180, %v2179, %v2177
    %s2182 = scalar_lea.vmem [#allocation1], 1723
    %v2183 = vld [vmem:[%s2182] sm:$0x40]
    %vm2184 = vcmask 1046534
    %v2185 = vsel %vm2184, %v2183, %v2181
    %s2186 = scalar_lea.vmem [#allocation1], 1978
    %v2187 = vld [vmem:[%s2186] sm:$0x80]
    %vm2188 = vcmask 1047559
    %v2189 = vsel %vm2188, %v2187, %v2185
    %2190 = vrot.lane.b32.xlu0 %v2189, 68
    %v2191 = vpop.permute.xlu0 %2190
    %vm2192 = vcmask 589344
    %s2193 = scalar_lea.vmem [#allocation0], 16
    %2194 = vst.msk [vmem:[%s2193] sm:$0xf] %vm2192, %v2191
    %s2195 = scalar_lea.vmem [#allocation0], 20
    %2196 = vst.msk [vmem:[%s2195] sm:$0xf0] %vm2192, %v2191
    %s2197 = scalar_lea.vmem [#allocation1], 64
    %v2198 = vld [vmem:[%s2197] sm:$0x1]
    %s2199 = scalar_lea.vmem [#allocation1], 319
    %v2200 = vld [vmem:[%s2199] sm:$0x2]
    %vm2201 = vcmask 1041409
    %v2202 = vsel %vm2201, %v2200, %v2198
    %s2203 = scalar_lea.vmem [#allocation1], 574
    %v2204 = vld [vmem:[%s2203] sm:$0x4]
    %vm2205 = vcmask 1042434
    %v2206 = vsel %vm2205, %v2204, %v2202
    %s2207 = scalar_lea.vmem [#allocation1], 829
    %v2208 = vld [vmem:[%s2207] sm:$0x8]
    %vm2209 = vcmask 1043459
    %v2210 = vsel %vm2209, %v2208, %v2206
    %s2211 = scalar_lea.vmem [#allocation1], 188
    %v2212 = vld [vmem:[%s2211] sm:$0x10]
    %vm2213 = vcmask 1044484
    %v2214 = vsel %vm2213, %v2212, %v2210
    %s2215 = scalar_lea.vmem [#allocation1], 443
    %v2216 = vld [vmem:[%s2215] sm:$0x20]
    %vm2217 = vcmask 1045509
    %v2218 = vsel %vm2217, %v2216, %v2214
    %s2219 = scalar_lea.vmem [#allocation1], 698
    %v2220 = vld [vmem:[%s2219] sm:$0x40]
    %vm2221 = vcmask 1046534
    %v2222 = vsel %vm2221, %v2220, %v2218
    %s2223 = scalar_lea.vmem [#allocation1], 953
    %v2224 = vld [vmem:[%s2223] sm:$0x80]
    %vm2225 = vcmask 1047559
    %v2226 = vsel %vm2225, %v2224, %v2222
    %2227 = vrot.lane.b32.xlu0 %v2226, 64
    %v2228 = vpop.permute.xlu0 %2227
    %vm2229 = vcmask 556544
    %2230 = vst.msk [vmem:[#allocation0] sm:$0xf] %vm2229, %v2228
    %s2231 = scalar_lea.vmem [#allocation0], 4
    %2232 = vst.msk [vmem:[%s2231] sm:$0xf0] %vm2229, %v2228
    %s2233 = scalar_lea.vmem [#allocation1], 1088
    %v2234 = vld [vmem:[%s2233] sm:$0x1]
    %s2235 = scalar_lea.vmem [#allocation1], 1343
    %v2236 = vld [vmem:[%s2235] sm:$0x2]
    %vm2237 = vcmask 1041409
    %v2238 = vsel %vm2237, %v2236, %v2234
    %s2239 = scalar_lea.vmem [#allocation1], 1598
    %v2240 = vld [vmem:[%s2239] sm:$0x4]
    %vm2241 = vcmask 1042434
    %v2242 = vsel %vm2241, %v2240, %v2238
    %s2243 = scalar_lea.vmem [#allocation1], 1853
    %v2244 = vld [vmem:[%s2243] sm:$0x8]
    %vm2245 = vcmask 1043459
    %v2246 = vsel %vm2245, %v2244, %v2242
    %s2247 = scalar_lea.vmem [#allocation1], 1212
    %v2248 = vld [vmem:[%s2247] sm:$0x10]
    %vm2249 = vcmask 1044484
    %v2250 = vsel %vm2249, %v2248, %v2246
    %s2251 = scalar_lea.vmem [#allocation1], 1467
    %v2252 = vld [vmem:[%s2251] sm:$0x20]
    %vm2253 = vcmask 1045509
    %v2254 = vsel %vm2253, %v2252, %v2250
    %s2255 = scalar_lea.vmem [#allocation1], 1722
    %v2256 = vld [vmem:[%s2255] sm:$0x40]
    %vm2257 = vcmask 1046534
    %v2258 = vsel %vm2257, %v2256, %v2254
    %s2259 = scalar_lea.vmem [#allocation1], 1977
    %v2260 = vld [vmem:[%s2259] sm:$0x80]
    %vm2261 = vcmask 1047559
    %v2262 = vsel %vm2261, %v2260, %v2258
    %2263 = vrot.lane.b32.xlu0 %v2262, 64
    %v2264 = vpop.permute.xlu0 %2263
    %vm2265 = vcmask 556544
    %s2266 = scalar_lea.vmem [#allocation0], 16
    %2267 = vst.msk [vmem:[%s2266] sm:$0xf] %vm2265, %v2264
    %s2268 = scalar_lea.vmem [#allocation0], 20
    %2269 = vst.msk [vmem:[%s2268] sm:$0xf0] %vm2265, %v2264
    %s2270 = scalar_lea.vmem [#allocation1], 57
    %v2271 = vld [vmem:[%s2270] sm:$0x1]
    %s2272 = scalar_lea.vmem [#allocation1], 312
    %v2273 = vld [vmem:[%s2272] sm:$0x2]
    %vm2274 = vcmask 1041409
    %v2275 = vsel %vm2274, %v2273, %v2271
    %s2276 = scalar_lea.vmem [#allocation1], 567
    %v2277 = vld [vmem:[%s2276] sm:$0x4]
    %vm2278 = vcmask 1042434
    %v2279 = vsel %vm2278, %v2277, %v2275
    %s2280 = scalar_lea.vmem [#allocation1], 822
    %v2281 = vld [vmem:[%s2280] sm:$0x8]
    %vm2282 = vcmask 1043459
    %v2283 = vsel %vm2282, %v2281, %v2279
    %s2284 = scalar_lea.vmem [#allocation1], 181
    %v2285 = vld [vmem:[%s2284] sm:$0x10]
    %vm2286 = vcmask 1044484
    %v2287 = vsel %vm2286, %v2285, %v2283
    %s2288 = scalar_lea.vmem [#allocation1], 436
    %v2289 = vld [vmem:[%s2288] sm:$0x20]
    %vm2290 = vcmask 1045509
    %v2291 = vsel %vm2290, %v2289, %v2287
    %s2292 = scalar_lea.vmem [#allocation1], 691
    %v2293 = vld [vmem:[%s2292] sm:$0x40]
    %vm2294 = vcmask 1046534
    %v2295 = vsel %vm2294, %v2293, %v2291
    %s2296 = scalar_lea.vmem [#allocation1], 946
    %v2297 = vld [vmem:[%s2296] sm:$0x80]
    %vm2298 = vcmask 1047559
    %v2299 = vsel %vm2298, %v2297, %v2295
    %2300 = vrot.lane.b32.xlu0 %v2299, 60
    %v2301 = vpop.permute.xlu0 %2300
    %vm2302 = vcmask 523744
    %2303 = vst.msk [vmem:[#allocation0] sm:$0xf] %vm2302, %v2301
    %s2304 = scalar_lea.vmem [#allocation0], 4
    %2305 = vst.msk [vmem:[%s2304] sm:$0xf0] %vm2302, %v2301
    %s2306 = scalar_lea.vmem [#allocation1], 1081
    %v2307 = vld [vmem:[%s2306] sm:$0x1]
    %s2308 = scalar_lea.vmem [#allocation1], 1336
    %v2309 = vld [vmem:[%s2308] sm:$0x2]
    %vm2310 = vcmask 1041409
    %v2311 = vsel %vm2310, %v2309, %v2307
    %s2312 = scalar_lea.vmem [#allocation1], 1591
    %v2313 = vld [vmem:[%s2312] sm:$0x4]
    %vm2314 = vcmask 1042434
    %v2315 = vsel %vm2314, %v2313, %v2311
    %s2316 = scalar_lea.vmem [#allocation1], 1846
    %v2317 = vld [vmem:[%s2316] sm:$0x8]
    %vm2318 = vcmask 1043459
    %v2319 = vsel %vm2318, %v2317, %v2315
    %s2320 = scalar_lea.vmem [#allocation1], 1205
    %v2321 = vld [vmem:[%s2320] sm:$0x10]
    %vm2322 = vcmask 1044484
    %v2323 = vsel %vm2322, %v2321, %v2319
    %s2324 = scalar_lea.vmem [#allocation1], 1460
    %v2325 = vld [vmem:[%s2324] sm:$0x20]
    %vm2326 = vcmask 1045509
    %v2327 = vsel %vm2326, %v2325, %v2323
    %s2328 = scalar_lea.vmem [#allocation1], 1715
    %v2329 = vld [vmem:[%s2328] sm:$0x40]
    %vm2330 = vcmask 1046534
    %v2331 = vsel %vm2330, %v2329, %v2327
    %s2332 = scalar_lea.vmem [#allocation1], 1970
    %v2333 = vld [vmem:[%s2332] sm:$0x80]
    %vm2334 = vcmask 1047559
    %v2335 = vsel %vm2334, %v2333, %v2331
    %2336 = vrot.lane.b32.xlu0 %v2335, 60
    %v2337 = vpop.permute.xlu0 %2336
    %vm2338 = vcmask 523744
    %s2339 = scalar_lea.vmem [#allocation0], 16
    %2340 = vst.msk [vmem:[%s2339] sm:$0xf] %vm2338, %v2337
    %s2341 = scalar_lea.vmem [#allocation0], 20
    %2342 = vst.msk [vmem:[%s2341] sm:$0xf0] %vm2338, %v2337
    %s2343 = scalar_lea.vmem [#allocation1], 56
    %v2344 = vld [vmem:[%s2343] sm:$0x1]
    %s2345 = scalar_lea.vmem [#allocation1], 311
    %v2346 = vld [vmem:[%s2345] sm:$0x2]
    %vm2347 = vcmask 1041409
    %v2348 = vsel %vm2347, %v2346, %v2344
    %s2349 = scalar_lea.vmem [#allocation1], 566
    %v2350 = vld [vmem:[%s2349] sm:$0x4]
    %vm2351 = vcmask 1042434
    %v2352 = vsel %vm2351, %v2350, %v2348
    %s2353 = scalar_lea.vmem [#allocation1], 821
    %v2354 = vld [vmem:[%s2353] sm:$0x8]
    %vm2355 = vcmask 1043459
    %v2356 = vsel %vm2355, %v2354, %v2352
    %s2357 = scalar_lea.vmem [#allocation1], 180
    %v2358 = vld [vmem:[%s2357] sm:$0x10]
    %vm2359 = vcmask 1044484
    %v2360 = vsel %vm2359, %v2358, %v2356
    %s2361 = scalar_lea.vmem [#allocation1], 435
    %v2362 = vld [vmem:[%s2361] sm:$0x20]
    %vm2363 = vcmask 1045509
    %v2364 = vsel %vm2363, %v2362, %v2360
    %s2365 = scalar_lea.vmem [#allocation1], 690
    %v2366 = vld [vmem:[%s2365] sm:$0x40]
    %vm2367 = vcmask 1046534
    %v2368 = vsel %vm2367, %v2366, %v2364
    %s2369 = scalar_lea.vmem [#allocation1], 945
    %v2370 = vld [vmem:[%s2369] sm:$0x80]
    %vm2371 = vcmask 1047559
    %v2372 = vsel %vm2371, %v2370, %v2368
    %2373 = vrot.lane.b32.xlu0 %v2372, 56
    %v2374 = vpop.permute.xlu0 %2373
    %vm2375 = vcmask 490944
    %2376 = vst.msk [vmem:[#allocation0] sm:$0xf] %vm2375, %v2374
    %s2377 = scalar_lea.vmem [#allocation0], 4
    %2378 = vst.msk [vmem:[%s2377] sm:$0xf0] %vm2375, %v2374
    %s2379 = scalar_lea.vmem [#allocation1], 1080
    %v2380 = vld [vmem:[%s2379] sm:$0x1]
    %s2381 = scalar_lea.vmem [#allocation1], 1335
    %v2382 = vld [vmem:[%s2381] sm:$0x2]
    %vm2383 = vcmask 1041409
    %v2384 = vsel %vm2383, %v2382, %v2380
    %s2385 = scalar_lea.vmem [#allocation1], 1590
    %v2386 = vld [vmem:[%s2385] sm:$0x4]
    %vm2387 = vcmask 1042434
    %v2388 = vsel %vm2387, %v2386, %v2384
    %s2389 = scalar_lea.vmem [#allocation1], 1845
    %v2390 = vld [vmem:[%s2389] sm:$0x8]
    %vm2391 = vcmask 1043459
    %v2392 = vsel %vm2391, %v2390, %v2388
    %s2393 = scalar_lea.vmem [#allocation1], 1204
    %v2394 = vld [vmem:[%s2393] sm:$0x10]
    %vm2395 = vcmask 1044484
    %v2396 = vsel %vm2395, %v2394, %v2392
    %s2397 = scalar_lea.vmem [#allocation1], 1459
    %v2398 = vld [vmem:[%s2397] sm:$0x20]
    %vm2399 = vcmask 1045509
    %v2400 = vsel %vm2399, %v2398, %v2396
    %s2401 = scalar_lea.vmem [#allocation1], 1714
    %v2402 = vld [vmem:[%s2401] sm:$0x40]
    %vm2403 = vcmask 1046534
    %v2404 = vsel %vm2403, %v2402, %v2400
    %s2405 = scalar_lea.vmem [#allocation1], 1969
    %v2406 = vld [vmem:[%s2405] sm:$0x80]
    %vm2407 = vcmask 1047559
    %v2408 = vsel %vm2407, %v2406, %v2404
    %2409 = vrot.lane.b32.xlu0 %v2408, 56
    %v2410 = vpop.permute.xlu0 %2409
    %vm2411 = vcmask 490944
    %s2412 = scalar_lea.vmem [#allocation0], 16
    %2413 = vst.msk [vmem:[%s2412] sm:$0xf] %vm2411, %v2410
    %s2414 = scalar_lea.vmem [#allocation0], 20
    %2415 = vst.msk [vmem:[%s2414] sm:$0xf0] %vm2411, %v2410
    %s2416 = scalar_lea.vmem [#allocation1], 49
    %v2417 = vld [vmem:[%s2416] sm:$0x1]
    %s2418 = scalar_lea.vmem [#allocation1], 304
    %v2419 = vld [vmem:[%s2418] sm:$0x2]
    %vm2420 = vcmask 1041409
    %v2421 = vsel %vm2420, %v2419, %v2417
    %s2422 = scalar_lea.vmem [#allocation1], 559
    %v2423 = vld [vmem:[%s2422] sm:$0x4]
    %vm2424 = vcmask 1042434
    %v2425 = vsel %vm2424, %v2423, %v2421
    %s2426 = scalar_lea.vmem [#allocation1], 814
    %v2427 = vld [vmem:[%s2426] sm:$0x8]
    %vm2428 = vcmask 1043459
    %v2429 = vsel %vm2428, %v2427, %v2425
    %s2430 = scalar_lea.vmem [#allocation1], 173
    %v2431 = vld [vmem:[%s2430] sm:$0x10]
    %vm2432 = vcmask 1044484
    %v2433 = vsel %vm2432, %v2431, %v2429
    %s2434 = scalar_lea.vmem [#allocation1], 428
    %v2435 = vld [vmem:[%s2434] sm:$0x20]
    %vm2436 = vcmask 1045509
    %v2437 = vsel %vm2436, %v2435, %v2433
    %s2438 = scalar_lea.vmem [#allocation1], 683
    %v2439 = vld [vmem:[%s2438] sm:$0x40]
    %vm2440 = vcmask 1046534
    %v2441 = vsel %vm2440, %v2439, %v2437
    %s2442 = scalar_lea.vmem [#allocation1], 938
    %v2443 = vld [vmem:[%s2442] sm:$0x80]
    %vm2444 = vcmask 1047559
    %v2445 = vsel %vm2444, %v2443, %v2441
    %2446 = vrot.lane.b32.xlu0 %v2445, 52
    %v2447 = vpop.permute.xlu0 %2446
    %vm2448 = vcmask 458144
    %2449 = vst.msk [vmem:[#allocation0] sm:$0xf] %vm2448, %v2447
    %s2450 = scalar_lea.vmem [#allocation0], 4
    %2451 = vst.msk [vmem:[%s2450] sm:$0xf0] %vm2448, %v2447
    %s2452 = scalar_lea.vmem [#allocation1], 1073
    %v2453 = vld [vmem:[%s2452] sm:$0x1]
    %s2454 = scalar_lea.vmem [#allocation1], 1328
    %v2455 = vld [vmem:[%s2454] sm:$0x2]
    %vm2456 = vcmask 1041409
    %v2457 = vsel %vm2456, %v2455, %v2453
    %s2458 = scalar_lea.vmem [#allocation1], 1583
    %v2459 = vld [vmem:[%s2458] sm:$0x4]
    %vm2460 = vcmask 1042434
    %v2461 = vsel %vm2460, %v2459, %v2457
    %s2462 = scalar_lea.vmem [#allocation1], 1838
    %v2463 = vld [vmem:[%s2462] sm:$0x8]
    %vm2464 = vcmask 1043459
    %v2465 = vsel %vm2464, %v2463, %v2461
    %s2466 = scalar_lea.vmem [#allocation1], 1197
    %v2467 = vld [vmem:[%s2466] sm:$0x10]
    %vm2468 = vcmask 1044484
    %v2469 = vsel %vm2468, %v2467, %v2465
    %s2470 = scalar_lea.vmem [#allocation1], 1452
    %v2471 = vld [vmem:[%s2470] sm:$0x20]
    %vm2472 = vcmask 1045509
    %v2473 = vsel %vm2472, %v2471, %v2469
    %s2474 = scalar_lea.vmem [#allocation1], 1707
    %v2475 = vld [vmem:[%s2474] sm:$0x40]
    %vm2476 = vcmask 1046534
    %v2477 = vsel %vm2476, %v2475, %v2473
    %s2478 = scalar_lea.vmem [#allocation1], 1962
    %v2479 = vld [vmem:[%s2478] sm:$0x80]
    %vm2480 = vcmask 1047559
    %v2481 = vsel %vm2480, %v2479, %v2477
    %2482 = vrot.lane.b32.xlu0 %v2481, 52
    %v2483 = vpop.permute.xlu0 %2482
    %vm2484 = vcmask 458144
    %s2485 = scalar_lea.vmem [#allocation0], 16
    %2486 = vst.msk [vmem:[%s2485] sm:$0xf] %vm2484, %v2483
    %s2487 = scalar_lea.vmem [#allocation0], 20
    %2488 = vst.msk [vmem:[%s2487] sm:$0xf0] %vm2484, %v2483
    %s2489 = scalar_lea.vmem [#allocation1], 48
    %v2490 = vld [vmem:[%s2489] sm:$0x1]
    %s2491 = scalar_lea.vmem [#allocation1], 303
    %v2492 = vld [vmem:[%s2491] sm:$0x2]
    %vm2493 = vcmask 1041409
    %v2494 = vsel %vm2493, %v2492, %v2490
    %s2495 = scalar_lea.vmem [#allocation1], 558
    %v2496 = vld [vmem:[%s2495] sm:$0x4]
    %vm2497 = vcmask 1042434
    %v2498 = vsel %vm2497, %v2496, %v2494
    %s2499 = scalar_lea.vmem [#allocation1], 813
    %v2500 = vld [vmem:[%s2499] sm:$0x8]
    %vm2501 = vcmask 1043459
    %v2502 = vsel %vm2501, %v2500, %v2498
    %s2503 = scalar_lea.vmem [#allocation1], 172
    %v2504 = vld [vmem:[%s2503] sm:$0x10]
    %vm2505 = vcmask 1044484
    %v2506 = vsel %vm2505, %v2504, %v2502
    %s2507 = scalar_lea.vmem [#allocation1], 427
    %v2508 = vld [vmem:[%s2507] sm:$0x20]
    %vm2509 = vcmask 1045509
    %v2510 = vsel %vm2509, %v2508, %v2506
    %s2511 = scalar_lea.vmem [#allocation1], 682
    %v2512 = vld [vmem:[%s2511] sm:$0x40]
    %vm2513 = vcmask 1046534
    %v2514 = vsel %vm2513, %v2512, %v2510
    %s2515 = scalar_lea.vmem [#allocation1], 937
    %v2516 = vld [vmem:[%s2515] sm:$0x80]
    %vm2517 = vcmask 1047559
    %v2518 = vsel %vm2517, %v2516, %v2514
    %2519 = vrot.lane.b32.xlu0 %v2518, 48
    %v2520 = vpop.permute.xlu0 %2519
    %vm2521 = vcmask 425344
    %2522 = vst.msk [vmem:[#allocation0] sm:$0xf] %vm2521, %v2520
    %s2523 = scalar_lea.vmem [#allocation0], 4
    %2524 = vst.msk [vmem:[%s2523] sm:$0xf0] %vm2521, %v2520
    %s2525 = scalar_lea.vmem [#allocation1], 1072
    %v2526 = vld [vmem:[%s2525] sm:$0x1]
    %s2527 = scalar_lea.vmem [#allocation1], 1327
    %v2528 = vld [vmem:[%s2527] sm:$0x2]
    %vm2529 = vcmask 1041409
    %v2530 = vsel %vm2529, %v2528, %v2526
    %s2531 = scalar_lea.vmem [#allocation1], 1582
    %v2532 = vld [vmem:[%s2531] sm:$0x4]
    %vm2533 = vcmask 1042434
    %v2534 = vsel %vm2533, %v2532, %v2530
    %s2535 = scalar_lea.vmem [#allocation1], 1837
    %v2536 = vld [vmem:[%s2535] sm:$0x8]
    %vm2537 = vcmask 1043459
    %v2538 = vsel %vm2537, %v2536, %v2534
    %s2539 = scalar_lea.vmem [#allocation1], 1196
    %v2540 = vld [vmem:[%s2539] sm:$0x10]
    %vm2541 = vcmask 1044484
    %v2542 = vsel %vm2541, %v2540, %v2538
    %s2543 = scalar_lea.vmem [#allocation1], 1451
    %v2544 = vld [vmem:[%s2543] sm:$0x20]
    %vm2545 = vcmask 1045509
    %v2546 = vsel %vm2545, %v2544, %v2542
    %s2547 = scalar_lea.vmem [#allocation1], 1706
    %v2548 = vld [vmem:[%s2547] sm:$0x40]
    %vm2549 = vcmask 1046534
    %v2550 = vsel %vm2549, %v2548, %v2546
    %s2551 = scalar_lea.vmem [#allocation1], 1961
    %v2552 = vld [vmem:[%s2551] sm:$0x80]
    %vm2553 = vcmask 1047559
    %v2554 = vsel %vm2553, %v2552, %v2550
    %2555 = vrot.lane.b32.xlu0 %v2554, 48
    %v2556 = vpop.permute.xlu0 %2555
    %vm2557 = vcmask 425344
    %s2558 = scalar_lea.vmem [#allocation0], 16
    %2559 = vst.msk [vmem:[%s2558] sm:$0xf] %vm2557, %v2556
    %s2560 = scalar_lea.vmem [#allocation0], 20
    %2561 = vst.msk [vmem:[%s2560] sm:$0xf0] %vm2557, %v2556
    %s2562 = scalar_lea.vmem [#allocation1], 41
    %v2563 = vld [vmem:[%s2562] sm:$0x1]
    %s2564 = scalar_lea.vmem [#allocation1], 296
    %v2565 = vld [vmem:[%s2564] sm:$0x2]
    %vm2566 = vcmask 1041409
    %v2567 = vsel %vm2566, %v2565, %v2563
    %s2568 = scalar_lea.vmem [#allocation1], 551
    %v2569 = vld [vmem:[%s2568] sm:$0x4]
    %vm2570 = vcmask 1042434
    %v2571 = vsel %vm2570, %v2569, %v2567
    %s2572 = scalar_lea.vmem [#allocation1], 806
    %v2573 = vld [vmem:[%s2572] sm:$0x8]
    %vm2574 = vcmask 1043459
    %v2575 = vsel %vm2574, %v2573, %v2571
    %s2576 = scalar_lea.vmem [#allocation1], 165
    %v2577 = vld [vmem:[%s2576] sm:$0x10]
    %vm2578 = vcmask 1044484
    %v2579 = vsel %vm2578, %v2577, %v2575
    %s2580 = scalar_lea.vmem [#allocation1], 420
    %v2581 = vld [vmem:[%s2580] sm:$0x20]
    %vm2582 = vcmask 1045509
    %v2583 = vsel %vm2582, %v2581, %v2579
    %s2584 = scalar_lea.vmem [#allocation1], 675
    %v2585 = vld [vmem:[%s2584] sm:$0x40]
    %vm2586 = vcmask 1046534
    %v2587 = vsel %vm2586, %v2585, %v2583
    %s2588 = scalar_lea.vmem [#allocation1], 930
    %v2589 = vld [vmem:[%s2588] sm:$0x80]
    %vm2590 = vcmask 1047559
    %v2591 = vsel %vm2590, %v2589, %v2587
    %2592 = vrot.lane.b32.xlu0 %v2591, 44
    %v2593 = vpop.permute.xlu0 %2592
    %vm2594 = vcmask 392544
    %2595 = vst.msk [vmem:[#allocation0] sm:$0xf] %vm2594, %v2593
    %s2596 = scalar_lea.vmem [#allocation0], 4
    %2597 = vst.msk [vmem:[%s2596] sm:$0xf0] %vm2594, %v2593
    %s2598 = scalar_lea.vmem [#allocation1], 1065
    %v2599 = vld [vmem:[%s2598] sm:$0x1]
    %s2600 = scalar_lea.vmem [#allocation1], 1320
    %v2601 = vld [vmem:[%s2600] sm:$0x2]
    %vm2602 = vcmask 1041409
    %v2603 = vsel %vm2602, %v2601, %v2599
    %s2604 = scalar_lea.vmem [#allocation1], 1575
    %v2605 = vld [vmem:[%s2604] sm:$0x4]
    %vm2606 = vcmask 1042434
    %v2607 = vsel %vm2606, %v2605, %v2603
    %s2608 = scalar_lea.vmem [#allocation1], 1830
    %v2609 = vld [vmem:[%s2608] sm:$0x8]
    %vm2610 = vcmask 1043459
    %v2611 = vsel %vm2610, %v2609, %v2607
    %s2612 = scalar_lea.vmem [#allocation1], 1189
    %v2613 = vld [vmem:[%s2612] sm:$0x10]
    %vm2614 = vcmask 1044484
    %v2615 = vsel %vm2614, %v2613, %v2611
    %s2616 = scalar_lea.vmem [#allocation1], 1444
    %v2617 = vld [vmem:[%s2616] sm:$0x20]
    %vm2618 = vcmask 1045509
    %v2619 = vsel %vm2618, %v2617, %v2615
    %s2620 = scalar_lea.vmem [#allocation1], 1699
    %v2621 = vld [vmem:[%s2620] sm:$0x40]
    %vm2622 = vcmask 1046534
    %v2623 = vsel %vm2622, %v2621, %v2619
    %s2624 = scalar_lea.vmem [#allocation1], 1954
    %v2625 = vld [vmem:[%s2624] sm:$0x80]
    %vm2626 = vcmask 1047559
    %v2627 = vsel %vm2626, %v2625, %v2623
    %2628 = vrot.lane.b32.xlu0 %v2627, 44
    %v2629 = vpop.permute.xlu0 %2628
    %vm2630 = vcmask 392544
    %s2631 = scalar_lea.vmem [#allocation0], 16
    %2632 = vst.msk [vmem:[%s2631] sm:$0xf] %vm2630, %v2629
    %s2633 = scalar_lea.vmem [#allocation0], 20
    %2634 = vst.msk [vmem:[%s2633] sm:$0xf0] %vm2630, %v2629
    %s2635 = scalar_lea.vmem [#allocation1], 40
    %v2636 = vld [vmem:[%s2635] sm:$0x1]
    %s2637 = scalar_lea.vmem [#allocation1], 295
    %v2638 = vld [vmem:[%s2637] sm:$0x2]
    %vm2639 = vcmask 1041409
    %v2640 = vsel %vm2639, %v2638, %v2636
    %s2641 = scalar_lea.vmem [#allocation1], 550
    %v2642 = vld [vmem:[%s2641] sm:$0x4]
    %vm2643 = vcmask 1042434
    %v2644 = vsel %vm2643, %v2642, %v2640
    %s2645 = scalar_lea.vmem [#allocation1], 805
    %v2646 = vld [vmem:[%s2645] sm:$0x8]
    %vm2647 = vcmask 1043459
    %v2648 = vsel %vm2647, %v2646, %v2644
    %s2649 = scalar_lea.vmem [#allocation1], 164
    %v2650 = vld [vmem:[%s2649] sm:$0x10]
    %vm2651 = vcmask 1044484
    %v2652 = vsel %vm2651, %v2650, %v2648
    %s2653 = scalar_lea.vmem [#allocation1], 419
    %v2654 = vld [vmem:[%s2653] sm:$0x20]
    %vm2655 = vcmask 1045509
    %v2656 = vsel %vm2655, %v2654, %v2652
    %s2657 = scalar_lea.vmem [#allocation1], 674
    %v2658 = vld [vmem:[%s2657] sm:$0x40]
    %vm2659 = vcmask 1046534
    %v2660 = vsel %vm2659, %v2658, %v2656
    %s2661 = scalar_lea.vmem [#allocation1], 929
    %v2662 = vld [vmem:[%s2661] sm:$0x80]
    %vm2663 = vcmask 1047559
    %v2664 = vsel %vm2663, %v2662, %v2660
    %2665 = vrot.lane.b32.xlu0 %v2664, 40
    %v2666 = vpop.permute.xlu0 %2665
    %vm2667 = vcmask 359744
    %2668 = vst.msk [vmem:[#allocation0] sm:$0xf] %vm2667, %v2666
    %s2669 = scalar_lea.vmem [#allocation0], 4
    %2670 = vst.msk [vmem:[%s2669] sm:$0xf0] %vm2667, %v2666
    %s2671 = scalar_lea.vmem [#allocation1], 1064
    %v2672 = vld [vmem:[%s2671] sm:$0x1]
    %s2673 = scalar_lea.vmem [#allocation1], 1319
    %v2674 = vld [vmem:[%s2673] sm:$0x2]
    %vm2675 = vcmask 1041409
    %v2676 = vsel %vm2675, %v2674, %v2672
    %s2677 = scalar_lea.vmem [#allocation1], 1574
    %v2678 = vld [vmem:[%s2677] sm:$0x4]
    %vm2679 = vcmask 1042434
    %v2680 = vsel %vm2679, %v2678, %v2676
    %s2681 = scalar_lea.vmem [#allocation1], 1829
    %v2682 = vld [vmem:[%s2681] sm:$0x8]
    %vm2683 = vcmask 1043459
    %v2684 = vsel %vm2683, %v2682, %v2680
    %s2685 = scalar_lea.vmem [#allocation1], 1188
    %v2686 = vld [vmem:[%s2685] sm:$0x10]
    %vm2687 = vcmask 1044484
    %v2688 = vsel %vm2687, %v2686, %v2684
    %s2689 = scalar_lea.vmem [#allocation1], 1443
    %v2690 = vld [vmem:[%s2689] sm:$0x20]
    %vm2691 = vcmask 1045509
    %v2692 = vsel %vm2691, %v2690, %v2688
    %s2693 = scalar_lea.vmem [#allocation1], 1698
    %v2694 = vld [vmem:[%s2693] sm:$0x40]
    %vm2695 = vcmask 1046534
    %v2696 = vsel %vm2695, %v2694, %v2692
    %s2697 = scalar_lea.vmem [#allocation1], 1953
    %v2698 = vld [vmem:[%s2697] sm:$0x80]
    %vm2699 = vcmask 1047559
    %v2700 = vsel %vm2699, %v2698, %v2696
    %2701 = vrot.lane.b32.xlu0 %v2700, 40
    %v2702 = vpop.permute.xlu0 %2701
    %vm2703 = vcmask 359744
    %s2704 = scalar_lea.vmem [#allocation0], 16
    %2705 = vst.msk [vmem:[%s2704] sm:$0xf] %vm2703, %v2702
    %s2706 = scalar_lea.vmem [#allocation0], 20
    %2707 = vst.msk [vmem:[%s2706] sm:$0xf0] %vm2703, %v2702
    %s2708 = scalar_lea.vmem [#allocation1], 33
    %v2709 = vld [vmem:[%s2708] sm:$0x1]
    %s2710 = scalar_lea.vmem [#allocation1], 288
    %v2711 = vld [vmem:[%s2710] sm:$0x2]
    %vm2712 = vcmask 1041409
    %v2713 = vsel %vm2712, %v2711, %v2709
    %s2714 = scalar_lea.vmem [#allocation1], 543
    %v2715 = vld [vmem:[%s2714] sm:$0x4]
    %vm2716 = vcmask 1042434
    %v2717 = vsel %vm2716, %v2715, %v2713
    %s2718 = scalar_lea.vmem [#allocation1], 798
    %v2719 = vld [vmem:[%s2718] sm:$0x8]
    %vm2720 = vcmask 1043459
    %v2721 = vsel %vm2720, %v2719, %v2717
    %s2722 = scalar_lea.vmem [#allocation1], 157
    %v2723 = vld [vmem:[%s2722] sm:$0x10]
    %vm2724 = vcmask 1044484
    %v2725 = vsel %vm2724, %v2723, %v2721
    %s2726 = scalar_lea.vmem [#allocation1], 412
    %v2727 = vld [vmem:[%s2726] sm:$0x20]
    %vm2728 = vcmask 1045509
    %v2729 = vsel %vm2728, %v2727, %v2725
    %s2730 = scalar_lea.vmem [#allocation1], 667
    %v2731 = vld [vmem:[%s2730] sm:$0x40]
    %vm2732 = vcmask 1046534
    %v2733 = vsel %vm2732, %v2731, %v2729
    %s2734 = scalar_lea.vmem [#allocation1], 922
    %v2735 = vld [vmem:[%s2734] sm:$0x80]
    %vm2736 = vcmask 1047559
    %v2737 = vsel %vm2736, %v2735, %v2733
    %2738 = vrot.lane.b32.xlu0 %v2737, 36
    %v2739 = vpop.permute.xlu0 %2738
    %vm2740 = vcmask 326944
    %2741 = vst.msk [vmem:[#allocation0] sm:$0xf] %vm2740, %v2739
    %s2742 = scalar_lea.vmem [#allocation0], 4
    %2743 = vst.msk [vmem:[%s2742] sm:$0xf0] %vm2740, %v2739
    %s2744 = scalar_lea.vmem [#allocation1], 1057
    %v2745 = vld [vmem:[%s2744] sm:$0x1]
    %s2746 = scalar_lea.vmem [#allocation1], 1312
    %v2747 = vld [vmem:[%s2746] sm:$0x2]
    %vm2748 = vcmask 1041409
    %v2749 = vsel %vm2748, %v2747, %v2745
    %s2750 = scalar_lea.vmem [#allocation1], 1567
    %v2751 = vld [vmem:[%s2750] sm:$0x4]
    %vm2752 = vcmask 1042434
    %v2753 = vsel %vm2752, %v2751, %v2749
    %s2754 = scalar_lea.vmem [#allocation1], 1822
    %v2755 = vld [vmem:[%s2754] sm:$0x8]
    %vm2756 = vcmask 1043459
    %v2757 = vsel %vm2756, %v2755, %v2753
    %s2758 = scalar_lea.vmem [#allocation1], 1181
    %v2759 = vld [vmem:[%s2758] sm:$0x10]
    %vm2760 = vcmask 1044484
    %v2761 = vsel %vm2760, %v2759, %v2757
    %s2762 = scalar_lea.vmem [#allocation1], 1436
    %v2763 = vld [vmem:[%s2762] sm:$0x20]
    %vm2764 = vcmask 1045509
    %v2765 = vsel %vm2764, %v2763, %v2761
    %s2766 = scalar_lea.vmem [#allocation1], 1691
    %v2767 = vld [vmem:[%s2766] sm:$0x40]
    %vm2768 = vcmask 1046534
    %v2769 = vsel %vm2768, %v2767, %v2765
    %s2770 = scalar_lea.vmem [#allocation1], 1946
    %v2771 = vld [vmem:[%s2770] sm:$0x80]
    %vm2772 = vcmask 1047559
    %v2773 = vsel %vm2772, %v2771, %v2769
    %2774 = vrot.lane.b32.xlu0 %v2773, 36
    %v2775 = vpop.permute.xlu0 %2774
    %vm2776 = vcmask 326944
    %s2777 = scalar_lea.vmem [#allocation0], 16
    %2778 = vst.msk [vmem:[%s2777] sm:$0xf] %vm2776, %v2775
    %s2779 = scalar_lea.vmem [#allocation0], 20
    %2780 = vst.msk [vmem:[%s2779] sm:$0xf0] %vm2776, %v2775
    %s2781 = scalar_lea.vmem [#allocation1], 32
    %v2782 = vld [vmem:[%s2781] sm:$0x1]
    %s2783 = scalar_lea.vmem [#allocation1], 287
    %v2784 = vld [vmem:[%s2783] sm:$0x2]
    %vm2785 = vcmask 1041409
    %v2786 = vsel %vm2785, %v2784, %v2782
    %s2787 = scalar_lea.vmem [#allocation1], 542
    %v2788 = vld [vmem:[%s2787] sm:$0x4]
    %vm2789 = vcmask 1042434
    %v2790 = vsel %vm2789, %v2788, %v2786
    %s2791 = scalar_lea.vmem [#allocation1], 797
    %v2792 = vld [vmem:[%s2791] sm:$0x8]
    %vm2793 = vcmask 1043459
    %v2794 = vsel %vm2793, %v2792, %v2790
    %s2795 = scalar_lea.vmem [#allocation1], 156
    %v2796 = vld [vmem:[%s2795] sm:$0x10]
    %vm2797 = vcmask 1044484
    %v2798 = vsel %vm2797, %v2796, %v2794
    %s2799 = scalar_lea.vmem [#allocation1], 411
    %v2800 = vld [vmem:[%s2799] sm:$0x20]
    %vm2801 = vcmask 1045509
    %v2802 = vsel %vm2801, %v2800, %v2798
    %s2803 = scalar_lea.vmem [#allocation1], 666
    %v2804 = vld [vmem:[%s2803] sm:$0x40]
    %vm2805 = vcmask 1046534
    %v2806 = vsel %vm2805, %v2804, %v2802
    %s2807 = scalar_lea.vmem [#allocation1], 921
    %v2808 = vld [vmem:[%s2807] sm:$0x80]
    %vm2809 = vcmask 1047559
    %v2810 = vsel %vm2809, %v2808, %v2806
    %2811 = vrot.lane.b32.xlu0 %v2810, 32
    %v2812 = vpop.permute.xlu0 %2811
    %vm2813 = vcmask 294144
    %2814 = vst.msk [vmem:[#allocation0] sm:$0xf] %vm2813, %v2812
    %s2815 = scalar_lea.vmem [#allocation0], 4
    %2816 = vst.msk [vmem:[%s2815] sm:$0xf0] %vm2813, %v2812
    %s2817 = scalar_lea.vmem [#allocation1], 1056
    %v2818 = vld [vmem:[%s2817] sm:$0x1]
    %s2819 = scalar_lea.vmem [#allocation1], 1311
    %v2820 = vld [vmem:[%s2819] sm:$0x2]
    %vm2821 = vcmask 1041409
    %v2822 = vsel %vm2821, %v2820, %v2818
    %s2823 = scalar_lea.vmem [#allocation1], 1566
    %v2824 = vld [vmem:[%s2823] sm:$0x4]
    %vm2825 = vcmask 1042434
    %v2826 = vsel %vm2825, %v2824, %v2822
    %s2827 = scalar_lea.vmem [#allocation1], 1821
    %v2828 = vld [vmem:[%s2827] sm:$0x8]
    %vm2829 = vcmask 1043459
    %v2830 = vsel %vm2829, %v2828, %v2826
    %s2831 = scalar_lea.vmem [#allocation1], 1180
    %v2832 = vld [vmem:[%s2831] sm:$0x10]
    %vm2833 = vcmask 1044484
    %v2834 = vsel %vm2833, %v2832, %v2830
    %s2835 = scalar_lea.vmem [#allocation1], 1435
    %v2836 = vld [vmem:[%s2835] sm:$0x20]
    %vm2837 = vcmask 1045509
    %v2838 = vsel %vm2837, %v2836, %v2834
    %s2839 = scalar_lea.vmem [#allocation1], 1690
    %v2840 = vld [vmem:[%s2839] sm:$0x40]
    %vm2841 = vcmask 1046534
    %v2842 = vsel %vm2841, %v2840, %v2838
    %s2843 = scalar_lea.vmem [#allocation1], 1945
    %v2844 = vld [vmem:[%s2843] sm:$0x80]
    %vm2845 = vcmask 1047559
    %v2846 = vsel %vm2845, %v2844, %v2842
    %2847 = vrot.lane.b32.xlu0 %v2846, 32
    %v2848 = vpop.permute.xlu0 %2847
    %vm2849 = vcmask 294144
    %s2850 = scalar_lea.vmem [#allocation0], 16
    %2851 = vst.msk [vmem:[%s2850] sm:$0xf] %vm2849, %v2848
    %s2852 = scalar_lea.vmem [#allocation0], 20
    %2853 = vst.msk [vmem:[%s2852] sm:$0xf0] %vm2849, %v2848
    %s2854 = scalar_lea.vmem [#allocation1], 25
    %v2855 = vld [vmem:[%s2854] sm:$0x1]
    %s2856 = scalar_lea.vmem [#allocation1], 280
    %v2857 = vld [vmem:[%s2856] sm:$0x2]
    %vm2858 = vcmask 1041409
    %v2859 = vsel %vm2858, %v2857, %v2855
    %s2860 = scalar_lea.vmem [#allocation1], 535
    %v2861 = vld [vmem:[%s2860] sm:$0x4]
    %vm2862 = vcmask 1042434
    %v2863 = vsel %vm2862, %v2861, %v2859
    %s2864 = scalar_lea.vmem [#allocation1], 790
    %v2865 = vld [vmem:[%s2864] sm:$0x8]
    %vm2866 = vcmask 1043459
    %v2867 = vsel %vm2866, %v2865, %v2863
    %s2868 = scalar_lea.vmem [#allocation1], 149
    %v2869 = vld [vmem:[%s2868] sm:$0x10]
    %vm2870 = vcmask 1044484
    %v2871 = vsel %vm2870, %v2869, %v2867
    %s2872 = scalar_lea.vmem [#allocation1], 404
    %v2873 = vld [vmem:[%s2872] sm:$0x20]
    %vm2874 = vcmask 1045509
    %v2875 = vsel %vm2874, %v2873, %v2871
    %s2876 = scalar_lea.vmem [#allocation1], 659
    %v2877 = vld [vmem:[%s2876] sm:$0x40]
    %vm2878 = vcmask 1046534
    %v2879 = vsel %vm2878, %v2877, %v2875
    %s2880 = scalar_lea.vmem [#allocation1], 914
    %v2881 = vld [vmem:[%s2880] sm:$0x80]
    %vm2882 = vcmask 1047559
    %v2883 = vsel %vm2882, %v2881, %v2879
    %2884 = vrot.lane.b32.xlu0 %v2883, 28
    %v2885 = vpop.permute.xlu0 %2884
    %vm2886 = vcmask 261344
    %2887 = vst.msk [vmem:[#allocation0] sm:$0xf] %vm2886, %v2885
    %s2888 = scalar_lea.vmem [#allocation0], 4
    %2889 = vst.msk [vmem:[%s2888] sm:$0xf0] %vm2886, %v2885
    %s2890 = scalar_lea.vmem [#allocation1], 1049
    %v2891 = vld [vmem:[%s2890] sm:$0x1]
    %s2892 = scalar_lea.vmem [#allocation1], 1304
    %v2893 = vld [vmem:[%s2892] sm:$0x2]
    %vm2894 = vcmask 1041409
    %v2895 = vsel %vm2894, %v2893, %v2891
    %s2896 = scalar_lea.vmem [#allocation1], 1559
    %v2897 = vld [vmem:[%s2896] sm:$0x4]
    %vm2898 = vcmask 1042434
    %v2899 = vsel %vm2898, %v2897, %v2895
    %s2900 = scalar_lea.vmem [#allocation1], 1814
    %v2901 = vld [vmem:[%s2900] sm:$0x8]
    %vm2902 = vcmask 1043459
    %v2903 = vsel %vm2902, %v2901, %v2899
    %s2904 = scalar_lea.vmem [#allocation1], 1173
    %v2905 = vld [vmem:[%s2904] sm:$0x10]
    %vm2906 = vcmask 1044484
    %v2907 = vsel %vm2906, %v2905, %v2903
    %s2908 = scalar_lea.vmem [#allocation1], 1428
    %v2909 = vld [vmem:[%s2908] sm:$0x20]
    %vm2910 = vcmask 1045509
    %v2911 = vsel %vm2910, %v2909, %v2907
    %s2912 = scalar_lea.vmem [#allocation1], 1683
    %v2913 = vld [vmem:[%s2912] sm:$0x40]
    %vm2914 = vcmask 1046534
    %v2915 = vsel %vm2914, %v2913, %v2911
    %s2916 = scalar_lea.vmem [#allocation1], 1938
    %v2917 = vld [vmem:[%s2916] sm:$0x80]
    %vm2918 = vcmask 1047559
    %v2919 = vsel %vm2918, %v2917, %v2915
    %2920 = vrot.lane.b32.xlu0 %v2919, 28
    %v2921 = vpop.permute.xlu0 %2920
    %vm2922 = vcmask 261344
    %s2923 = scalar_lea.vmem [#allocation0], 16
    %2924 = vst.msk [vmem:[%s2923] sm:$0xf] %vm2922, %v2921
    %s2925 = scalar_lea.vmem [#allocation0], 20
    %2926 = vst.msk [vmem:[%s2925] sm:$0xf0] %vm2922, %v2921
    %s2927 = scalar_lea.vmem [#allocation1], 24
    %v2928 = vld [vmem:[%s2927] sm:$0x1]
    %s2929 = scalar_lea.vmem [#allocation1], 279
    %v2930 = vld [vmem:[%s2929] sm:$0x2]
    %vm2931 = vcmask 1041409
    %v2932 = vsel %vm2931, %v2930, %v2928
    %s2933 = scalar_lea.vmem [#allocation1], 534
    %v2934 = vld [vmem:[%s2933] sm:$0x4]
    %vm2935 = vcmask 1042434
    %v2936 = vsel %vm2935, %v2934, %v2932
    %s2937 = scalar_lea.vmem [#allocation1], 789
    %v2938 = vld [vmem:[%s2937] sm:$0x8]
    %vm2939 = vcmask 1043459
    %v2940 = vsel %vm2939, %v2938, %v2936
    %s2941 = scalar_lea.vmem [#allocation1], 148
    %v2942 = vld [vmem:[%s2941] sm:$0x10]
    %vm2943 = vcmask 1044484
    %v2944 = vsel %vm2943, %v2942, %v2940
    %s2945 = scalar_lea.vmem [#allocation1], 403
    %v2946 = vld [vmem:[%s2945] sm:$0x20]
    %vm2947 = vcmask 1045509
    %v2948 = vsel %vm2947, %v2946, %v2944
    %s2949 = scalar_lea.vmem [#allocation1], 658
    %v2950 = vld [vmem:[%s2949] sm:$0x40]
    %vm2951 = vcmask 1046534
    %v2952 = vsel %vm2951, %v2950, %v2948
    %s2953 = scalar_lea.vmem [#allocation1], 913
    %v2954 = vld [vmem:[%s2953] sm:$0x80]
    %vm2955 = vcmask 1047559
    %v2956 = vsel %vm2955, %v2954, %v2952
    %2957 = vrot.lane.b32.xlu0 %v2956, 24
    %v2958 = vpop.permute.xlu0 %2957
    %vm2959 = vcmask 228544
    %2960 = vst.msk [vmem:[#allocation0] sm:$0xf] %vm2959, %v2958
    %s2961 = scalar_lea.vmem [#allocation0], 4
    %2962 = vst.msk [vmem:[%s2961] sm:$0xf0] %vm2959, %v2958
    %s2963 = scalar_lea.vmem [#allocation1], 1048
    %v2964 = vld [vmem:[%s2963] sm:$0x1]
    %s2965 = scalar_lea.vmem [#allocation1], 1303
    %v2966 = vld [vmem:[%s2965] sm:$0x2]
    %vm2967 = vcmask 1041409
    %v2968 = vsel %vm2967, %v2966, %v2964
    %s2969 = scalar_lea.vmem [#allocation1], 1558
    %v2970 = vld [vmem:[%s2969] sm:$0x4]
    %vm2971 = vcmask 1042434
    %v2972 = vsel %vm2971, %v2970, %v2968
    %s2973 = scalar_lea.vmem [#allocation1], 1813
    %v2974 = vld [vmem:[%s2973] sm:$0x8]
    %vm2975 = vcmask 1043459
    %v2976 = vsel %vm2975, %v2974, %v2972
    %s2977 = scalar_lea.vmem [#allocation1], 1172
    %v2978 = vld [vmem:[%s2977] sm:$0x10]
    %vm2979 = vcmask 1044484
    %v2980 = vsel %vm2979, %v2978, %v2976
    %s2981 = scalar_lea.vmem [#allocation1], 1427
    %v2982 = vld [vmem:[%s2981] sm:$0x20]
    %vm2983 = vcmask 1045509
    %v2984 = vsel %vm2983, %v2982, %v2980
    %s2985 = scalar_lea.vmem [#allocation1], 1682
    %v2986 = vld [vmem:[%s2985] sm:$0x40]
    %vm2987 = vcmask 1046534
    %v2988 = vsel %vm2987, %v2986, %v2984
    %s2989 = scalar_lea.vmem [#allocation1], 1937
    %v2990 = vld [vmem:[%s2989] sm:$0x80]
    %vm2991 = vcmask 1047559
    %v2992 = vsel %vm2991, %v2990, %v2988
    %2993 = vrot.lane.b32.xlu0 %v2992, 24
    %v2994 = vpop.permute.xlu0 %2993
    %vm2995 = vcmask 228544
    %s2996 = scalar_lea.vmem [#allocation0], 16
    %2997 = vst.msk [vmem:[%s2996] sm:$0xf] %vm2995, %v2994
    %s2998 = scalar_lea.vmem [#allocation0], 20
    %2999 = vst.msk [vmem:[%s2998] sm:$0xf0] %vm2995, %v2994
    %s3000 = scalar_lea.vmem [#allocation1], 17
    %v3001 = vld [vmem:[%s3000] sm:$0x1]
    %s3002 = scalar_lea.vmem [#allocation1], 272
    %v3003 = vld [vmem:[%s3002] sm:$0x2]
    %vm3004 = vcmask 1041409
    %v3005 = vsel %vm3004, %v3003, %v3001
    %s3006 = scalar_lea.vmem [#allocation1], 527
    %v3007 = vld [vmem:[%s3006] sm:$0x4]
    %vm3008 = vcmask 1042434
    %v3009 = vsel %vm3008, %v3007, %v3005
    %s3010 = scalar_lea.vmem [#allocation1], 782
    %v3011 = vld [vmem:[%s3010] sm:$0x8]
    %vm3012 = vcmask 1043459
    %v3013 = vsel %vm3012, %v3011, %v3009
    %s3014 = scalar_lea.vmem [#allocation1], 141
    %v3015 = vld [vmem:[%s3014] sm:$0x10]
    %vm3016 = vcmask 1044484
    %v3017 = vsel %vm3016, %v3015, %v3013
    %s3018 = scalar_lea.vmem [#allocation1], 396
    %v3019 = vld [vmem:[%s3018] sm:$0x20]
    %vm3020 = vcmask 1045509
    %v3021 = vsel %vm3020, %v3019, %v3017
    %s3022 = scalar_lea.vmem [#allocation1], 651
    %v3023 = vld [vmem:[%s3022] sm:$0x40]
    %vm3024 = vcmask 1046534
    %v3025 = vsel %vm3024, %v3023, %v3021
    %s3026 = scalar_lea.vmem [#allocation1], 906
    %v3027 = vld [vmem:[%s3026] sm:$0x80]
    %vm3028 = vcmask 1047559
    %v3029 = vsel %vm3028, %v3027, %v3025
    %3030 = vrot.lane.b32.xlu0 %v3029, 20
    %v3031 = vpop.permute.xlu0 %3030
    %vm3032 = vcmask 195744
    %3033 = vst.msk [vmem:[#allocation0] sm:$0xf] %vm3032, %v3031
    %s3034 = scalar_lea.vmem [#allocation0], 4
    %3035 = vst.msk [vmem:[%s3034] sm:$0xf0] %vm3032, %v3031
    %s3036 = scalar_lea.vmem [#allocation1], 1041
    %v3037 = vld [vmem:[%s3036] sm:$0x1]
    %s3038 = scalar_lea.vmem [#allocation1], 1296
    %v3039 = vld [vmem:[%s3038] sm:$0x2]
    %vm3040 = vcmask 1041409
    %v3041 = vsel %vm3040, %v3039, %v3037
    %s3042 = scalar_lea.vmem [#allocation1], 1551
    %v3043 = vld [vmem:[%s3042] sm:$0x4]
    %vm3044 = vcmask 1042434
    %v3045 = vsel %vm3044, %v3043, %v3041
    %s3046 = scalar_lea.vmem [#allocation1], 1806
    %v3047 = vld [vmem:[%s3046] sm:$0x8]
    %vm3048 = vcmask 1043459
    %v3049 = vsel %vm3048, %v3047, %v3045
    %s3050 = scalar_lea.vmem [#allocation1], 1165
    %v3051 = vld [vmem:[%s3050] sm:$0x10]
    %vm3052 = vcmask 1044484
    %v3053 = vsel %vm3052, %v3051, %v3049
    %s3054 = scalar_lea.vmem [#allocation1], 1420
    %v3055 = vld [vmem:[%s3054] sm:$0x20]
    %vm3056 = vcmask 1045509
    %v3057 = vsel %vm3056, %v3055, %v3053
    %s3058 = scalar_lea.vmem [#allocation1], 1675
    %v3059 = vld [vmem:[%s3058] sm:$0x40]
    %vm3060 = vcmask 1046534
    %v3061 = vsel %vm3060, %v3059, %v3057
    %s3062 = scalar_lea.vmem [#allocation1], 1930
    %v3063 = vld [vmem:[%s3062] sm:$0x80]
    %vm3064 = vcmask 1047559
    %v3065 = vsel %vm3064, %v3063, %v3061
    %3066 = vrot.lane.b32.xlu0 %v3065, 20
    %v3067 = vpop.permute.xlu0 %3066
    %vm3068 = vcmask 195744
    %s3069 = scalar_lea.vmem [#allocation0], 16
    %3070 = vst.msk [vmem:[%s3069] sm:$0xf] %vm3068, %v3067
    %s3071 = scalar_lea.vmem [#allocation0], 20
    %3072 = vst.msk [vmem:[%s3071] sm:$0xf0] %vm3068, %v3067
    %s3073 = scalar_lea.vmem [#allocation1], 16
    %v3074 = vld [vmem:[%s3073] sm:$0x1]
    %s3075 = scalar_lea.vmem [#allocation1], 271
    %v3076 = vld [vmem:[%s3075] sm:$0x2]
    %vm3077 = vcmask 1041409
    %v3078 = vsel %vm3077, %v3076, %v3074
    %s3079 = scalar_lea.vmem [#allocation1], 526
    %v3080 = vld [vmem:[%s3079] sm:$0x4]
    %vm3081 = vcmask 1042434
    %v3082 = vsel %vm3081, %v3080, %v3078
    %s3083 = scalar_lea.vmem [#allocation1], 781
    %v3084 = vld [vmem:[%s3083] sm:$0x8]
    %vm3085 = vcmask 1043459
    %v3086 = vsel %vm3085, %v3084, %v3082
    %s3087 = scalar_lea.vmem [#allocation1], 140
    %v3088 = vld [vmem:[%s3087] sm:$0x10]
    %vm3089 = vcmask 1044484
    %v3090 = vsel %vm3089, %v3088, %v3086
    %s3091 = scalar_lea.vmem [#allocation1], 395
    %v3092 = vld [vmem:[%s3091] sm:$0x20]
    %vm3093 = vcmask 1045509
    %v3094 = vsel %vm3093, %v3092, %v3090
    %s3095 = scalar_lea.vmem [#allocation1], 650
    %v3096 = vld [vmem:[%s3095] sm:$0x40]
    %vm3097 = vcmask 1046534
    %v3098 = vsel %vm3097, %v3096, %v3094
    %s3099 = scalar_lea.vmem [#allocation1], 905
    %v3100 = vld [vmem:[%s3099] sm:$0x80]
    %vm3101 = vcmask 1047559
    %v3102 = vsel %vm3101, %v3100, %v3098
    %3103 = vrot.lane.b32.xlu0 %v3102, 16
    %v3104 = vpop.permute.xlu0 %3103
    %vm3105 = vcmask 162944
    %3106 = vst.msk [vmem:[#allocation0] sm:$0xf] %vm3105, %v3104
    %s3107 = scalar_lea.vmem [#allocation0], 4
    %3108 = vst.msk [vmem:[%s3107] sm:$0xf0] %vm3105, %v3104
    %s3109 = scalar_lea.vmem [#allocation1], 1040
    %v3110 = vld [vmem:[%s3109] sm:$0x1]
    %s3111 = scalar_lea.vmem [#allocation1], 1295
    %v3112 = vld [vmem:[%s3111] sm:$0x2]
    %vm3113 = vcmask 1041409
    %v3114 = vsel %vm3113, %v3112, %v3110
    %s3115 = scalar_lea.vmem [#allocation1], 1550
    %v3116 = vld [vmem:[%s3115] sm:$0x4]
    %vm3117 = vcmask 1042434
    %v3118 = vsel %vm3117, %v3116, %v3114
    %s3119 = scalar_lea.vmem [#allocation1], 1805
    %v3120 = vld [vmem:[%s3119] sm:$0x8]
    %vm3121 = vcmask 1043459
    %v3122 = vsel %vm3121, %v3120, %v3118
    %s3123 = scalar_lea.vmem [#allocation1], 1164
    %v3124 = vld [vmem:[%s3123] sm:$0x10]
    %vm3125 = vcmask 1044484
    %v3126 = vsel %vm3125, %v3124, %v3122
    %s3127 = scalar_lea.vmem [#allocation1], 1419
    %v3128 = vld [vmem:[%s3127] sm:$0x20]
    %vm3129 = vcmask 1045509
    %v3130 = vsel %vm3129, %v3128, %v3126
    %s3131 = scalar_lea.vmem [#allocation1], 1674
    %v3132 = vld [vmem:[%s3131] sm:$0x40]
    %vm3133 = vcmask 1046534
    %v3134 = vsel %vm3133, %v3132, %v3130
    %s3135 = scalar_lea.vmem [#allocation1], 1929
    %v3136 = vld [vmem:[%s3135] sm:$0x80]
    %vm3137 = vcmask 1047559
    %v3138 = vsel %vm3137, %v3136, %v3134
    %3139 = vrot.lane.b32.xlu0 %v3138, 16
    %v3140 = vpop.permute.xlu0 %3139
    %vm3141 = vcmask 162944
    %s3142 = scalar_lea.vmem [#allocation0], 16
    %3143 = vst.msk [vmem:[%s3142] sm:$0xf] %vm3141, %v3140
    %s3144 = scalar_lea.vmem [#allocation0], 20
    %3145 = vst.msk [vmem:[%s3144] sm:$0xf0] %vm3141, %v3140
    %s3146 = scalar_lea.vmem [#allocation1], 9
    %v3147 = vld [vmem:[%s3146] sm:$0x1]
    %s3148 = scalar_lea.vmem [#allocation1], 264
    %v3149 = vld [vmem:[%s3148] sm:$0x2]
    %vm3150 = vcmask 1041409
    %v3151 = vsel %vm3150, %v3149, %v3147
    %s3152 = scalar_lea.vmem [#allocation1], 519
    %v3153 = vld [vmem:[%s3152] sm:$0x4]
    %vm3154 = vcmask 1042434
    %v3155 = vsel %vm3154, %v3153, %v3151
    %s3156 = scalar_lea.vmem [#allocation1], 774
    %v3157 = vld [vmem:[%s3156] sm:$0x8]
    %vm3158 = vcmask 1043459
    %v3159 = vsel %vm3158, %v3157, %v3155
    %s3160 = scalar_lea.vmem [#allocation1], 133
    %v3161 = vld [vmem:[%s3160] sm:$0x10]
    %vm3162 = vcmask 1044484
    %v3163 = vsel %vm3162, %v3161, %v3159
    %s3164 = scalar_lea.vmem [#allocation1], 388
    %v3165 = vld [vmem:[%s3164] sm:$0x20]
    %vm3166 = vcmask 1045509
    %v3167 = vsel %vm3166, %v3165, %v3163
    %s3168 = scalar_lea.vmem [#allocation1], 643
    %v3169 = vld [vmem:[%s3168] sm:$0x40]
    %vm3170 = vcmask 1046534
    %v3171 = vsel %vm3170, %v3169, %v3167
    %s3172 = scalar_lea.vmem [#allocation1], 898
    %v3173 = vld [vmem:[%s3172] sm:$0x80]
    %vm3174 = vcmask 1047559
    %v3175 = vsel %vm3174, %v3173, %v3171
    %3176 = vrot.lane.b32.xlu0 %v3175, 12
    %v3177 = vpop.permute.xlu0 %3176
    %vm3178 = vcmask 130144
    %3179 = vst.msk [vmem:[#allocation0] sm:$0xf] %vm3178, %v3177
    %s3180 = scalar_lea.vmem [#allocation0], 4
    %3181 = vst.msk [vmem:[%s3180] sm:$0xf0] %vm3178, %v3177
    %s3182 = scalar_lea.vmem [#allocation1], 1033
    %v3183 = vld [vmem:[%s3182] sm:$0x1]
    %s3184 = scalar_lea.vmem [#allocation1], 1288
    %v3185 = vld [vmem:[%s3184] sm:$0x2]
    %vm3186 = vcmask 1041409
    %v3187 = vsel %vm3186, %v3185, %v3183
    %s3188 = scalar_lea.vmem [#allocation1], 1543
    %v3189 = vld [vmem:[%s3188] sm:$0x4]
    %vm3190 = vcmask 1042434
    %v3191 = vsel %vm3190, %v3189, %v3187
    %s3192 = scalar_lea.vmem [#allocation1], 1798
    %v3193 = vld [vmem:[%s3192] sm:$0x8]
    %vm3194 = vcmask 1043459
    %v3195 = vsel %vm3194, %v3193, %v3191
    %s3196 = scalar_lea.vmem [#allocation1], 1157
    %v3197 = vld [vmem:[%s3196] sm:$0x10]
    %vm3198 = vcmask 1044484
    %v3199 = vsel %vm3198, %v3197, %v3195
    %s3200 = scalar_lea.vmem [#allocation1], 1412
    %v3201 = vld [vmem:[%s3200] sm:$0x20]
    %vm3202 = vcmask 1045509
    %v3203 = vsel %vm3202, %v3201, %v3199
    %s3204 = scalar_lea.vmem [#allocation1], 1667
    %v3205 = vld [vmem:[%s3204] sm:$0x40]
    %vm3206 = vcmask 1046534
    %v3207 = vsel %vm3206, %v3205, %v3203
    %s3208 = scalar_lea.vmem [#allocation1], 1922
    %v3209 = vld [vmem:[%s3208] sm:$0x80]
    %vm3210 = vcmask 1047559
    %v3211 = vsel %vm3210, %v3209, %v3207
    %3212 = vrot.lane.b32.xlu0 %v3211, 12
    %v3213 = vpop.permute.xlu0 %3212
    %vm3214 = vcmask 130144
    %s3215 = scalar_lea.vmem [#allocation0], 16
    %3216 = vst.msk [vmem:[%s3215] sm:$0xf] %vm3214, %v3213
    %s3217 = scalar_lea.vmem [#allocation0], 20
    %3218 = vst.msk [vmem:[%s3217] sm:$0xf0] %vm3214, %v3213
    %s3219 = scalar_lea.vmem [#allocation1], 8
    %v3220 = vld [vmem:[%s3219] sm:$0x1]
    %s3221 = scalar_lea.vmem [#allocation1], 263
    %v3222 = vld [vmem:[%s3221] sm:$0x2]
    %vm3223 = vcmask 1041409
    %v3224 = vsel %vm3223, %v3222, %v3220
    %s3225 = scalar_lea.vmem [#allocation1], 518
    %v3226 = vld [vmem:[%s3225] sm:$0x4]
    %vm3227 = vcmask 1042434
    %v3228 = vsel %vm3227, %v3226, %v3224
    %s3229 = scalar_lea.vmem [#allocation1], 773
    %v3230 = vld [vmem:[%s3229] sm:$0x8]
    %vm3231 = vcmask 1043459
    %v3232 = vsel %vm3231, %v3230, %v3228
    %s3233 = scalar_lea.vmem [#allocation1], 132
    %v3234 = vld [vmem:[%s3233] sm:$0x10]
    %vm3235 = vcmask 1044484
    %v3236 = vsel %vm3235, %v3234, %v3232
    %s3237 = scalar_lea.vmem [#allocation1], 387
    %v3238 = vld [vmem:[%s3237] sm:$0x20]
    %vm3239 = vcmask 1045509
    %v3240 = vsel %vm3239, %v3238, %v3236
    %s3241 = scalar_lea.vmem [#allocation1], 642
    %v3242 = vld [vmem:[%s3241] sm:$0x40]
    %vm3243 = vcmask 1046534
    %v3244 = vsel %vm3243, %v3242, %v3240
    %s3245 = scalar_lea.vmem [#allocation1], 897
    %v3246 = vld [vmem:[%s3245] sm:$0x80]
    %vm3247 = vcmask 1047559
    %v3248 = vsel %vm3247, %v3246, %v3244
    %3249 = vrot.lane.b32.xlu0 %v3248, 8
    %v3250 = vpop.permute.xlu0 %3249
    %vm3251 = vcmask 97344
    %3252 = vst.msk [vmem:[#allocation0] sm:$0xf] %vm3251, %v3250
    %s3253 = scalar_lea.vmem [#allocation0], 4
    %3254 = vst.msk [vmem:[%s3253] sm:$0xf0] %vm3251, %v3250
    %s3255 = scalar_lea.vmem [#allocation1], 1032
    %v3256 = vld [vmem:[%s3255] sm:$0x1]
    %s3257 = scalar_lea.vmem [#allocation1], 1287
    %v3258 = vld [vmem:[%s3257] sm:$0x2]
    %vm3259 = vcmask 1041409
    %v3260 = vsel %vm3259, %v3258, %v3256
    %s3261 = scalar_lea.vmem [#allocation1], 1542
    %v3262 = vld [vmem:[%s3261] sm:$0x4]
    %vm3263 = vcmask 1042434
    %v3264 = vsel %vm3263, %v3262, %v3260
    %s3265 = scalar_lea.vmem [#allocation1], 1797
    %v3266 = vld [vmem:[%s3265] sm:$0x8]
    %vm3267 = vcmask 1043459
    %v3268 = vsel %vm3267, %v3266, %v3264
    %s3269 = scalar_lea.vmem [#allocation1], 1156
    %v3270 = vld [vmem:[%s3269] sm:$0x10]
    %vm3271 = vcmask 1044484
    %v3272 = vsel %vm3271, %v3270, %v3268
    %s3273 = scalar_lea.vmem [#allocation1], 1411
    %v3274 = vld [vmem:[%s3273] sm:$0x20]
    %vm3275 = vcmask 1045509
    %v3276 = vsel %vm3275, %v3274, %v3272
    %s3277 = scalar_lea.vmem [#allocation1], 1666
    %v3278 = vld [vmem:[%s3277] sm:$0x40]
    %vm3279 = vcmask 1046534
    %v3280 = vsel %vm3279, %v3278, %v3276
    %s3281 = scalar_lea.vmem [#allocation1], 1921
    %v3282 = vld [vmem:[%s3281] sm:$0x80]
    %vm3283 = vcmask 1047559
    %v3284 = vsel %vm3283, %v3282, %v3280
    %3285 = vrot.lane.b32.xlu0 %v3284, 8
    %v3286 = vpop.permute.xlu0 %3285
    %vm3287 = vcmask 97344
    %s3288 = scalar_lea.vmem [#allocation0], 16
    %3289 = vst.msk [vmem:[%s3288] sm:$0xf] %vm3287, %v3286
    %s3290 = scalar_lea.vmem [#allocation0], 20
    %3291 = vst.msk [vmem:[%s3290] sm:$0xf0] %vm3287, %v3286
    %s3292 = scalar_lea.vmem [#allocation1], 1
    %v3293 = vld [vmem:[%s3292] sm:$0x1]
    %s3294 = scalar_lea.vmem [#allocation1], 256
    %v3295 = vld [vmem:[%s3294] sm:$0x2]
    %vm3296 = vcmask 1041409
    %v3297 = vsel %vm3296, %v3295, %v3293
    %s3298 = scalar_lea.vmem [#allocation1], 511
    %v3299 = vld [vmem:[%s3298] sm:$0x4]
    %vm3300 = vcmask 1042434
    %v3301 = vsel %vm3300, %v3299, %v3297
    %s3302 = scalar_lea.vmem [#allocation1], 766
    %v3303 = vld [vmem:[%s3302] sm:$0x8]
    %vm3304 = vcmask 1043459
    %v3305 = vsel %vm3304, %v3303, %v3301
    %s3306 = scalar_lea.vmem [#allocation1], 125
    %v3307 = vld [vmem:[%s3306] sm:$0x10]
    %vm3308 = vcmask 1044484
    %v3309 = vsel %vm3308, %v3307, %v3305
    %s3310 = scalar_lea.vmem [#allocation1], 380
    %v3311 = vld [vmem:[%s3310] sm:$0x20]
    %vm3312 = vcmask 1045509
    %v3313 = vsel %vm3312, %v3311, %v3309
    %s3314 = scalar_lea.vmem [#allocation1], 635
    %v3315 = vld [vmem:[%s3314] sm:$0x40]
    %vm3316 = vcmask 1046534
    %v3317 = vsel %vm3316, %v3315, %v3313
    %s3318 = scalar_lea.vmem [#allocation1], 890
    %v3319 = vld [vmem:[%s3318] sm:$0x80]
    %vm3320 = vcmask 1047559
    %v3321 = vsel %vm3320, %v3319, %v3317
    %3322 = vrot.lane.b32.xlu0 %v3321, 4
    %v3323 = vpop.permute.xlu0 %3322
    %vm3324 = vcmask 64544
    %3325 = vst.msk [vmem:[#allocation0] sm:$0xf] %vm3324, %v3323
    %s3326 = scalar_lea.vmem [#allocation0], 4
    %3327 = vst.msk [vmem:[%s3326] sm:$0xf0] %vm3324, %v3323
    %s3328 = scalar_lea.vmem [#allocation1], 1025
    %v3329 = vld [vmem:[%s3328] sm:$0x1]
    %s3330 = scalar_lea.vmem [#allocation1], 1280
    %v3331 = vld [vmem:[%s3330] sm:$0x2]
    %vm3332 = vcmask 1041409
    %v3333 = vsel %vm3332, %v3331, %v3329
    %s3334 = scalar_lea.vmem [#allocation1], 1535
    %v3335 = vld [vmem:[%s3334] sm:$0x4]
    %vm3336 = vcmask 1042434
    %v3337 = vsel %vm3336, %v3335, %v3333
    %s3338 = scalar_lea.vmem [#allocation1], 1790
    %v3339 = vld [vmem:[%s3338] sm:$0x8]
    %vm3340 = vcmask 1043459
    %v3341 = vsel %vm3340, %v3339, %v3337
    %s3342 = scalar_lea.vmem [#allocation1], 1149
    %v3343 = vld [vmem:[%s3342] sm:$0x10]
    %vm3344 = vcmask 1044484
    %v3345 = vsel %vm3344, %v3343, %v3341
    %s3346 = scalar_lea.vmem [#allocation1], 1404
    %v3347 = vld [vmem:[%s3346] sm:$0x20]
    %vm3348 = vcmask 1045509
    %v3349 = vsel %vm3348, %v3347, %v3345
    %s3350 = scalar_lea.vmem [#allocation1], 1659
    %v3351 = vld [vmem:[%s3350] sm:$0x40]
    %vm3352 = vcmask 1046534
    %v3353 = vsel %vm3352, %v3351, %v3349
    %s3354 = scalar_lea.vmem [#allocation1], 1914
    %v3355 = vld [vmem:[%s3354] sm:$0x80]
    %vm3356 = vcmask 1047559
    %v3357 = vsel %vm3356, %v3355, %v3353
    %3358 = vrot.lane.b32.xlu0 %v3357, 4
    %v3359 = vpop.permute.xlu0 %3358
    %vm3360 = vcmask 64544
    %s3361 = scalar_lea.vmem [#allocation0], 16
    %3362 = vst.msk [vmem:[%s3361] sm:$0xf] %vm3360, %v3359
    %s3363 = scalar_lea.vmem [#allocation0], 20
    %3364 = vst.msk [vmem:[%s3363] sm:$0xf0] %vm3360, %v3359
    %s3366 = ssub.s32 16, 1
    %v3367 = vld [vmem:[#allocation0] sm:%s3366]
    %s3369 = ssub.s32 16, 1
    %3370 = vst [vmem:[%s1] sm:%s3369] %v3367
    %s3371 = scalar_lea.vmem [#allocation0], 8
    %v3372 = vld [vmem:[%s3371] sm:%s3366]
    %s3374 = ssub.s32 16, 1
    %s3375 = scalar_lea.vmem %s1, 4
    %3376 = vst [vmem:[%s3375] sm:%s3374] %v3372
    %s3377 = scalar_lea.vmem [#allocation0], 16
    %v3378 = vld [vmem:[%s3377] sm:%s3366]
    %s3380 = ssub.s32 16, 1
    %s3381 = scalar_lea.vmem %s1, 8
    %3382 = vst [vmem:[%s3381] sm:%s3380] %v3378
    %s3383 = scalar_lea.vmem [#allocation0], 24
    %v3384 = vld [vmem:[%s3383] sm:%s3366]
    %s3386 = ssub.s32 16, 1
    %s3387 = scalar_lea.vmem %s1, 12
    %3388 = vst [vmem:[%s3387] sm:%s3386] %v3384

// kernel: reverse.0
$region0: #{reverse.0}
  %s0 = inlined_call_operand.vmem [shape: f32[2,4,4,8,3], index: 0, kind: input, shape index: {}]
  %s1 = inlined_call_operand.vmem [shape: f32[2,4,4,8,3], index: 1, kind: output, shape index: {}]
  $region1: #{reverse.0} parent=0
    #allocation0 [shape = 'u8[262144]{0}', space=vmem, size = 0x40000, scoped, tag = 'operand span for operand 0']
    #allocation1 [shape = 'u8[131072]{0}', space=vmem, size = 0x20000, scoped, tag = 'packed  for operand 0']
    #allocation2 [shape = 'u8[131072]{0}', space=vmem, size = 0x20000, scoped, tag = 'operand span for operand 1']
    #allocation3 [shape = 'u8[65536]{0}', space=vmem, size = 0x10000, scoped, tag = 'packed  for operand 1']
    %s2 = scalar_lea.vmem [#allocation1], 4
    // Predicated region
    $region2: #{reverse.0} parent=1 // pred_check
      _
    $region3: #{reverse.0} parent=1 // pred_check_branch
      %4 = sbr.rel (0) target = $region5
    $region4: #{reverse.0} parent=1 // pred_region
      // Predicated region
      $region6: #{reverse.0} parent=4 // pred_check
        _
      $region7: #{reverse.0} parent=4 // pred_check_branch
        %6 = sbr.rel target = $region9
      $region8: #{reverse.0} parent=4 // pred_region
        // Predicated region
        $region21: #{reverse.0} parent=8 // pred_check
          _
        $region22: #{reverse.0} parent=8 // pred_check_branch
          %84 = sbr.rel (0) target = $region24
        $region23: #{reverse.0} parent=8 // pred_region
          loop: start=0, step=1, limit=1
          $region25: #{reverse.0} parent=23 // loop_pre_header
            _
          $region26: #{reverse.0} parent=23 // loop_header
            %s86 = sphi 0, %s90
            %p87 = scmp.ge.s32.totalorder %s86, 1
            %s91 = sphi %s0, %s0
            %s92 = sphi %s2, %s2
          $region27: #{reverse.0} parent=23 // loop_header_branch
            %89 = sbr.rel (%p87) target = $region31
          $region28: #{reverse.0} parent=23 // loop_body
            _
          $region29: #{reverse.0} parent=23 // loop_footer
            %s90 = sadd.s32 1, %s86
          $region30: #{reverse.0} parent=23 // loop_footer_branch
            %85 = sbr.rel target = $region26
          $region31: #{reverse.0} parent=23 // loop_exit
            _
          %s94 = ssub.s32 16, 1
          loop: start=0, step=1, limit=1
          $region32: #{reverse.0} parent=23 // loop_pre_header
            _
          $region33: #{reverse.0} parent=23 // loop_header
            %s96 = sphi 0, %s100
            %p97 = scmp.ge.s32.totalorder %s96, 1
            %s101 = sphi %s0, %s0
            %s102 = sphi %s2, %s2
          $region34: #{reverse.0} parent=23 // loop_header_branch
            %99 = sbr.rel (%p97) target = $region38
          $region35: #{reverse.0} parent=23 // loop_body
            %v103 = vld [vmem:[%s101] sm:%s94]
            %104 = vst [vmem:[%s102] sm:%s94] %v103
            %v105 = vld [vmem:[%s101 + $0x4] sm:%s94]
            %106 = vst [vmem:[%s102 + $0x8] sm:%s94] %v105
            %v107 = vld [vmem:[%s101 + $0x8] sm:%s94]
            %108 = vst [vmem:[%s102 + $0x10] sm:%s94] %v107
            %v109 = vld [vmem:[%s101 + $0xc] sm:%s94]
            %110 = vst [vmem:[%s102 + $0x18] sm:%s94] %v109
            %v111 = vld [vmem:[%s101 + $0x10] sm:%s94]
            %112 = vst [vmem:[%s102 + $0x20] sm:%s94] %v111
            %v113 = vld [vmem:[%s101 + $0x14] sm:%s94]
            %114 = vst [vmem:[%s102 + $0x28] sm:%s94] %v113
            %v115 = vld [vmem:[%s101 + $0x18] sm:%s94]
            %116 = vst [vmem:[%s102 + $0x30] sm:%s94] %v115
            %v117 = vld [vmem:[%s101 + $0x1c] sm:%s94]
            %118 = vst [vmem:[%s102 + $0x38] sm:%s94] %v117
            %v119 = vld [vmem:[%s101 + $0x20] sm:%s94]
            %120 = vst [vmem:[%s102 + $0x40] sm:%s94] %v119
            %v121 = vld [vmem:[%s101 + $0x24] sm:%s94]
            %122 = vst [vmem:[%s102 + $0x48] sm:%s94] %v121
            %v123 = vld [vmem:[%s101 + $0x28] sm:%s94]
            %124 = vst [vmem:[%s102 + $0x50] sm:%s94] %v123
            %v125 = vld [vmem:[%s101 + $0x2c] sm:%s94]
            %126 = vst [vmem:[%s102 + $0x58] sm:%s94] %v125
            %v127 = vld [vmem:[%s101 + $0x30] sm:%s94]
            %128 = vst [vmem:[%s102 + $0x60] sm:%s94] %v127
            %v129 = vld [vmem:[%s101 + $0x34] sm:%s94]
            %130 = vst [vmem:[%s102 + $0x68] sm:%s94] %v129
            %v131 = vld [vmem:[%s101 + $0x38] sm:%s94]
            %132 = vst [vmem:[%s102 + $0x70] sm:%s94] %v131
            %v133 = vld [vmem:[%s101 + $0x3c] sm:%s94]
            %134 = vst [vmem:[%s102 + $0x78] sm:%s94] %v133
            %v135 = vld [vmem:[%s101 + $0x40] sm:%s94]
            %136 = vst [vmem:[%s102 + $0x80] sm:%s94] %v135
            %v137 = vld [vmem:[%s101 + $0x44] sm:%s94]
            %138 = vst [vmem:[%s102 + $0x88] sm:%s94] %v137
            %v139 = vld [vmem:[%s101 + $0x48] sm:%s94]
            %140 = vst [vmem:[%s102 + $0x90] sm:%s94] %v139
            %v141 = vld [vmem:[%s101 + $0x4c] sm:%s94]
            %142 = vst [vmem:[%s102 + $0x98] sm:%s94] %v141
            %v143 = vld [vmem:[%s101 + $0x50] sm:%s94]
            %144 = vst [vmem:[%s102 + $0xa0] sm:%s94] %v143
            %v145 = vld [vmem:[%s101 + $0x54] sm:%s94]
            %146 = vst [vmem:[%s102 + $0xa8] sm:%s94] %v145
            %v147 = vld [vmem:[%s101 + $0x58] sm:%s94]
            %148 = vst [vmem:[%s102 + $0xb0] sm:%s94] %v147
            %v149 = vld [vmem:[%s101 + $0x5c] sm:%s94]
            %150 = vst [vmem:[%s102 + $0xb8] sm:%s94] %v149
            %v151 = vld [vmem:[%s101 + $0x60] sm:%s94]
            %152 = vst [vmem:[%s102 + $0xc0] sm:%s94] %v151
            %v153 = vld [vmem:[%s101 + $0x64] sm:%s94]
            %154 = vst [vmem:[%s102 + $0xc8] sm:%s94] %v153
            %v155 = vld [vmem:[%s101 + $0x68] sm:%s94]
            %156 = vst [vmem:[%s102 + $0xd0] sm:%s94] %v155
            %v157 = vld [vmem:[%s101 + $0x6c] sm:%s94]
            %158 = vst [vmem:[%s102 + $0xd8] sm:%s94] %v157
            %v159 = vld [vmem:[%s101 + $0x70] sm:%s94]
            %160 = vst [vmem:[%s102 + $0xe0] sm:%s94] %v159
            %v161 = vld [vmem:[%s101 + $0x74] sm:%s94]
            %162 = vst [vmem:[%s102 + $0xe8] sm:%s94] %v161
            %v163 = vld [vmem:[%s101 + $0x78] sm:%s94]
            %164 = vst [vmem:[%s102 + $0xf0] sm:%s94] %v163
            %v165 = vld [vmem:[%s101 + $0x7c] sm:%s94]
            %166 = vst [vmem:[%s102 + $0xf8] sm:%s94] %v165
          $region36: #{reverse.0} parent=23 // loop_footer
            %s100 = sadd.s32 1, %s96
          $region37: #{reverse.0} parent=23 // loop_footer_branch
            %95 = sbr.rel target = $region33
          $region38: #{reverse.0} parent=23 // loop_exit
            _
        $region24: #{reverse.0} parent=8 // pred_fallthru
          _
      $region9: #{reverse.0} parent=4 // pred_fallthru
        _
      // Predicated region
      $region10: #{reverse.0} parent=4 // pred_check
        _
      $region11: #{reverse.0} parent=4 // pred_check_branch
        %8 = sbr.rel (0) target = $region13
      $region12: #{reverse.0} parent=4 // pred_region
        %s10 = ssub.s32 16, 1
        loop: start=0, step=1, limit=1
        $region14: #{reverse.0} parent=12 // loop_pre_header
          _
        $region15: #{reverse.0} parent=12 // loop_header
          %s12 = sphi 0, %s16
          %p13 = scmp.ge.s32.totalorder %s12, 1
          %s17 = sphi %s0, %s0
          %s18 = sphi %s2, %s2
        $region16: #{reverse.0} parent=12 // loop_header_branch
          %15 = sbr.rel (%p13) target = $region20
        $region17: #{reverse.0} parent=12 // loop_body
          %v19 = vld [vmem:[%s17] sm:%s10]
          %20 = vst [vmem:[%s18] sm:%s10] %v19
          %v21 = vld [vmem:[%s17 + $0x4] sm:%s10]
          %22 = vst [vmem:[%s18 + $0x8] sm:%s10] %v21
          %v23 = vld [vmem:[%s17 + $0x8] sm:%s10]
          %24 = vst [vmem:[%s18 + $0x10] sm:%s10] %v23
          %v25 = vld [vmem:[%s17 + $0xc] sm:%s10]
          %26 = vst [vmem:[%s18 + $0x18] sm:%s10] %v25
          %v27 = vld [vmem:[%s17 + $0x10] sm:%s10]
          %28 = vst [vmem:[%s18 + $0x20] sm:%s10] %v27
          %v29 = vld [vmem:[%s17 + $0x14] sm:%s10]
          %30 = vst [vmem:[%s18 + $0x28] sm:%s10] %v29
          %v31 = vld [vmem:[%s17 + $0x18] sm:%s10]
          %32 = vst [vmem:[%s18 + $0x30] sm:%s10] %v31
          %v33 = vld [vmem:[%s17 + $0x1c] sm:%s10]
          %34 = vst [vmem:[%s18 + $0x38] sm:%s10] %v33
          %v35 = vld [vmem:[%s17 + $0x20] sm:%s10]
          %36 = vst [vmem:[%s18 + $0x40] sm:%s10] %v35
          %v37 = vld [vmem:[%s17 + $0x24] sm:%s10]
          %38 = vst [vmem:[%s18 + $0x48] sm:%s10] %v37
          %v39 = vld [vmem:[%s17 + $0x28] sm:%s10]
          %40 = vst [vmem:[%s18 + $0x50] sm:%s10] %v39
          %v41 = vld [vmem:[%s17 + $0x2c] sm:%s10]
          %42 = vst [vmem:[%s18 + $0x58] sm:%s10] %v41
          %v43 = vld [vmem:[%s17 + $0x30] sm:%s10]
          %44 = vst [vmem:[%s18 + $0x60] sm:%s10] %v43
          %v45 = vld [vmem:[%s17 + $0x34] sm:%s10]
          %46 = vst [vmem:[%s18 + $0x68] sm:%s10] %v45
          %v47 = vld [vmem:[%s17 + $0x38] sm:%s10]
          %48 = vst [vmem:[%s18 + $0x70] sm:%s10] %v47
          %v49 = vld [vmem:[%s17 + $0x3c] sm:%s10]
          %50 = vst [vmem:[%s18 + $0x78] sm:%s10] %v49
          %v51 = vld [vmem:[%s17 + $0x40] sm:%s10]
          %52 = vst [vmem:[%s18 + $0x80] sm:%s10] %v51
          %v53 = vld [vmem:[%s17 + $0x44] sm:%s10]
          %54 = vst [vmem:[%s18 + $0x88] sm:%s10] %v53
          %v55 = vld [vmem:[%s17 + $0x48] sm:%s10]
          %56 = vst [vmem:[%s18 + $0x90] sm:%s10] %v55
          %v57 = vld [vmem:[%s17 + $0x4c] sm:%s10]
          %58 = vst [vmem:[%s18 + $0x98] sm:%s10] %v57
          %v59 = vld [vmem:[%s17 + $0x50] sm:%s10]
          %60 = vst [vmem:[%s18 + $0xa0] sm:%s10] %v59
          %v61 = vld [vmem:[%s17 + $0x54] sm:%s10]
          %62 = vst [vmem:[%s18 + $0xa8] sm:%s10] %v61
          %v63 = vld [vmem:[%s17 + $0x58] sm:%s10]
          %64 = vst [vmem:[%s18 + $0xb0] sm:%s10] %v63
          %v65 = vld [vmem:[%s17 + $0x5c] sm:%s10]
          %66 = vst [vmem:[%s18 + $0xb8] sm:%s10] %v65
          %v67 = vld [vmem:[%s17 + $0x60] sm:%s10]
          %68 = vst [vmem:[%s18 + $0xc0] sm:%s10] %v67
          %v69 = vld [vmem:[%s17 + $0x64] sm:%s10]
          %70 = vst [vmem:[%s18 + $0xc8] sm:%s10] %v69
          %v71 = vld [vmem:[%s17 + $0x68] sm:%s10]
          %72 = vst [vmem:[%s18 + $0xd0] sm:%s10] %v71
          %v73 = vld [vmem:[%s17 + $0x6c] sm:%s10]
          %74 = vst [vmem:[%s18 + $0xd8] sm:%s10] %v73
          %v75 = vld [vmem:[%s17 + $0x70] sm:%s10]
          %76 = vst [vmem:[%s18 + $0xe0] sm:%s10] %v75
          %v77 = vld [vmem:[%s17 + $0x74] sm:%s10]
          %78 = vst [vmem:[%s18 + $0xe8] sm:%s10] %v77
          %v79 = vld [vmem:[%s17 + $0x78] sm:%s10]
          %80 = vst [vmem:[%s18 + $0xf0] sm:%s10] %v79
          %v81 = vld [vmem:[%s17 + $0x7c] sm:%s10]
          %82 = vst [vmem:[%s18 + $0xf8] sm:%s10] %v81
        $region18: #{reverse.0} parent=12 // loop_footer
          %s16 = sadd.s32 1, %s12
        $region19: #{reverse.0} parent=12 // loop_footer_branch
          %11 = sbr.rel target = $region15
        $region20: #{reverse.0} parent=12 // loop_exit
          _
      $region13: #{reverse.0} parent=4 // pred_fallthru
        _
    $region5: #{reverse.0} parent=1 // pred_fallthru
      _
    %167 = vnop
    %s169 = ssub.s32 16, 1
    %s170 = scalar_lea.vmem [#allocation1], 252
    %v171 = vld [vmem:[%s170] sm:%s169]
    %s172 = scalar_lea.vmem [#allocation0], 504
    %173 = vst [vmem:[%s172] sm:%s169] %v171
    %s174 = scalar_lea.vmem [#allocation1], 248
    %v175 = vld [vmem:[%s174] sm:%s169]
    %s176 = scalar_lea.vmem [#allocation0], 496
    %177 = vst [vmem:[%s176] sm:%s169] %v175
    %s178 = scalar_lea.vmem [#allocation1], 244
    %v179 = vld [vmem:[%s178] sm:%s169]
    %s180 = scalar_lea.vmem [#allocation0], 488
    %181 = vst [vmem:[%s180] sm:%s169] %v179
    %s182 = scalar_lea.vmem [#allocation1], 240
    %v183 = vld [vmem:[%s182] sm:%s169]
    %s184 = scalar_lea.vmem [#allocation0], 480
    %185 = vst [vmem:[%s184] sm:%s169] %v183
    %s186 = scalar_lea.vmem [#allocation1], 236
    %v187 = vld [vmem:[%s186] sm:%s169]
    %s188 = scalar_lea.vmem [#allocation0], 472
    %189 = vst [vmem:[%s188] sm:%s169] %v187
    %s190 = scalar_lea.vmem [#allocation1], 232
    %v191 = vld [vmem:[%s190] sm:%s169]
    %s192 = scalar_lea.vmem [#allocation0], 464
    %193 = vst [vmem:[%s192] sm:%s169] %v191
    %s194 = scalar_lea.vmem [#allocation1], 228
    %v195 = vld [vmem:[%s194] sm:%s169]
    %s196 = scalar_lea.vmem [#allocation0], 456
    %197 = vst [vmem:[%s196] sm:%s169] %v195
    %s198 = scalar_lea.vmem [#allocation1], 224
    %v199 = vld [vmem:[%s198] sm:%s169]
    %s200 = scalar_lea.vmem [#allocation0], 448
    %201 = vst [vmem:[%s200] sm:%s169] %v199
    %s202 = scalar_lea.vmem [#allocation1], 220
    %v203 = vld [vmem:[%s202] sm:%s169]
    %s204 = scalar_lea.vmem [#allocation0], 440
    %205 = vst [vmem:[%s204] sm:%s169] %v203
    %s206 = scalar_lea.vmem [#allocation1], 216
    %v207 = vld [vmem:[%s206] sm:%s169]
    %s208 = scalar_lea.vmem [#allocation0], 432
    %209 = vst [vmem:[%s208] sm:%s169] %v207
    %s210 = scalar_lea.vmem [#allocation1], 212
    %v211 = vld [vmem:[%s210] sm:%s169]
    %s212 = scalar_lea.vmem [#allocation0], 424
    %213 = vst [vmem:[%s212] sm:%s169] %v211
    %s214 = scalar_lea.vmem [#allocation1], 208
    %v215 = vld [vmem:[%s214] sm:%s169]
    %s216 = scalar_lea.vmem [#allocation0], 416
    %217 = vst [vmem:[%s216] sm:%s169] %v215
    %s218 = scalar_lea.vmem [#allocation1], 204
    %v219 = vld [vmem:[%s218] sm:%s169]
    %s220 = scalar_lea.vmem [#allocation0], 408
    %221 = vst [vmem:[%s220] sm:%s169] %v219
    %s222 = scalar_lea.vmem [#allocation1], 200
    %v223 = vld [vmem:[%s222] sm:%s169]
    %s224 = scalar_lea.vmem [#allocation0], 400
    %225 = vst [vmem:[%s224] sm:%s169] %v223
    %s226 = scalar_lea.vmem [#allocation1], 196
    %v227 = vld [vmem:[%s226] sm:%s169]
    %s228 = scalar_lea.vmem [#allocation0], 392
    %229 = vst [vmem:[%s228] sm:%s169] %v227
    %s230 = scalar_lea.vmem [#allocation1], 192
    %v231 = vld [vmem:[%s230] sm:%s169]
    %s232 = scalar_lea.vmem [#allocation0], 384
    %233 = vst [vmem:[%s232] sm:%s169] %v231
    %s234 = scalar_lea.vmem [#allocation1], 188
    %v235 = vld [vmem:[%s234] sm:%s169]
    %s236 = scalar_lea.vmem [#allocation0], 376
    %237 = vst [vmem:[%s236] sm:%s169] %v235
    %s238 = scalar_lea.vmem [#allocation1], 184
    %v239 = vld [vmem:[%s238] sm:%s169]
    %s240 = scalar_lea.vmem [#allocation0], 368
    %241 = vst [vmem:[%s240] sm:%s169] %v239
    %s242 = scalar_lea.vmem [#allocation1], 180
    %v243 = vld [vmem:[%s242] sm:%s169]
    %s244 = scalar_lea.vmem [#allocation0], 360
    %245 = vst [vmem:[%s244] sm:%s169] %v243
    %s246 = scalar_lea.vmem [#allocation1], 176
    %v247 = vld [vmem:[%s246] sm:%s169]
    %s248 = scalar_lea.vmem [#allocation0], 352
    %249 = vst [vmem:[%s248] sm:%s169] %v247
    %s250 = scalar_lea.vmem [#allocation1], 172
    %v251 = vld [vmem:[%s250] sm:%s169]
    %s252 = scalar_lea.vmem [#allocation0], 344
    %253 = vst [vmem:[%s252] sm:%s169] %v251
    %s254 = scalar_lea.vmem [#allocation1], 168
    %v255 = vld [vmem:[%s254] sm:%s169]
    %s256 = scalar_lea.vmem [#allocation0], 336
    %257 = vst [vmem:[%s256] sm:%s169] %v255
    %s258 = scalar_lea.vmem [#allocation1], 164
    %v259 = vld [vmem:[%s258] sm:%s169]
    %s260 = scalar_lea.vmem [#allocation0], 328
    %261 = vst [vmem:[%s260] sm:%s169] %v259
    %s262 = scalar_lea.vmem [#allocation1], 160
    %v263 = vld [vmem:[%s262] sm:%s169]
    %s264 = scalar_lea.vmem [#allocation0], 320
    %265 = vst [vmem:[%s264] sm:%s169] %v263
    %s266 = scalar_lea.vmem [#allocation1], 156
    %v267 = vld [vmem:[%s266] sm:%s169]
    %s268 = scalar_lea.vmem [#allocation0], 312
    %269 = vst [vmem:[%s268] sm:%s169] %v267
    %s270 = scalar_lea.vmem [#allocation1], 152
    %v271 = vld [vmem:[%s270] sm:%s169]
    %s272 = scalar_lea.vmem [#allocation0], 304
    %273 = vst [vmem:[%s272] sm:%s169] %v271
    %s274 = scalar_lea.vmem [#allocation1], 148
    %v275 = vld [vmem:[%s274] sm:%s169]
    %s276 = scalar_lea.vmem [#allocation0], 296
    %277 = vst [vmem:[%s276] sm:%s169] %v275
    %s278 = scalar_lea.vmem [#allocation1], 144
    %v279 = vld [vmem:[%s278] sm:%s169]
    %s280 = scalar_lea.vmem [#allocation0], 288
    %281 = vst [vmem:[%s280] sm:%s169] %v279
    %s282 = scalar_lea.vmem [#allocation1], 140
    %v283 = vld [vmem:[%s282] sm:%s169]
    %s284 = scalar_lea.vmem [#allocation0], 280
    %285 = vst [vmem:[%s284] sm:%s169] %v283
    %s286 = scalar_lea.vmem [#allocation1], 136
    %v287 = vld [vmem:[%s286] sm:%s169]
    %s288 = scalar_lea.vmem [#allocation0], 272
    %289 = vst [vmem:[%s288] sm:%s169] %v287
    %s290 = scalar_lea.vmem [#allocation1], 132
    %v291 = vld [vmem:[%s290] sm:%s169]
    %s292 = scalar_lea.vmem [#allocation0], 264
    %293 = vst [vmem:[%s292] sm:%s169] %v291
    %s294 = scalar_lea.vmem [#allocation1], 128
    %v295 = vld [vmem:[%s294] sm:%s169]
    %s296 = scalar_lea.vmem [#allocation0], 256
    %297 = vst [vmem:[%s296] sm:%s169] %v295
    %s298 = scalar_lea.vmem [#allocation1], 124
    %v299 = vld [vmem:[%s298] sm:%s169]
    %s300 = scalar_lea.vmem [#allocation0], 248
    %301 = vst [vmem:[%s300] sm:%s169] %v299
    %s302 = scalar_lea.vmem [#allocation1], 120
    %v303 = vld [vmem:[%s302] sm:%s169]
    %s304 = scalar_lea.vmem [#allocation0], 240
    %305 = vst [vmem:[%s304] sm:%s169] %v303
    %s306 = scalar_lea.vmem [#allocation1], 116
    %v307 = vld [vmem:[%s306] sm:%s169]
    %s308 = scalar_lea.vmem [#allocation0], 232
    %309 = vst [vmem:[%s308] sm:%s169] %v307
    %s310 = scalar_lea.vmem [#allocation1], 112
    %v311 = vld [vmem:[%s310] sm:%s169]
    %s312 = scalar_lea.vmem [#allocation0], 224
    %313 = vst [vmem:[%s312] sm:%s169] %v311
    %s314 = scalar_lea.vmem [#allocation1], 108
    %v315 = vld [vmem:[%s314] sm:%s169]
    %s316 = scalar_lea.vmem [#allocation0], 216
    %317 = vst [vmem:[%s316] sm:%s169] %v315
    %s318 = scalar_lea.vmem [#allocation1], 104
    %v319 = vld [vmem:[%s318] sm:%s169]
    %s320 = scalar_lea.vmem [#allocation0], 208
    %321 = vst [vmem:[%s320] sm:%s169] %v319
    %s322 = scalar_lea.vmem [#allocation1], 100
    %v323 = vld [vmem:[%s322] sm:%s169]
    %s324 = scalar_lea.vmem [#allocation0], 200
    %325 = vst [vmem:[%s324] sm:%s169] %v323
    %s326 = scalar_lea.vmem [#allocation1], 96
    %v327 = vld [vmem:[%s326] sm:%s169]
    %s328 = scalar_lea.vmem [#allocation0], 192
    %329 = vst [vmem:[%s328] sm:%s169] %v327
    %s330 = scalar_lea.vmem [#allocation1], 92
    %v331 = vld [vmem:[%s330] sm:%s169]
    %s332 = scalar_lea.vmem [#allocation0], 184
    %333 = vst [vmem:[%s332] sm:%s169] %v331
    %s334 = scalar_lea.vmem [#allocation1], 88
    %v335 = vld [vmem:[%s334] sm:%s169]
    %s336 = scalar_lea.vmem [#allocation0], 176
    %337 = vst [vmem:[%s336] sm:%s169] %v335
    %s338 = scalar_lea.vmem [#allocation1], 84
    %v339 = vld [vmem:[%s338] sm:%s169]
    %s340 = scalar_lea.vmem [#allocation0], 168
    %341 = vst [vmem:[%s340] sm:%s169] %v339
    %s342 = scalar_lea.vmem [#allocation1], 80
    %v343 = vld [vmem:[%s342] sm:%s169]
    %s344 = scalar_lea.vmem [#allocation0], 160
    %345 = vst [vmem:[%s344] sm:%s169] %v343
    %s346 = scalar_lea.vmem [#allocation1], 76
    %v347 = vld [vmem:[%s346] sm:%s169]
    %s348 = scalar_lea.vmem [#allocation0], 152
    %349 = vst [vmem:[%s348] sm:%s169] %v347
    %s350 = scalar_lea.vmem [#allocation1], 72
    %v351 = vld [vmem:[%s350] sm:%s169]
    %s352 = scalar_lea.vmem [#allocation0], 144
    %353 = vst [vmem:[%s352] sm:%s169] %v351
    %s354 = scalar_lea.vmem [#allocation1], 68
    %v355 = vld [vmem:[%s354] sm:%s169]
    %s356 = scalar_lea.vmem [#allocation0], 136
    %357 = vst [vmem:[%s356] sm:%s169] %v355
    %s358 = scalar_lea.vmem [#allocation1], 64
    %v359 = vld [vmem:[%s358] sm:%s169]
    %s360 = scalar_lea.vmem [#allocation0], 128
    %361 = vst [vmem:[%s360] sm:%s169] %v359
    %s362 = scalar_lea.vmem [#allocation1], 60
    %v363 = vld [vmem:[%s362] sm:%s169]
    %s364 = scalar_lea.vmem [#allocation0], 120
    %365 = vst [vmem:[%s364] sm:%s169] %v363
    %s366 = scalar_lea.vmem [#allocation1], 56
    %v367 = vld [vmem:[%s366] sm:%s169]
    %s368 = scalar_lea.vmem [#allocation0], 112
    %369 = vst [vmem:[%s368] sm:%s169] %v367
    %s370 = scalar_lea.vmem [#allocation1], 52
    %v371 = vld [vmem:[%s370] sm:%s169]
    %s372 = scalar_lea.vmem [#allocation0], 104
    %373 = vst [vmem:[%s372] sm:%s169] %v371
    %s374 = scalar_lea.vmem [#allocation1], 48
    %v375 = vld [vmem:[%s374] sm:%s169]
    %s376 = scalar_lea.vmem [#allocation0], 96
    %377 = vst [vmem:[%s376] sm:%s169] %v375
    %s378 = scalar_lea.vmem [#allocation1], 44
    %v379 = vld [vmem:[%s378] sm:%s169]
    %s380 = scalar_lea.vmem [#allocation0], 88
    %381 = vst [vmem:[%s380] sm:%s169] %v379
    %s382 = scalar_lea.vmem [#allocation1], 40
    %v383 = vld [vmem:[%s382] sm:%s169]
    %s384 = scalar_lea.vmem [#allocation0], 80
    %385 = vst [vmem:[%s384] sm:%s169] %v383
    %s386 = scalar_lea.vmem [#allocation1], 36
    %v387 = vld [vmem:[%s386] sm:%s169]
    %s388 = scalar_lea.vmem [#allocation0], 72
    %389 = vst [vmem:[%s388] sm:%s169] %v387
    %s390 = scalar_lea.vmem [#allocation1], 32
    %v391 = vld [vmem:[%s390] sm:%s169]
    %s392 = scalar_lea.vmem [#allocation0], 64
    %393 = vst [vmem:[%s392] sm:%s169] %v391
    %s394 = scalar_lea.vmem [#allocation1], 28
    %v395 = vld [vmem:[%s394] sm:%s169]
    %s396 = scalar_lea.vmem [#allocation0], 56
    %397 = vst [vmem:[%s396] sm:%s169] %v395
    %s398 = scalar_lea.vmem [#allocation1], 24
    %v399 = vld [vmem:[%s398] sm:%s169]
    %s400 = scalar_lea.vmem [#allocation0], 48
    %401 = vst [vmem:[%s400] sm:%s169] %v399
    %s402 = scalar_lea.vmem [#allocation1], 20
    %v403 = vld [vmem:[%s402] sm:%s169]
    %s404 = scalar_lea.vmem [#allocation0], 40
    %405 = vst [vmem:[%s404] sm:%s169] %v403
    %s406 = scalar_lea.vmem [#allocation1], 16
    %v407 = vld [vmem:[%s406] sm:%s169]
    %s408 = scalar_lea.vmem [#allocation0], 32
    %409 = vst [vmem:[%s408] sm:%s169] %v407
    %s410 = scalar_lea.vmem [#allocation1], 12
    %v411 = vld [vmem:[%s410] sm:%s169]
    %s412 = scalar_lea.vmem [#allocation0], 24
    %413 = vst [vmem:[%s412] sm:%s169] %v411
    %s414 = scalar_lea.vmem [#allocation1], 8
    %v415 = vld [vmem:[%s414] sm:%s169]
    %s416 = scalar_lea.vmem [#allocation0], 16
    %417 = vst [vmem:[%s416] sm:%s169] %v415
    %s418 = scalar_lea.vmem [#allocation1], 4
    %v419 = vld [vmem:[%s418] sm:%s169]
    %s420 = scalar_lea.vmem [#allocation0], 8
    %421 = vst [vmem:[%s420] sm:%s169] %v419
    %v422 = vld [vmem:[#allocation1] sm:%s169]
    %423 = vst [vmem:[#allocation0] sm:%s169] %v422
    %s424 = scalar_lea.vmem [#allocation0], 7
    %v425 = vld [vmem:[%s424] ss:$-1 sm:$0xff]
    %v426 = vrot.slane %v425, 5
    %427 = vst [vmem:[#allocation2] sm:$0xff] %v426
    %s428 = scalar_lea.vmem [#allocation0], 8
    %s429 = scalar_lea.vmem %s428, 7 [#allocation0]
    %v430 = vld [vmem:[%s429] ss:$-1 sm:$0xff]
    %v431 = vrot.slane %v430, 5
    %v432 = vlaneseq
    %v433 = vshrl.u32 %v432, 7
    %vm434 = vcmp.lt.s32.totalorder %v433, 3
    %435 = vst.msk [vmem:[#allocation2] sm:$0xff] %vm434, %v431
    %s436 = scalar_lea.vmem [#allocation2], 8
    %s437 = scalar_lea.vmem [#allocation0], 16
    %s438 = scalar_lea.vmem %s437, 7 [#allocation0]
    %v439 = vld [vmem:[%s438] ss:$-1 sm:$0xff]
    %v440 = vrot.slane %v439, 5
    %441 = vst [vmem:[%s436] sm:$0xff] %v440
    %s442 = scalar_lea.vmem %s437, 8 [#allocation0]
    %s443 = scalar_lea.vmem %s442, 7 [#allocation0]
    %v444 = vld [vmem:[%s443] ss:$-1 sm:$0xff]
    %v445 = vrot.slane %v444, 5
    %v446 = vlaneseq
    %v447 = vshrl.u32 %v446, 7
    %vm448 = vcmp.lt.s32.totalorder %v447, 3
    %449 = vst.msk [vmem:[%s436] sm:$0xff] %vm448, %v445
    %s450 = scalar_lea.vmem [#allocation2], 16
    %s451 = scalar_lea.vmem [#allocation0], 32
    %s452 = scalar_lea.vmem %s451, 7 [#allocation0]
    %v453 = vld [vmem:[%s452] ss:$-1 sm:$0xff]
    %v454 = vrot.slane %v453, 5
    %455 = vst [vmem:[%s450] sm:$0xff] %v454
    %s456 = scalar_lea.vmem %s451, 8 [#allocation0]
    %s457 = scalar_lea.vmem %s456, 7 [#allocation0]
    %v458 = vld [vmem:[%s457] ss:$-1 sm:$0xff]
    %v459 = vrot.slane %v458, 5
    %v460 = vlaneseq
    %v461 = vshrl.u32 %v460, 7
    %vm462 = vcmp.lt.s32.totalorder %v461, 3
    %463 = vst.msk [vmem:[%s450] sm:$0xff] %vm462, %v459
    %s464 = scalar_lea.vmem [#allocation2], 24
    %s465 = scalar_lea.vmem [#allocation0], 48
    %s466 = scalar_lea.vmem %s465, 7 [#allocation0]
    %v467 = vld [vmem:[%s466] ss:$-1 sm:$0xff]
    %v468 = vrot.slane %v467, 5
    %469 = vst [vmem:[%s464] sm:$0xff] %v468
    %s470 = scalar_lea.vmem %s465, 8 [#allocation0]
    %s471 = scalar_lea.vmem %s470, 7 [#allocation0]
    %v472 = vld [vmem:[%s471] ss:$-1 sm:$0xff]
    %v473 = vrot.slane %v472, 5
    %v474 = vlaneseq
    %v475 = vshrl.u32 %v474, 7
    %vm476 = vcmp.lt.s32.totalorder %v475, 3
    %477 = vst.msk [vmem:[%s464] sm:$0xff] %vm476, %v473
    %s478 = scalar_lea.vmem [#allocation2], 32
    %s479 = scalar_lea.vmem [#allocation0], 64
    %s480 = scalar_lea.vmem %s479, 7 [#allocation0]
    %v481 = vld [vmem:[%s480] ss:$-1 sm:$0xff]
    %v482 = vrot.slane %v481, 5
    %483 = vst [vmem:[%s478] sm:$0xff] %v482
    %s484 = scalar_lea.vmem %s479, 8 [#allocation0]
    %s485 = scalar_lea.vmem %s484, 7 [#allocation0]
    %v486 = vld [vmem:[%s485] ss:$-1 sm:$0xff]
    %v487 = vrot.slane %v486, 5
    %v488 = vlaneseq
    %v489 = vshrl.u32 %v488, 7
    %vm490 = vcmp.lt.s32.totalorder %v489, 3
    %491 = vst.msk [vmem:[%s478] sm:$0xff] %vm490, %v487
    %s492 = scalar_lea.vmem [#allocation2], 40
    %s493 = scalar_lea.vmem [#allocation0], 80
    %s494 = scalar_lea.vmem %s493, 7 [#allocation0]
    %v495 = vld [vmem:[%s494] ss:$-1 sm:$0xff]
    %v496 = vrot.slane %v495, 5
    %497 = vst [vmem:[%s492] sm:$0xff] %v496
    %s498 = scalar_lea.vmem %s493, 8 [#allocation0]
    %s499 = scalar_lea.vmem %s498, 7 [#allocation0]
    %v500 = vld [vmem:[%s499] ss:$-1 sm:$0xff]
    %v501 = vrot.slane %v500, 5
    %v502 = vlaneseq
    %v503 = vshrl.u32 %v502, 7
    %vm504 = vcmp.lt.s32.totalorder %v503, 3
    %505 = vst.msk [vmem:[%s492] sm:$0xff] %vm504, %v501
    %s506 = scalar_lea.vmem [#allocation2], 48
    %s507 = scalar_lea.vmem [#allocation0], 96
    %s508 = scalar_lea.vmem %s507, 7 [#allocation0]
    %v509 = vld [vmem:[%s508] ss:$-1 sm:$0xff]
    %v510 = vrot.slane %v509, 5
    %511 = vst [vmem:[%s506] sm:$0xff] %v510
    %s512 = scalar_lea.vmem %s507, 8 [#allocation0]
    %s513 = scalar_lea.vmem %s512, 7 [#allocation0]
    %v514 = vld [vmem:[%s513] ss:$-1 sm:$0xff]
    %v515 = vrot.slane %v514, 5
    %v516 = vlaneseq
    %v517 = vshrl.u32 %v516, 7
    %vm518 = vcmp.lt.s32.totalorder %v517, 3
    %519 = vst.msk [vmem:[%s506] sm:$0xff] %vm518, %v515
    %s520 = scalar_lea.vmem [#allocation2], 56
    %s521 = scalar_lea.vmem [#allocation0], 112
    %s522 = scalar_lea.vmem %s521, 7 [#allocation0]
    %v523 = vld [vmem:[%s522] ss:$-1 sm:$0xff]
    %v524 = vrot.slane %v523, 5
    %525 = vst [vmem:[%s520] sm:$0xff] %v524
    %s526 = scalar_lea.vmem %s521, 8 [#allocation0]
    %s527 = scalar_lea.vmem %s526, 7 [#allocation0]
    %v528 = vld [vmem:[%s527] ss:$-1 sm:$0xff]
    %v529 = vrot.slane %v528, 5
    %v530 = vlaneseq
    %v531 = vshrl.u32 %v530, 7
    %vm532 = vcmp.lt.s32.totalorder %v531, 3
    %533 = vst.msk [vmem:[%s520] sm:$0xff] %vm532, %v529
    %s534 = scalar_lea.vmem [#allocation2], 64
    %s535 = scalar_lea.vmem [#allocation0], 128
    %s536 = scalar_lea.vmem %s535, 7 [#allocation0]
    %v537 = vld [vmem:[%s536] ss:$-1 sm:$0xff]
    %v538 = vrot.slane %v537, 5
    %539 = vst [vmem:[%s534] sm:$0xff] %v538
    %s540 = scalar_lea.vmem %s535, 8 [#allocation0]
    %s541 = scalar_lea.vmem %s540, 7 [#allocation0]
    %v542 = vld [vmem:[%s541] ss:$-1 sm:$0xff]
    %v543 = vrot.slane %v542, 5
    %v544 = vlaneseq
    %v545 = vshrl.u32 %v544, 7
    %vm546 = vcmp.lt.s32.totalorder %v545, 3
    %547 = vst.msk [vmem:[%s534] sm:$0xff] %vm546, %v543
    %s548 = scalar_lea.vmem [#allocation2], 72
    %s549 = scalar_lea.vmem [#allocation0], 144
    %s550 = scalar_lea.vmem %s549, 7 [#allocation0]
    %v551 = vld [vmem:[%s550] ss:$-1 sm:$0xff]
    %v552 = vrot.slane %v551, 5
    %553 = vst [vmem:[%s548] sm:$0xff] %v552
    %s554 = scalar_lea.vmem %s549, 8 [#allocation0]
    %s555 = scalar_lea.vmem %s554, 7 [#allocation0]
    %v556 = vld [vmem:[%s555] ss:$-1 sm:$0xff]
    %v557 = vrot.slane %v556, 5
    %v558 = vlaneseq
    %v559 = vshrl.u32 %v558, 7
    %vm560 = vcmp.lt.s32.totalorder %v559, 3
    %561 = vst.msk [vmem:[%s548] sm:$0xff] %vm560, %v557
    %s562 = scalar_lea.vmem [#allocation2], 80
    %s563 = scalar_lea.vmem [#allocation0], 160
    %s564 = scalar_lea.vmem %s563, 7 [#allocation0]
    %v565 = vld [vmem:[%s564] ss:$-1 sm:$0xff]
    %v566 = vrot.slane %v565, 5
    %567 = vst [vmem:[%s562] sm:$0xff] %v566
    %s568 = scalar_lea.vmem %s563, 8 [#allocation0]
    %s569 = scalar_lea.vmem %s568, 7 [#allocation0]
    %v570 = vld [vmem:[%s569] ss:$-1 sm:$0xff]
    %v571 = vrot.slane %v570, 5
    %v572 = vlaneseq
    %v573 = vshrl.u32 %v572, 7
    %vm574 = vcmp.lt.s32.totalorder %v573, 3
    %575 = vst.msk [vmem:[%s562] sm:$0xff] %vm574, %v571
    %s576 = scalar_lea.vmem [#allocation2], 88
    %s577 = scalar_lea.vmem [#allocation0], 176
    %s578 = scalar_lea.vmem %s577, 7 [#allocation0]
    %v579 = vld [vmem:[%s578] ss:$-1 sm:$0xff]
    %v580 = vrot.slane %v579, 5
    %581 = vst [vmem:[%s576] sm:$0xff] %v580
    %s582 = scalar_lea.vmem %s577, 8 [#allocation0]
    %s583 = scalar_lea.vmem %s582, 7 [#allocation0]
    %v584 = vld [vmem:[%s583] ss:$-1 sm:$0xff]
    %v585 = vrot.slane %v584, 5
    %v586 = vlaneseq
    %v587 = vshrl.u32 %v586, 7
    %vm588 = vcmp.lt.s32.totalorder %v587, 3
    %589 = vst.msk [vmem:[%s576] sm:$0xff] %vm588, %v585
    %s590 = scalar_lea.vmem [#allocation2], 96
    %s591 = scalar_lea.vmem [#allocation0], 192
    %s592 = scalar_lea.vmem %s591, 7 [#allocation0]
    %v593 = vld [vmem:[%s592] ss:$-1 sm:$0xff]
    %v594 = vrot.slane %v593, 5
    %595 = vst [vmem:[%s590] sm:$0xff] %v594
    %s596 = scalar_lea.vmem %s591, 8 [#allocation0]
    %s597 = scalar_lea.vmem %s596, 7 [#allocation0]
    %v598 = vld [vmem:[%s597] ss:$-1 sm:$0xff]
    %v599 = vrot.slane %v598, 5
    %v600 = vlaneseq
    %v601 = vshrl.u32 %v600, 7
    %vm602 = vcmp.lt.s32.totalorder %v601, 3
    %603 = vst.msk [vmem:[%s590] sm:$0xff] %vm602, %v599
    %s604 = scalar_lea.vmem [#allocation2], 104
    %s605 = scalar_lea.vmem [#allocation0], 208
    %s606 = scalar_lea.vmem %s605, 7 [#allocation0]
    %v607 = vld [vmem:[%s606] ss:$-1 sm:$0xff]
    %v608 = vrot.slane %v607, 5
    %609 = vst [vmem:[%s604] sm:$0xff] %v608
    %s610 = scalar_lea.vmem %s605, 8 [#allocation0]
    %s611 = scalar_lea.vmem %s610, 7 [#allocation0]
    %v612 = vld [vmem:[%s611] ss:$-1 sm:$0xff]
    %v613 = vrot.slane %v612, 5
    %v614 = vlaneseq
    %v615 = vshrl.u32 %v614, 7
    %vm616 = vcmp.lt.s32.totalorder %v615, 3
    %617 = vst.msk [vmem:[%s604] sm:$0xff] %vm616, %v613
    %s618 = scalar_lea.vmem [#allocation2], 112
    %s619 = scalar_lea.vmem [#allocation0], 224
    %s620 = scalar_lea.vmem %s619, 7 [#allocation0]
    %v621 = vld [vmem:[%s620] ss:$-1 sm:$0xff]
    %v622 = vrot.slane %v621, 5
    %623 = vst [vmem:[%s618] sm:$0xff] %v622
    %s624 = scalar_lea.vmem %s619, 8 [#allocation0]
    %s625 = scalar_lea.vmem %s624, 7 [#allocation0]
    %v626 = vld [vmem:[%s625] ss:$-1 sm:$0xff]
    %v627 = vrot.slane %v626, 5
    %v628 = vlaneseq
    %v629 = vshrl.u32 %v628, 7
    %vm630 = vcmp.lt.s32.totalorder %v629, 3
    %631 = vst.msk [vmem:[%s618] sm:$0xff] %vm630, %v627
    %s632 = scalar_lea.vmem [#allocation2], 120
    %s633 = scalar_lea.vmem [#allocation0], 240
    %s634 = scalar_lea.vmem %s633, 7 [#allocation0]
    %v635 = vld [vmem:[%s634] ss:$-1 sm:$0xff]
    %v636 = vrot.slane %v635, 5
    %637 = vst [vmem:[%s632] sm:$0xff] %v636
    %s638 = scalar_lea.vmem %s633, 8 [#allocation0]
    %s639 = scalar_lea.vmem %s638, 7 [#allocation0]
    %v640 = vld [vmem:[%s639] ss:$-1 sm:$0xff]
    %v641 = vrot.slane %v640, 5
    %v642 = vlaneseq
    %v643 = vshrl.u32 %v642, 7
    %vm644 = vcmp.lt.s32.totalorder %v643, 3
    %645 = vst.msk [vmem:[%s632] sm:$0xff] %vm644, %v641
    %s646 = scalar_lea.vmem [#allocation2], 128
    %s647 = scalar_lea.vmem [#allocation0], 256
    %s648 = scalar_lea.vmem %s647, 7 [#allocation0]
    %v649 = vld [vmem:[%s648] ss:$-1 sm:$0xff]
    %v650 = vrot.slane %v649, 5
    %651 = vst [vmem:[%s646] sm:$0xff] %v650
    %s652 = scalar_lea.vmem %s647, 8 [#allocation0]
    %s653 = scalar_lea.vmem %s652, 7 [#allocation0]
    %v654 = vld [vmem:[%s653] ss:$-1 sm:$0xff]
    %v655 = vrot.slane %v654, 5
    %v656 = vlaneseq
    %v657 = vshrl.u32 %v656, 7
    %vm658 = vcmp.lt.s32.totalorder %v657, 3
    %659 = vst.msk [vmem:[%s646] sm:$0xff] %vm658, %v655
    %s660 = scalar_lea.vmem [#allocation2], 136
    %s661 = scalar_lea.vmem [#allocation0], 272
    %s662 = scalar_lea.vmem %s661, 7 [#allocation0]
    %v663 = vld [vmem:[%s662] ss:$-1 sm:$0xff]
    %v664 = vrot.slane %v663, 5
    %665 = vst [vmem:[%s660] sm:$0xff] %v664
    %s666 = scalar_lea.vmem %s661, 8 [#allocation0]
    %s667 = scalar_lea.vmem %s666, 7 [#allocation0]
    %v668 = vld [vmem:[%s667] ss:$-1 sm:$0xff]
    %v669 = vrot.slane %v668, 5
    %v670 = vlaneseq
    %v671 = vshrl.u32 %v670, 7
    %vm672 = vcmp.lt.s32.totalorder %v671, 3
    %673 = vst.msk [vmem:[%s660] sm:$0xff] %vm672, %v669
    %s674 = scalar_lea.vmem [#allocation2], 144
    %s675 = scalar_lea.vmem [#allocation0], 288
    %s676 = scalar_lea.vmem %s675, 7 [#allocation0]
    %v677 = vld [vmem:[%s676] ss:$-1 sm:$0xff]
    %v678 = vrot.slane %v677, 5
    %679 = vst [vmem:[%s674] sm:$0xff] %v678
    %s680 = scalar_lea.vmem %s675, 8 [#allocation0]
    %s681 = scalar_lea.vmem %s680, 7 [#allocation0]
    %v682 = vld [vmem:[%s681] ss:$-1 sm:$0xff]
    %v683 = vrot.slane %v682, 5
    %v684 = vlaneseq
    %v685 = vshrl.u32 %v684, 7
    %vm686 = vcmp.lt.s32.totalorder %v685, 3
    %687 = vst.msk [vmem:[%s674] sm:$0xff] %vm686, %v683
    %s688 = scalar_lea.vmem [#allocation2], 152
    %s689 = scalar_lea.vmem [#allocation0], 304
    %s690 = scalar_lea.vmem %s689, 7 [#allocation0]
    %v691 = vld [vmem:[%s690] ss:$-1 sm:$0xff]
    %v692 = vrot.slane %v691, 5
    %693 = vst [vmem:[%s688] sm:$0xff] %v692
    %s694 = scalar_lea.vmem %s689, 8 [#allocation0]
    %s695 = scalar_lea.vmem %s694, 7 [#allocation0]
    %v696 = vld [vmem:[%s695] ss:$-1 sm:$0xff]
    %v697 = vrot.slane %v696, 5
    %v698 = vlaneseq
    %v699 = vshrl.u32 %v698, 7
    %vm700 = vcmp.lt.s32.totalorder %v699, 3
    %701 = vst.msk [vmem:[%s688] sm:$0xff] %vm700, %v697
    %s702 = scalar_lea.vmem [#allocation2], 160
    %s703 = scalar_lea.vmem [#allocation0], 320
    %s704 = scalar_lea.vmem %s703, 7 [#allocation0]
    %v705 = vld [vmem:[%s704] ss:$-1 sm:$0xff]
    %v706 = vrot.slane %v705, 5
    %707 = vst [vmem:[%s702] sm:$0xff] %v706
    %s708 = scalar_lea.vmem %s703, 8 [#allocation0]
    %s709 = scalar_lea.vmem %s708, 7 [#allocation0]
    %v710 = vld [vmem:[%s709] ss:$-1 sm:$0xff]
    %v711 = vrot.slane %v710, 5
    %v712 = vlaneseq
    %v713 = vshrl.u32 %v712, 7
    %vm714 = vcmp.lt.s32.totalorder %v713, 3
    %715 = vst.msk [vmem:[%s702] sm:$0xff] %vm714, %v711
    %s716 = scalar_lea.vmem [#allocation2], 168
    %s717 = scalar_lea.vmem [#allocation0], 336
    %s718 = scalar_lea.vmem %s717, 7 [#allocation0]
    %v719 = vld [vmem:[%s718] ss:$-1 sm:$0xff]
    %v720 = vrot.slane %v719, 5
    %721 = vst [vmem:[%s716] sm:$0xff] %v720
    %s722 = scalar_lea.vmem %s717, 8 [#allocation0]
    %s723 = scalar_lea.vmem %s722, 7 [#allocation0]
    %v724 = vld [vmem:[%s723] ss:$-1 sm:$0xff]
    %v725 = vrot.slane %v724, 5
    %v726 = vlaneseq
    %v727 = vshrl.u32 %v726, 7
    %vm728 = vcmp.lt.s32.totalorder %v727, 3
    %729 = vst.msk [vmem:[%s716] sm:$0xff] %vm728, %v725
    %s730 = scalar_lea.vmem [#allocation2], 176
    %s731 = scalar_lea.vmem [#allocation0], 352
    %s732 = scalar_lea.vmem %s731, 7 [#allocation0]
    %v733 = vld [vmem:[%s732] ss:$-1 sm:$0xff]
    %v734 = vrot.slane %v733, 5
    %735 = vst [vmem:[%s730] sm:$0xff] %v734
    %s736 = scalar_lea.vmem %s731, 8 [#allocation0]
    %s737 = scalar_lea.vmem %s736, 7 [#allocation0]
    %v738 = vld [vmem:[%s737] ss:$-1 sm:$0xff]
    %v739 = vrot.slane %v738, 5
    %v740 = vlaneseq
    %v741 = vshrl.u32 %v740, 7
    %vm742 = vcmp.lt.s32.totalorder %v741, 3
    %743 = vst.msk [vmem:[%s730] sm:$0xff] %vm742, %v739
    %s744 = scalar_lea.vmem [#allocation2], 184
    %s745 = scalar_lea.vmem [#allocation0], 368
    %s746 = scalar_lea.vmem %s745, 7 [#allocation0]
    %v747 = vld [vmem:[%s746] ss:$-1 sm:$0xff]
    %v748 = vrot.slane %v747, 5
    %749 = vst [vmem:[%s744] sm:$0xff] %v748
    %s750 = scalar_lea.vmem %s745, 8 [#allocation0]
    %s751 = scalar_lea.vmem %s750, 7 [#allocation0]
    %v752 = vld [vmem:[%s751] ss:$-1 sm:$0xff]
    %v753 = vrot.slane %v752, 5
    %v754 = vlaneseq
    %v755 = vshrl.u32 %v754, 7
    %vm756 = vcmp.lt.s32.totalorder %v755, 3
    %757 = vst.msk [vmem:[%s744] sm:$0xff] %vm756, %v753
    %s758 = scalar_lea.vmem [#allocation2], 192
    %s759 = scalar_lea.vmem [#allocation0], 384
    %s760 = scalar_lea.vmem %s759, 7 [#allocation0]
    %v761 = vld [vmem:[%s760] ss:$-1 sm:$0xff]
    %v762 = vrot.slane %v761, 5
    %763 = vst [vmem:[%s758] sm:$0xff] %v762
    %s764 = scalar_lea.vmem %s759, 8 [#allocation0]
    %s765 = scalar_lea.vmem %s764, 7 [#allocation0]
    %v766 = vld [vmem:[%s765] ss:$-1 sm:$0xff]
    %v767 = vrot.slane %v766, 5
    %v768 = vlaneseq
    %v769 = vshrl.u32 %v768, 7
    %vm770 = vcmp.lt.s32.totalorder %v769, 3
    %771 = vst.msk [vmem:[%s758] sm:$0xff] %vm770, %v767
    %s772 = scalar_lea.vmem [#allocation2], 200
    %s773 = scalar_lea.vmem [#allocation0], 400
    %s774 = scalar_lea.vmem %s773, 7 [#allocation0]
    %v775 = vld [vmem:[%s774] ss:$-1 sm:$0xff]
    %v776 = vrot.slane %v775, 5
    %777 = vst [vmem:[%s772] sm:$0xff] %v776
    %s778 = scalar_lea.vmem %s773, 8 [#allocation0]
    %s779 = scalar_lea.vmem %s778, 7 [#allocation0]
    %v780 = vld [vmem:[%s779] ss:$-1 sm:$0xff]
    %v781 = vrot.slane %v780, 5
    %v782 = vlaneseq
    %v783 = vshrl.u32 %v782, 7
    %vm784 = vcmp.lt.s32.totalorder %v783, 3
    %785 = vst.msk [vmem:[%s772] sm:$0xff] %vm784, %v781
    %s786 = scalar_lea.vmem [#allocation2], 208
    %s787 = scalar_lea.vmem [#allocation0], 416
    %s788 = scalar_lea.vmem %s787, 7 [#allocation0]
    %v789 = vld [vmem:[%s788] ss:$-1 sm:$0xff]
    %v790 = vrot.slane %v789, 5
    %791 = vst [vmem:[%s786] sm:$0xff] %v790
    %s792 = scalar_lea.vmem %s787, 8 [#allocation0]
    %s793 = scalar_lea.vmem %s792, 7 [#allocation0]
    %v794 = vld [vmem:[%s793] ss:$-1 sm:$0xff]
    %v795 = vrot.slane %v794, 5
    %v796 = vlaneseq
    %v797 = vshrl.u32 %v796, 7
    %vm798 = vcmp.lt.s32.totalorder %v797, 3
    %799 = vst.msk [vmem:[%s786] sm:$0xff] %vm798, %v795
    %s800 = scalar_lea.vmem [#allocation2], 216
    %s801 = scalar_lea.vmem [#allocation0], 432
    %s802 = scalar_lea.vmem %s801, 7 [#allocation0]
    %v803 = vld [vmem:[%s802] ss:$-1 sm:$0xff]
    %v804 = vrot.slane %v803, 5
    %805 = vst [vmem:[%s800] sm:$0xff] %v804
    %s806 = scalar_lea.vmem %s801, 8 [#allocation0]
    %s807 = scalar_lea.vmem %s806, 7 [#allocation0]
    %v808 = vld [vmem:[%s807] ss:$-1 sm:$0xff]
    %v809 = vrot.slane %v808, 5
    %v810 = vlaneseq
    %v811 = vshrl.u32 %v810, 7
    %vm812 = vcmp.lt.s32.totalorder %v811, 3
    %813 = vst.msk [vmem:[%s800] sm:$0xff] %vm812, %v809
    %s814 = scalar_lea.vmem [#allocation2], 224
    %s815 = scalar_lea.vmem [#allocation0], 448
    %s816 = scalar_lea.vmem %s815, 7 [#allocation0]
    %v817 = vld [vmem:[%s816] ss:$-1 sm:$0xff]
    %v818 = vrot.slane %v817, 5
    %819 = vst [vmem:[%s814] sm:$0xff] %v818
    %s820 = scalar_lea.vmem %s815, 8 [#allocation0]
    %s821 = scalar_lea.vmem %s820, 7 [#allocation0]
    %v822 = vld [vmem:[%s821] ss:$-1 sm:$0xff]
    %v823 = vrot.slane %v822, 5
    %v824 = vlaneseq
    %v825 = vshrl.u32 %v824, 7
    %vm826 = vcmp.lt.s32.totalorder %v825, 3
    %827 = vst.msk [vmem:[%s814] sm:$0xff] %vm826, %v823
    %s828 = scalar_lea.vmem [#allocation2], 232
    %s829 = scalar_lea.vmem [#allocation0], 464
    %s830 = scalar_lea.vmem %s829, 7 [#allocation0]
    %v831 = vld [vmem:[%s830] ss:$-1 sm:$0xff]
    %v832 = vrot.slane %v831, 5
    %833 = vst [vmem:[%s828] sm:$0xff] %v832
    %s834 = scalar_lea.vmem %s829, 8 [#allocation0]
    %s835 = scalar_lea.vmem %s834, 7 [#allocation0]
    %v836 = vld [vmem:[%s835] ss:$-1 sm:$0xff]
    %v837 = vrot.slane %v836, 5
    %v838 = vlaneseq
    %v839 = vshrl.u32 %v838, 7
    %vm840 = vcmp.lt.s32.totalorder %v839, 3
    %841 = vst.msk [vmem:[%s828] sm:$0xff] %vm840, %v837
    %s842 = scalar_lea.vmem [#allocation2], 240
    %s843 = scalar_lea.vmem [#allocation0], 480
    %s844 = scalar_lea.vmem %s843, 7 [#allocation0]
    %v845 = vld [vmem:[%s844] ss:$-1 sm:$0xff]
    %v846 = vrot.slane %v845, 5
    %847 = vst [vmem:[%s842] sm:$0xff] %v846
    %s848 = scalar_lea.vmem %s843, 8 [#allocation0]
    %s849 = scalar_lea.vmem %s848, 7 [#allocation0]
    %v850 = vld [vmem:[%s849] ss:$-1 sm:$0xff]
    %v851 = vrot.slane %v850, 5
    %v852 = vlaneseq
    %v853 = vshrl.u32 %v852, 7
    %vm854 = vcmp.lt.s32.totalorder %v853, 3
    %855 = vst.msk [vmem:[%s842] sm:$0xff] %vm854, %v851
    %s856 = scalar_lea.vmem [#allocation2], 248
    %s857 = scalar_lea.vmem [#allocation0], 496
    %s858 = scalar_lea.vmem %s857, 7 [#allocation0]
    %v859 = vld [vmem:[%s858] ss:$-1 sm:$0xff]
    %v860 = vrot.slane %v859, 5
    %861 = vst [vmem:[%s856] sm:$0xff] %v860
    %s862 = scalar_lea.vmem %s857, 8 [#allocation0]
    %s863 = scalar_lea.vmem %s862, 7 [#allocation0]
    %v864 = vld [vmem:[%s863] ss:$-1 sm:$0xff]
    %v865 = vrot.slane %v864, 5
    %v866 = vlaneseq
    %v867 = vshrl.u32 %v866, 7
    %vm868 = vcmp.lt.s32.totalorder %v867, 3
    %869 = vst.msk [vmem:[%s856] sm:$0xff] %vm868, %v865
    %s871 = ssub.s32 16, 1
    %v872 = vld [vmem:[#allocation2] sm:%s871]
    %s874 = ssub.s32 16, 1
    %875 = vst [vmem:[#allocation3] sm:%s874] %v872
    %s876 = scalar_lea.vmem [#allocation2], 8
    %v877 = vld [vmem:[%s876] sm:%s871]
    %s879 = ssub.s32 16, 1
    %s880 = scalar_lea.vmem [#allocation3], 4
    %881 = vst [vmem:[%s880] sm:%s879] %v877
    %s882 = scalar_lea.vmem [#allocation2], 16
    %v883 = vld [vmem:[%s882] sm:%s871]
    %s885 = ssub.s32 16, 1
    %s886 = scalar_lea.vmem [#allocation3], 8
    %887 = vst [vmem:[%s886] sm:%s885] %v883
    %s888 = scalar_lea.vmem [#allocation2], 24
    %v889 = vld [vmem:[%s888] sm:%s871]
    %s891 = ssub.s32 16, 1
    %s892 = scalar_lea.vmem [#allocation3], 12
    %893 = vst [vmem:[%s892] sm:%s891] %v889
    %s894 = scalar_lea.vmem [#allocation2], 32
    %v895 = vld [vmem:[%s894] sm:%s871]
    %s897 = ssub.s32 16, 1
    %s898 = scalar_lea.vmem [#allocation3], 16
    %899 = vst [vmem:[%s898] sm:%s897] %v895
    %s900 = scalar_lea.vmem [#allocation2], 40
    %v901 = vld [vmem:[%s900] sm:%s871]
    %s903 = ssub.s32 16, 1
    %s904 = scalar_lea.vmem [#allocation3], 20
    %905 = vst [vmem:[%s904] sm:%s903] %v901
    %s906 = scalar_lea.vmem [#allocation2], 48
    %v907 = vld [vmem:[%s906] sm:%s871]
    %s909 = ssub.s32 16, 1
    %s910 = scalar_lea.vmem [#allocation3], 24
    %911 = vst [vmem:[%s910] sm:%s909] %v907
    %s912 = scalar_lea.vmem [#allocation2], 56
    %v913 = vld [vmem:[%s912] sm:%s871]
    %s915 = ssub.s32 16, 1
    %s916 = scalar_lea.vmem [#allocation3], 28
    %917 = vst [vmem:[%s916] sm:%s915] %v913
    %s918 = scalar_lea.vmem [#allocation2], 64
    %v919 = vld [vmem:[%s918] sm:%s871]
    %s921 = ssub.s32 16, 1
    %s922 = scalar_lea.vmem [#allocation3], 32
    %923 = vst [vmem:[%s922] sm:%s921] %v919
    %s924 = scalar_lea.vmem [#allocation2], 72
    %v925 = vld [vmem:[%s924] sm:%s871]
    %s927 = ssub.s32 16, 1
    %s928 = scalar_lea.vmem [#allocation3], 36
    %929 = vst [vmem:[%s928] sm:%s927] %v925
    %s930 = scalar_lea.vmem [#allocation2], 80
    %v931 = vld [vmem:[%s930] sm:%s871]
    %s933 = ssub.s32 16, 1
    %s934 = scalar_lea.vmem [#allocation3], 40
    %935 = vst [vmem:[%s934] sm:%s933] %v931
    %s936 = scalar_lea.vmem [#allocation2], 88
    %v937 = vld [vmem:[%s936] sm:%s871]
    %s939 = ssub.s32 16, 1
    %s940 = scalar_lea.vmem [#allocation3], 44
    %941 = vst [vmem:[%s940] sm:%s939] %v937
    %s942 = scalar_lea.vmem [#allocation2], 96
    %v943 = vld [vmem:[%s942] sm:%s871]
    %s945 = ssub.s32 16, 1
    %s946 = scalar_lea.vmem [#allocation3], 48
    %947 = vst [vmem:[%s946] sm:%s945] %v943
    %s948 = scalar_lea.vmem [#allocation2], 104
    %v949 = vld [vmem:[%s948] sm:%s871]
    %s951 = ssub.s32 16, 1
    %s952 = scalar_lea.vmem [#allocation3], 52
    %953 = vst [vmem:[%s952] sm:%s951] %v949
    %s954 = scalar_lea.vmem [#allocation2], 112
    %v955 = vld [vmem:[%s954] sm:%s871]
    %s957 = ssub.s32 16, 1
    %s958 = scalar_lea.vmem [#allocation3], 56
    %959 = vst [vmem:[%s958] sm:%s957] %v955
    %s960 = scalar_lea.vmem [#allocation2], 120
    %v961 = vld [vmem:[%s960] sm:%s871]
    %s963 = ssub.s32 16, 1
    %s964 = scalar_lea.vmem [#allocation3], 60
    %965 = vst [vmem:[%s964] sm:%s963] %v961
    %s966 = scalar_lea.vmem [#allocation2], 128
    %v967 = vld [vmem:[%s966] sm:%s871]
    %s969 = ssub.s32 16, 1
    %s970 = scalar_lea.vmem [#allocation3], 64
    %971 = vst [vmem:[%s970] sm:%s969] %v967
    %s972 = scalar_lea.vmem [#allocation2], 136
    %v973 = vld [vmem:[%s972] sm:%s871]
    %s975 = ssub.s32 16, 1
    %s976 = scalar_lea.vmem [#allocation3], 68
    %977 = vst [vmem:[%s976] sm:%s975] %v973
    %s978 = scalar_lea.vmem [#allocation2], 144
    %v979 = vld [vmem:[%s978] sm:%s871]
    %s981 = ssub.s32 16, 1
    %s982 = scalar_lea.vmem [#allocation3], 72
    %983 = vst [vmem:[%s982] sm:%s981] %v979
    %s984 = scalar_lea.vmem [#allocation2], 152
    %v985 = vld [vmem:[%s984] sm:%s871]
    %s987 = ssub.s32 16, 1
    %s988 = scalar_lea.vmem [#allocation3], 76
    %989 = vst [vmem:[%s988] sm:%s987] %v985
    %s990 = scalar_lea.vmem [#allocation2], 160
    %v991 = vld [vmem:[%s990] sm:%s871]
    %s993 = ssub.s32 16, 1
    %s994 = scalar_lea.vmem [#allocation3], 80
    %995 = vst [vmem:[%s994] sm:%s993] %v991
    %s996 = scalar_lea.vmem [#allocation2], 168
    %v997 = vld [vmem:[%s996] sm:%s871]
    %s999 = ssub.s32 16, 1
    %s1000 = scalar_lea.vmem [#allocation3], 84
    %1001 = vst [vmem:[%s1000] sm:%s999] %v997
    %s1002 = scalar_lea.vmem [#allocation2], 176
    %v1003 = vld [vmem:[%s1002] sm:%s871]
    %s1005 = ssub.s32 16, 1
    %s1006 = scalar_lea.vmem [#allocation3], 88
    %1007 = vst [vmem:[%s1006] sm:%s1005] %v1003
    %s1008 = scalar_lea.vmem [#allocation2], 184
    %v1009 = vld [vmem:[%s1008] sm:%s871]
    %s1011 = ssub.s32 16, 1
    %s1012 = scalar_lea.vmem [#allocation3], 92
    %1013 = vst [vmem:[%s1012] sm:%s1011] %v1009
    %s1014 = scalar_lea.vmem [#allocation2], 192
    %v1015 = vld [vmem:[%s1014] sm:%s871]
    %s1017 = ssub.s32 16, 1
    %s1018 = scalar_lea.vmem [#allocation3], 96
    %1019 = vst [vmem:[%s1018] sm:%s1017] %v1015
    %s1020 = scalar_lea.vmem [#allocation2], 200
    %v1021 = vld [vmem:[%s1020] sm:%s871]
    %s1023 = ssub.s32 16, 1
    %s1024 = scalar_lea.vmem [#allocation3], 100
    %1025 = vst [vmem:[%s1024] sm:%s1023] %v1021
    %s1026 = scalar_lea.vmem [#allocation2], 208
    %v1027 = vld [vmem:[%s1026] sm:%s871]
    %s1029 = ssub.s32 16, 1
    %s1030 = scalar_lea.vmem [#allocation3], 104
    %1031 = vst [vmem:[%s1030] sm:%s1029] %v1027
    %s1032 = scalar_lea.vmem [#allocation2], 216
    %v1033 = vld [vmem:[%s1032] sm:%s871]
    %s1035 = ssub.s32 16, 1
    %s1036 = scalar_lea.vmem [#allocation3], 108
    %1037 = vst [vmem:[%s1036] sm:%s1035] %v1033
    %s1038 = scalar_lea.vmem [#allocation2], 224
    %v1039 = vld [vmem:[%s1038] sm:%s871]
    %s1041 = ssub.s32 16, 1
    %s1042 = scalar_lea.vmem [#allocation3], 112
    %1043 = vst [vmem:[%s1042] sm:%s1041] %v1039
    %s1044 = scalar_lea.vmem [#allocation2], 232
    %v1045 = vld [vmem:[%s1044] sm:%s871]
    %s1047 = ssub.s32 16, 1
    %s1048 = scalar_lea.vmem [#allocation3], 116
    %1049 = vst [vmem:[%s1048] sm:%s1047] %v1045
    %s1050 = scalar_lea.vmem [#allocation2], 240
    %v1051 = vld [vmem:[%s1050] sm:%s871]
    %s1053 = ssub.s32 16, 1
    %s1054 = scalar_lea.vmem [#allocation3], 120
    %1055 = vst [vmem:[%s1054] sm:%s1053] %v1051
    %s1056 = scalar_lea.vmem [#allocation2], 248
    %v1057 = vld [vmem:[%s1056] sm:%s871]
    %s1059 = ssub.s32 16, 1
    %s1060 = scalar_lea.vmem [#allocation3], 124
    %1061 = vst [vmem:[%s1060] sm:%s1059] %v1057
    // Predicated region
    $region39: #{reverse.0} parent=1 // pred_check
      _
    $region40: #{reverse.0} parent=1 // pred_check_branch
      %1063 = sbr.rel (0) target = $region42
    $region41: #{reverse.0} parent=1 // pred_region
      // Predicated region
      $region43: #{reverse.0} parent=41 // pred_check
        _
      $region44: #{reverse.0} parent=41 // pred_check_branch
        %1065 = sbr.rel target = $region46
      $region45: #{reverse.0} parent=41 // pred_region
        // Predicated region
        $region58: #{reverse.0} parent=45 // pred_check
          _
        $region59: #{reverse.0} parent=45 // pred_check_branch
          %1143 = sbr.rel (0) target = $region61
        $region60: #{reverse.0} parent=45 // pred_region
          loop: start=0, step=1, limit=1
          $region62: #{reverse.0} parent=60 // loop_pre_header
            _
          $region63: #{reverse.0} parent=60 // loop_header
            %s1145 = sphi 0, %s1149
            %p1146 = scmp.ge.s32.totalorder %s1145, 1
            %s1150 = sphi [#allocation3], [#allocation3]
            %s1151 = sphi %s1, %s1
          $region64: #{reverse.0} parent=60 // loop_header_branch
            %1148 = sbr.rel (%p1146) target = $region68
          $region65: #{reverse.0} parent=60 // loop_body
            _
          $region66: #{reverse.0} parent=60 // loop_footer
            %s1149 = sadd.s32 1, %s1145
          $region67: #{reverse.0} parent=60 // loop_footer_branch
            %1144 = sbr.rel target = $region63
          $region68: #{reverse.0} parent=60 // loop_exit
            _
          %s1153 = ssub.s32 16, 1
          loop: start=0, step=1, limit=1
          $region69: #{reverse.0} parent=60 // loop_pre_header
            _
          $region70: #{reverse.0} parent=60 // loop_header
            %s1155 = sphi 0, %s1159
            %p1156 = scmp.ge.s32.totalorder %s1155, 1
            %s1160 = sphi [#allocation3], [#allocation3]
            %s1161 = sphi %s1, %s1
          $region71: #{reverse.0} parent=60 // loop_header_branch
            %1158 = sbr.rel (%p1156) target = $region75
          $region72: #{reverse.0} parent=60 // loop_body
            %v1162 = vld [vmem:[%s1160] sm:%s1153]
            %1163 = vst [vmem:[%s1161] sm:%s1153] %v1162
            %v1164 = vld [vmem:[%s1160 + $0x4] sm:%s1153]
            %1165 = vst [vmem:[%s1161 + $0x4] sm:%s1153] %v1164
            %v1166 = vld [vmem:[%s1160 + $0x8] sm:%s1153]
            %1167 = vst [vmem:[%s1161 + $0x8] sm:%s1153] %v1166
            %v1168 = vld [vmem:[%s1160 + $0xc] sm:%s1153]
            %1169 = vst [vmem:[%s1161 + $0xc] sm:%s1153] %v1168
            %v1170 = vld [vmem:[%s1160 + $0x10] sm:%s1153]
            %1171 = vst [vmem:[%s1161 + $0x10] sm:%s1153] %v1170
            %v1172 = vld [vmem:[%s1160 + $0x14] sm:%s1153]
            %1173 = vst [vmem:[%s1161 + $0x14] sm:%s1153] %v1172
            %v1174 = vld [vmem:[%s1160 + $0x18] sm:%s1153]
            %1175 = vst [vmem:[%s1161 + $0x18] sm:%s1153] %v1174
            %v1176 = vld [vmem:[%s1160 + $0x1c] sm:%s1153]
            %1177 = vst [vmem:[%s1161 + $0x1c] sm:%s1153] %v1176
            %v1178 = vld [vmem:[%s1160 + $0x20] sm:%s1153]
            %1179 = vst [vmem:[%s1161 + $0x20] sm:%s1153] %v1178
            %v1180 = vld [vmem:[%s1160 + $0x24] sm:%s1153]
            %1181 = vst [vmem:[%s1161 + $0x24] sm:%s1153] %v1180
            %v1182 = vld [vmem:[%s1160 + $0x28] sm:%s1153]
            %1183 = vst [vmem:[%s1161 + $0x28] sm:%s1153] %v1182
            %v1184 = vld [vmem:[%s1160 + $0x2c] sm:%s1153]
            %1185 = vst [vmem:[%s1161 + $0x2c] sm:%s1153] %v1184
            %v1186 = vld [vmem:[%s1160 + $0x30] sm:%s1153]
            %1187 = vst [vmem:[%s1161 + $0x30] sm:%s1153] %v1186
            %v1188 = vld [vmem:[%s1160 + $0x34] sm:%s1153]
            %1189 = vst [vmem:[%s1161 + $0x34] sm:%s1153] %v1188
            %v1190 = vld [vmem:[%s1160 + $0x38] sm:%s1153]
            %1191 = vst [vmem:[%s1161 + $0x38] sm:%s1153] %v1190
            %v1192 = vld [vmem:[%s1160 + $0x3c] sm:%s1153]
            %1193 = vst [vmem:[%s1161 + $0x3c] sm:%s1153] %v1192
            %v1194 = vld [vmem:[%s1160 + $0x40] sm:%s1153]
            %1195 = vst [vmem:[%s1161 + $0x40] sm:%s1153] %v1194
            %v1196 = vld [vmem:[%s1160 + $0x44] sm:%s1153]
            %1197 = vst [vmem:[%s1161 + $0x44] sm:%s1153] %v1196
            %v1198 = vld [vmem:[%s1160 + $0x48] sm:%s1153]
            %1199 = vst [vmem:[%s1161 + $0x48] sm:%s1153] %v1198
            %v1200 = vld [vmem:[%s1160 + $0x4c] sm:%s1153]
            %1201 = vst [vmem:[%s1161 + $0x4c] sm:%s1153] %v1200
            %v1202 = vld [vmem:[%s1160 + $0x50] sm:%s1153]
            %1203 = vst [vmem:[%s1161 + $0x50] sm:%s1153] %v1202
            %v1204 = vld [vmem:[%s1160 + $0x54] sm:%s1153]
            %1205 = vst [vmem:[%s1161 + $0x54] sm:%s1153] %v1204
            %v1206 = vld [vmem:[%s1160 + $0x58] sm:%s1153]
            %1207 = vst [vmem:[%s1161 + $0x58] sm:%s1153] %v1206
            %v1208 = vld [vmem:[%s1160 + $0x5c] sm:%s1153]
            %1209 = vst [vmem:[%s1161 + $0x5c] sm:%s1153] %v1208
            %v1210 = vld [vmem:[%s1160 + $0x60] sm:%s1153]
            %1211 = vst [vmem:[%s1161 + $0x60] sm:%s1153] %v1210
            %v1212 = vld [vmem:[%s1160 + $0x64] sm:%s1153]
            %1213 = vst [vmem:[%s1161 + $0x64] sm:%s1153] %v1212
            %v1214 = vld [vmem:[%s1160 + $0x68] sm:%s1153]
            %1215 = vst [vmem:[%s1161 + $0x68] sm:%s1153] %v1214
            %v1216 = vld [vmem:[%s1160 + $0x6c] sm:%s1153]
            %1217 = vst [vmem:[%s1161 + $0x6c] sm:%s1153] %v1216
            %v1218 = vld [vmem:[%s1160 + $0x70] sm:%s1153]
            %1219 = vst [vmem:[%s1161 + $0x70] sm:%s1153] %v1218
            %v1220 = vld [vmem:[%s1160 + $0x74] sm:%s1153]
            %1221 = vst [vmem:[%s1161 + $0x74] sm:%s1153] %v1220
            %v1222 = vld [vmem:[%s1160 + $0x78] sm:%s1153]
            %1223 = vst [vmem:[%s1161 + $0x78] sm:%s1153] %v1222
            %v1224 = vld [vmem:[%s1160 + $0x7c] sm:%s1153]
            %1225 = vst [vmem:[%s1161 + $0x7c] sm:%s1153] %v1224
          $region73: #{reverse.0} parent=60 // loop_footer
            %s1159 = sadd.s32 1, %s1155
          $region74: #{reverse.0} parent=60 // loop_footer_branch
            %1154 = sbr.rel target = $region70
          $region75: #{reverse.0} parent=60 // loop_exit
            _
        $region61: #{reverse.0} parent=45 // pred_fallthru
          _
      $region46: #{reverse.0} parent=41 // pred_fallthru
        _
      // Predicated region
      $region47: #{reverse.0} parent=41 // pred_check
        _
      $region48: #{reverse.0} parent=41 // pred_check_branch
        %1067 = sbr.rel (0) target = $region50
      $region49: #{reverse.0} parent=41 // pred_region
        %s1069 = ssub.s32 16, 1
        loop: start=0, step=1, limit=1
        $region51: #{reverse.0} parent=49 // loop_pre_header
          _
        $region52: #{reverse.0} parent=49 // loop_header
          %s1071 = sphi 0, %s1075
          %p1072 = scmp.ge.s32.totalorder %s1071, 1
          %s1076 = sphi [#allocation3], [#allocation3]
          %s1077 = sphi %s1, %s1
        $region53: #{reverse.0} parent=49 // loop_header_branch
          %1074 = sbr.rel (%p1072) target = $region57
        $region54: #{reverse.0} parent=49 // loop_body
          %v1078 = vld [vmem:[%s1076] sm:%s1069]
          %1079 = vst [vmem:[%s1077] sm:%s1069] %v1078
          %v1080 = vld [vmem:[%s1076 + $0x4] sm:%s1069]
          %1081 = vst [vmem:[%s1077 + $0x4] sm:%s1069] %v1080
          %v1082 = vld [vmem:[%s1076 + $0x8] sm:%s1069]
          %1083 = vst [vmem:[%s1077 + $0x8] sm:%s1069] %v1082
          %v1084 = vld [vmem:[%s1076 + $0xc] sm:%s1069]
          %1085 = vst [vmem:[%s1077 + $0xc] sm:%s1069] %v1084
          %v1086 = vld [vmem:[%s1076 + $0x10] sm:%s1069]
          %1087 = vst [vmem:[%s1077 + $0x10] sm:%s1069] %v1086
          %v1088 = vld [vmem:[%s1076 + $0x14] sm:%s1069]
          %1089 = vst [vmem:[%s1077 + $0x14] sm:%s1069] %v1088
          %v1090 = vld [vmem:[%s1076 + $0x18] sm:%s1069]
          %1091 = vst [vmem:[%s1077 + $0x18] sm:%s1069] %v1090
          %v1092 = vld [vmem:[%s1076 + $0x1c] sm:%s1069]
          %1093 = vst [vmem:[%s1077 + $0x1c] sm:%s1069] %v1092
          %v1094 = vld [vmem:[%s1076 + $0x20] sm:%s1069]
          %1095 = vst [vmem:[%s1077 + $0x20] sm:%s1069] %v1094
          %v1096 = vld [vmem:[%s1076 + $0x24] sm:%s1069]
          %1097 = vst [vmem:[%s1077 + $0x24] sm:%s1069] %v1096
          %v1098 = vld [vmem:[%s1076 + $0x28] sm:%s1069]
          %1099 = vst [vmem:[%s1077 + $0x28] sm:%s1069] %v1098
          %v1100 = vld [vmem:[%s1076 + $0x2c] sm:%s1069]
          %1101 = vst [vmem:[%s1077 + $0x2c] sm:%s1069] %v1100
          %v1102 = vld [vmem:[%s1076 + $0x30] sm:%s1069]
          %1103 = vst [vmem:[%s1077 + $0x30] sm:%s1069] %v1102
          %v1104 = vld [vmem:[%s1076 + $0x34] sm:%s1069]
          %1105 = vst [vmem:[%s1077 + $0x34] sm:%s1069] %v1104
          %v1106 = vld [vmem:[%s1076 + $0x38] sm:%s1069]
          %1107 = vst [vmem:[%s1077 + $0x38] sm:%s1069] %v1106
          %v1108 = vld [vmem:[%s1076 + $0x3c] sm:%s1069]
          %1109 = vst [vmem:[%s1077 + $0x3c] sm:%s1069] %v1108
          %v1110 = vld [vmem:[%s1076 + $0x40] sm:%s1069]
          %1111 = vst [vmem:[%s1077 + $0x40] sm:%s1069] %v1110
          %v1112 = vld [vmem:[%s1076 + $0x44] sm:%s1069]
          %1113 = vst [vmem:[%s1077 + $0x44] sm:%s1069] %v1112
          %v1114 = vld [vmem:[%s1076 + $0x48] sm:%s1069]
          %1115 = vst [vmem:[%s1077 + $0x48] sm:%s1069] %v1114
          %v1116 = vld [vmem:[%s1076 + $0x4c] sm:%s1069]
          %1117 = vst [vmem:[%s1077 + $0x4c] sm:%s1069] %v1116
          %v1118 = vld [vmem:[%s1076 + $0x50] sm:%s1069]
          %1119 = vst [vmem:[%s1077 + $0x50] sm:%s1069] %v1118
          %v1120 = vld [vmem:[%s1076 + $0x54] sm:%s1069]
          %1121 = vst [vmem:[%s1077 + $0x54] sm:%s1069] %v1120
          %v1122 = vld [vmem:[%s1076 + $0x58] sm:%s1069]
          %1123 = vst [vmem:[%s1077 + $0x58] sm:%s1069] %v1122
          %v1124 = vld [vmem:[%s1076 + $0x5c] sm:%s1069]
          %1125 = vst [vmem:[%s1077 + $0x5c] sm:%s1069] %v1124
          %v1126 = vld [vmem:[%s1076 + $0x60] sm:%s1069]
          %1127 = vst [vmem:[%s1077 + $0x60] sm:%s1069] %v1126
          %v1128 = vld [vmem:[%s1076 + $0x64] sm:%s1069]
          %1129 = vst [vmem:[%s1077 + $0x64] sm:%s1069] %v1128
          %v1130 = vld [vmem:[%s1076 + $0x68] sm:%s1069]
          %1131 = vst [vmem:[%s1077 + $0x68] sm:%s1069] %v1130
          %v1132 = vld [vmem:[%s1076 + $0x6c] sm:%s1069]
          %1133 = vst [vmem:[%s1077 + $0x6c] sm:%s1069] %v1132
          %v1134 = vld [vmem:[%s1076 + $0x70] sm:%s1069]
          %1135 = vst [vmem:[%s1077 + $0x70] sm:%s1069] %v1134
          %v1136 = vld [vmem:[%s1076 + $0x74] sm:%s1069]
          %1137 = vst [vmem:[%s1077 + $0x74] sm:%s1069] %v1136
          %v1138 = vld [vmem:[%s1076 + $0x78] sm:%s1069]
          %1139 = vst [vmem:[%s1077 + $0x78] sm:%s1069] %v1138
          %v1140 = vld [vmem:[%s1076 + $0x7c] sm:%s1069]
          %1141 = vst [vmem:[%s1077 + $0x7c] sm:%s1069] %v1140
        $region55: #{reverse.0} parent=49 // loop_footer
          %s1075 = sadd.s32 1, %s1071
        $region56: #{reverse.0} parent=49 // loop_footer_branch
          %1070 = sbr.rel target = $region52
        $region57: #{reverse.0} parent=49 // loop_exit
          _
      $region50: #{reverse.0} parent=41 // pred_fallthru
        _
    $region42: #{reverse.0} parent=1 // pred_fallthru
      _
    %1226 = vnop

// kernel: ffc_bn_act_forward.5
$region0: #{ffc_bn_act_forward.5}
  #allocation0 [shape = 'u32[]', space=smem, size = 0x4, offset = 0x4, fixed_abs, tag = 'smem constant byte address 0x4 - core index']
  #allocation1 [shape = 'u32[72,128]{1,0:T(1,128)}', space=vmem, size = 0x9000, scoped, tag = 'internal scratch']
  %s0 = inlined_call_operand.vmem [shape: f32[2,16,256], index: 0, kind: input, shape index: {}]
  %s1 = inlined_call_operand.vmem [shape: f32[2,4,256], index: 1, kind: input, shape index: {}]
  %s2 = inlined_call_operand.vmem [shape: f32[2,4,256], index: 2, kind: input, shape index: {}]
  %s3 = inlined_call_operand.vmem [shape: f32[2,4,256], index: 3, kind: input, shape index: {}]
  %s4 = inlined_call_operand.vmem [shape: f32[16,16], index: 4, kind: input, shape index: {}]
  %s5 = inlined_call_operand.vmem [shape: f32[8,4], index: 5, kind: input, shape index: {}]
  %s6 = inlined_call_operand.vmem [shape: f32[8,1], index: 6, kind: input, shape index: {}]
  %s7 = inlined_call_operand.vmem [shape: f32[8,1], index: 7, kind: input, shape index: {}]
  %s8 = inlined_call_operand.vmem [shape: f32[2,8,256], index: 8, kind: output, shape index: {0}]
  %s9 = inlined_call_operand.vmem [shape: f32[2,8,256], index: 9, kind: output, shape index: {1}]
  %10 = xla_tuple %s8, %s9
  %s11 = sld [smem:[#allocation0]]
  $region73: #{ffc_bn_act_forward.5} parent=0
    _
  %s13 = ssub.s32 1, %s11
  %s14 = scalar_select 0, %s13, %s11
  loop: start=0, step=1, limit=4
  $region2: #{ffc_bn_act_forward.5} parent=0 // loop_pre_header
    _
  $region3: #{ffc_bn_act_forward.5} parent=0 // loop_header
    %s16 = sphi 0, %s20
    %p17 = scmp.ge.s32.totalorder %s16, 4
    %s23 = sphi 0, %s35
    %s24 = sphi 0, %s31
    %s25 = sphi 0, %s23
    %s26 = sphi 0, %s24
    %s27 = sphi 0, %s25
    %s28 = sphi 0, %s26
    %s40 = sphi 0, %s42
    %s43 = sphi 0, %s40
    %s44 = sphi 0, %s43
    %s60 = sphi 0, %s44
    %s68 = sphi 0, %s70
    %s71 = sphi 0, %s68
    %s72 = sphi 0, %s71
    %s88 = sphi 0, %s72
    %s96 = sphi 0, %s98
    %s99 = sphi 0, %s96
    %s100 = sphi 0, %s99
    %s116 = sphi 0, %s100
    %s124 = sphi 0, %s126
    %s127 = sphi 0, %s124
    %s128 = sphi 0, %s127
    %s144 = sphi 0, %s128
    %s148 = sphi 0, %s148
    %s150 = sphi 0, %s148
    %s151 = sphi 0, %s150
    %s165 = sphi 0, %s151
    %s169 = sphi 0, %s169
    %s171 = sphi 0, %s169
    %s172 = sphi 0, %s171
    %s186 = sphi 0, %s172
    %s190 = sphi 0, %s190
    %s192 = sphi 0, %s190
    %s193 = sphi 0, %s192
    %s207 = sphi 0, %s193
    %s211 = sphi 0, %s211
    %s213 = sphi 0, %s211
    %s214 = sphi 0, %s213
    %s228 = sphi 0, %s214
    %s236 = sphi 0, %s238
    %s239 = sphi 0, %s236
    %s240 = sphi 0, %s239
    %s256 = sphi 0, %s240
    %s264 = sphi 0, %s266
    %s267 = sphi 0, %s264
    %s268 = sphi 0, %s267
    %s284 = sphi 0, %s268
  $region4: #{ffc_bn_act_forward.5} parent=0 // loop_header_branch
    %19 = sbr.rel (%p17) target = $region8
  $region5: #{ffc_bn_act_forward.5} parent=0 // loop_body
    %s21 = ssub.s32 %s16, 1
    %s22 = ssub.s32 %s16, 2
    %s29 = sadd.s32 1, %s24
    %p30 = scmp.ge.s32.totalorder %s29, 1
    %s31 = scalar_select %p30, 0, %s29
    %s32 = sadd.s32 1, %s23
    %s33 = scalar_select %p30, %s32, %s23
    %p34 = scmp.ge.s32.totalorder %s33, 2
    %s35 = scalar_select %p34, 0, %s33
    %s36 = ssub.s32 %s23, %s35
    %s37 = ssub.s32 %s24, %s31
    %s38 = sor.u32 %s36, %s37
    %p39 = scmp.eq.s32.totalorder %s38, 0
    %s41 = sadd.s32 %s40, 1
    %s42 = scalar_select %p39, %s40, %s41
    %p45 = pneg %p39
    %p46 = scmp.eq.s32.totalorder %s16, 1
    %p47 = por %p45, %p46
    %p48 = scmp.ne.s32.totalorder %s40, %s43
    %p49 = scmp.eq.s32.totalorder %s16, 0
    %p50 = por %p48, %p49
    %p51 = scmp.ne.s32.totalorder %s40, %s43
    %p52 = scmp.eq.s32.totalorder %s21, 1
    %p53 = por %p51, %p52
    %p54 = scmp.ne.s32.totalorder %s43, %s44
    %p55 = scmp.eq.s32.totalorder %s21, 0
    %p56 = por %p54, %p55
    %p57 = scmp.ne.s32.totalorder %s43, %s44
    %p58 = scmp.eq.s32.totalorder %s22, 1
    %p59 = por %p57, %p58
    %p61 = scmp.ne.s32.totalorder %s44, %s60
    %p62 = scmp.eq.s32.totalorder %s22, 0
    %p63 = por %p61, %p62
    %s64 = ssub.s32 %s23, %s35
    %s65 = ssub.s32 %s24, %s31
    %s66 = sor.u32 %s64, %s65
    %p67 = scmp.eq.s32.totalorder %s66, 0
    %s69 = sadd.s32 %s68, 1
    %s70 = scalar_select %p67, %s68, %s69
    %p73 = pneg %p67
    %p74 = scmp.eq.s32.totalorder %s16, 1
    %p75 = por %p73, %p74
    %p76 = scmp.ne.s32.totalorder %s68, %s71
    %p77 = scmp.eq.s32.totalorder %s16, 0
    %p78 = por %p76, %p77
    %p79 = scmp.ne.s32.totalorder %s68, %s71
    %p80 = scmp.eq.s32.totalorder %s21, 1
    %p81 = por %p79, %p80
    %p82 = scmp.ne.s32.totalorder %s71, %s72
    %p83 = scmp.eq.s32.totalorder %s21, 0
    %p84 = por %p82, %p83
    %p85 = scmp.ne.s32.totalorder %s71, %s72
    %p86 = scmp.eq.s32.totalorder %s22, 1
    %p87 = por %p85, %p86
    %p89 = scmp.ne.s32.totalorder %s72, %s88
    %p90 = scmp.eq.s32.totalorder %s22, 0
    %p91 = por %p89, %p90
    %s92 = ssub.s32 %s23, %s35
    %s93 = ssub.s32 %s24, %s31
    %s94 = sor.u32 %s92, %s93
    %p95 = scmp.eq.s32.totalorder %s94, 0
    %s97 = sadd.s32 %s96, 1
    %s98 = scalar_select %p95, %s96, %s97
    %p101 = pneg %p95
    %p102 = scmp.eq.s32.totalorder %s16, 1
    %p103 = por %p101, %p102
    %p104 = scmp.ne.s32.totalorder %s96, %s99
    %p105 = scmp.eq.s32.totalorder %s16, 0
    %p106 = por %p104, %p105
    %p107 = scmp.ne.s32.totalorder %s96, %s99
    %p108 = scmp.eq.s32.totalorder %s21, 1
    %p109 = por %p107, %p108
    %p110 = scmp.ne.s32.totalorder %s99, %s100
    %p111 = scmp.eq.s32.totalorder %s21, 0
    %p112 = por %p110, %p111
    %p113 = scmp.ne.s32.totalorder %s99, %s100
    %p114 = scmp.eq.s32.totalorder %s22, 1
    %p115 = por %p113, %p114
    %p117 = scmp.ne.s32.totalorder %s100, %s116
    %p118 = scmp.eq.s32.totalorder %s22, 0
    %p119 = por %p117, %p118
    %s120 = ssub.s32 %s23, %s35
    %s121 = ssub.s32 %s24, %s31
    %s122 = sor.u32 %s120, %s121
    %p123 = scmp.eq.s32.totalorder %s122, 0
    %s125 = sadd.s32 %s124, 1
    %s126 = scalar_select %p123, %s124, %s125
    %p129 = pneg %p123
    %p130 = scmp.eq.s32.totalorder %s16, 1
    %p131 = por %p129, %p130
    %p132 = scmp.ne.s32.totalorder %s124, %s127
    %p133 = scmp.eq.s32.totalorder %s16, 0
    %p134 = por %p132, %p133
    %p135 = scmp.ne.s32.totalorder %s124, %s127
    %p136 = scmp.eq.s32.totalorder %s21, 1
    %p137 = por %p135, %p136
    %p138 = scmp.ne.s32.totalorder %s127, %s128
    %p139 = scmp.eq.s32.totalorder %s21, 0
    %p140 = por %p138, %p139
    %p141 = scmp.ne.s32.totalorder %s127, %s128
    %p142 = scmp.eq.s32.totalorder %s22, 1
    %p143 = por %p141, %p142
    %p145 = scmp.ne.s32.totalorder %s128, %s144
    %p146 = scmp.eq.s32.totalorder %s22, 0
    %p147 = por %p145, %p146
    %s149 = sadd.s32 %s148, 1
    %p152 = scmp.eq.s32.totalorder %s16, 1
    %p153 = scmp.ne.s32.totalorder %s148, %s150
    %p154 = scmp.eq.s32.totalorder %s16, 0
    %p155 = por %p153, %p154
    %p156 = scmp.ne.s32.totalorder %s148, %s150
    %p157 = scmp.eq.s32.totalorder %s21, 1
    %p158 = por %p156, %p157
    %p159 = scmp.ne.s32.totalorder %s150, %s151
    %p160 = scmp.eq.s32.totalorder %s21, 0
    %p161 = por %p159, %p160
    %p162 = scmp.ne.s32.totalorder %s150, %s151
    %p163 = scmp.eq.s32.totalorder %s22, 1
    %p164 = por %p162, %p163
    %p166 = scmp.ne.s32.totalorder %s151, %s165
    %p167 = scmp.eq.s32.totalorder %s22, 0
    %p168 = por %p166, %p167
    %s170 = sadd.s32 %s169, 1
    %p173 = scmp.eq.s32.totalorder %s16, 1
    %p174 = scmp.ne.s32.totalorder %s169, %s171
    %p175 = scmp.eq.s32.totalorder %s16, 0
    %p176 = por %p174, %p175
    %p177 = scmp.ne.s32.totalorder %s169, %s171
    %p178 = scmp.eq.s32.totalorder %s21, 1
    %p179 = por %p177, %p178
    %p180 = scmp.ne.s32.totalorder %s171, %s172
    %p181 = scmp.eq.s32.totalorder %s21, 0
    %p182 = por %p180, %p181
    %p183 = scmp.ne.s32.totalorder %s171, %s172
    %p184 = scmp.eq.s32.totalorder %s22, 1
    %p185 = por %p183, %p184
    %p187 = scmp.ne.s32.totalorder %s172, %s186
    %p188 = scmp.eq.s32.totalorder %s22, 0
    %p189 = por %p187, %p188
    %s191 = sadd.s32 %s190, 1
    %p194 = scmp.eq.s32.totalorder %s16, 1
    %p195 = scmp.ne.s32.totalorder %s190, %s192
    %p196 = scmp.eq.s32.totalorder %s16, 0
    %p197 = por %p195, %p196
    %p198 = scmp.ne.s32.totalorder %s190, %s192
    %p199 = scmp.eq.s32.totalorder %s21, 1
    %p200 = por %p198, %p199
    %p201 = scmp.ne.s32.totalorder %s192, %s193
    %p202 = scmp.eq.s32.totalorder %s21, 0
    %p203 = por %p201, %p202
    %p204 = scmp.ne.s32.totalorder %s192, %s193
    %p205 = scmp.eq.s32.totalorder %s22, 1
    %p206 = por %p204, %p205
    %p208 = scmp.ne.s32.totalorder %s193, %s207
    %p209 = scmp.eq.s32.totalorder %s22, 0
    %p210 = por %p208, %p209
    %s212 = sadd.s32 %s211, 1
    %p215 = scmp.eq.s32.totalorder %s16, 1
    %p216 = scmp.ne.s32.totalorder %s211, %s213
    %p217 = scmp.eq.s32.totalorder %s16, 0
    %p218 = por %p216, %p217
    %p219 = scmp.ne.s32.totalorder %s211, %s213
    %p220 = scmp.eq.s32.totalorder %s21, 1
    %p221 = por %p219, %p220
    %p222 = scmp.ne.s32.totalorder %s213, %s214
    %p223 = scmp.eq.s32.totalorder %s21, 0
    %p224 = por %p222, %p223
    %p225 = scmp.ne.s32.totalorder %s213, %s214
    %p226 = scmp.eq.s32.totalorder %s22, 1
    %p227 = por %p225, %p226
    %p229 = scmp.ne.s32.totalorder %s214, %s228
    %p230 = scmp.eq.s32.totalorder %s22, 0
    %p231 = por %p229, %p230
    %s232 = ssub.s32 %s23, %s35
    %s233 = ssub.s32 %s24, %s31
    %s234 = sor.u32 %s232, %s233
    %p235 = scmp.eq.s32.totalorder %s234, 0
    %s237 = sadd.s32 %s236, 1
    %s238 = scalar_select %p235, %s236, %s237
    %p241 = pneg %p235
    %p242 = scmp.eq.s32.totalorder %s16, 1
    %p243 = por %p241, %p242
    %p244 = scmp.ne.s32.totalorder %s236, %s239
    %p245 = scmp.eq.s32.totalorder %s16, 0
    %p246 = por %p244, %p245
    %p247 = scmp.ne.s32.totalorder %s236, %s239
    %p248 = scmp.eq.s32.totalorder %s21, 1
    %p249 = por %p247, %p248
    %p250 = scmp.ne.s32.totalorder %s239, %s240
    %p251 = scmp.eq.s32.totalorder %s21, 0
    %p252 = por %p250, %p251
    %p253 = scmp.ne.s32.totalorder %s239, %s240
    %p254 = scmp.eq.s32.totalorder %s22, 1
    %p255 = por %p253, %p254
    %p257 = scmp.ne.s32.totalorder %s240, %s256
    %p258 = scmp.eq.s32.totalorder %s22, 0
    %p259 = por %p257, %p258
    %s260 = ssub.s32 %s23, %s35
    %s261 = ssub.s32 %s24, %s31
    %s262 = sor.u32 %s260, %s261
    %p263 = scmp.eq.s32.totalorder %s262, 0
    %s265 = sadd.s32 %s264, 1
    %s266 = scalar_select %p263, %s264, %s265
    %p269 = pneg %p263
    %p270 = scmp.eq.s32.totalorder %s16, 1
    %p271 = por %p269, %p270
    %p272 = scmp.ne.s32.totalorder %s264, %s267
    %p273 = scmp.eq.s32.totalorder %s16, 0
    %p274 = por %p272, %p273
    %p275 = scmp.ne.s32.totalorder %s264, %s267
    %p276 = scmp.eq.s32.totalorder %s21, 1
    %p277 = por %p275, %p276
    %p278 = scmp.ne.s32.totalorder %s267, %s268
    %p279 = scmp.eq.s32.totalorder %s21, 0
    %p280 = por %p278, %p279
    %p281 = scmp.ne.s32.totalorder %s267, %s268
    %p282 = scmp.eq.s32.totalorder %s22, 1
    %p283 = por %p281, %p282
    %p285 = scmp.ne.s32.totalorder %s268, %s284
    %p286 = scmp.eq.s32.totalorder %s22, 0
    %p287 = por %p285, %p286
    %p288 = scmp.le.s32.totalorder 1, %s16
    %p289 = scmp.lt.s32.totalorder %s16, 3
    %p290 = pnand %p288, %p289
    %p291 = pneg %p290
    // Predicated region
    $region9: #{ffc_bn_act_forward.5} parent=5 // pred_check
      _
    $region10: #{ffc_bn_act_forward.5} parent=5 // pred_check_branch
      %293 = sbr.rel (%p290) target = $region12
    $region11: #{ffc_bn_act_forward.5} parent=5 // pred_region
      %s294 = ssub.s32 %s16, 1
      // Predicated region
      $region13: #{ffc_bn_act_forward.5} parent=11 // pred_check
        %p295 = pneg %p161
      $region14: #{ffc_bn_act_forward.5} parent=11 // pred_check_branch
        %297 = sbr.rel (%p295) target = $region16
      $region15: #{ffc_bn_act_forward.5} parent=11 // pred_region
        _
      $region16: #{ffc_bn_act_forward.5} parent=11 // pred_fallthru
        _
      // Predicated region
      $region17: #{ffc_bn_act_forward.5} parent=11 // pred_check
        %p298 = pneg %p182
      $region18: #{ffc_bn_act_forward.5} parent=11 // pred_check_branch
        %300 = sbr.rel (%p298) target = $region20
      $region19: #{ffc_bn_act_forward.5} parent=11 // pred_region
        _
      $region20: #{ffc_bn_act_forward.5} parent=11 // pred_fallthru
        _
      // Predicated region
      $region21: #{ffc_bn_act_forward.5} parent=11 // pred_check
        %p301 = pneg %p203
      $region22: #{ffc_bn_act_forward.5} parent=11 // pred_check_branch
        %303 = sbr.rel (%p301) target = $region24
      $region23: #{ffc_bn_act_forward.5} parent=11 // pred_region
        _
      $region24: #{ffc_bn_act_forward.5} parent=11 // pred_fallthru
        _
      // Predicated region
      $region25: #{ffc_bn_act_forward.5} parent=11 // pred_check
        %p304 = pneg %p224
      $region26: #{ffc_bn_act_forward.5} parent=11 // pred_check_branch
        %306 = sbr.rel (%p304) target = $region28
      $region27: #{ffc_bn_act_forward.5} parent=11 // pred_region
        _
      $region28: #{ffc_bn_act_forward.5} parent=11 // pred_fallthru
        _
    $region12: #{ffc_bn_act_forward.5} parent=5 // pred_fallthru
      _
    %p307 = scmp.lt.s32.totalorder %s16, 2
    // Predicated region
    $region29: #{ffc_bn_act_forward.5} parent=5 // pred_check
      %p308 = pneg %p307
    $region30: #{ffc_bn_act_forward.5} parent=5 // pred_check_branch
      %310 = sbr.rel (%p308) target = $region32
    $region31: #{ffc_bn_act_forward.5} parent=5 // pred_region
      // Predicated region
      $region33: #{ffc_bn_act_forward.5} parent=31 // pred_check
        %p311 = pneg %p50
      $region34: #{ffc_bn_act_forward.5} parent=31 // pred_check_branch
        %313 = sbr.rel (%p311) target = $region36
      $region35: #{ffc_bn_act_forward.5} parent=31 // pred_region
        %s314 = smul.u32 2, %s24
        %p315 = scmp.lt.s32.totalorder %s23, 1
        %s316 = scalar_select %p315, %s23, 1
        %p317 = scmp.lt.s32.totalorder %s314, 1
        %s318 = scalar_select %p317, %s314, 1
        %s319 = smul.addr %s316, 4
        %s320 = sadd.s32 %s318, %s319
        %s321 = smul.addr %s320, 8
        %s322 = scalar_lea.vmem %s0, %s321
        %s323 = smul.u32 2, %s24
      $region36: #{ffc_bn_act_forward.5} parent=31 // pred_fallthru
        _
      // Predicated region
      $region37: #{ffc_bn_act_forward.5} parent=31 // pred_check
        %p324 = pneg %p78
      $region38: #{ffc_bn_act_forward.5} parent=31 // pred_check_branch
        %326 = sbr.rel (%p324) target = $region40
      $region39: #{ffc_bn_act_forward.5} parent=31 // pred_region
        %s327 = smul.u32 2, %s24
        %p328 = scmp.lt.s32.totalorder %s23, 1
        %s329 = scalar_select %p328, %s23, 1
        %p330 = scmp.lt.s32.totalorder %s327, 1
        %s331 = scalar_select %p330, %s327, 1
        %s332 = smul.addr %s329, 2
        %s333 = sadd.s32 %s331, %s332
        %s334 = smul.addr %s333, 4
        %s335 = scalar_lea.vmem %s1, %s334
        %s336 = smul.u32 2, %s24
      $region40: #{ffc_bn_act_forward.5} parent=31 // pred_fallthru
        _
      // Predicated region
      $region41: #{ffc_bn_act_forward.5} parent=31 // pred_check
        %p337 = pneg %p106
      $region42: #{ffc_bn_act_forward.5} parent=31 // pred_check_branch
        %339 = sbr.rel (%p337) target = $region44
      $region43: #{ffc_bn_act_forward.5} parent=31 // pred_region
        %s340 = smul.u32 2, %s24
        %p341 = scmp.lt.s32.totalorder %s23, 1
        %s342 = scalar_select %p341, %s23, 1
        %p343 = scmp.lt.s32.totalorder %s340, 1
        %s344 = scalar_select %p343, %s340, 1
        %s345 = smul.addr %s342, 2
        %s346 = sadd.s32 %s344, %s345
        %s347 = smul.addr %s346, 4
        %s348 = scalar_lea.vmem %s2, %s347
        %s349 = smul.u32 2, %s24
      $region44: #{ffc_bn_act_forward.5} parent=31 // pred_fallthru
        _
      // Predicated region
      $region45: #{ffc_bn_act_forward.5} parent=31 // pred_check
        %p350 = pneg %p134
      $region46: #{ffc_bn_act_forward.5} parent=31 // pred_check_branch
        %352 = sbr.rel (%p350) target = $region48
      $region47: #{ffc_bn_act_forward.5} parent=31 // pred_region
        %s353 = smul.u32 2, %s24
        %p354 = scmp.lt.s32.totalorder %s23, 1
        %s355 = scalar_select %p354, %s23, 1
        %p356 = scmp.lt.s32.totalorder %s353, 1
        %s357 = scalar_select %p356, %s353, 1
        %s358 = smul.addr %s355, 2
        %s359 = sadd.s32 %s357, %s358
        %s360 = smul.addr %s359, 4
        %s361 = scalar_lea.vmem %s3, %s360
        %s362 = smul.u32 2, %s24
      $region48: #{ffc_bn_act_forward.5} parent=31 // pred_fallthru
        _
    $region32: #{ffc_bn_act_forward.5} parent=5 // pred_fallthru
      _
    %p363 = scmp.le.s32.totalorder 1, %s16
    %p364 = scmp.lt.s32.totalorder %s16, 3
    %p365 = pnand %p363, %p364
    %p366 = pneg %p365
    // Predicated region
    $region49: #{ffc_bn_act_forward.5} parent=5 // pred_check
      _
    $region50: #{ffc_bn_act_forward.5} parent=5 // pred_check_branch
      %368 = sbr.rel (%p365) target = $region52
    $region51: #{ffc_bn_act_forward.5} parent=5 // pred_region
      %s369 = ssub.s32 %s16, 1
      %s370 = smul.u32 2, %s26
      %p371 = scmp.lt.s32.totalorder %s25, 1
      %s372 = scalar_select %p371, %s25, 1
      %p373 = scmp.lt.s32.totalorder %s370, 1
      %s374 = scalar_select %p373, %s370, 1
      %s375 = smul.addr %s372, 4
      %s376 = sadd.s32 %s374, %s375
      %s377 = smul.addr %s376, 8
      %s378 = scalar_lea.vmem %s0, %s377
      %p379 = pneg %p56
      %p380 = pneg %p53
      %s381 = smul.u32 2, %s26
      %p382 = scmp.lt.s32.totalorder %s25, 1
      %s383 = scalar_select %p382, %s25, 1
      %p384 = scmp.lt.s32.totalorder %s381, 1
      %s385 = scalar_select %p384, %s381, 1
      %s386 = smul.addr %s383, 2
      %s387 = sadd.s32 %s385, %s386
      %s388 = smul.addr %s387, 4
      %s389 = scalar_lea.vmem %s1, %s388
      %p390 = pneg %p84
      %p391 = pneg %p81
      %s392 = smul.u32 2, %s26
      %p393 = scmp.lt.s32.totalorder %s25, 1
      %s394 = scalar_select %p393, %s25, 1
      %p395 = scmp.lt.s32.totalorder %s392, 1
      %s396 = scalar_select %p395, %s392, 1
      %s397 = smul.addr %s394, 2
      %s398 = sadd.s32 %s396, %s397
      %s399 = smul.addr %s398, 4
      %s400 = scalar_lea.vmem %s2, %s399
      %p401 = pneg %p112
      %p402 = pneg %p109
      %s403 = smul.u32 2, %s26
      %p404 = scmp.lt.s32.totalorder %s25, 1
      %s405 = scalar_select %p404, %s25, 1
      %p406 = scmp.lt.s32.totalorder %s403, 1
      %s407 = scalar_select %p406, %s403, 1
      %s408 = smul.addr %s405, 2
      %s409 = sadd.s32 %s407, %s408
      %s410 = smul.addr %s409, 4
      %s411 = scalar_lea.vmem %s3, %s410
      %p412 = pneg %p140
      %p413 = pneg %p137
      %p414 = pneg %p161
      %p415 = pneg %p158
      %p416 = pneg %p182
      %p417 = pneg %p179
      %p418 = pneg %p203
      %p419 = pneg %p200
      %p420 = pneg %p224
      %p421 = pneg %p221
      %p422 = pneg %p252
      %p423 = pneg %p249
      %s424 = smul.u32 2, %s26
      %p425 = scmp.lt.s32.totalorder %s25, 1
      %s426 = scalar_select %p425, %s25, 1
      %p427 = scmp.lt.s32.totalorder %s424, 1
      %s428 = scalar_select %p427, %s424, 1
      %s429 = smul.addr %s426, 2
      %s430 = sadd.s32 %s428, %s429
      %s431 = smul.addr %s430, 8
      %s432 = scalar_lea.vmem %s8, %s431
      %p433 = pneg %p280
      %p434 = pneg %p277
      %s435 = smul.u32 2, %s26
      %p436 = scmp.lt.s32.totalorder %s25, 1
      %s437 = scalar_select %p436, %s25, 1
      %p438 = scmp.lt.s32.totalorder %s435, 1
      %s439 = scalar_select %p438, %s435, 1
      %s440 = smul.addr %s437, 2
      %s441 = sadd.s32 %s439, %s440
      %s442 = smul.addr %s441, 8
      %s443 = scalar_lea.vmem %s9, %s442
      %s444 = smul.u32 2, %s26
      %p445 = scmp.lt.s32.totalorder %s25, 1
      %s446 = scalar_select %p445, %s25, 1
      %p447 = scmp.lt.s32.totalorder %s444, 1
      %s448 = scalar_select %p447, %s444, 1
      %s449 = smul.addr %s446, 4
      %s450 = sadd.s32 %s448, %s449
      %s451 = smul.addr %s450, 8
      %s452 = scalar_lea.vmem %s0, %s451
      %s453 = smul.u32 2, %s26
      %s454 = smul.u32 2, %s26
      %p455 = scmp.lt.s32.totalorder %s25, 1
      %s456 = scalar_select %p455, %s25, 1
      %p457 = scmp.lt.s32.totalorder %s454, 1
      %s458 = scalar_select %p457, %s454, 1
      %s459 = smul.addr %s456, 2
      %s460 = sadd.s32 %s458, %s459
      %s461 = smul.addr %s460, 4
      %s462 = scalar_lea.vmem %s1, %s461
      %s463 = smul.u32 2, %s26
      %s464 = smul.u32 2, %s26
      %p465 = scmp.lt.s32.totalorder %s25, 1
      %s466 = scalar_select %p465, %s25, 1
      %p467 = scmp.lt.s32.totalorder %s464, 1
      %s468 = scalar_select %p467, %s464, 1
      %s469 = smul.addr %s466, 2
      %s470 = sadd.s32 %s468, %s469
      %s471 = smul.addr %s470, 4
      %s472 = scalar_lea.vmem %s2, %s471
      %s473 = smul.u32 2, %s26
      %s474 = smul.u32 2, %s26
      %p475 = scmp.lt.s32.totalorder %s25, 1
      %s476 = scalar_select %p475, %s25, 1
      %p477 = scmp.lt.s32.totalorder %s474, 1
      %s478 = scalar_select %p477, %s474, 1
      %s479 = smul.addr %s476, 2
      %s480 = sadd.s32 %s478, %s479
      %s481 = smul.addr %s480, 4
      %s482 = scalar_lea.vmem %s3, %s481
      %s483 = smul.u32 2, %s26
      %s484 = smul.u32 2, %s26
      %p485 = scmp.lt.s32.totalorder %s25, 1
      %s486 = scalar_select %p485, %s25, 1
      %p487 = scmp.lt.s32.totalorder %s484, 1
      %s488 = scalar_select %p487, %s484, 1
      %s489 = smul.addr %s486, 2
      %s490 = sadd.s32 %s488, %s489
      %s491 = smul.addr %s490, 8
      %s492 = scalar_lea.vmem %s8, %s491
      %s493 = smul.u32 2, %s26
      %s494 = smul.u32 2, %s26
      %p495 = scmp.lt.s32.totalorder %s25, 1
      %s496 = scalar_select %p495, %s25, 1
      %p497 = scmp.lt.s32.totalorder %s494, 1
      %s498 = scalar_select %p497, %s494, 1
      %s499 = smul.addr %s496, 2
      %s500 = sadd.s32 %s498, %s499
      %s501 = smul.addr %s500, 8
      %s502 = scalar_lea.vmem %s9, %s501
      %s503 = smul.u32 2, %s26
      %v504 = vld [vmem:[%s4] sm:$0xff]
      %v505 = vld [vmem:[%s4 + $0x8] sm:$0xff]
      %v506 = vld [vmem:[%s452] sm:$0xff]
      %v507 = vld [vmem:[%s452 + $0x8] sm:$0xff]
      %v508 = vld [vmem:[%s452 + $0x10] sm:$0xff]
      %v509 = vld [vmem:[%s452 + $0x18] sm:$0xff]
      %vm510 = vcmask 130048
      %v512 = vsel %vm510, %v504, 0
      %v515 = vsel %vm510, %v505, 0
      %517 = vmatpush.msra.mxu0 0.0
      %518 = vmatpush.msra.mxu0 0.0
      %519 = vmatpush.msra.mxu0 0.0
      %520 = vmatpush.msra.mxu0 0.0
      %521 = vmatpush.msra.mxu0 0.0
      %522 = vmatpush.msra.mxu0 0.0
      %523 = vmatpush.msra.mxu0 0.0
      %524 = vmatpush.msra.mxu0 0.0
      %525 = vmatpush.msra.mxu0 0.0
      %526 = vmatpush.msra.mxu0 0.0
      %527 = vmatpush.msra.mxu0 0.0
      %528 = vmatpush.msra.mxu0 0.0
      %529 = vmatpush.msra.mxu0 0.0
      %530 = vmatpush.msra.mxu0 0.0
      %531 = vmatpush.msra.mxu0 %v508
      %532 = vmatpush.msra.mxu0 %v506
      %533 = vmatmul.f32.gmra.mxu0 %v512
      %v534 = vpop.f32.mrf.mxu0
      %v535 = vadd.f32 0.0, %v534
      %536 = vmatmul.f32.gmra.mxu0 %v515
      %v537 = vpop.f32.mrf.mxu0
      %v538 = vadd.f32 0.0, %v537
      %539 = vdwg.mxu0
      %540 = vmatpush.msra.mxu0 0.0
      %541 = vmatpush.msra.mxu0 0.0
      %542 = vmatpush.msra.mxu0 0.0
      %543 = vmatpush.msra.mxu0 0.0
      %544 = vmatpush.msra.mxu0 0.0
      %545 = vmatpush.msra.mxu0 0.0
      %546 = vmatpush.msra.mxu0 0.0
      %547 = vmatpush.msra.mxu0 0.0
      %548 = vmatpush.msra.mxu0 0.0
      %549 = vmatpush.msra.mxu0 0.0
      %550 = vmatpush.msra.mxu0 0.0
      %551 = vmatpush.msra.mxu0 0.0
      %552 = vmatpush.msra.mxu0 0.0
      %553 = vmatpush.msra.mxu0 0.0
      %554 = vmatpush.msra.mxu0 %v509
      %555 = vmatpush.msra.mxu0 %v507
      %556 = vmatmul.f32.gmra.mxu0 %v512
      %v557 = vpop.f32.mrf.mxu0
      %v558 = vadd.f32 0.0, %v557
      %559 = vmatmul.f32.gmra.mxu0 %v515
      %v560 = vpop.f32.mrf.mxu0
      %v561 = vadd.f32 0.0, %v560
      %562 = vdwg.mxu0
      %v563 = vld [vmem:[%s462] sm:$0xff]
      %v564 = vld [vmem:[%s472] sm:$0xff]
      %v565 = vadd.f32 %v563, %v564
      %v566 = vld [vmem:[%s482] sm:$0xff]
      %v567 = vadd.f32 %v565, %v566
      %v568 = vld [vmem:[%s5] sm:$0xff]
      %570 = vst [vmem:[#allocation1] ss:$2 sm:$0xff] %v567
      %v571 = vld.sshfl [vmem:[#allocation1] sm:$0xff pattern:$0x75316420]
      %v572 = vld.sshfl [vmem:[#allocation1 + $0x8] sm:$0xff pattern:$0x75316420]
      %vm573 = vcmask 31744
      %v575 = vsel %vm573, %v568, 0
      %vm577 = vcmask 1043456
      %v578 = vsel %vm577, %v571, 0
      %v580 = vsel %vm577, %v572, 0
      %582 = vmatpush.msra.mxu0 0.0
      %583 = vmatpush.msra.mxu0 0.0
      %584 = vmatpush.msra.mxu0 0.0
      %585 = vmatpush.msra.mxu0 0.0
      %586 = vmatpush.msra.mxu0 0.0
      %587 = vmatpush.msra.mxu0 0.0
      %588 = vmatpush.msra.mxu0 0.0
      %589 = vmatpush.msra.mxu0 0.0
      %590 = vmatpush.msra.mxu0 0.0
      %591 = vmatpush.msra.mxu0 0.0
      %592 = vmatpush.msra.mxu0 0.0
      %593 = vmatpush.msra.mxu0 0.0
      %594 = vmatpush.msra.mxu0 0.0
      %595 = vmatpush.msra.mxu0 0.0
      %596 = vmatpush.msra.mxu0 0.0
      %597 = vmatpush.msra.mxu0 %v578
      %598 = vmatmul.f32.gmra.mxu0 %v575
      %v599 = vpop.f32.mrf.mxu0
      %v600 = vadd.f32 0.0, %v599
      %601 = vdwg.mxu0
      %602 = vmatpush.msra.mxu0 0.0
      %603 = vmatpush.msra.mxu0 0.0
      %604 = vmatpush.msra.mxu0 0.0
      %605 = vmatpush.msra.mxu0 0.0
      %606 = vmatpush.msra.mxu0 0.0
      %607 = vmatpush.msra.mxu0 0.0
      %608 = vmatpush.msra.mxu0 0.0
      %609 = vmatpush.msra.mxu0 0.0
      %610 = vmatpush.msra.mxu0 0.0
      %611 = vmatpush.msra.mxu0 0.0
      %612 = vmatpush.msra.mxu0 0.0
      %613 = vmatpush.msra.mxu0 0.0
      %614 = vmatpush.msra.mxu0 0.0
      %615 = vmatpush.msra.mxu0 0.0
      %616 = vmatpush.msra.mxu0 0.0
      %617 = vmatpush.msra.mxu0 %v580
      %618 = vmatmul.f32.gmra.mxu0 %v575
      %v619 = vpop.f32.mrf.mxu0
      %v620 = vadd.f32 0.0, %v619
      %621 = vdwg.mxu0
      %v622 = vld [vmem:[%s6] sm:$0xff]
      %624 = vset.pattern.permute.xlu0 0
      %625 = vperm.xlu0 %624, %v622
      %v626 = vpop.permute.xlu0 %625
      %v628 = vadd.f32 %v535, %v626
      %v629 = vadd.f32 %v558, %v626
      %v630 = vmax.f32 %v628, 0.0
      %v631 = vmax.f32 %v629, 0.0
      %632 = vst [vmem:[%s492] sm:$0xff] %v630
      %633 = vst [vmem:[%s492 + $0x8] sm:$0xff] %v631
      %v634 = vadd.f32 %v538, %v600
      %v635 = vadd.f32 %v561, %v620
      %v636 = vld [vmem:[%s7] sm:$0xff]
      %638 = vset.pattern.permute.xlu0 0
      %639 = vperm.xlu0 %638, %v636
      %v640 = vpop.permute.xlu0 %639
      %v642 = vadd.f32 %v634, %v640
      %v643 = vadd.f32 %v635, %v640
      %v644 = vmax.f32 %v642, 0.0
      %v645 = vmax.f32 %v643, 0.0
      %646 = vst [vmem:[%s502] sm:$0xff] %v644
      %647 = vst [vmem:[%s502 + $0x8] sm:$0xff] %v645
      %s648 = smul.u32 2, %s26
      %p649 = scmp.lt.s32.totalorder %s25, 1
      %s650 = scalar_select %p649, %s25, 1
      %p651 = scmp.lt.s32.totalorder %s648, 1
      %s652 = scalar_select %p651, %s648, 1
      %s653 = smul.addr %s650, 2
      %s654 = sadd.s32 %s652, %s653
      %s655 = smul.addr %s654, 8
      %s656 = scalar_lea.vmem %s8, %s655
      %s657 = smul.u32 2, %s26
      %p658 = scmp.lt.s32.totalorder %s25, 1
      %s659 = scalar_select %p658, %s25, 1
      %p660 = scmp.lt.s32.totalorder %s657, 1
      %s661 = scalar_select %p660, %s657, 1
      %s662 = smul.addr %s659, 2
      %s663 = sadd.s32 %s661, %s662
      %s664 = smul.addr %s663, 8
      %s665 = scalar_lea.vmem %s9, %s664
      // Predicated region
      $region53: #{ffc_bn_act_forward.5} parent=51 // pred_check
        %p666 = pneg %p249
      $region54: #{ffc_bn_act_forward.5} parent=51 // pred_check_branch
        %668 = sbr.rel (%p666) target = $region56
      $region55: #{ffc_bn_act_forward.5} parent=51 // pred_region
        %s669 = smul.u32 2, %s26
      $region56: #{ffc_bn_act_forward.5} parent=51 // pred_fallthru
        _
      // Predicated region
      $region57: #{ffc_bn_act_forward.5} parent=51 // pred_check
        %p670 = pneg %p277
      $region58: #{ffc_bn_act_forward.5} parent=51 // pred_check_branch
        %672 = sbr.rel (%p670) target = $region60
      $region59: #{ffc_bn_act_forward.5} parent=51 // pred_region
        %s673 = smul.u32 2, %s26
      $region60: #{ffc_bn_act_forward.5} parent=51 // pred_fallthru
        _
    $region52: #{ffc_bn_act_forward.5} parent=5 // pred_fallthru
      _
    %p674 = scmp.le.s32.totalorder 2, %s16
    // Predicated region
    $region61: #{ffc_bn_act_forward.5} parent=5 // pred_check
      %p675 = pneg %p674
    $region62: #{ffc_bn_act_forward.5} parent=5 // pred_check_branch
      %677 = sbr.rel (%p675) target = $region64
    $region63: #{ffc_bn_act_forward.5} parent=5 // pred_region
      %s678 = ssub.s32 %s16, 2
      // Predicated region
      $region65: #{ffc_bn_act_forward.5} parent=63 // pred_check
        %p679 = pneg %p255
      $region66: #{ffc_bn_act_forward.5} parent=63 // pred_check_branch
        %681 = sbr.rel (%p679) target = $region68
      $region67: #{ffc_bn_act_forward.5} parent=63 // pred_region
        %s682 = smul.u32 2, %s28
        %p683 = scmp.lt.s32.totalorder %s27, 1
        %s684 = scalar_select %p683, %s27, 1
        %p685 = scmp.lt.s32.totalorder %s682, 1
        %s686 = scalar_select %p685, %s682, 1
        %s687 = smul.addr %s684, 2
        %s688 = sadd.s32 %s686, %s687
        %s689 = smul.addr %s688, 8
        %s690 = scalar_lea.vmem %s8, %s689
      $region68: #{ffc_bn_act_forward.5} parent=63 // pred_fallthru
        _
      // Predicated region
      $region69: #{ffc_bn_act_forward.5} parent=63 // pred_check
        %p691 = pneg %p283
      $region70: #{ffc_bn_act_forward.5} parent=63 // pred_check_branch
        %693 = sbr.rel (%p691) target = $region72
      $region71: #{ffc_bn_act_forward.5} parent=63 // pred_region
        %s694 = smul.u32 2, %s28
        %p695 = scmp.lt.s32.totalorder %s27, 1
        %s696 = scalar_select %p695, %s27, 1
        %p697 = scmp.lt.s32.totalorder %s694, 1
        %s698 = scalar_select %p697, %s694, 1
        %s699 = smul.addr %s696, 2
        %s700 = sadd.s32 %s698, %s699
        %s701 = smul.addr %s700, 8
        %s702 = scalar_lea.vmem %s9, %s701
      $region72: #{ffc_bn_act_forward.5} parent=63 // pred_fallthru
        _
    $region64: #{ffc_bn_act_forward.5} parent=5 // pred_fallthru
      _
  $region6: #{ffc_bn_act_forward.5} parent=0 // loop_footer
    %s20 = sadd.s32 1, %s16
  $region7: #{ffc_bn_act_forward.5} parent=0 // loop_footer_branch
    %15 = sbr.rel target = $region3
  $region8: #{ffc_bn_act_forward.5} parent=0 // loop_exit
    _

</llo_original>
